<compile_context>
chip_gen: v7x
topology: tpu7x:2x2x1
jax: 0.10.0
libtpu: 0.0.40
codegen_flags: <defaults>
</compile_context>

<pallas_src>
import jax
import jax.numpy as jnp
from jax.experimental import pallas as pl
from jax.experimental.pallas import tpu as pltpu


_VMEM = pl.BlockSpec(memory_space=pltpu.MemorySpace.VMEM)
_SMEM = pl.BlockSpec(memory_space=pltpu.MemorySpace.SMEM)
_ANY = pl.BlockSpec(memory_space=pl.ANY)


def _softplus(z):
    # numerically stable softplus (f32 VPU/EUP path)
    return jnp.maximum(z, 0.0) + jnp.log(1.0 + jnp.exp(-jnp.abs(z)))


def _two_block_ce(q_bf, cand_a_bf, cand_b_bf, lbl, b_label_off):
    """Mean CE of q against candidates [cand_a ; cand_b] without concatenating.

    Inputs are already bf16 (cast hoisted by the caller).  Streaming max/sum
    across the two candidate blocks; the picked logit is folded into the same
    pass via a one-hot select.  dot_general contracts last dims (q @ cand^T),
    so no transpose is materialized.
    """
    dn = (((1,), (1,)), ((), ()))
    la = jax.lax.dot_general(q_bf, cand_a_bf, dn, preferred_element_type=jnp.float32)
    ia = jax.lax.broadcasted_iota(jnp.int32, la.shape, 1)
    pick = jnp.sum(jnp.where(ia == lbl, la, 0.0), axis=-1, keepdims=True)
    m = jnp.max(la, axis=-1, keepdims=True)
    if cand_b_bf.shape[0] > 0:
        lb = jax.lax.dot_general(q_bf, cand_b_bf, dn, preferred_element_type=jnp.float32)
        ib = jax.lax.broadcasted_iota(jnp.int32, lb.shape, 1)
        pick = pick + jnp.sum(jnp.where(ib == (lbl - b_label_off), lb, 0.0),
                              axis=-1, keepdims=True)
        m = jnp.maximum(m, jnp.max(lb, axis=-1, keepdims=True))
        ssum = (jnp.sum(jnp.exp(la - m), axis=-1, keepdims=True)
                + jnp.sum(jnp.exp(lb - m), axis=-1, keepdims=True))
    else:
        ssum = jnp.sum(jnp.exp(la - m), axis=-1, keepdims=True)
    lse = jnp.log(ssum) + m
    return jnp.mean(lse - pick)


def _make_fused_kernel(P_src, P_ref, T_src, T_ref, S2T, T2S, H, Hp, D, Dp):
    n_align = P_src + P_ref
    n_tkz = T_src + T_ref
    G = n_align + n_tkz

    def kernel(src_hbm, ref_hbm,                    # [B*S, H] f32 in HBM (ANY)
               wcat_ref, b_ref,                     # [2Hp, Dp] bf16, [1, Dp] f32
               s2t_lbl_ref, t2s_lbl_ref,            # [S2T,1]/[T2S,1] int32
               sign_ref,                            # [n_tkz,1] f32 (1 - 2*label)
               sa_s_ref, sa_e_ref, ra_s_ref, ra_e_ref,   # SMEM flat row indices
               st_s_ref, st_e_ref, rt_s_ref, rt_e_ref,
               misc_ref,                            # SMEM (1,) f32 [tkz_weight]
               out_ref,                             # SMEM (1,1) f32
               g_ref, sem_ref):                     # VMEM (G, 2Hp) + DMA sems (2,)
        # Zero the lane-pad columns of the gather buffer (only when H % 128 != 0;
        # static Python branch -> not traced in the aligned case).  The matching
        # weight rows are zero, but uninitialized VMEM could hold NaNs.
        if Hp != H:
            zcol = jnp.zeros((G, Hp - H), jnp.float32)
            g_ref[:, H:Hp] = zcol
            g_ref[:, Hp + H:2 * Hp] = zcol

        # -------- in-kernel row gather: HBM -> VMEM DMAs (start|end in one row) -----
        # TODO(synk): replace the unrolled DMA prologue with a chunked, double-buffered
        # lax.fori_loop gather at production G (bounds in-flight DMAs / prologue size).
        align_copies = []
        tkz_copies = []

        def gather(h_hbm, s_idx_ref, e_idx_ref, n, row_off, sem, out_list):
            for i in range(n):
                row = row_off + i
                cs = pltpu.make_async_copy(
                    h_hbm.at[pl.ds(s_idx_ref[i], 1), :],
                    g_ref.at[pl.ds(row, 1), pl.ds(0, H)], sem)
                ce = pltpu.make_async_copy(
                    h_hbm.at[pl.ds(e_idx_ref[i], 1), :],
                    g_ref.at[pl.ds(row, 1), pl.ds(Hp, H)], sem)
                cs.start()
                ce.start()
                out_list.append(cs)
                out_list.append(ce)

        # Alignment rows first (on sem[0]) so they complete first; tokenizer rows
        # go on sem[1] so their wait can be deferred past the projection + CEs.
        gather(src_hbm, sa_s_ref, sa_e_ref, P_src, 0, sem_ref.at[0], align_copies)
        gather(ref_hbm, ra_s_ref, ra_e_ref, P_ref, P_src, sem_ref.at[0], align_copies)
        gather(src_hbm, st_s_ref, st_e_ref, T_src, n_align, sem_ref.at[1], tkz_copies)
        gather(ref_hbm, rt_s_ref, rt_e_ref, T_ref, n_align + T_src, sem_ref.at[1],
               tkz_copies)

        # ----- wait ONLY the alignment-row copies (all same size, same semaphore) ---
        for c in align_copies:
            c.wait()

        # ------- fused phrase projection: src + ref rows in ONE stacked matmul ------
        slab = g_ref[0:n_align, :].astype(jnp.bfloat16)          # [n_align, 2Hp]
        emb = (jnp.dot(slab, wcat_ref[...], preferred_element_type=jnp.float32)
               + b_ref[...])                                     # [n_align, Dp] f32
        # Mask the pad / tokenizer lanes (>= D) so CE logits contract over exactly D
        # dims, then cast to bf16 ONCE (shared by query and candidate sides).
        lane = jax.lax.broadcasted_iota(jnp.int32, emb.shape, 1)
        emb_bf = jnp.where(lane < D, emb, 0.0).astype(jnp.bfloat16)
        src_bf = emb_bf[0:P_src]
        ref_bf = emb_bf[P_src:n_align]

        # ------------------- both alignment cross-entropies -------------------------
        s2t_loss = _two_block_ce(src_bf[0:S2T], ref_bf, src_bf[S2T:P_src],
                                 s2t_lbl_ref[...], P_ref)
        t2s_loss = _two_block_ce(ref_bf[0:T2S], src_bf, ref_bf[T2S:P_ref],
                                 t2s_lbl_ref[...], P_src)

        # --------- now wait the tokenizer-row copies (overlapped with the above) ----
        for c in tkz_copies:
            c.wait()

        # Tokenizer head rides the MXU: same stacked weight, logit-diff (+ bias diff)
        # lives in pad column D of the result.
        tslab = g_ref[n_align:n_align + n_tkz, :].astype(jnp.bfloat16)
        temb = (jnp.dot(tslab, wcat_ref[...], preferred_element_type=jnp.float32)
                + b_ref[...])                                    # [n_tkz, Dp] f32
        tlane = jax.lax.broadcasted_iota(jnp.int32, temb.shape, 1)
        d = jnp.sum(jnp.where(tlane == D, temb, 0.0), axis=-1, keepdims=True)
        sd = _softplus(d * sign_ref[...])                        # per-row 2-class CE
        src_tkz = jnp.mean(sd[0:T_src])
        ref_tkz = jnp.mean(sd[T_src:n_tkz])

        out_ref[0, 0] = s2t_loss + t2s_loss + misc_ref[0] * (src_tkz + ref_tkz)

    return kernel


# ----------------------------------- wrapper ---------------------------------------

def retrieval_forward(params, batch):
    """Mirrors RetrievalModel.forward_simplified_with_tokenization."""
    src_h = batch['src_hidden_states']    # [B, S, H]
    ref_h = batch['ref_hidden_states']    # [B, S, H]
    B, S, H = src_h.shape
    W, b = params['linear_w'], params['linear_b']            # [D, 2H], [D]
    Wt, bt = params['tkz_w'], params['tkz_b']                # [2, 2H], [2]
    tkz_w = params['tkz_loss_weight']
    D = W.shape[0]
    Hp = ((H + 127) // 128) * 128            # lane-aligned per-row width
    Dp = ((D + 1 + 127) // 128) * 128        # >= D+1 so pad column D can host tkz head

    # Stacked [2Hp, Dp] bf16 projection weight; tokenizer logit-diff folded into
    # pad column D (bias diff folded into the bias pad column).
    wcat = jnp.zeros((2 * Hp, Dp), jnp.float32)
    wcat = wcat.at[0:H, 0:D].set(W[:, :H].T)
    wcat = wcat.at[Hp:Hp + H, 0:D].set(W[:, H:].T)
    wcat = wcat.at[0:H, D].set(Wt[1, :H] - Wt[0, :H])
    wcat = wcat.at[Hp:Hp + H, D].set(Wt[1, H:] - Wt[0, H:])
    wcat = wcat.astype(jnp.bfloat16)
    bp = (jnp.zeros((1, Dp), jnp.float32)
          .at[0, 0:D].set(b)
          .at[0, D].set(bt[1] - bt[0]))

    sb, ss, se = batch['src_phrase_align_data']
    rb, rs, re = batch['ref_phrase_align_data']
    stb, sts, ste = batch['src_phrase_tkz_data']
    rtb, rts, rte = batch['ref_phrase_tkz_data']

    def flat(bi, si):
        return bi.astype(jnp.int32) * S + si.astype(jnp.int32)

    sa_s, sa_e = flat(sb, ss), flat(sb, se)
    ra_s, ra_e = flat(rb, rs), flat(rb, re)
    st_s, st_e = flat(stb, sts), flat(stb, ste)
    rt_s, rt_e = flat(rtb, rts), flat(rtb, rte)

    s2t_lbl = batch['s2t_align_labels'].astype(jnp.int32).reshape(-1, 1)
    t2s_lbl = batch['t2s_align_labels'].astype(jnp.int32).reshape(-1, 1)
    signs = jnp.concatenate(
        [1.0 - 2.0 * batch['src_phrase_tkz_labels'].astype(jnp.float32),
         1.0 - 2.0 * batch['ref_phrase_tkz_labels'].astype(jnp.float32)]).reshape(-1, 1)
    misc = jnp.asarray([tkz_w], jnp.float32)

    P_src, P_ref = sa_s.shape[0], ra_s.shape[0]
    T_src, T_ref = st_s.shape[0], rt_s.shape[0]
    S2T, T2S = s2t_lbl.shape[0], t2s_lbl.shape[0]
    n_align, n_tkz = P_src + P_ref, T_src + T_ref
    G = n_align + n_tkz

    # hidden states stay in HBM; only the needed rows are DMA'd in-kernel.
    src_flat = src_h.reshape(B * S, H)
    ref_flat = ref_h.reshape(B * S, H)

    kernel = _make_fused_kernel(P_src, P_ref, T_src, T_ref, S2T, T2S, H, Hp, D, Dp)

    # Cost estimate + VMEM budget sized to the actual resident set.
    nc_s2t = P_ref + (P_src - S2T)
    nc_t2s = P_src + (P_ref - T2S)
    flops = (2 * G * (2 * Hp) * Dp
             + 2 * S2T * Dp * nc_s2t
             + 2 * T2S * Dp * nc_t2s)
    transcendentals = S2T * nc_s2t + T2S * nc_t2s + 2 * n_tkz
    bytes_accessed = (2 * G * H * 4 + wcat.size * 2 + bp.size * 4
                      + 4 * (s2t_lbl.size + t2s_lbl.size) + 4 * signs.size + 4 * 8 * G)
    resident = (G * 2 * Hp * 4 + wcat.size * 2 + bp.size * 4
                + 4 * n_align * Dp * 4 + 4 * n_tkz * Dp * 4)
    vmem_limit = int(min(64 * 1024 * 1024, max(4 * resident, 16 * 1024 * 1024)))

    out = pl.pallas_call(
        kernel,
        out_shape=jax.ShapeDtypeStruct((1, 1), jnp.float32),
        in_specs=[_ANY, _ANY, _VMEM, _VMEM, _VMEM, _VMEM, _VMEM] + [_SMEM] * 9,
        out_specs=_SMEM,
        scratch_shapes=[pltpu.VMEM((G, 2 * Hp), src_flat.dtype),
                        pltpu.SemaphoreType.DMA((2,))],
        compiler_params=pltpu.CompilerParams(vmem_limit_bytes=vmem_limit),
        cost_estimate=pl.CostEstimate(flops=flops,
                                      transcendentals=transcendentals,
                                      bytes_accessed=bytes_accessed),
    )(src_flat, ref_flat, wcat, bp, s2t_lbl, t2s_lbl, signs,
      sa_s, sa_e, ra_s, ra_e, st_s, st_e, rt_s, rt_e, misc)
    return out[0, 0]


# -------------------------------- pure-JAX reference --------------------------------

def _ce(logits, labels):
    logp = jax.nn.log_softmax(logits, axis=-1)
    return -jnp.mean(jnp.take_along_axis(logp, labels[:, None], axis=-1))


def reference_forward(params, batch):
    src_h, ref_h = batch['src_hidden_states'], batch['ref_hidden_states']
    W, b, Wt, bt = (params['linear_w'], params['linear_b'],
                    params['tkz_w'], params['tkz_b'])
    sb, ss, se = batch['src_phrase_align_data']
    rb, rs, re = batch['ref_phrase_align_data']
    src_p = jnp.concatenate([src_h[sb, ss], src_h[sb, se]], -1) @ W.T + b
    ref_p = jnp.concatenate([ref_h[rb, rs], ref_h[rb, re]], -1) @ W.T + b
    s2t_num = batch['s2t_align_labels'].shape[0]
    t2s_num = batch['t2s_align_labels'].shape[0]
    s2t_logits = src_p[:s2t_num] @ jnp.concatenate([ref_p, src_p[s2t_num:]], 0).T
    t2s_logits = ref_p[:t2s_num] @ jnp.concatenate([src_p, ref_p[t2s_num:]], 0).T
    s2t_loss = _ce(s2t_logits, batch['s2t_align_labels'])
    t2s_loss = _ce(t2s_logits, batch['t2s_align_labels'])
    stb, sts, ste = batch['src_phrase_tkz_data']
    rtb, rts, rte = batch['ref_phrase_tkz_data']
    src_tkz = _ce(jnp.concatenate([src_h[stb, sts], src_h[stb, ste]], -1) @ Wt.T + bt,
                  batch['src_phrase_tkz_labels'])
    ref_tkz = _ce(jnp.concatenate([ref_h[rtb, rts], ref_h[rtb, rte]], -1) @ Wt.T + bt,
                  batch['ref_phrase_tkz_labels'])
    return s2t_loss + t2s_loss + params['tkz_loss_weight'] * (ref_tkz + src_tkz)


# ------------------------------------- main ------------------------------------------

if __name__ == "__main__":
    B, S, H, D = 2, 16, 128, 32       # batch, seq, hidden_size, out_hidden_size
    P_SRC, P_REF = 8, 8               # number of src / ref phrases
    S2T_NUM, T2S_NUM = 6, 6           # queries per direction
    T_SRC, T_REF = 8, 8               # tokenizer-head pairs

    key = jax.random.PRNGKey(0)
    keys = jax.random.split(key, 16)

    params = {
        'linear_w': jax.random.normal(keys[0], (D, 2 * H), jnp.float32) * 0.05,
        'linear_b': jax.random.normal(keys[1], (D,), jnp.float32) * 0.05,
        'tkz_w':    jax.random.normal(keys[2], (2, 2 * H), jnp.float32) * 0.05,
        'tkz_b':    jax.random.normal(keys[3], (2,), jnp.float32) * 0.05,
        'tkz_loss_weight': 1.0,
    }

    def rand_idx(k, n, hi):
        return jax.random.randint(k, (n,), 0, hi, jnp.int32)

    batch = {
        # stand-in encoder hidden states (see TODO(synk) above)
        'src_hidden_states': jax.random.normal(keys[4], (B, S, H), jnp.float32) * 0.5,
        'ref_hidden_states': jax.random.normal(keys[5], (B, S, H), jnp.float32) * 0.5,
        'src_phrase_align_data': (rand_idx(keys[6], P_SRC, B),
                                  rand_idx(keys[7], P_SRC, S),
                                  rand_idx(keys[8], P_SRC, S)),
        'ref_phrase_align_data': (rand_idx(keys[9], P_REF, B),
                                  rand_idx(keys[10], P_REF, S),
                                  rand_idx(keys[11], P_REF, S)),
        's2t_align_labels': rand_idx(keys[12], S2T_NUM, P_REF + (P_SRC - S2T_NUM)),
        't2s_align_labels': rand_idx(keys[13], T2S_NUM, P_SRC + (P_REF - T2S_NUM)),
        'src_phrase_tkz_data': (rand_idx(keys[14], T_SRC, B),
                                rand_idx(keys[15], T_SRC, S),
                                rand_idx(keys[6], T_SRC, S)),
        'src_phrase_tkz_labels': rand_idx(keys[7], T_SRC, 2),
        'ref_phrase_tkz_data': (rand_idx(keys[8], T_REF, B),
                                rand_idx(keys[9], T_REF, S),
                                rand_idx(keys[10], T_REF, S)),
        'ref_phrase_tkz_labels': rand_idx(keys[11], T_REF, 2),
    }

    loss = jax.block_until_ready(retrieval_forward(params, batch))
    ref = jax.block_until_ready(reference_forward(params, batch))
    assert jnp.isfinite(loss), "loss is not finite"
    assert jnp.allclose(loss, ref, rtol=1e-2, atol=1e-2), (loss, ref)
    print("KERNEL_OK")
</pallas_src>

<mosaic_0001>
module attributes {stable_mosaic.version = 11 : i64} {
  func.func @kernel(%arg0: memref<32x128xf32, #tpu.memory_space<any>>, %arg1: memref<32x128xf32, #tpu.memory_space<any>>, %arg2: memref<256x128xbf16, #tpu.memory_space<vmem>>, %arg3: memref<1x128xf32, #tpu.memory_space<vmem>>, %arg4: memref<6x1xi32, #tpu.memory_space<vmem>>, %arg5: memref<6x1xi32, #tpu.memory_space<vmem>>, %arg6: memref<16x1xf32, #tpu.memory_space<vmem>>, %arg7: memref<8xi32, #tpu.memory_space<smem>>, %arg8: memref<8xi32, #tpu.memory_space<smem>>, %arg9: memref<8xi32, #tpu.memory_space<smem>>, %arg10: memref<8xi32, #tpu.memory_space<smem>>, %arg11: memref<8xi32, #tpu.memory_space<smem>>, %arg12: memref<8xi32, #tpu.memory_space<smem>>, %arg13: memref<8xi32, #tpu.memory_space<smem>>, %arg14: memref<8xi32, #tpu.memory_space<smem>>, %arg15: memref<1xf32, #tpu.memory_space<smem>>, %arg16: memref<1x1xf32, #tpu.memory_space<smem>>, %arg17: memref<32x256xf32, #tpu.memory_space<vmem>>, %arg18: memref<2x!tpu.dma_semaphore, #tpu.memory_space<semaphore_mem>>) attributes {dimension_semantics = [], scalar_prefetch = 0 : i64, scratch_operands = 2 : i64, tpu.core_type = #tpu.core_type<tc>} {
    %c0 = arith.constant 0 : index
    %0 = memref.load %arg7[%c0] : memref<8xi32, #tpu.memory_space<smem>>
    %c0_0 = arith.constant 0 : index
    %1 = memref.load %arg8[%c0_0] : memref<8xi32, #tpu.memory_space<smem>>
    %c0_i32 = arith.constant 0 : i32
    %c0_i32_1 = arith.constant 0 : i32
    %2 = tpu.memref_slice %arg0[%0, %c0_i32_1] : memref<32x128xf32, #tpu.memory_space<any>> -> memref<1x128xf32, #tpu.memory_space<any>>
    %c0_i32_2 = arith.constant 0 : i32
    %c0_i32_3 = arith.constant 0 : i32
    %3 = tpu.memref_slice %arg17[%c0_i32_2, %c0_i32_3] : memref<32x256xf32, #tpu.memory_space<vmem>> -> memref<1x128xf32, #tpu.memory_space<vmem>>
    %4 = tpu.memref_slice %arg18[%c0_i32] : memref<2x!tpu.dma_semaphore, #tpu.memory_space<semaphore_mem>> -> memref<1x!tpu.dma_semaphore, #tpu.memory_space<semaphore_mem>>
    %5 = tpu.memref_squeeze %4 : memref<1x!tpu.dma_semaphore, #tpu.memory_space<semaphore_mem>> -> memref<!tpu.dma_semaphore, #tpu.memory_space<semaphore_mem>>
    tpu.enqueue_dma source(%2 : memref<1x128xf32, #tpu.memory_space<any>>) target(%3 : memref<1x128xf32, #tpu.memory_space<vmem>>) target_semaphore(%5 : memref<!tpu.dma_semaphore, #tpu.memory_space<semaphore_mem>>)
    %c0_i32_4 = arith.constant 0 : i32
    %c0_i32_5 = arith.constant 0 : i32
    %6 = tpu.memref_slice %arg0[%1, %c0_i32_5] : memref<32x128xf32, #tpu.memory_space<any>> -> memref<1x128xf32, #tpu.memory_space<any>>
    %c0_i32_6 = arith.constant 0 : i32
    %c128_i32 = arith.constant 128 : i32
    %7 = tpu.memref_slice %arg17[%c0_i32_6, %c128_i32] : memref<32x256xf32, #tpu.memory_space<vmem>> -> memref<1x128xf32, #tpu.memory_space<vmem>>
    %8 = tpu.memref_slice %arg18[%c0_i32_4] : memref<2x!tpu.dma_semaphore, #tpu.memory_space<semaphore_mem>> -> memref<1x!tpu.dma_semaphore, #tpu.memory_space<semaphore_mem>>
    %9 = tpu.memref_squeeze %8 : memref<1x!tpu.dma_semaphore, #tpu.memory_space<semaphore_mem>> -> memref<!tpu.dma_semaphore, #tpu.memory_space<semaphore_mem>>
    tpu.enqueue_dma source(%6 : memref<1x128xf32, #tpu.memory_space<any>>) target(%7 : memref<1x128xf32, #tpu.memory_space<vmem>>) target_semaphore(%9 : memref<!tpu.dma_semaphore, #tpu.memory_space<semaphore_mem>>)
    %c1 = arith.constant 1 : index
    %10 = memref.load %arg7[%c1] : memref<8xi32, #tpu.memory_space<smem>>
    %c1_7 = arith.constant 1 : index
    %11 = memref.load %arg8[%c1_7] : memref<8xi32, #tpu.memory_space<smem>>
    %c0_i32_8 = arith.constant 0 : i32
    %c0_i32_9 = arith.constant 0 : i32
    %12 = tpu.memref_slice %arg0[%10, %c0_i32_9] : memref<32x128xf32, #tpu.memory_space<any>> -> memref<1x128xf32, #tpu.memory_space<any>>
    %c1_i32 = arith.constant 1 : i32
    %c0_i32_10 = arith.constant 0 : i32
    %13 = tpu.memref_slice %arg17[%c1_i32, %c0_i32_10] : memref<32x256xf32, #tpu.memory_space<vmem>> -> memref<1x128xf32, #tpu.memory_space<vmem>>
    %14 = tpu.memref_slice %arg18[%c0_i32_8] : memref<2x!tpu.dma_semaphore, #tpu.memory_space<semaphore_mem>> -> memref<1x!tpu.dma_semaphore, #tpu.memory_space<semaphore_mem>>
    %15 = tpu.memref_squeeze %14 : memref<1x!tpu.dma_semaphore, #tpu.memory_space<semaphore_mem>> -> memref<!tpu.dma_semaphore, #tpu.memory_space<semaphore_mem>>
    tpu.enqueue_dma source(%12 : memref<1x128xf32, #tpu.memory_space<any>>) target(%13 : memref<1x128xf32, #tpu.memory_space<vmem>>) target_semaphore(%15 : memref<!tpu.dma_semaphore, #tpu.memory_space<semaphore_mem>>)
    %c0_i32_11 = arith.constant 0 : i32
    %c0_i32_12 = arith.constant 0 : i32
    %16 = tpu.memref_slice %arg0[%11, %c0_i32_12] : memref<32x128xf32, #tpu.memory_space<any>> -> memref<1x128xf32, #tpu.memory_space<any>>
    %c1_i32_13 = arith.constant 1 : i32
    %c128_i32_14 = arith.constant 128 : i32
    %17 = tpu.memref_slice %arg17[%c1_i32_13, %c128_i32_14] : memref<32x256xf32, #tpu.memory_space<vmem>> -> memref<1x128xf32, #tpu.memory_space<vmem>>
    %18 = tpu.memref_slice %arg18[%c0_i32_11] : memref<2x!tpu.dma_semaphore, #tpu.memory_space<semaphore_mem>> -> memref<1x!tpu.dma_semaphore, #tpu.memory_space<semaphore_mem>>
    %19 = tpu.memref_squeeze %18 : memref<1x!tpu.dma_semaphore, #tpu.memory_space<semaphore_mem>> -> memref<!tpu.dma_semaphore, #tpu.memory_space<semaphore_mem>>
    tpu.enqueue_dma source(%16 : memref<1x128xf32, #tpu.memory_space<any>>) target(%17 : memref<1x128xf32, #tpu.memory_space<vmem>>) target_semaphore(%19 : memref<!tpu.dma_semaphore, #tpu.memory_space<semaphore_mem>>)
    %c2 = arith.constant 2 : index
    %20 = memref.load %arg7[%c2] : memref<8xi32, #tpu.memory_space<smem>>
    %c2_15 = arith.constant 2 : index
    %21 = memref.load %arg8[%c2_15] : memref<8xi32, #tpu.memory_space<smem>>
    %c0_i32_16 = arith.constant 0 : i32
    %c0_i32_17 = arith.constant 0 : i32
    %22 = tpu.memref_slice %arg0[%20, %c0_i32_17] : memref<32x128xf32, #tpu.memory_space<any>> -> memref<1x128xf32, #tpu.memory_space<any>>
    %c2_i32 = arith.constant 2 : i32
    %c0_i32_18 = arith.constant 0 : i32
    %23 = tpu.memref_slice %arg17[%c2_i32, %c0_i32_18] : memref<32x256xf32, #tpu.memory_space<vmem>> -> memref<1x128xf32, #tpu.memory_space<vmem>>
    %24 = tpu.memref_slice %arg18[%c0_i32_16] : memref<2x!tpu.dma_semaphore, #tpu.memory_space<semaphore_mem>> -> memref<1x!tpu.dma_semaphore, #tpu.memory_space<semaphore_mem>>
    %25 = tpu.memref_squeeze %24 : memref<1x!tpu.dma_semaphore, #tpu.memory_space<semaphore_mem>> -> memref<!tpu.dma_semaphore, #tpu.memory_space<semaphore_mem>>
    tpu.enqueue_dma source(%22 : memref<1x128xf32, #tpu.memory_space<any>>) target(%23 : memref<1x128xf32, #tpu.memory_space<vmem>>) target_semaphore(%25 : memref<!tpu.dma_semaphore, #tpu.memory_space<semaphore_mem>>)
    %c0_i32_19 = arith.constant 0 : i32
    %c0_i32_20 = arith.constant 0 : i32
    %26 = tpu.memref_slice %arg0[%21, %c0_i32_20] : memref<32x128xf32, #tpu.memory_space<any>> -> memref<1x128xf32, #tpu.memory_space<any>>
    %c2_i32_21 = arith.constant 2 : i32
    %c128_i32_22 = arith.constant 128 : i32
    %27 = tpu.memref_slice %arg17[%c2_i32_21, %c128_i32_22] : memref<32x256xf32, #tpu.memory_space<vmem>> -> memref<1x128xf32, #tpu.memory_space<vmem>>
    %28 = tpu.memref_slice %arg18[%c0_i32_19] : memref<2x!tpu.dma_semaphore, #tpu.memory_space<semaphore_mem>> -> memref<1x!tpu.dma_semaphore, #tpu.memory_space<semaphore_mem>>
    %29 = tpu.memref_squeeze %28 : memref<1x!tpu.dma_semaphore, #tpu.memory_space<semaphore_mem>> -> memref<!tpu.dma_semaphore, #tpu.memory_space<semaphore_mem>>
    tpu.enqueue_dma source(%26 : memref<1x128xf32, #tpu.memory_space<any>>) target(%27 : memref<1x128xf32, #tpu.memory_space<vmem>>) target_semaphore(%29 : memref<!tpu.dma_semaphore, #tpu.memory_space<semaphore_mem>>)
    %c3 = arith.constant 3 : index
    %30 = memref.load %arg7[%c3] : memref<8xi32, #tpu.memory_space<smem>>
    %c3_23 = arith.constant 3 : index
    %31 = memref.load %arg8[%c3_23] : memref<8xi32, #tpu.memory_space<smem>>
    %c0_i32_24 = arith.constant 0 : i32
    %c0_i32_25 = arith.constant 0 : i32
    %32 = tpu.memref_slice %arg0[%30, %c0_i32_25] : memref<32x128xf32, #tpu.memory_space<any>> -> memref<1x128xf32, #tpu.memory_space<any>>
    %c3_i32 = arith.constant 3 : i32
    %c0_i32_26 = arith.constant 0 : i32
    %33 = tpu.memref_slice %arg17[%c3_i32, %c0_i32_26] : memref<32x256xf32, #tpu.memory_space<vmem>> -> memref<1x128xf32, #tpu.memory_space<vmem>>
    %34 = tpu.memref_slice %arg18[%c0_i32_24] : memref<2x!tpu.dma_semaphore, #tpu.memory_space<semaphore_mem>> -> memref<1x!tpu.dma_semaphore, #tpu.memory_space<semaphore_mem>>
    %35 = tpu.memref_squeeze %34 : memref<1x!tpu.dma_semaphore, #tpu.memory_space<semaphore_mem>> -> memref<!tpu.dma_semaphore, #tpu.memory_space<semaphore_mem>>
    tpu.enqueue_dma source(%32 : memref<1x128xf32, #tpu.memory_space<any>>) target(%33 : memref<1x128xf32, #tpu.memory_space<vmem>>) target_semaphore(%35 : memref<!tpu.dma_semaphore, #tpu.memory_space<semaphore_mem>>)
    %c0_i32_27 = arith.constant 0 : i32
    %c0_i32_28 = arith.constant 0 : i32
    %36 = tpu.memref_slice %arg0[%31, %c0_i32_28] : memref<32x128xf32, #tpu.memory_space<any>> -> memref<1x128xf32, #tpu.memory_space<any>>
    %c3_i32_29 = arith.constant 3 : i32
    %c128_i32_30 = arith.constant 128 : i32
    %37 = tpu.memref_slice %arg17[%c3_i32_29, %c128_i32_30] : memref<32x256xf32, #tpu.memory_space<vmem>> -> memref<1x128xf32, #tpu.memory_space<vmem>>
    %38 = tpu.memref_slice %arg18[%c0_i32_27] : memref<2x!tpu.dma_semaphore, #tpu.memory_space<semaphore_mem>> -> memref<1x!tpu.dma_semaphore, #tpu.memory_space<semaphore_mem>>
    %39 = tpu.memref_squeeze %38 : memref<1x!tpu.dma_semaphore, #tpu.memory_space<semaphore_mem>> -> memref<!tpu.dma_semaphore, #tpu.memory_space<semaphore_mem>>
    tpu.enqueue_dma source(%36 : memref<1x128xf32, #tpu.memory_space<any>>) target(%37 : memref<1x128xf32, #tpu.memory_space<vmem>>) target_semaphore(%39 : memref<!tpu.dma_semaphore, #tpu.memory_space<semaphore_mem>>)
    %c4 = arith.constant 4 : index
    %40 = memref.load %arg7[%c4] : memref<8xi32, #tpu.memory_space<smem>>
    %c4_31 = arith.constant 4 : index
    %41 = memref.load %arg8[%c4_31] : memref<8xi32, #tpu.memory_space<smem>>
    %c0_i32_32 = arith.constant 0 : i32
    %c0_i32_33 = arith.constant 0 : i32
    %42 = tpu.memref_slice %arg0[%40, %c0_i32_33] : memref<32x128xf32, #tpu.memory_space<any>> -> memref<1x128xf32, #tpu.memory_space<any>>
    %c4_i32 = arith.constant 4 : i32
    %c0_i32_34 = arith.constant 0 : i32
    %43 = tpu.memref_slice %arg17[%c4_i32, %c0_i32_34] : memref<32x256xf32, #tpu.memory_space<vmem>> -> memref<1x128xf32, #tpu.memory_space<vmem>>
    %44 = tpu.memref_slice %arg18[%c0_i32_32] : memref<2x!tpu.dma_semaphore, #tpu.memory_space<semaphore_mem>> -> memref<1x!tpu.dma_semaphore, #tpu.memory_space<semaphore_mem>>
    %45 = tpu.memref_squeeze %44 : memref<1x!tpu.dma_semaphore, #tpu.memory_space<semaphore_mem>> -> memref<!tpu.dma_semaphore, #tpu.memory_space<semaphore_mem>>
    tpu.enqueue_dma source(%42 : memref<1x128xf32, #tpu.memory_space<any>>) target(%43 : memref<1x128xf32, #tpu.memory_space<vmem>>) target_semaphore(%45 : memref<!tpu.dma_semaphore, #tpu.memory_space<semaphore_mem>>)
    %c0_i32_35 = arith.constant 0 : i32
    %c0_i32_36 = arith.constant 0 : i32
    %46 = tpu.memref_slice %arg0[%41, %c0_i32_36] : memref<32x128xf32, #tpu.memory_space<any>> -> memref<1x128xf32, #tpu.memory_space<any>>
    %c4_i32_37 = arith.constant 4 : i32
    %c128_i32_38 = arith.constant 128 : i32
    %47 = tpu.memref_slice %arg17[%c4_i32_37, %c128_i32_38] : memref<32x256xf32, #tpu.memory_space<vmem>> -> memref<1x128xf32, #tpu.memory_space<vmem>>
    %48 = tpu.memref_slice %arg18[%c0_i32_35] : memref<2x!tpu.dma_semaphore, #tpu.memory_space<semaphore_mem>> -> memref<1x!tpu.dma_semaphore, #tpu.memory_space<semaphore_mem>>
    %49 = tpu.memref_squeeze %48 : memref<1x!tpu.dma_semaphore, #tpu.memory_space<semaphore_mem>> -> memref<!tpu.dma_semaphore, #tpu.memory_space<semaphore_mem>>
    tpu.enqueue_dma source(%46 : memref<1x128xf32, #tpu.memory_space<any>>) target(%47 : memref<1x128xf32, #tpu.memory_space<vmem>>) target_semaphore(%49 : memref<!tpu.dma_semaphore, #tpu.memory_space<semaphore_mem>>)
    %c5 = arith.constant 5 : index
    %50 = memref.load %arg7[%c5] : memref<8xi32, #tpu.memory_space<smem>>
    %c5_39 = arith.constant 5 : index
    %51 = memref.load %arg8[%c5_39] : memref<8xi32, #tpu.memory_space<smem>>
    %c0_i32_40 = arith.constant 0 : i32
    %c0_i32_41 = arith.constant 0 : i32
    %52 = tpu.memref_slice %arg0[%50, %c0_i32_41] : memref<32x128xf32, #tpu.memory_space<any>> -> memref<1x128xf32, #tpu.memory_space<any>>
    %c5_i32 = arith.constant 5 : i32
    %c0_i32_42 = arith.constant 0 : i32
    %53 = tpu.memref_slice %arg17[%c5_i32, %c0_i32_42] : memref<32x256xf32, #tpu.memory_space<vmem>> -> memref<1x128xf32, #tpu.memory_space<vmem>>
    %54 = tpu.memref_slice %arg18[%c0_i32_40] : memref<2x!tpu.dma_semaphore, #tpu.memory_space<semaphore_mem>> -> memref<1x!tpu.dma_semaphore, #tpu.memory_space<semaphore_mem>>
    %55 = tpu.memref_squeeze %54 : memref<1x!tpu.dma_semaphore, #tpu.memory_space<semaphore_mem>> -> memref<!tpu.dma_semaphore, #tpu.memory_space<semaphore_mem>>
    tpu.enqueue_dma source(%52 : memref<1x128xf32, #tpu.memory_space<any>>) target(%53 : memref<1x128xf32, #tpu.memory_space<vmem>>) target_semaphore(%55 : memref<!tpu.dma_semaphore, #tpu.memory_space<semaphore_mem>>)
    %c0_i32_43 = arith.constant 0 : i32
    %c0_i32_44 = arith.constant 0 : i32
    %56 = tpu.memref_slice %arg0[%51, %c0_i32_44] : memref<32x128xf32, #tpu.memory_space<any>> -> memref<1x128xf32, #tpu.memory_space<any>>
    %c5_i32_45 = arith.constant 5 : i32
    %c128_i32_46 = arith.constant 128 : i32
    %57 = tpu.memref_slice %arg17[%c5_i32_45, %c128_i32_46] : memref<32x256xf32, #tpu.memory_space<vmem>> -> memref<1x128xf32, #tpu.memory_space<vmem>>
    %58 = tpu.memref_slice %arg18[%c0_i32_43] : memref<2x!tpu.dma_semaphore, #tpu.memory_space<semaphore_mem>> -> memref<1x!tpu.dma_semaphore, #tpu.memory_space<semaphore_mem>>
    %59 = tpu.memref_squeeze %58 : memref<1x!tpu.dma_semaphore, #tpu.memory_space<semaphore_mem>> -> memref<!tpu.dma_semaphore, #tpu.memory_space<semaphore_mem>>
    tpu.enqueue_dma source(%56 : memref<1x128xf32, #tpu.memory_space<any>>) target(%57 : memref<1x128xf32, #tpu.memory_space<vmem>>) target_semaphore(%59 : memref<!tpu.dma_semaphore, #tpu.memory_space<semaphore_mem>>)
    %c6 = arith.constant 6 : index
    %60 = memref.load %arg7[%c6] : memref<8xi32, #tpu.memory_space<smem>>
    %c6_47 = arith.constant 6 : index
    %61 = memref.load %arg8[%c6_47] : memref<8xi32, #tpu.memory_space<smem>>
    %c0_i32_48 = arith.constant 0 : i32
    %c0_i32_49 = arith.constant 0 : i32
    %62 = tpu.memref_slice %arg0[%60, %c0_i32_49] : memref<32x128xf32, #tpu.memory_space<any>> -> memref<1x128xf32, #tpu.memory_space<any>>
    %c6_i32 = arith.constant 6 : i32
    %c0_i32_50 = arith.constant 0 : i32
    %63 = tpu.memref_slice %arg17[%c6_i32, %c0_i32_50] : memref<32x256xf32, #tpu.memory_space<vmem>> -> memref<1x128xf32, #tpu.memory_space<vmem>>
    %64 = tpu.memref_slice %arg18[%c0_i32_48] : memref<2x!tpu.dma_semaphore, #tpu.memory_space<semaphore_mem>> -> memref<1x!tpu.dma_semaphore, #tpu.memory_space<semaphore_mem>>
    %65 = tpu.memref_squeeze %64 : memref<1x!tpu.dma_semaphore, #tpu.memory_space<semaphore_mem>> -> memref<!tpu.dma_semaphore, #tpu.memory_space<semaphore_mem>>
    tpu.enqueue_dma source(%62 : memref<1x128xf32, #tpu.memory_space<any>>) target(%63 : memref<1x128xf32, #tpu.memory_space<vmem>>) target_semaphore(%65 : memref<!tpu.dma_semaphore, #tpu.memory_space<semaphore_mem>>)
    %c0_i32_51 = arith.constant 0 : i32
    %c0_i32_52 = arith.constant 0 : i32
    %66 = tpu.memref_slice %arg0[%61, %c0_i32_52] : memref<32x128xf32, #tpu.memory_space<any>> -> memref<1x128xf32, #tpu.memory_space<any>>
    %c6_i32_53 = arith.constant 6 : i32
    %c128_i32_54 = arith.constant 128 : i32
    %67 = tpu.memref_slice %arg17[%c6_i32_53, %c128_i32_54] : memref<32x256xf32, #tpu.memory_space<vmem>> -> memref<1x128xf32, #tpu.memory_space<vmem>>
    %68 = tpu.memref_slice %arg18[%c0_i32_51] : memref<2x!tpu.dma_semaphore, #tpu.memory_space<semaphore_mem>> -> memref<1x!tpu.dma_semaphore, #tpu.memory_space<semaphore_mem>>
    %69 = tpu.memref_squeeze %68 : memref<1x!tpu.dma_semaphore, #tpu.memory_space<semaphore_mem>> -> memref<!tpu.dma_semaphore, #tpu.memory_space<semaphore_mem>>
    tpu.enqueue_dma source(%66 : memref<1x128xf32, #tpu.memory_space<any>>) target(%67 : memref<1x128xf32, #tpu.memory_space<vmem>>) target_semaphore(%69 : memref<!tpu.dma_semaphore, #tpu.memory_space<semaphore_mem>>)
    %c7 = arith.constant 7 : index
    %70 = memref.load %arg7[%c7] : memref<8xi32, #tpu.memory_space<smem>>
    %c7_55 = arith.constant 7 : index
    %71 = memref.load %arg8[%c7_55] : memref<8xi32, #tpu.memory_space<smem>>
    %c0_i32_56 = arith.constant 0 : i32
    %c0_i32_57 = arith.constant 0 : i32
    %72 = tpu.memref_slice %arg0[%70, %c0_i32_57] : memref<32x128xf32, #tpu.memory_space<any>> -> memref<1x128xf32, #tpu.memory_space<any>>
    %c7_i32 = arith.constant 7 : i32
    %c0_i32_58 = arith.constant 0 : i32
    %73 = tpu.memref_slice %arg17[%c7_i32, %c0_i32_58] : memref<32x256xf32, #tpu.memory_space<vmem>> -> memref<1x128xf32, #tpu.memory_space<vmem>>
    %74 = tpu.memref_slice %arg18[%c0_i32_56] : memref<2x!tpu.dma_semaphore, #tpu.memory_space<semaphore_mem>> -> memref<1x!tpu.dma_semaphore, #tpu.memory_space<semaphore_mem>>
    %75 = tpu.memref_squeeze %74 : memref<1x!tpu.dma_semaphore, #tpu.memory_space<semaphore_mem>> -> memref<!tpu.dma_semaphore, #tpu.memory_space<semaphore_mem>>
    tpu.enqueue_dma source(%72 : memref<1x128xf32, #tpu.memory_space<any>>) target(%73 : memref<1x128xf32, #tpu.memory_space<vmem>>) target_semaphore(%75 : memref<!tpu.dma_semaphore, #tpu.memory_space<semaphore_mem>>)
    %c0_i32_59 = arith.constant 0 : i32
    %c0_i32_60 = arith.constant 0 : i32
    %76 = tpu.memref_slice %arg0[%71, %c0_i32_60] : memref<32x128xf32, #tpu.memory_space<any>> -> memref<1x128xf32, #tpu.memory_space<any>>
    %c7_i32_61 = arith.constant 7 : i32
    %c128_i32_62 = arith.constant 128 : i32
    %77 = tpu.memref_slice %arg17[%c7_i32_61, %c128_i32_62] : memref<32x256xf32, #tpu.memory_space<vmem>> -> memref<1x128xf32, #tpu.memory_space<vmem>>
    %78 = tpu.memref_slice %arg18[%c0_i32_59] : memref<2x!tpu.dma_semaphore, #tpu.memory_space<semaphore_mem>> -> memref<1x!tpu.dma_semaphore, #tpu.memory_space<semaphore_mem>>
    %79 = tpu.memref_squeeze %78 : memref<1x!tpu.dma_semaphore, #tpu.memory_space<semaphore_mem>> -> memref<!tpu.dma_semaphore, #tpu.memory_space<semaphore_mem>>
    tpu.enqueue_dma source(%76 : memref<1x128xf32, #tpu.memory_space<any>>) target(%77 : memref<1x128xf32, #tpu.memory_space<vmem>>) target_semaphore(%79 : memref<!tpu.dma_semaphore, #tpu.memory_space<semaphore_mem>>)
    %c0_63 = arith.constant 0 : index
    %80 = memref.load %arg9[%c0_63] : memref<8xi32, #tpu.memory_space<smem>>
    %c0_64 = arith.constant 0 : index
    %81 = memref.load %arg10[%c0_64] : memref<8xi32, #tpu.memory_space<smem>>
    %c0_i32_65 = arith.constant 0 : i32
    %c0_i32_66 = arith.constant 0 : i32
    %82 = tpu.memref_slice %arg1[%80, %c0_i32_66] : memref<32x128xf32, #tpu.memory_space<any>> -> memref<1x128xf32, #tpu.memory_space<any>>
    %c8_i32 = arith.constant 8 : i32
    %c0_i32_67 = arith.constant 0 : i32
    %83 = tpu.memref_slice %arg17[%c8_i32, %c0_i32_67] : memref<32x256xf32, #tpu.memory_space<vmem>> -> memref<1x128xf32, #tpu.memory_space<vmem>>
    %84 = tpu.memref_slice %arg18[%c0_i32_65] : memref<2x!tpu.dma_semaphore, #tpu.memory_space<semaphore_mem>> -> memref<1x!tpu.dma_semaphore, #tpu.memory_space<semaphore_mem>>
    %85 = tpu.memref_squeeze %84 : memref<1x!tpu.dma_semaphore, #tpu.memory_space<semaphore_mem>> -> memref<!tpu.dma_semaphore, #tpu.memory_space<semaphore_mem>>
    tpu.enqueue_dma source(%82 : memref<1x128xf32, #tpu.memory_space<any>>) target(%83 : memref<1x128xf32, #tpu.memory_space<vmem>>) target_semaphore(%85 : memref<!tpu.dma_semaphore, #tpu.memory_space<semaphore_mem>>)
    %c0_i32_68 = arith.constant 0 : i32
    %c0_i32_69 = arith.constant 0 : i32
    %86 = tpu.memref_slice %arg1[%81, %c0_i32_69] : memref<32x128xf32, #tpu.memory_space<any>> -> memref<1x128xf32, #tpu.memory_space<any>>
    %c8_i32_70 = arith.constant 8 : i32
    %c128_i32_71 = arith.constant 128 : i32
    %87 = tpu.memref_slice %arg17[%c8_i32_70, %c128_i32_71] : memref<32x256xf32, #tpu.memory_space<vmem>> -> memref<1x128xf32, #tpu.memory_space<vmem>>
    %88 = tpu.memref_slice %arg18[%c0_i32_68] : memref<2x!tpu.dma_semaphore, #tpu.memory_space<semaphore_mem>> -> memref<1x!tpu.dma_semaphore, #tpu.memory_space<semaphore_mem>>
    %89 = tpu.memref_squeeze %88 : memref<1x!tpu.dma_semaphore, #tpu.memory_space<semaphore_mem>> -> memref<!tpu.dma_semaphore, #tpu.memory_space<semaphore_mem>>
    tpu.enqueue_dma source(%86 : memref<1x128xf32, #tpu.memory_space<any>>) target(%87 : memref<1x128xf32, #tpu.memory_space<vmem>>) target_semaphore(%89 : memref<!tpu.dma_semaphore, #tpu.memory_space<semaphore_mem>>)
    %c1_72 = arith.constant 1 : index
    %90 = memref.load %arg9[%c1_72] : memref<8xi32, #tpu.memory_space<smem>>
    %c1_73 = arith.constant 1 : index
    %91 = memref.load %arg10[%c1_73] : memref<8xi32, #tpu.memory_space<smem>>
    %c0_i32_74 = arith.constant 0 : i32
    %c0_i32_75 = arith.constant 0 : i32
    %92 = tpu.memref_slice %arg1[%90, %c0_i32_75] : memref<32x128xf32, #tpu.memory_space<any>> -> memref<1x128xf32, #tpu.memory_space<any>>
    %c9_i32 = arith.constant 9 : i32
    %c0_i32_76 = arith.constant 0 : i32
    %93 = tpu.memref_slice %arg17[%c9_i32, %c0_i32_76] : memref<32x256xf32, #tpu.memory_space<vmem>> -> memref<1x128xf32, #tpu.memory_space<vmem>>
    %94 = tpu.memref_slice %arg18[%c0_i32_74] : memref<2x!tpu.dma_semaphore, #tpu.memory_space<semaphore_mem>> -> memref<1x!tpu.dma_semaphore, #tpu.memory_space<semaphore_mem>>
    %95 = tpu.memref_squeeze %94 : memref<1x!tpu.dma_semaphore, #tpu.memory_space<semaphore_mem>> -> memref<!tpu.dma_semaphore, #tpu.memory_space<semaphore_mem>>
    tpu.enqueue_dma source(%92 : memref<1x128xf32, #tpu.memory_space<any>>) target(%93 : memref<1x128xf32, #tpu.memory_space<vmem>>) target_semaphore(%95 : memref<!tpu.dma_semaphore, #tpu.memory_space<semaphore_mem>>)
    %c0_i32_77 = arith.constant 0 : i32
    %c0_i32_78 = arith.constant 0 : i32
    %96 = tpu.memref_slice %arg1[%91, %c0_i32_78] : memref<32x128xf32, #tpu.memory_space<any>> -> memref<1x128xf32, #tpu.memory_space<any>>
    %c9_i32_79 = arith.constant 9 : i32
    %c128_i32_80 = arith.constant 128 : i32
    %97 = tpu.memref_slice %arg17[%c9_i32_79, %c128_i32_80] : memref<32x256xf32, #tpu.memory_space<vmem>> -> memref<1x128xf32, #tpu.memory_space<vmem>>
    %98 = tpu.memref_slice %arg18[%c0_i32_77] : memref<2x!tpu.dma_semaphore, #tpu.memory_space<semaphore_mem>> -> memref<1x!tpu.dma_semaphore, #tpu.memory_space<semaphore_mem>>
    %99 = tpu.memref_squeeze %98 : memref<1x!tpu.dma_semaphore, #tpu.memory_space<semaphore_mem>> -> memref<!tpu.dma_semaphore, #tpu.memory_space<semaphore_mem>>
    tpu.enqueue_dma source(%96 : memref<1x128xf32, #tpu.memory_space<any>>) target(%97 : memref<1x128xf32, #tpu.memory_space<vmem>>) target_semaphore(%99 : memref<!tpu.dma_semaphore, #tpu.memory_space<semaphore_mem>>)
    %c2_81 = arith.constant 2 : index
    %100 = memref.load %arg9[%c2_81] : memref<8xi32, #tpu.memory_space<smem>>
    %c2_82 = arith.constant 2 : index
    %101 = memref.load %arg10[%c2_82] : memref<8xi32, #tpu.memory_space<smem>>
    %c0_i32_83 = arith.constant 0 : i32
    %c0_i32_84 = arith.constant 0 : i32
    %102 = tpu.memref_slice %arg1[%100, %c0_i32_84] : memref<32x128xf32, #tpu.memory_space<any>> -> memref<1x128xf32, #tpu.memory_space<any>>
    %c10_i32 = arith.constant 10 : i32
    %c0_i32_85 = arith.constant 0 : i32
    %103 = tpu.memref_slice %arg17[%c10_i32, %c0_i32_85] : memref<32x256xf32, #tpu.memory_space<vmem>> -> memref<1x128xf32, #tpu.memory_space<vmem>>
    %104 = tpu.memref_slice %arg18[%c0_i32_83] : memref<2x!tpu.dma_semaphore, #tpu.memory_space<semaphore_mem>> -> memref<1x!tpu.dma_semaphore, #tpu.memory_space<semaphore_mem>>
    %105 = tpu.memref_squeeze %104 : memref<1x!tpu.dma_semaphore, #tpu.memory_space<semaphore_mem>> -> memref<!tpu.dma_semaphore, #tpu.memory_space<semaphore_mem>>
    tpu.enqueue_dma source(%102 : memref<1x128xf32, #tpu.memory_space<any>>) target(%103 : memref<1x128xf32, #tpu.memory_space<vmem>>) target_semaphore(%105 : memref<!tpu.dma_semaphore, #tpu.memory_space<semaphore_mem>>)
    %c0_i32_86 = arith.constant 0 : i32
    %c0_i32_87 = arith.constant 0 : i32
    %106 = tpu.memref_slice %arg1[%101, %c0_i32_87] : memref<32x128xf32, #tpu.memory_space<any>> -> memref<1x128xf32, #tpu.memory_space<any>>
    %c10_i32_88 = arith.constant 10 : i32
    %c128_i32_89 = arith.constant 128 : i32
    %107 = tpu.memref_slice %arg17[%c10_i32_88, %c128_i32_89] : memref<32x256xf32, #tpu.memory_space<vmem>> -> memref<1x128xf32, #tpu.memory_space<vmem>>
    %108 = tpu.memref_slice %arg18[%c0_i32_86] : memref<2x!tpu.dma_semaphore, #tpu.memory_space<semaphore_mem>> -> memref<1x!tpu.dma_semaphore, #tpu.memory_space<semaphore_mem>>
    %109 = tpu.memref_squeeze %108 : memref<1x!tpu.dma_semaphore, #tpu.memory_space<semaphore_mem>> -> memref<!tpu.dma_semaphore, #tpu.memory_space<semaphore_mem>>
    tpu.enqueue_dma source(%106 : memref<1x128xf32, #tpu.memory_space<any>>) target(%107 : memref<1x128xf32, #tpu.memory_space<vmem>>) target_semaphore(%109 : memref<!tpu.dma_semaphore, #tpu.memory_space<semaphore_mem>>)
    %c3_90 = arith.constant 3 : index
    %110 = memref.load %arg9[%c3_90] : memref<8xi32, #tpu.memory_space<smem>>
    %c3_91 = arith.constant 3 : index
    %111 = memref.load %arg10[%c3_91] : memref<8xi32, #tpu.memory_space<smem>>
    %c0_i32_92 = arith.constant 0 : i32
    %c0_i32_93 = arith.constant 0 : i32
    %112 = tpu.memref_slice %arg1[%110, %c0_i32_93] : memref<32x128xf32, #tpu.memory_space<any>> -> memref<1x128xf32, #tpu.memory_space<any>>
    %c11_i32 = arith.constant 11 : i32
    %c0_i32_94 = arith.constant 0 : i32
    %113 = tpu.memref_slice %arg17[%c11_i32, %c0_i32_94] : memref<32x256xf32, #tpu.memory_space<vmem>> -> memref<1x128xf32, #tpu.memory_space<vmem>>
    %114 = tpu.memref_slice %arg18[%c0_i32_92] : memref<2x!tpu.dma_semaphore, #tpu.memory_space<semaphore_mem>> -> memref<1x!tpu.dma_semaphore, #tpu.memory_space<semaphore_mem>>
    %115 = tpu.memref_squeeze %114 : memref<1x!tpu.dma_semaphore, #tpu.memory_space<semaphore_mem>> -> memref<!tpu.dma_semaphore, #tpu.memory_space<semaphore_mem>>
    tpu.enqueue_dma source(%112 : memref<1x128xf32, #tpu.memory_space<any>>) target(%113 : memref<1x128xf32, #tpu.memory_space<vmem>>) target_semaphore(%115 : memref<!tpu.dma_semaphore, #tpu.memory_space<semaphore_mem>>)
    %c0_i32_95 = arith.constant 0 : i32
    %c0_i32_96 = arith.constant 0 : i32
    %116 = tpu.memref_slice %arg1[%111, %c0_i32_96] : memref<32x128xf32, #tpu.memory_space<any>> -> memref<1x128xf32, #tpu.memory_space<any>>
    %c11_i32_97 = arith.constant 11 : i32
    %c128_i32_98 = arith.constant 128 : i32
    %117 = tpu.memref_slice %arg17[%c11_i32_97, %c128_i32_98] : memref<32x256xf32, #tpu.memory_space<vmem>> -> memref<1x128xf32, #tpu.memory_space<vmem>>
    %118 = tpu.memref_slice %arg18[%c0_i32_95] : memref<2x!tpu.dma_semaphore, #tpu.memory_space<semaphore_mem>> -> memref<1x!tpu.dma_semaphore, #tpu.memory_space<semaphore_mem>>
    %119 = tpu.memref_squeeze %118 : memref<1x!tpu.dma_semaphore, #tpu.memory_space<semaphore_mem>> -> memref<!tpu.dma_semaphore, #tpu.memory_space<semaphore_mem>>
    tpu.enqueue_dma source(%116 : memref<1x128xf32, #tpu.memory_space<any>>) target(%117 : memref<1x128xf32, #tpu.memory_space<vmem>>) target_semaphore(%119 : memref<!tpu.dma_semaphore, #tpu.memory_space<semaphore_mem>>)
    %c4_99 = arith.constant 4 : index
    %120 = memref.load %arg9[%c4_99] : memref<8xi32, #tpu.memory_space<smem>>
    %c4_100 = arith.constant 4 : index
    %121 = memref.load %arg10[%c4_100] : memref<8xi32, #tpu.memory_space<smem>>
    %c0_i32_101 = arith.constant 0 : i32
    %c0_i32_102 = arith.constant 0 : i32
    %122 = tpu.memref_slice %arg1[%120, %c0_i32_102] : memref<32x128xf32, #tpu.memory_space<any>> -> memref<1x128xf32, #tpu.memory_space<any>>
    %c12_i32 = arith.constant 12 : i32
    %c0_i32_103 = arith.constant 0 : i32
    %123 = tpu.memref_slice %arg17[%c12_i32, %c0_i32_103] : memref<32x256xf32, #tpu.memory_space<vmem>> -> memref<1x128xf32, #tpu.memory_space<vmem>>
    %124 = tpu.memref_slice %arg18[%c0_i32_101] : memref<2x!tpu.dma_semaphore, #tpu.memory_space<semaphore_mem>> -> memref<1x!tpu.dma_semaphore, #tpu.memory_space<semaphore_mem>>
    %125 = tpu.memref_squeeze %124 : memref<1x!tpu.dma_semaphore, #tpu.memory_space<semaphore_mem>> -> memref<!tpu.dma_semaphore, #tpu.memory_space<semaphore_mem>>
    tpu.enqueue_dma source(%122 : memref<1x128xf32, #tpu.memory_space<any>>) target(%123 : memref<1x128xf32, #tpu.memory_space<vmem>>) target_semaphore(%125 : memref<!tpu.dma_semaphore, #tpu.memory_space<semaphore_mem>>)
    %c0_i32_104 = arith.constant 0 : i32
    %c0_i32_105 = arith.constant 0 : i32
    %126 = tpu.memref_slice %arg1[%121, %c0_i32_105] : memref<32x128xf32, #tpu.memory_space<any>> -> memref<1x128xf32, #tpu.memory_space<any>>
    %c12_i32_106 = arith.constant 12 : i32
    %c128_i32_107 = arith.constant 128 : i32
    %127 = tpu.memref_slice %arg17[%c12_i32_106, %c128_i32_107] : memref<32x256xf32, #tpu.memory_space<vmem>> -> memref<1x128xf32, #tpu.memory_space<vmem>>
    %128 = tpu.memref_slice %arg18[%c0_i32_104] : memref<2x!tpu.dma_semaphore, #tpu.memory_space<semaphore_mem>> -> memref<1x!tpu.dma_semaphore, #tpu.memory_space<semaphore_mem>>
    %129 = tpu.memref_squeeze %128 : memref<1x!tpu.dma_semaphore, #tpu.memory_space<semaphore_mem>> -> memref<!tpu.dma_semaphore, #tpu.memory_space<semaphore_mem>>
    tpu.enqueue_dma source(%126 : memref<1x128xf32, #tpu.memory_space<any>>) target(%127 : memref<1x128xf32, #tpu.memory_space<vmem>>) target_semaphore(%129 : memref<!tpu.dma_semaphore, #tpu.memory_space<semaphore_mem>>)
    %c5_108 = arith.constant 5 : index
    %130 = memref.load %arg9[%c5_108] : memref<8xi32, #tpu.memory_space<smem>>
    %c5_109 = arith.constant 5 : index
    %131 = memref.load %arg10[%c5_109] : memref<8xi32, #tpu.memory_space<smem>>
    %c0_i32_110 = arith.constant 0 : i32
    %c0_i32_111 = arith.constant 0 : i32
    %132 = tpu.memref_slice %arg1[%130, %c0_i32_111] : memref<32x128xf32, #tpu.memory_space<any>> -> memref<1x128xf32, #tpu.memory_space<any>>
    %c13_i32 = arith.constant 13 : i32
    %c0_i32_112 = arith.constant 0 : i32
    %133 = tpu.memref_slice %arg17[%c13_i32, %c0_i32_112] : memref<32x256xf32, #tpu.memory_space<vmem>> -> memref<1x128xf32, #tpu.memory_space<vmem>>
    %134 = tpu.memref_slice %arg18[%c0_i32_110] : memref<2x!tpu.dma_semaphore, #tpu.memory_space<semaphore_mem>> -> memref<1x!tpu.dma_semaphore, #tpu.memory_space<semaphore_mem>>
    %135 = tpu.memref_squeeze %134 : memref<1x!tpu.dma_semaphore, #tpu.memory_space<semaphore_mem>> -> memref<!tpu.dma_semaphore, #tpu.memory_space<semaphore_mem>>
    tpu.enqueue_dma source(%132 : memref<1x128xf32, #tpu.memory_space<any>>) target(%133 : memref<1x128xf32, #tpu.memory_space<vmem>>) target_semaphore(%135 : memref<!tpu.dma_semaphore, #tpu.memory_space<semaphore_mem>>)
    %c0_i32_113 = arith.constant 0 : i32
    %c0_i32_114 = arith.constant 0 : i32
    %136 = tpu.memref_slice %arg1[%131, %c0_i32_114] : memref<32x128xf32, #tpu.memory_space<any>> -> memref<1x128xf32, #tpu.memory_space<any>>
    %c13_i32_115 = arith.constant 13 : i32
    %c128_i32_116 = arith.constant 128 : i32
    %137 = tpu.memref_slice %arg17[%c13_i32_115, %c128_i32_116] : memref<32x256xf32, #tpu.memory_space<vmem>> -> memref<1x128xf32, #tpu.memory_space<vmem>>
    %138 = tpu.memref_slice %arg18[%c0_i32_113] : memref<2x!tpu.dma_semaphore, #tpu.memory_space<semaphore_mem>> -> memref<1x!tpu.dma_semaphore, #tpu.memory_space<semaphore_mem>>
    %139 = tpu.memref_squeeze %138 : memref<1x!tpu.dma_semaphore, #tpu.memory_space<semaphore_mem>> -> memref<!tpu.dma_semaphore, #tpu.memory_space<semaphore_mem>>
    tpu.enqueue_dma source(%136 : memref<1x128xf32, #tpu.memory_space<any>>) target(%137 : memref<1x128xf32, #tpu.memory_space<vmem>>) target_semaphore(%139 : memref<!tpu.dma_semaphore, #tpu.memory_space<semaphore_mem>>)
    %c6_117 = arith.constant 6 : index
    %140 = memref.load %arg9[%c6_117] : memref<8xi32, #tpu.memory_space<smem>>
    %c6_118 = arith.constant 6 : index
    %141 = memref.load %arg10[%c6_118] : memref<8xi32, #tpu.memory_space<smem>>
    %c0_i32_119 = arith.constant 0 : i32
    %c0_i32_120 = arith.constant 0 : i32
    %142 = tpu.memref_slice %arg1[%140, %c0_i32_120] : memref<32x128xf32, #tpu.memory_space<any>> -> memref<1x128xf32, #tpu.memory_space<any>>
    %c14_i32 = arith.constant 14 : i32
    %c0_i32_121 = arith.constant 0 : i32
    %143 = tpu.memref_slice %arg17[%c14_i32, %c0_i32_121] : memref<32x256xf32, #tpu.memory_space<vmem>> -> memref<1x128xf32, #tpu.memory_space<vmem>>
    %144 = tpu.memref_slice %arg18[%c0_i32_119] : memref<2x!tpu.dma_semaphore, #tpu.memory_space<semaphore_mem>> -> memref<1x!tpu.dma_semaphore, #tpu.memory_space<semaphore_mem>>
    %145 = tpu.memref_squeeze %144 : memref<1x!tpu.dma_semaphore, #tpu.memory_space<semaphore_mem>> -> memref<!tpu.dma_semaphore, #tpu.memory_space<semaphore_mem>>
    tpu.enqueue_dma source(%142 : memref<1x128xf32, #tpu.memory_space<any>>) target(%143 : memref<1x128xf32, #tpu.memory_space<vmem>>) target_semaphore(%145 : memref<!tpu.dma_semaphore, #tpu.memory_space<semaphore_mem>>)
    %c0_i32_122 = arith.constant 0 : i32
    %c0_i32_123 = arith.constant 0 : i32
    %146 = tpu.memref_slice %arg1[%141, %c0_i32_123] : memref<32x128xf32, #tpu.memory_space<any>> -> memref<1x128xf32, #tpu.memory_space<any>>
    %c14_i32_124 = arith.constant 14 : i32
    %c128_i32_125 = arith.constant 128 : i32
    %147 = tpu.memref_slice %arg17[%c14_i32_124, %c128_i32_125] : memref<32x256xf32, #tpu.memory_space<vmem>> -> memref<1x128xf32, #tpu.memory_space<vmem>>
    %148 = tpu.memref_slice %arg18[%c0_i32_122] : memref<2x!tpu.dma_semaphore, #tpu.memory_space<semaphore_mem>> -> memref<1x!tpu.dma_semaphore, #tpu.memory_space<semaphore_mem>>
    %149 = tpu.memref_squeeze %148 : memref<1x!tpu.dma_semaphore, #tpu.memory_space<semaphore_mem>> -> memref<!tpu.dma_semaphore, #tpu.memory_space<semaphore_mem>>
    tpu.enqueue_dma source(%146 : memref<1x128xf32, #tpu.memory_space<any>>) target(%147 : memref<1x128xf32, #tpu.memory_space<vmem>>) target_semaphore(%149 : memref<!tpu.dma_semaphore, #tpu.memory_space<semaphore_mem>>)
    %c7_126 = arith.constant 7 : index
    %150 = memref.load %arg9[%c7_126] : memref<8xi32, #tpu.memory_space<smem>>
    %c7_127 = arith.constant 7 : index
    %151 = memref.load %arg10[%c7_127] : memref<8xi32, #tpu.memory_space<smem>>
    %c0_i32_128 = arith.constant 0 : i32
    %c0_i32_129 = arith.constant 0 : i32
    %152 = tpu.memref_slice %arg1[%150, %c0_i32_129] : memref<32x128xf32, #tpu.memory_space<any>> -> memref<1x128xf32, #tpu.memory_space<any>>
    %c15_i32 = arith.constant 15 : i32
    %c0_i32_130 = arith.constant 0 : i32
    %153 = tpu.memref_slice %arg17[%c15_i32, %c0_i32_130] : memref<32x256xf32, #tpu.memory_space<vmem>> -> memref<1x128xf32, #tpu.memory_space<vmem>>
    %154 = tpu.memref_slice %arg18[%c0_i32_128] : memref<2x!tpu.dma_semaphore, #tpu.memory_space<semaphore_mem>> -> memref<1x!tpu.dma_semaphore, #tpu.memory_space<semaphore_mem>>
    %155 = tpu.memref_squeeze %154 : memref<1x!tpu.dma_semaphore, #tpu.memory_space<semaphore_mem>> -> memref<!tpu.dma_semaphore, #tpu.memory_space<semaphore_mem>>
    tpu.enqueue_dma source(%152 : memref<1x128xf32, #tpu.memory_space<any>>) target(%153 : memref<1x128xf32, #tpu.memory_space<vmem>>) target_semaphore(%155 : memref<!tpu.dma_semaphore, #tpu.memory_space<semaphore_mem>>)
    %c0_i32_131 = arith.constant 0 : i32
    %c0_i32_132 = arith.constant 0 : i32
    %156 = tpu.memref_slice %arg1[%151, %c0_i32_132] : memref<32x128xf32, #tpu.memory_space<any>> -> memref<1x128xf32, #tpu.memory_space<any>>
    %c15_i32_133 = arith.constant 15 : i32
    %c128_i32_134 = arith.constant 128 : i32
    %157 = tpu.memref_slice %arg17[%c15_i32_133, %c128_i32_134] : memref<32x256xf32, #tpu.memory_space<vmem>> -> memref<1x128xf32, #tpu.memory_space<vmem>>
    %158 = tpu.memref_slice %arg18[%c0_i32_131] : memref<2x!tpu.dma_semaphore, #tpu.memory_space<semaphore_mem>> -> memref<1x!tpu.dma_semaphore, #tpu.memory_space<semaphore_mem>>
    %159 = tpu.memref_squeeze %158 : memref<1x!tpu.dma_semaphore, #tpu.memory_space<semaphore_mem>> -> memref<!tpu.dma_semaphore, #tpu.memory_space<semaphore_mem>>
    tpu.enqueue_dma source(%156 : memref<1x128xf32, #tpu.memory_space<any>>) target(%157 : memref<1x128xf32, #tpu.memory_space<vmem>>) target_semaphore(%159 : memref<!tpu.dma_semaphore, #tpu.memory_space<semaphore_mem>>)
    %c0_135 = arith.constant 0 : index
    %160 = memref.load %arg11[%c0_135] : memref<8xi32, #tpu.memory_space<smem>>
    %c0_136 = arith.constant 0 : index
    %161 = memref.load %arg12[%c0_136] : memref<8xi32, #tpu.memory_space<smem>>
    %c1_i32_137 = arith.constant 1 : i32
    %c0_i32_138 = arith.constant 0 : i32
    %162 = tpu.memref_slice %arg0[%160, %c0_i32_138] : memref<32x128xf32, #tpu.memory_space<any>> -> memref<1x128xf32, #tpu.memory_space<any>>
    %c16_i32 = arith.constant 16 : i32
    %c0_i32_139 = arith.constant 0 : i32
    %163 = tpu.memref_slice %arg17[%c16_i32, %c0_i32_139] : memref<32x256xf32, #tpu.memory_space<vmem>> -> memref<1x128xf32, #tpu.memory_space<vmem>>
    %164 = tpu.memref_slice %arg18[%c1_i32_137] : memref<2x!tpu.dma_semaphore, #tpu.memory_space<semaphore_mem>> -> memref<1x!tpu.dma_semaphore, #tpu.memory_space<semaphore_mem>>
    %165 = tpu.memref_squeeze %164 : memref<1x!tpu.dma_semaphore, #tpu.memory_space<semaphore_mem>> -> memref<!tpu.dma_semaphore, #tpu.memory_space<semaphore_mem>>
    tpu.enqueue_dma source(%162 : memref<1x128xf32, #tpu.memory_space<any>>) target(%163 : memref<1x128xf32, #tpu.memory_space<vmem>>) target_semaphore(%165 : memref<!tpu.dma_semaphore, #tpu.memory_space<semaphore_mem>>)
    %c1_i32_140 = arith.constant 1 : i32
    %c0_i32_141 = arith.constant 0 : i32
    %166 = tpu.memref_slice %arg0[%161, %c0_i32_141] : memref<32x128xf32, #tpu.memory_space<any>> -> memref<1x128xf32, #tpu.memory_space<any>>
    %c16_i32_142 = arith.constant 16 : i32
    %c128_i32_143 = arith.constant 128 : i32
    %167 = tpu.memref_slice %arg17[%c16_i32_142, %c128_i32_143] : memref<32x256xf32, #tpu.memory_space<vmem>> -> memref<1x128xf32, #tpu.memory_space<vmem>>
    %168 = tpu.memref_slice %arg18[%c1_i32_140] : memref<2x!tpu.dma_semaphore, #tpu.memory_space<semaphore_mem>> -> memref<1x!tpu.dma_semaphore, #tpu.memory_space<semaphore_mem>>
    %169 = tpu.memref_squeeze %168 : memref<1x!tpu.dma_semaphore, #tpu.memory_space<semaphore_mem>> -> memref<!tpu.dma_semaphore, #tpu.memory_space<semaphore_mem>>
    tpu.enqueue_dma source(%166 : memref<1x128xf32, #tpu.memory_space<any>>) target(%167 : memref<1x128xf32, #tpu.memory_space<vmem>>) target_semaphore(%169 : memref<!tpu.dma_semaphore, #tpu.memory_space<semaphore_mem>>)
    %c1_144 = arith.constant 1 : index
    %170 = memref.load %arg11[%c1_144] : memref<8xi32, #tpu.memory_space<smem>>
    %c1_145 = arith.constant 1 : index
    %171 = memref.load %arg12[%c1_145] : memref<8xi32, #tpu.memory_space<smem>>
    %c1_i32_146 = arith.constant 1 : i32
    %c0_i32_147 = arith.constant 0 : i32
    %172 = tpu.memref_slice %arg0[%170, %c0_i32_147] : memref<32x128xf32, #tpu.memory_space<any>> -> memref<1x128xf32, #tpu.memory_space<any>>
    %c17_i32 = arith.constant 17 : i32
    %c0_i32_148 = arith.constant 0 : i32
    %173 = tpu.memref_slice %arg17[%c17_i32, %c0_i32_148] : memref<32x256xf32, #tpu.memory_space<vmem>> -> memref<1x128xf32, #tpu.memory_space<vmem>>
    %174 = tpu.memref_slice %arg18[%c1_i32_146] : memref<2x!tpu.dma_semaphore, #tpu.memory_space<semaphore_mem>> -> memref<1x!tpu.dma_semaphore, #tpu.memory_space<semaphore_mem>>
    %175 = tpu.memref_squeeze %174 : memref<1x!tpu.dma_semaphore, #tpu.memory_space<semaphore_mem>> -> memref<!tpu.dma_semaphore, #tpu.memory_space<semaphore_mem>>
    tpu.enqueue_dma source(%172 : memref<1x128xf32, #tpu.memory_space<any>>) target(%173 : memref<1x128xf32, #tpu.memory_space<vmem>>) target_semaphore(%175 : memref<!tpu.dma_semaphore, #tpu.memory_space<semaphore_mem>>)
    %c1_i32_149 = arith.constant 1 : i32
    %c0_i32_150 = arith.constant 0 : i32
    %176 = tpu.memref_slice %arg0[%171, %c0_i32_150] : memref<32x128xf32, #tpu.memory_space<any>> -> memref<1x128xf32, #tpu.memory_space<any>>
    %c17_i32_151 = arith.constant 17 : i32
    %c128_i32_152 = arith.constant 128 : i32
    %177 = tpu.memref_slice %arg17[%c17_i32_151, %c128_i32_152] : memref<32x256xf32, #tpu.memory_space<vmem>> -> memref<1x128xf32, #tpu.memory_space<vmem>>
    %178 = tpu.memref_slice %arg18[%c1_i32_149] : memref<2x!tpu.dma_semaphore, #tpu.memory_space<semaphore_mem>> -> memref<1x!tpu.dma_semaphore, #tpu.memory_space<semaphore_mem>>
    %179 = tpu.memref_squeeze %178 : memref<1x!tpu.dma_semaphore, #tpu.memory_space<semaphore_mem>> -> memref<!tpu.dma_semaphore, #tpu.memory_space<semaphore_mem>>
    tpu.enqueue_dma source(%176 : memref<1x128xf32, #tpu.memory_space<any>>) target(%177 : memref<1x128xf32, #tpu.memory_space<vmem>>) target_semaphore(%179 : memref<!tpu.dma_semaphore, #tpu.memory_space<semaphore_mem>>)
    %c2_153 = arith.constant 2 : index
    %180 = memref.load %arg11[%c2_153] : memref<8xi32, #tpu.memory_space<smem>>
    %c2_154 = arith.constant 2 : index
    %181 = memref.load %arg12[%c2_154] : memref<8xi32, #tpu.memory_space<smem>>
    %c1_i32_155 = arith.constant 1 : i32
    %c0_i32_156 = arith.constant 0 : i32
    %182 = tpu.memref_slice %arg0[%180, %c0_i32_156] : memref<32x128xf32, #tpu.memory_space<any>> -> memref<1x128xf32, #tpu.memory_space<any>>
    %c18_i32 = arith.constant 18 : i32
    %c0_i32_157 = arith.constant 0 : i32
    %183 = tpu.memref_slice %arg17[%c18_i32, %c0_i32_157] : memref<32x256xf32, #tpu.memory_space<vmem>> -> memref<1x128xf32, #tpu.memory_space<vmem>>
    %184 = tpu.memref_slice %arg18[%c1_i32_155] : memref<2x!tpu.dma_semaphore, #tpu.memory_space<semaphore_mem>> -> memref<1x!tpu.dma_semaphore, #tpu.memory_space<semaphore_mem>>
    %185 = tpu.memref_squeeze %184 : memref<1x!tpu.dma_semaphore, #tpu.memory_space<semaphore_mem>> -> memref<!tpu.dma_semaphore, #tpu.memory_space<semaphore_mem>>
    tpu.enqueue_dma source(%182 : memref<1x128xf32, #tpu.memory_space<any>>) target(%183 : memref<1x128xf32, #tpu.memory_space<vmem>>) target_semaphore(%185 : memref<!tpu.dma_semaphore, #tpu.memory_space<semaphore_mem>>)
    %c1_i32_158 = arith.constant 1 : i32
    %c0_i32_159 = arith.constant 0 : i32
    %186 = tpu.memref_slice %arg0[%181, %c0_i32_159] : memref<32x128xf32, #tpu.memory_space<any>> -> memref<1x128xf32, #tpu.memory_space<any>>
    %c18_i32_160 = arith.constant 18 : i32
    %c128_i32_161 = arith.constant 128 : i32
    %187 = tpu.memref_slice %arg17[%c18_i32_160, %c128_i32_161] : memref<32x256xf32, #tpu.memory_space<vmem>> -> memref<1x128xf32, #tpu.memory_space<vmem>>
    %188 = tpu.memref_slice %arg18[%c1_i32_158] : memref<2x!tpu.dma_semaphore, #tpu.memory_space<semaphore_mem>> -> memref<1x!tpu.dma_semaphore, #tpu.memory_space<semaphore_mem>>
    %189 = tpu.memref_squeeze %188 : memref<1x!tpu.dma_semaphore, #tpu.memory_space<semaphore_mem>> -> memref<!tpu.dma_semaphore, #tpu.memory_space<semaphore_mem>>
    tpu.enqueue_dma source(%186 : memref<1x128xf32, #tpu.memory_space<any>>) target(%187 : memref<1x128xf32, #tpu.memory_space<vmem>>) target_semaphore(%189 : memref<!tpu.dma_semaphore, #tpu.memory_space<semaphore_mem>>)
    %c3_162 = arith.constant 3 : index
    %190 = memref.load %arg11[%c3_162] : memref<8xi32, #tpu.memory_space<smem>>
    %c3_163 = arith.constant 3 : index
    %191 = memref.load %arg12[%c3_163] : memref<8xi32, #tpu.memory_space<smem>>
    %c1_i32_164 = arith.constant 1 : i32
    %c0_i32_165 = arith.constant 0 : i32
    %192 = tpu.memref_slice %arg0[%190, %c0_i32_165] : memref<32x128xf32, #tpu.memory_space<any>> -> memref<1x128xf32, #tpu.memory_space<any>>
    %c19_i32 = arith.constant 19 : i32
    %c0_i32_166 = arith.constant 0 : i32
    %193 = tpu.memref_slice %arg17[%c19_i32, %c0_i32_166] : memref<32x256xf32, #tpu.memory_space<vmem>> -> memref<1x128xf32, #tpu.memory_space<vmem>>
    %194 = tpu.memref_slice %arg18[%c1_i32_164] : memref<2x!tpu.dma_semaphore, #tpu.memory_space<semaphore_mem>> -> memref<1x!tpu.dma_semaphore, #tpu.memory_space<semaphore_mem>>
    %195 = tpu.memref_squeeze %194 : memref<1x!tpu.dma_semaphore, #tpu.memory_space<semaphore_mem>> -> memref<!tpu.dma_semaphore, #tpu.memory_space<semaphore_mem>>
    tpu.enqueue_dma source(%192 : memref<1x128xf32, #tpu.memory_space<any>>) target(%193 : memref<1x128xf32, #tpu.memory_space<vmem>>) target_semaphore(%195 : memref<!tpu.dma_semaphore, #tpu.memory_space<semaphore_mem>>)
    %c1_i32_167 = arith.constant 1 : i32
    %c0_i32_168 = arith.constant 0 : i32
    %196 = tpu.memref_slice %arg0[%191, %c0_i32_168] : memref<32x128xf32, #tpu.memory_space<any>> -> memref<1x128xf32, #tpu.memory_space<any>>
    %c19_i32_169 = arith.constant 19 : i32
    %c128_i32_170 = arith.constant 128 : i32
    %197 = tpu.memref_slice %arg17[%c19_i32_169, %c128_i32_170] : memref<32x256xf32, #tpu.memory_space<vmem>> -> memref<1x128xf32, #tpu.memory_space<vmem>>
    %198 = tpu.memref_slice %arg18[%c1_i32_167] : memref<2x!tpu.dma_semaphore, #tpu.memory_space<semaphore_mem>> -> memref<1x!tpu.dma_semaphore, #tpu.memory_space<semaphore_mem>>
    %199 = tpu.memref_squeeze %198 : memref<1x!tpu.dma_semaphore, #tpu.memory_space<semaphore_mem>> -> memref<!tpu.dma_semaphore, #tpu.memory_space<semaphore_mem>>
    tpu.enqueue_dma source(%196 : memref<1x128xf32, #tpu.memory_space<any>>) target(%197 : memref<1x128xf32, #tpu.memory_space<vmem>>) target_semaphore(%199 : memref<!tpu.dma_semaphore, #tpu.memory_space<semaphore_mem>>)
    %c4_171 = arith.constant 4 : index
    %200 = memref.load %arg11[%c4_171] : memref<8xi32, #tpu.memory_space<smem>>
    %c4_172 = arith.constant 4 : index
    %201 = memref.load %arg12[%c4_172] : memref<8xi32, #tpu.memory_space<smem>>
    %c1_i32_173 = arith.constant 1 : i32
    %c0_i32_174 = arith.constant 0 : i32
    %202 = tpu.memref_slice %arg0[%200, %c0_i32_174] : memref<32x128xf32, #tpu.memory_space<any>> -> memref<1x128xf32, #tpu.memory_space<any>>
    %c20_i32 = arith.constant 20 : i32
    %c0_i32_175 = arith.constant 0 : i32
    %203 = tpu.memref_slice %arg17[%c20_i32, %c0_i32_175] : memref<32x256xf32, #tpu.memory_space<vmem>> -> memref<1x128xf32, #tpu.memory_space<vmem>>
    %204 = tpu.memref_slice %arg18[%c1_i32_173] : memref<2x!tpu.dma_semaphore, #tpu.memory_space<semaphore_mem>> -> memref<1x!tpu.dma_semaphore, #tpu.memory_space<semaphore_mem>>
    %205 = tpu.memref_squeeze %204 : memref<1x!tpu.dma_semaphore, #tpu.memory_space<semaphore_mem>> -> memref<!tpu.dma_semaphore, #tpu.memory_space<semaphore_mem>>
    tpu.enqueue_dma source(%202 : memref<1x128xf32, #tpu.memory_space<any>>) target(%203 : memref<1x128xf32, #tpu.memory_space<vmem>>) target_semaphore(%205 : memref<!tpu.dma_semaphore, #tpu.memory_space<semaphore_mem>>)
    %c1_i32_176 = arith.constant 1 : i32
    %c0_i32_177 = arith.constant 0 : i32
    %206 = tpu.memref_slice %arg0[%201, %c0_i32_177] : memref<32x128xf32, #tpu.memory_space<any>> -> memref<1x128xf32, #tpu.memory_space<any>>
    %c20_i32_178 = arith.constant 20 : i32
    %c128_i32_179 = arith.constant 128 : i32
    %207 = tpu.memref_slice %arg17[%c20_i32_178, %c128_i32_179] : memref<32x256xf32, #tpu.memory_space<vmem>> -> memref<1x128xf32, #tpu.memory_space<vmem>>
    %208 = tpu.memref_slice %arg18[%c1_i32_176] : memref<2x!tpu.dma_semaphore, #tpu.memory_space<semaphore_mem>> -> memref<1x!tpu.dma_semaphore, #tpu.memory_space<semaphore_mem>>
    %209 = tpu.memref_squeeze %208 : memref<1x!tpu.dma_semaphore, #tpu.memory_space<semaphore_mem>> -> memref<!tpu.dma_semaphore, #tpu.memory_space<semaphore_mem>>
    tpu.enqueue_dma source(%206 : memref<1x128xf32, #tpu.memory_space<any>>) target(%207 : memref<1x128xf32, #tpu.memory_space<vmem>>) target_semaphore(%209 : memref<!tpu.dma_semaphore, #tpu.memory_space<semaphore_mem>>)
    %c5_180 = arith.constant 5 : index
    %210 = memref.load %arg11[%c5_180] : memref<8xi32, #tpu.memory_space<smem>>
    %c5_181 = arith.constant 5 : index
    %211 = memref.load %arg12[%c5_181] : memref<8xi32, #tpu.memory_space<smem>>
    %c1_i32_182 = arith.constant 1 : i32
    %c0_i32_183 = arith.constant 0 : i32
    %212 = tpu.memref_slice %arg0[%210, %c0_i32_183] : memref<32x128xf32, #tpu.memory_space<any>> -> memref<1x128xf32, #tpu.memory_space<any>>
    %c21_i32 = arith.constant 21 : i32
    %c0_i32_184 = arith.constant 0 : i32
    %213 = tpu.memref_slice %arg17[%c21_i32, %c0_i32_184] : memref<32x256xf32, #tpu.memory_space<vmem>> -> memref<1x128xf32, #tpu.memory_space<vmem>>
    %214 = tpu.memref_slice %arg18[%c1_i32_182] : memref<2x!tpu.dma_semaphore, #tpu.memory_space<semaphore_mem>> -> memref<1x!tpu.dma_semaphore, #tpu.memory_space<semaphore_mem>>
    %215 = tpu.memref_squeeze %214 : memref<1x!tpu.dma_semaphore, #tpu.memory_space<semaphore_mem>> -> memref<!tpu.dma_semaphore, #tpu.memory_space<semaphore_mem>>
    tpu.enqueue_dma source(%212 : memref<1x128xf32, #tpu.memory_space<any>>) target(%213 : memref<1x128xf32, #tpu.memory_space<vmem>>) target_semaphore(%215 : memref<!tpu.dma_semaphore, #tpu.memory_space<semaphore_mem>>)
    %c1_i32_185 = arith.constant 1 : i32
    %c0_i32_186 = arith.constant 0 : i32
    %216 = tpu.memref_slice %arg0[%211, %c0_i32_186] : memref<32x128xf32, #tpu.memory_space<any>> -> memref<1x128xf32, #tpu.memory_space<any>>
    %c21_i32_187 = arith.constant 21 : i32
    %c128_i32_188 = arith.constant 128 : i32
    %217 = tpu.memref_slice %arg17[%c21_i32_187, %c128_i32_188] : memref<32x256xf32, #tpu.memory_space<vmem>> -> memref<1x128xf32, #tpu.memory_space<vmem>>
    %218 = tpu.memref_slice %arg18[%c1_i32_185] : memref<2x!tpu.dma_semaphore, #tpu.memory_space<semaphore_mem>> -> memref<1x!tpu.dma_semaphore, #tpu.memory_space<semaphore_mem>>
    %219 = tpu.memref_squeeze %218 : memref<1x!tpu.dma_semaphore, #tpu.memory_space<semaphore_mem>> -> memref<!tpu.dma_semaphore, #tpu.memory_space<semaphore_mem>>
    tpu.enqueue_dma source(%216 : memref<1x128xf32, #tpu.memory_space<any>>) target(%217 : memref<1x128xf32, #tpu.memory_space<vmem>>) target_semaphore(%219 : memref<!tpu.dma_semaphore, #tpu.memory_space<semaphore_mem>>)
    %c6_189 = arith.constant 6 : index
    %220 = memref.load %arg11[%c6_189] : memref<8xi32, #tpu.memory_space<smem>>
    %c6_190 = arith.constant 6 : index
    %221 = memref.load %arg12[%c6_190] : memref<8xi32, #tpu.memory_space<smem>>
    %c1_i32_191 = arith.constant 1 : i32
    %c0_i32_192 = arith.constant 0 : i32
    %222 = tpu.memref_slice %arg0[%220, %c0_i32_192] : memref<32x128xf32, #tpu.memory_space<any>> -> memref<1x128xf32, #tpu.memory_space<any>>
    %c22_i32 = arith.constant 22 : i32
    %c0_i32_193 = arith.constant 0 : i32
    %223 = tpu.memref_slice %arg17[%c22_i32, %c0_i32_193] : memref<32x256xf32, #tpu.memory_space<vmem>> -> memref<1x128xf32, #tpu.memory_space<vmem>>
    %224 = tpu.memref_slice %arg18[%c1_i32_191] : memref<2x!tpu.dma_semaphore, #tpu.memory_space<semaphore_mem>> -> memref<1x!tpu.dma_semaphore, #tpu.memory_space<semaphore_mem>>
    %225 = tpu.memref_squeeze %224 : memref<1x!tpu.dma_semaphore, #tpu.memory_space<semaphore_mem>> -> memref<!tpu.dma_semaphore, #tpu.memory_space<semaphore_mem>>
    tpu.enqueue_dma source(%222 : memref<1x128xf32, #tpu.memory_space<any>>) target(%223 : memref<1x128xf32, #tpu.memory_space<vmem>>) target_semaphore(%225 : memref<!tpu.dma_semaphore, #tpu.memory_space<semaphore_mem>>)
    %c1_i32_194 = arith.constant 1 : i32
    %c0_i32_195 = arith.constant 0 : i32
    %226 = tpu.memref_slice %arg0[%221, %c0_i32_195] : memref<32x128xf32, #tpu.memory_space<any>> -> memref<1x128xf32, #tpu.memory_space<any>>
    %c22_i32_196 = arith.constant 22 : i32
    %c128_i32_197 = arith.constant 128 : i32
    %227 = tpu.memref_slice %arg17[%c22_i32_196, %c128_i32_197] : memref<32x256xf32, #tpu.memory_space<vmem>> -> memref<1x128xf32, #tpu.memory_space<vmem>>
    %228 = tpu.memref_slice %arg18[%c1_i32_194] : memref<2x!tpu.dma_semaphore, #tpu.memory_space<semaphore_mem>> -> memref<1x!tpu.dma_semaphore, #tpu.memory_space<semaphore_mem>>
    %229 = tpu.memref_squeeze %228 : memref<1x!tpu.dma_semaphore, #tpu.memory_space<semaphore_mem>> -> memref<!tpu.dma_semaphore, #tpu.memory_space<semaphore_mem>>
    tpu.enqueue_dma source(%226 : memref<1x128xf32, #tpu.memory_space<any>>) target(%227 : memref<1x128xf32, #tpu.memory_space<vmem>>) target_semaphore(%229 : memref<!tpu.dma_semaphore, #tpu.memory_space<semaphore_mem>>)
    %c7_198 = arith.constant 7 : index
    %230 = memref.load %arg11[%c7_198] : memref<8xi32, #tpu.memory_space<smem>>
    %c7_199 = arith.constant 7 : index
    %231 = memref.load %arg12[%c7_199] : memref<8xi32, #tpu.memory_space<smem>>
    %c1_i32_200 = arith.constant 1 : i32
    %c0_i32_201 = arith.constant 0 : i32
    %232 = tpu.memref_slice %arg0[%230, %c0_i32_201] : memref<32x128xf32, #tpu.memory_space<any>> -> memref<1x128xf32, #tpu.memory_space<any>>
    %c23_i32 = arith.constant 23 : i32
    %c0_i32_202 = arith.constant 0 : i32
    %233 = tpu.memref_slice %arg17[%c23_i32, %c0_i32_202] : memref<32x256xf32, #tpu.memory_space<vmem>> -> memref<1x128xf32, #tpu.memory_space<vmem>>
    %234 = tpu.memref_slice %arg18[%c1_i32_200] : memref<2x!tpu.dma_semaphore, #tpu.memory_space<semaphore_mem>> -> memref<1x!tpu.dma_semaphore, #tpu.memory_space<semaphore_mem>>
    %235 = tpu.memref_squeeze %234 : memref<1x!tpu.dma_semaphore, #tpu.memory_space<semaphore_mem>> -> memref<!tpu.dma_semaphore, #tpu.memory_space<semaphore_mem>>
    tpu.enqueue_dma source(%232 : memref<1x128xf32, #tpu.memory_space<any>>) target(%233 : memref<1x128xf32, #tpu.memory_space<vmem>>) target_semaphore(%235 : memref<!tpu.dma_semaphore, #tpu.memory_space<semaphore_mem>>)
    %c1_i32_203 = arith.constant 1 : i32
    %c0_i32_204 = arith.constant 0 : i32
    %236 = tpu.memref_slice %arg0[%231, %c0_i32_204] : memref<32x128xf32, #tpu.memory_space<any>> -> memref<1x128xf32, #tpu.memory_space<any>>
    %c23_i32_205 = arith.constant 23 : i32
    %c128_i32_206 = arith.constant 128 : i32
    %237 = tpu.memref_slice %arg17[%c23_i32_205, %c128_i32_206] : memref<32x256xf32, #tpu.memory_space<vmem>> -> memref<1x128xf32, #tpu.memory_space<vmem>>
    %238 = tpu.memref_slice %arg18[%c1_i32_203] : memref<2x!tpu.dma_semaphore, #tpu.memory_space<semaphore_mem>> -> memref<1x!tpu.dma_semaphore, #tpu.memory_space<semaphore_mem>>
    %239 = tpu.memref_squeeze %238 : memref<1x!tpu.dma_semaphore, #tpu.memory_space<semaphore_mem>> -> memref<!tpu.dma_semaphore, #tpu.memory_space<semaphore_mem>>
    tpu.enqueue_dma source(%236 : memref<1x128xf32, #tpu.memory_space<any>>) target(%237 : memref<1x128xf32, #tpu.memory_space<vmem>>) target_semaphore(%239 : memref<!tpu.dma_semaphore, #tpu.memory_space<semaphore_mem>>)
    %c0_207 = arith.constant 0 : index
    %240 = memref.load %arg13[%c0_207] : memref<8xi32, #tpu.memory_space<smem>>
    %c0_208 = arith.constant 0 : index
    %241 = memref.load %arg14[%c0_208] : memref<8xi32, #tpu.memory_space<smem>>
    %c1_i32_209 = arith.constant 1 : i32
    %c0_i32_210 = arith.constant 0 : i32
    %242 = tpu.memref_slice %arg1[%240, %c0_i32_210] : memref<32x128xf32, #tpu.memory_space<any>> -> memref<1x128xf32, #tpu.memory_space<any>>
    %c24_i32 = arith.constant 24 : i32
    %c0_i32_211 = arith.constant 0 : i32
    %243 = tpu.memref_slice %arg17[%c24_i32, %c0_i32_211] : memref<32x256xf32, #tpu.memory_space<vmem>> -> memref<1x128xf32, #tpu.memory_space<vmem>>
    %244 = tpu.memref_slice %arg18[%c1_i32_209] : memref<2x!tpu.dma_semaphore, #tpu.memory_space<semaphore_mem>> -> memref<1x!tpu.dma_semaphore, #tpu.memory_space<semaphore_mem>>
    %245 = tpu.memref_squeeze %244 : memref<1x!tpu.dma_semaphore, #tpu.memory_space<semaphore_mem>> -> memref<!tpu.dma_semaphore, #tpu.memory_space<semaphore_mem>>
    tpu.enqueue_dma source(%242 : memref<1x128xf32, #tpu.memory_space<any>>) target(%243 : memref<1x128xf32, #tpu.memory_space<vmem>>) target_semaphore(%245 : memref<!tpu.dma_semaphore, #tpu.memory_space<semaphore_mem>>)
    %c1_i32_212 = arith.constant 1 : i32
    %c0_i32_213 = arith.constant 0 : i32
    %246 = tpu.memref_slice %arg1[%241, %c0_i32_213] : memref<32x128xf32, #tpu.memory_space<any>> -> memref<1x128xf32, #tpu.memory_space<any>>
    %c24_i32_214 = arith.constant 24 : i32
    %c128_i32_215 = arith.constant 128 : i32
    %247 = tpu.memref_slice %arg17[%c24_i32_214, %c128_i32_215] : memref<32x256xf32, #tpu.memory_space<vmem>> -> memref<1x128xf32, #tpu.memory_space<vmem>>
    %248 = tpu.memref_slice %arg18[%c1_i32_212] : memref<2x!tpu.dma_semaphore, #tpu.memory_space<semaphore_mem>> -> memref<1x!tpu.dma_semaphore, #tpu.memory_space<semaphore_mem>>
    %249 = tpu.memref_squeeze %248 : memref<1x!tpu.dma_semaphore, #tpu.memory_space<semaphore_mem>> -> memref<!tpu.dma_semaphore, #tpu.memory_space<semaphore_mem>>
    tpu.enqueue_dma source(%246 : memref<1x128xf32, #tpu.memory_space<any>>) target(%247 : memref<1x128xf32, #tpu.memory_space<vmem>>) target_semaphore(%249 : memref<!tpu.dma_semaphore, #tpu.memory_space<semaphore_mem>>)
    %c1_216 = arith.constant 1 : index
    %250 = memref.load %arg13[%c1_216] : memref<8xi32, #tpu.memory_space<smem>>
    %c1_217 = arith.constant 1 : index
    %251 = memref.load %arg14[%c1_217] : memref<8xi32, #tpu.memory_space<smem>>
    %c1_i32_218 = arith.constant 1 : i32
    %c0_i32_219 = arith.constant 0 : i32
    %252 = tpu.memref_slice %arg1[%250, %c0_i32_219] : memref<32x128xf32, #tpu.memory_space<any>> -> memref<1x128xf32, #tpu.memory_space<any>>
    %c25_i32 = arith.constant 25 : i32
    %c0_i32_220 = arith.constant 0 : i32
    %253 = tpu.memref_slice %arg17[%c25_i32, %c0_i32_220] : memref<32x256xf32, #tpu.memory_space<vmem>> -> memref<1x128xf32, #tpu.memory_space<vmem>>
    %254 = tpu.memref_slice %arg18[%c1_i32_218] : memref<2x!tpu.dma_semaphore, #tpu.memory_space<semaphore_mem>> -> memref<1x!tpu.dma_semaphore, #tpu.memory_space<semaphore_mem>>
    %255 = tpu.memref_squeeze %254 : memref<1x!tpu.dma_semaphore, #tpu.memory_space<semaphore_mem>> -> memref<!tpu.dma_semaphore, #tpu.memory_space<semaphore_mem>>
    tpu.enqueue_dma source(%252 : memref<1x128xf32, #tpu.memory_space<any>>) target(%253 : memref<1x128xf32, #tpu.memory_space<vmem>>) target_semaphore(%255 : memref<!tpu.dma_semaphore, #tpu.memory_space<semaphore_mem>>)
    %c1_i32_221 = arith.constant 1 : i32
    %c0_i32_222 = arith.constant 0 : i32
    %256 = tpu.memref_slice %arg1[%251, %c0_i32_222] : memref<32x128xf32, #tpu.memory_space<any>> -> memref<1x128xf32, #tpu.memory_space<any>>
    %c25_i32_223 = arith.constant 25 : i32
    %c128_i32_224 = arith.constant 128 : i32
    %257 = tpu.memref_slice %arg17[%c25_i32_223, %c128_i32_224] : memref<32x256xf32, #tpu.memory_space<vmem>> -> memref<1x128xf32, #tpu.memory_space<vmem>>
    %258 = tpu.memref_slice %arg18[%c1_i32_221] : memref<2x!tpu.dma_semaphore, #tpu.memory_space<semaphore_mem>> -> memref<1x!tpu.dma_semaphore, #tpu.memory_space<semaphore_mem>>
    %259 = tpu.memref_squeeze %258 : memref<1x!tpu.dma_semaphore, #tpu.memory_space<semaphore_mem>> -> memref<!tpu.dma_semaphore, #tpu.memory_space<semaphore_mem>>
    tpu.enqueue_dma source(%256 : memref<1x128xf32, #tpu.memory_space<any>>) target(%257 : memref<1x128xf32, #tpu.memory_space<vmem>>) target_semaphore(%259 : memref<!tpu.dma_semaphore, #tpu.memory_space<semaphore_mem>>)
    %c2_225 = arith.constant 2 : index
    %260 = memref.load %arg13[%c2_225] : memref<8xi32, #tpu.memory_space<smem>>
    %c2_226 = arith.constant 2 : index
    %261 = memref.load %arg14[%c2_226] : memref<8xi32, #tpu.memory_space<smem>>
    %c1_i32_227 = arith.constant 1 : i32
    %c0_i32_228 = arith.constant 0 : i32
    %262 = tpu.memref_slice %arg1[%260, %c0_i32_228] : memref<32x128xf32, #tpu.memory_space<any>> -> memref<1x128xf32, #tpu.memory_space<any>>
    %c26_i32 = arith.constant 26 : i32
    %c0_i32_229 = arith.constant 0 : i32
    %263 = tpu.memref_slice %arg17[%c26_i32, %c0_i32_229] : memref<32x256xf32, #tpu.memory_space<vmem>> -> memref<1x128xf32, #tpu.memory_space<vmem>>
    %264 = tpu.memref_slice %arg18[%c1_i32_227] : memref<2x!tpu.dma_semaphore, #tpu.memory_space<semaphore_mem>> -> memref<1x!tpu.dma_semaphore, #tpu.memory_space<semaphore_mem>>
    %265 = tpu.memref_squeeze %264 : memref<1x!tpu.dma_semaphore, #tpu.memory_space<semaphore_mem>> -> memref<!tpu.dma_semaphore, #tpu.memory_space<semaphore_mem>>
    tpu.enqueue_dma source(%262 : memref<1x128xf32, #tpu.memory_space<any>>) target(%263 : memref<1x128xf32, #tpu.memory_space<vmem>>) target_semaphore(%265 : memref<!tpu.dma_semaphore, #tpu.memory_space<semaphore_mem>>)
    %c1_i32_230 = arith.constant 1 : i32
    %c0_i32_231 = arith.constant 0 : i32
    %266 = tpu.memref_slice %arg1[%261, %c0_i32_231] : memref<32x128xf32, #tpu.memory_space<any>> -> memref<1x128xf32, #tpu.memory_space<any>>
    %c26_i32_232 = arith.constant 26 : i32
    %c128_i32_233 = arith.constant 128 : i32
    %267 = tpu.memref_slice %arg17[%c26_i32_232, %c128_i32_233] : memref<32x256xf32, #tpu.memory_space<vmem>> -> memref<1x128xf32, #tpu.memory_space<vmem>>
    %268 = tpu.memref_slice %arg18[%c1_i32_230] : memref<2x!tpu.dma_semaphore, #tpu.memory_space<semaphore_mem>> -> memref<1x!tpu.dma_semaphore, #tpu.memory_space<semaphore_mem>>
    %269 = tpu.memref_squeeze %268 : memref<1x!tpu.dma_semaphore, #tpu.memory_space<semaphore_mem>> -> memref<!tpu.dma_semaphore, #tpu.memory_space<semaphore_mem>>
    tpu.enqueue_dma source(%266 : memref<1x128xf32, #tpu.memory_space<any>>) target(%267 : memref<1x128xf32, #tpu.memory_space<vmem>>) target_semaphore(%269 : memref<!tpu.dma_semaphore, #tpu.memory_space<semaphore_mem>>)
    %c3_234 = arith.constant 3 : index
    %270 = memref.load %arg13[%c3_234] : memref<8xi32, #tpu.memory_space<smem>>
    %c3_235 = arith.constant 3 : index
    %271 = memref.load %arg14[%c3_235] : memref<8xi32, #tpu.memory_space<smem>>
    %c1_i32_236 = arith.constant 1 : i32
    %c0_i32_237 = arith.constant 0 : i32
    %272 = tpu.memref_slice %arg1[%270, %c0_i32_237] : memref<32x128xf32, #tpu.memory_space<any>> -> memref<1x128xf32, #tpu.memory_space<any>>
    %c27_i32 = arith.constant 27 : i32
    %c0_i32_238 = arith.constant 0 : i32
    %273 = tpu.memref_slice %arg17[%c27_i32, %c0_i32_238] : memref<32x256xf32, #tpu.memory_space<vmem>> -> memref<1x128xf32, #tpu.memory_space<vmem>>
    %274 = tpu.memref_slice %arg18[%c1_i32_236] : memref<2x!tpu.dma_semaphore, #tpu.memory_space<semaphore_mem>> -> memref<1x!tpu.dma_semaphore, #tpu.memory_space<semaphore_mem>>
    %275 = tpu.memref_squeeze %274 : memref<1x!tpu.dma_semaphore, #tpu.memory_space<semaphore_mem>> -> memref<!tpu.dma_semaphore, #tpu.memory_space<semaphore_mem>>
    tpu.enqueue_dma source(%272 : memref<1x128xf32, #tpu.memory_space<any>>) target(%273 : memref<1x128xf32, #tpu.memory_space<vmem>>) target_semaphore(%275 : memref<!tpu.dma_semaphore, #tpu.memory_space<semaphore_mem>>)
    %c1_i32_239 = arith.constant 1 : i32
    %c0_i32_240 = arith.constant 0 : i32
    %276 = tpu.memref_slice %arg1[%271, %c0_i32_240] : memref<32x128xf32, #tpu.memory_space<any>> -> memref<1x128xf32, #tpu.memory_space<any>>
    %c27_i32_241 = arith.constant 27 : i32
    %c128_i32_242 = arith.constant 128 : i32
    %277 = tpu.memref_slice %arg17[%c27_i32_241, %c128_i32_242] : memref<32x256xf32, #tpu.memory_space<vmem>> -> memref<1x128xf32, #tpu.memory_space<vmem>>
    %278 = tpu.memref_slice %arg18[%c1_i32_239] : memref<2x!tpu.dma_semaphore, #tpu.memory_space<semaphore_mem>> -> memref<1x!tpu.dma_semaphore, #tpu.memory_space<semaphore_mem>>
    %279 = tpu.memref_squeeze %278 : memref<1x!tpu.dma_semaphore, #tpu.memory_space<semaphore_mem>> -> memref<!tpu.dma_semaphore, #tpu.memory_space<semaphore_mem>>
    tpu.enqueue_dma source(%276 : memref<1x128xf32, #tpu.memory_space<any>>) target(%277 : memref<1x128xf32, #tpu.memory_space<vmem>>) target_semaphore(%279 : memref<!tpu.dma_semaphore, #tpu.memory_space<semaphore_mem>>)
    %c4_243 = arith.constant 4 : index
    %280 = memref.load %arg13[%c4_243] : memref<8xi32, #tpu.memory_space<smem>>
    %c4_244 = arith.constant 4 : index
    %281 = memref.load %arg14[%c4_244] : memref<8xi32, #tpu.memory_space<smem>>
    %c1_i32_245 = arith.constant 1 : i32
    %c0_i32_246 = arith.constant 0 : i32
    %282 = tpu.memref_slice %arg1[%280, %c0_i32_246] : memref<32x128xf32, #tpu.memory_space<any>> -> memref<1x128xf32, #tpu.memory_space<any>>
    %c28_i32 = arith.constant 28 : i32
    %c0_i32_247 = arith.constant 0 : i32
    %283 = tpu.memref_slice %arg17[%c28_i32, %c0_i32_247] : memref<32x256xf32, #tpu.memory_space<vmem>> -> memref<1x128xf32, #tpu.memory_space<vmem>>
    %284 = tpu.memref_slice %arg18[%c1_i32_245] : memref<2x!tpu.dma_semaphore, #tpu.memory_space<semaphore_mem>> -> memref<1x!tpu.dma_semaphore, #tpu.memory_space<semaphore_mem>>
    %285 = tpu.memref_squeeze %284 : memref<1x!tpu.dma_semaphore, #tpu.memory_space<semaphore_mem>> -> memref<!tpu.dma_semaphore, #tpu.memory_space<semaphore_mem>>
    tpu.enqueue_dma source(%282 : memref<1x128xf32, #tpu.memory_space<any>>) target(%283 : memref<1x128xf32, #tpu.memory_space<vmem>>) target_semaphore(%285 : memref<!tpu.dma_semaphore, #tpu.memory_space<semaphore_mem>>)
    %c1_i32_248 = arith.constant 1 : i32
    %c0_i32_249 = arith.constant 0 : i32
    %286 = tpu.memref_slice %arg1[%281, %c0_i32_249] : memref<32x128xf32, #tpu.memory_space<any>> -> memref<1x128xf32, #tpu.memory_space<any>>
    %c28_i32_250 = arith.constant 28 : i32
    %c128_i32_251 = arith.constant 128 : i32
    %287 = tpu.memref_slice %arg17[%c28_i32_250, %c128_i32_251] : memref<32x256xf32, #tpu.memory_space<vmem>> -> memref<1x128xf32, #tpu.memory_space<vmem>>
    %288 = tpu.memref_slice %arg18[%c1_i32_248] : memref<2x!tpu.dma_semaphore, #tpu.memory_space<semaphore_mem>> -> memref<1x!tpu.dma_semaphore, #tpu.memory_space<semaphore_mem>>
    %289 = tpu.memref_squeeze %288 : memref<1x!tpu.dma_semaphore, #tpu.memory_space<semaphore_mem>> -> memref<!tpu.dma_semaphore, #tpu.memory_space<semaphore_mem>>
    tpu.enqueue_dma source(%286 : memref<1x128xf32, #tpu.memory_space<any>>) target(%287 : memref<1x128xf32, #tpu.memory_space<vmem>>) target_semaphore(%289 : memref<!tpu.dma_semaphore, #tpu.memory_space<semaphore_mem>>)
    %c5_252 = arith.constant 5 : index
    %290 = memref.load %arg13[%c5_252] : memref<8xi32, #tpu.memory_space<smem>>
    %c5_253 = arith.constant 5 : index
    %291 = memref.load %arg14[%c5_253] : memref<8xi32, #tpu.memory_space<smem>>
    %c1_i32_254 = arith.constant 1 : i32
    %c0_i32_255 = arith.constant 0 : i32
    %292 = tpu.memref_slice %arg1[%290, %c0_i32_255] : memref<32x128xf32, #tpu.memory_space<any>> -> memref<1x128xf32, #tpu.memory_space<any>>
    %c29_i32 = arith.constant 29 : i32
    %c0_i32_256 = arith.constant 0 : i32
    %293 = tpu.memref_slice %arg17[%c29_i32, %c0_i32_256] : memref<32x256xf32, #tpu.memory_space<vmem>> -> memref<1x128xf32, #tpu.memory_space<vmem>>
    %294 = tpu.memref_slice %arg18[%c1_i32_254] : memref<2x!tpu.dma_semaphore, #tpu.memory_space<semaphore_mem>> -> memref<1x!tpu.dma_semaphore, #tpu.memory_space<semaphore_mem>>
    %295 = tpu.memref_squeeze %294 : memref<1x!tpu.dma_semaphore, #tpu.memory_space<semaphore_mem>> -> memref<!tpu.dma_semaphore, #tpu.memory_space<semaphore_mem>>
    tpu.enqueue_dma source(%292 : memref<1x128xf32, #tpu.memory_space<any>>) target(%293 : memref<1x128xf32, #tpu.memory_space<vmem>>) target_semaphore(%295 : memref<!tpu.dma_semaphore, #tpu.memory_space<semaphore_mem>>)
    %c1_i32_257 = arith.constant 1 : i32
    %c0_i32_258 = arith.constant 0 : i32
    %296 = tpu.memref_slice %arg1[%291, %c0_i32_258] : memref<32x128xf32, #tpu.memory_space<any>> -> memref<1x128xf32, #tpu.memory_space<any>>
    %c29_i32_259 = arith.constant 29 : i32
    %c128_i32_260 = arith.constant 128 : i32
    %297 = tpu.memref_slice %arg17[%c29_i32_259, %c128_i32_260] : memref<32x256xf32, #tpu.memory_space<vmem>> -> memref<1x128xf32, #tpu.memory_space<vmem>>
    %298 = tpu.memref_slice %arg18[%c1_i32_257] : memref<2x!tpu.dma_semaphore, #tpu.memory_space<semaphore_mem>> -> memref<1x!tpu.dma_semaphore, #tpu.memory_space<semaphore_mem>>
    %299 = tpu.memref_squeeze %298 : memref<1x!tpu.dma_semaphore, #tpu.memory_space<semaphore_mem>> -> memref<!tpu.dma_semaphore, #tpu.memory_space<semaphore_mem>>
    tpu.enqueue_dma source(%296 : memref<1x128xf32, #tpu.memory_space<any>>) target(%297 : memref<1x128xf32, #tpu.memory_space<vmem>>) target_semaphore(%299 : memref<!tpu.dma_semaphore, #tpu.memory_space<semaphore_mem>>)
    %c6_261 = arith.constant 6 : index
    %300 = memref.load %arg13[%c6_261] : memref<8xi32, #tpu.memory_space<smem>>
    %c6_262 = arith.constant 6 : index
    %301 = memref.load %arg14[%c6_262] : memref<8xi32, #tpu.memory_space<smem>>
    %c1_i32_263 = arith.constant 1 : i32
    %c0_i32_264 = arith.constant 0 : i32
    %302 = tpu.memref_slice %arg1[%300, %c0_i32_264] : memref<32x128xf32, #tpu.memory_space<any>> -> memref<1x128xf32, #tpu.memory_space<any>>
    %c30_i32 = arith.constant 30 : i32
    %c0_i32_265 = arith.constant 0 : i32
    %303 = tpu.memref_slice %arg17[%c30_i32, %c0_i32_265] : memref<32x256xf32, #tpu.memory_space<vmem>> -> memref<1x128xf32, #tpu.memory_space<vmem>>
    %304 = tpu.memref_slice %arg18[%c1_i32_263] : memref<2x!tpu.dma_semaphore, #tpu.memory_space<semaphore_mem>> -> memref<1x!tpu.dma_semaphore, #tpu.memory_space<semaphore_mem>>
    %305 = tpu.memref_squeeze %304 : memref<1x!tpu.dma_semaphore, #tpu.memory_space<semaphore_mem>> -> memref<!tpu.dma_semaphore, #tpu.memory_space<semaphore_mem>>
    tpu.enqueue_dma source(%302 : memref<1x128xf32, #tpu.memory_space<any>>) target(%303 : memref<1x128xf32, #tpu.memory_space<vmem>>) target_semaphore(%305 : memref<!tpu.dma_semaphore, #tpu.memory_space<semaphore_mem>>)
    %c1_i32_266 = arith.constant 1 : i32
    %c0_i32_267 = arith.constant 0 : i32
    %306 = tpu.memref_slice %arg1[%301, %c0_i32_267] : memref<32x128xf32, #tpu.memory_space<any>> -> memref<1x128xf32, #tpu.memory_space<any>>
    %c30_i32_268 = arith.constant 30 : i32
    %c128_i32_269 = arith.constant 128 : i32
    %307 = tpu.memref_slice %arg17[%c30_i32_268, %c128_i32_269] : memref<32x256xf32, #tpu.memory_space<vmem>> -> memref<1x128xf32, #tpu.memory_space<vmem>>
    %308 = tpu.memref_slice %arg18[%c1_i32_266] : memref<2x!tpu.dma_semaphore, #tpu.memory_space<semaphore_mem>> -> memref<1x!tpu.dma_semaphore, #tpu.memory_space<semaphore_mem>>
    %309 = tpu.memref_squeeze %308 : memref<1x!tpu.dma_semaphore, #tpu.memory_space<semaphore_mem>> -> memref<!tpu.dma_semaphore, #tpu.memory_space<semaphore_mem>>
    tpu.enqueue_dma source(%306 : memref<1x128xf32, #tpu.memory_space<any>>) target(%307 : memref<1x128xf32, #tpu.memory_space<vmem>>) target_semaphore(%309 : memref<!tpu.dma_semaphore, #tpu.memory_space<semaphore_mem>>)
    %c7_270 = arith.constant 7 : index
    %310 = memref.load %arg13[%c7_270] : memref<8xi32, #tpu.memory_space<smem>>
    %c7_271 = arith.constant 7 : index
    %311 = memref.load %arg14[%c7_271] : memref<8xi32, #tpu.memory_space<smem>>
    %c1_i32_272 = arith.constant 1 : i32
    %c0_i32_273 = arith.constant 0 : i32
    %312 = tpu.memref_slice %arg1[%310, %c0_i32_273] : memref<32x128xf32, #tpu.memory_space<any>> -> memref<1x128xf32, #tpu.memory_space<any>>
    %c31_i32 = arith.constant 31 : i32
    %c0_i32_274 = arith.constant 0 : i32
    %313 = tpu.memref_slice %arg17[%c31_i32, %c0_i32_274] : memref<32x256xf32, #tpu.memory_space<vmem>> -> memref<1x128xf32, #tpu.memory_space<vmem>>
    %314 = tpu.memref_slice %arg18[%c1_i32_272] : memref<2x!tpu.dma_semaphore, #tpu.memory_space<semaphore_mem>> -> memref<1x!tpu.dma_semaphore, #tpu.memory_space<semaphore_mem>>
    %315 = tpu.memref_squeeze %314 : memref<1x!tpu.dma_semaphore, #tpu.memory_space<semaphore_mem>> -> memref<!tpu.dma_semaphore, #tpu.memory_space<semaphore_mem>>
    tpu.enqueue_dma source(%312 : memref<1x128xf32, #tpu.memory_space<any>>) target(%313 : memref<1x128xf32, #tpu.memory_space<vmem>>) target_semaphore(%315 : memref<!tpu.dma_semaphore, #tpu.memory_space<semaphore_mem>>)
    %c1_i32_275 = arith.constant 1 : i32
    %c0_i32_276 = arith.constant 0 : i32
    %316 = tpu.memref_slice %arg1[%311, %c0_i32_276] : memref<32x128xf32, #tpu.memory_space<any>> -> memref<1x128xf32, #tpu.memory_space<any>>
    %c31_i32_277 = arith.constant 31 : i32
    %c128_i32_278 = arith.constant 128 : i32
    %317 = tpu.memref_slice %arg17[%c31_i32_277, %c128_i32_278] : memref<32x256xf32, #tpu.memory_space<vmem>> -> memref<1x128xf32, #tpu.memory_space<vmem>>
    %318 = tpu.memref_slice %arg18[%c1_i32_275] : memref<2x!tpu.dma_semaphore, #tpu.memory_space<semaphore_mem>> -> memref<1x!tpu.dma_semaphore, #tpu.memory_space<semaphore_mem>>
    %319 = tpu.memref_squeeze %318 : memref<1x!tpu.dma_semaphore, #tpu.memory_space<semaphore_mem>> -> memref<!tpu.dma_semaphore, #tpu.memory_space<semaphore_mem>>
    tpu.enqueue_dma source(%316 : memref<1x128xf32, #tpu.memory_space<any>>) target(%317 : memref<1x128xf32, #tpu.memory_space<vmem>>) target_semaphore(%319 : memref<!tpu.dma_semaphore, #tpu.memory_space<semaphore_mem>>)
    %c0_i32_279 = arith.constant 0 : i32
    %c0_i32_280 = arith.constant 0 : i32
    %320 = tpu.memref_slice %arg0[%0, %c0_i32_280] : memref<32x128xf32, #tpu.memory_space<any>> -> memref<1x128xf32, #tpu.memory_space<any>>
    %c0_i32_281 = arith.constant 0 : i32
    %c0_i32_282 = arith.constant 0 : i32
    %321 = tpu.memref_slice %arg17[%c0_i32_281, %c0_i32_282] : memref<32x256xf32, #tpu.memory_space<vmem>> -> memref<1x128xf32, #tpu.memory_space<vmem>>
    %322 = tpu.memref_slice %arg18[%c0_i32_279] : memref<2x!tpu.dma_semaphore, #tpu.memory_space<semaphore_mem>> -> memref<1x!tpu.dma_semaphore, #tpu.memory_space<semaphore_mem>>
    %323 = tpu.memref_squeeze %322 : memref<1x!tpu.dma_semaphore, #tpu.memory_space<semaphore_mem>> -> memref<!tpu.dma_semaphore, #tpu.memory_space<semaphore_mem>>
    tpu.wait_dma2 semaphore(%323 : memref<!tpu.dma_semaphore, #tpu.memory_space<semaphore_mem>>) src(%320 : memref<1x128xf32, #tpu.memory_space<any>>) dst(%321 : memref<1x128xf32, #tpu.memory_space<vmem>>)
    %c0_i32_283 = arith.constant 0 : i32
    %c0_i32_284 = arith.constant 0 : i32
    %324 = tpu.memref_slice %arg0[%1, %c0_i32_284] : memref<32x128xf32, #tpu.memory_space<any>> -> memref<1x128xf32, #tpu.memory_space<any>>
    %c0_i32_285 = arith.constant 0 : i32
    %c128_i32_286 = arith.constant 128 : i32
    %325 = tpu.memref_slice %arg17[%c0_i32_285, %c128_i32_286] : memref<32x256xf32, #tpu.memory_space<vmem>> -> memref<1x128xf32, #tpu.memory_space<vmem>>
    %326 = tpu.memref_slice %arg18[%c0_i32_283] : memref<2x!tpu.dma_semaphore, #tpu.memory_space<semaphore_mem>> -> memref<1x!tpu.dma_semaphore, #tpu.memory_space<semaphore_mem>>
    %327 = tpu.memref_squeeze %326 : memref<1x!tpu.dma_semaphore, #tpu.memory_space<semaphore_mem>> -> memref<!tpu.dma_semaphore, #tpu.memory_space<semaphore_mem>>
    tpu.wait_dma2 semaphore(%327 : memref<!tpu.dma_semaphore, #tpu.memory_space<semaphore_mem>>) src(%324 : memref<1x128xf32, #tpu.memory_space<any>>) dst(%325 : memref<1x128xf32, #tpu.memory_space<vmem>>)
    %c0_i32_287 = arith.constant 0 : i32
    %c0_i32_288 = arith.constant 0 : i32
    %328 = tpu.memref_slice %arg0[%10, %c0_i32_288] : memref<32x128xf32, #tpu.memory_space<any>> -> memref<1x128xf32, #tpu.memory_space<any>>
    %c1_i32_289 = arith.constant 1 : i32
    %c0_i32_290 = arith.constant 0 : i32
    %329 = tpu.memref_slice %arg17[%c1_i32_289, %c0_i32_290] : memref<32x256xf32, #tpu.memory_space<vmem>> -> memref<1x128xf32, #tpu.memory_space<vmem>>
    %330 = tpu.memref_slice %arg18[%c0_i32_287] : memref<2x!tpu.dma_semaphore, #tpu.memory_space<semaphore_mem>> -> memref<1x!tpu.dma_semaphore, #tpu.memory_space<semaphore_mem>>
    %331 = tpu.memref_squeeze %330 : memref<1x!tpu.dma_semaphore, #tpu.memory_space<semaphore_mem>> -> memref<!tpu.dma_semaphore, #tpu.memory_space<semaphore_mem>>
    tpu.wait_dma2 semaphore(%331 : memref<!tpu.dma_semaphore, #tpu.memory_space<semaphore_mem>>) src(%328 : memref<1x128xf32, #tpu.memory_space<any>>) dst(%329 : memref<1x128xf32, #tpu.memory_space<vmem>>)
    %c0_i32_291 = arith.constant 0 : i32
    %c0_i32_292 = arith.constant 0 : i32
    %332 = tpu.memref_slice %arg0[%11, %c0_i32_292] : memref<32x128xf32, #tpu.memory_space<any>> -> memref<1x128xf32, #tpu.memory_space<any>>
    %c1_i32_293 = arith.constant 1 : i32
    %c128_i32_294 = arith.constant 128 : i32
    %333 = tpu.memref_slice %arg17[%c1_i32_293, %c128_i32_294] : memref<32x256xf32, #tpu.memory_space<vmem>> -> memref<1x128xf32, #tpu.memory_space<vmem>>
    %334 = tpu.memref_slice %arg18[%c0_i32_291] : memref<2x!tpu.dma_semaphore, #tpu.memory_space<semaphore_mem>> -> memref<1x!tpu.dma_semaphore, #tpu.memory_space<semaphore_mem>>
    %335 = tpu.memref_squeeze %334 : memref<1x!tpu.dma_semaphore, #tpu.memory_space<semaphore_mem>> -> memref<!tpu.dma_semaphore, #tpu.memory_space<semaphore_mem>>
    tpu.wait_dma2 semaphore(%335 : memref<!tpu.dma_semaphore, #tpu.memory_space<semaphore_mem>>) src(%332 : memref<1x128xf32, #tpu.memory_space<any>>) dst(%333 : memref<1x128xf32, #tpu.memory_space<vmem>>)
    %c0_i32_295 = arith.constant 0 : i32
    %c0_i32_296 = arith.constant 0 : i32
    %336 = tpu.memref_slice %arg0[%20, %c0_i32_296] : memref<32x128xf32, #tpu.memory_space<any>> -> memref<1x128xf32, #tpu.memory_space<any>>
    %c2_i32_297 = arith.constant 2 : i32
    %c0_i32_298 = arith.constant 0 : i32
    %337 = tpu.memref_slice %arg17[%c2_i32_297, %c0_i32_298] : memref<32x256xf32, #tpu.memory_space<vmem>> -> memref<1x128xf32, #tpu.memory_space<vmem>>
    %338 = tpu.memref_slice %arg18[%c0_i32_295] : memref<2x!tpu.dma_semaphore, #tpu.memory_space<semaphore_mem>> -> memref<1x!tpu.dma_semaphore, #tpu.memory_space<semaphore_mem>>
    %339 = tpu.memref_squeeze %338 : memref<1x!tpu.dma_semaphore, #tpu.memory_space<semaphore_mem>> -> memref<!tpu.dma_semaphore, #tpu.memory_space<semaphore_mem>>
    tpu.wait_dma2 semaphore(%339 : memref<!tpu.dma_semaphore, #tpu.memory_space<semaphore_mem>>) src(%336 : memref<1x128xf32, #tpu.memory_space<any>>) dst(%337 : memref<1x128xf32, #tpu.memory_space<vmem>>)
    %c0_i32_299 = arith.constant 0 : i32
    %c0_i32_300 = arith.constant 0 : i32
    %340 = tpu.memref_slice %arg0[%21, %c0_i32_300] : memref<32x128xf32, #tpu.memory_space<any>> -> memref<1x128xf32, #tpu.memory_space<any>>
    %c2_i32_301 = arith.constant 2 : i32
    %c128_i32_302 = arith.constant 128 : i32
    %341 = tpu.memref_slice %arg17[%c2_i32_301, %c128_i32_302] : memref<32x256xf32, #tpu.memory_space<vmem>> -> memref<1x128xf32, #tpu.memory_space<vmem>>
    %342 = tpu.memref_slice %arg18[%c0_i32_299] : memref<2x!tpu.dma_semaphore, #tpu.memory_space<semaphore_mem>> -> memref<1x!tpu.dma_semaphore, #tpu.memory_space<semaphore_mem>>
    %343 = tpu.memref_squeeze %342 : memref<1x!tpu.dma_semaphore, #tpu.memory_space<semaphore_mem>> -> memref<!tpu.dma_semaphore, #tpu.memory_space<semaphore_mem>>
    tpu.wait_dma2 semaphore(%343 : memref<!tpu.dma_semaphore, #tpu.memory_space<semaphore_mem>>) src(%340 : memref<1x128xf32, #tpu.memory_space<any>>) dst(%341 : memref<1x128xf32, #tpu.memory_space<vmem>>)
    %c0_i32_303 = arith.constant 0 : i32
    %c0_i32_304 = arith.constant 0 : i32
    %344 = tpu.memref_slice %arg0[%30, %c0_i32_304] : memref<32x128xf32, #tpu.memory_space<any>> -> memref<1x128xf32, #tpu.memory_space<any>>
    %c3_i32_305 = arith.constant 3 : i32
    %c0_i32_306 = arith.constant 0 : i32
    %345 = tpu.memref_slice %arg17[%c3_i32_305, %c0_i32_306] : memref<32x256xf32, #tpu.memory_space<vmem>> -> memref<1x128xf32, #tpu.memory_space<vmem>>
    %346 = tpu.memref_slice %arg18[%c0_i32_303] : memref<2x!tpu.dma_semaphore, #tpu.memory_space<semaphore_mem>> -> memref<1x!tpu.dma_semaphore, #tpu.memory_space<semaphore_mem>>
    %347 = tpu.memref_squeeze %346 : memref<1x!tpu.dma_semaphore, #tpu.memory_space<semaphore_mem>> -> memref<!tpu.dma_semaphore, #tpu.memory_space<semaphore_mem>>
    tpu.wait_dma2 semaphore(%347 : memref<!tpu.dma_semaphore, #tpu.memory_space<semaphore_mem>>) src(%344 : memref<1x128xf32, #tpu.memory_space<any>>) dst(%345 : memref<1x128xf32, #tpu.memory_space<vmem>>)
    %c0_i32_307 = arith.constant 0 : i32
    %c0_i32_308 = arith.constant 0 : i32
    %348 = tpu.memref_slice %arg0[%31, %c0_i32_308] : memref<32x128xf32, #tpu.memory_space<any>> -> memref<1x128xf32, #tpu.memory_space<any>>
    %c3_i32_309 = arith.constant 3 : i32
    %c128_i32_310 = arith.constant 128 : i32
    %349 = tpu.memref_slice %arg17[%c3_i32_309, %c128_i32_310] : memref<32x256xf32, #tpu.memory_space<vmem>> -> memref<1x128xf32, #tpu.memory_space<vmem>>
    %350 = tpu.memref_slice %arg18[%c0_i32_307] : memref<2x!tpu.dma_semaphore, #tpu.memory_space<semaphore_mem>> -> memref<1x!tpu.dma_semaphore, #tpu.memory_space<semaphore_mem>>
    %351 = tpu.memref_squeeze %350 : memref<1x!tpu.dma_semaphore, #tpu.memory_space<semaphore_mem>> -> memref<!tpu.dma_semaphore, #tpu.memory_space<semaphore_mem>>
    tpu.wait_dma2 semaphore(%351 : memref<!tpu.dma_semaphore, #tpu.memory_space<semaphore_mem>>) src(%348 : memref<1x128xf32, #tpu.memory_space<any>>) dst(%349 : memref<1x128xf32, #tpu.memory_space<vmem>>)
    %c0_i32_311 = arith.constant 0 : i32
    %c0_i32_312 = arith.constant 0 : i32
    %352 = tpu.memref_slice %arg0[%40, %c0_i32_312] : memref<32x128xf32, #tpu.memory_space<any>> -> memref<1x128xf32, #tpu.memory_space<any>>
    %c4_i32_313 = arith.constant 4 : i32
    %c0_i32_314 = arith.constant 0 : i32
    %353 = tpu.memref_slice %arg17[%c4_i32_313, %c0_i32_314] : memref<32x256xf32, #tpu.memory_space<vmem>> -> memref<1x128xf32, #tpu.memory_space<vmem>>
    %354 = tpu.memref_slice %arg18[%c0_i32_311] : memref<2x!tpu.dma_semaphore, #tpu.memory_space<semaphore_mem>> -> memref<1x!tpu.dma_semaphore, #tpu.memory_space<semaphore_mem>>
    %355 = tpu.memref_squeeze %354 : memref<1x!tpu.dma_semaphore, #tpu.memory_space<semaphore_mem>> -> memref<!tpu.dma_semaphore, #tpu.memory_space<semaphore_mem>>
    tpu.wait_dma2 semaphore(%355 : memref<!tpu.dma_semaphore, #tpu.memory_space<semaphore_mem>>) src(%352 : memref<1x128xf32, #tpu.memory_space<any>>) dst(%353 : memref<1x128xf32, #tpu.memory_space<vmem>>)
    %c0_i32_315 = arith.constant 0 : i32
    %c0_i32_316 = arith.constant 0 : i32
    %356 = tpu.memref_slice %arg0[%41, %c0_i32_316] : memref<32x128xf32, #tpu.memory_space<any>> -> memref<1x128xf32, #tpu.memory_space<any>>
    %c4_i32_317 = arith.constant 4 : i32
    %c128_i32_318 = arith.constant 128 : i32
    %357 = tpu.memref_slice %arg17[%c4_i32_317, %c128_i32_318] : memref<32x256xf32, #tpu.memory_space<vmem>> -> memref<1x128xf32, #tpu.memory_space<vmem>>
    %358 = tpu.memref_slice %arg18[%c0_i32_315] : memref<2x!tpu.dma_semaphore, #tpu.memory_space<semaphore_mem>> -> memref<1x!tpu.dma_semaphore, #tpu.memory_space<semaphore_mem>>
    %359 = tpu.memref_squeeze %358 : memref<1x!tpu.dma_semaphore, #tpu.memory_space<semaphore_mem>> -> memref<!tpu.dma_semaphore, #tpu.memory_space<semaphore_mem>>
    tpu.wait_dma2 semaphore(%359 : memref<!tpu.dma_semaphore, #tpu.memory_space<semaphore_mem>>) src(%356 : memref<1x128xf32, #tpu.memory_space<any>>) dst(%357 : memref<1x128xf32, #tpu.memory_space<vmem>>)
    %c0_i32_319 = arith.constant 0 : i32
    %c0_i32_320 = arith.constant 0 : i32
    %360 = tpu.memref_slice %arg0[%50, %c0_i32_320] : memref<32x128xf32, #tpu.memory_space<any>> -> memref<1x128xf32, #tpu.memory_space<any>>
    %c5_i32_321 = arith.constant 5 : i32
    %c0_i32_322 = arith.constant 0 : i32
    %361 = tpu.memref_slice %arg17[%c5_i32_321, %c0_i32_322] : memref<32x256xf32, #tpu.memory_space<vmem>> -> memref<1x128xf32, #tpu.memory_space<vmem>>
    %362 = tpu.memref_slice %arg18[%c0_i32_319] : memref<2x!tpu.dma_semaphore, #tpu.memory_space<semaphore_mem>> -> memref<1x!tpu.dma_semaphore, #tpu.memory_space<semaphore_mem>>
    %363 = tpu.memref_squeeze %362 : memref<1x!tpu.dma_semaphore, #tpu.memory_space<semaphore_mem>> -> memref<!tpu.dma_semaphore, #tpu.memory_space<semaphore_mem>>
    tpu.wait_dma2 semaphore(%363 : memref<!tpu.dma_semaphore, #tpu.memory_space<semaphore_mem>>) src(%360 : memref<1x128xf32, #tpu.memory_space<any>>) dst(%361 : memref<1x128xf32, #tpu.memory_space<vmem>>)
    %c0_i32_323 = arith.constant 0 : i32
    %c0_i32_324 = arith.constant 0 : i32
    %364 = tpu.memref_slice %arg0[%51, %c0_i32_324] : memref<32x128xf32, #tpu.memory_space<any>> -> memref<1x128xf32, #tpu.memory_space<any>>
    %c5_i32_325 = arith.constant 5 : i32
    %c128_i32_326 = arith.constant 128 : i32
    %365 = tpu.memref_slice %arg17[%c5_i32_325, %c128_i32_326] : memref<32x256xf32, #tpu.memory_space<vmem>> -> memref<1x128xf32, #tpu.memory_space<vmem>>
    %366 = tpu.memref_slice %arg18[%c0_i32_323] : memref<2x!tpu.dma_semaphore, #tpu.memory_space<semaphore_mem>> -> memref<1x!tpu.dma_semaphore, #tpu.memory_space<semaphore_mem>>
    %367 = tpu.memref_squeeze %366 : memref<1x!tpu.dma_semaphore, #tpu.memory_space<semaphore_mem>> -> memref<!tpu.dma_semaphore, #tpu.memory_space<semaphore_mem>>
    tpu.wait_dma2 semaphore(%367 : memref<!tpu.dma_semaphore, #tpu.memory_space<semaphore_mem>>) src(%364 : memref<1x128xf32, #tpu.memory_space<any>>) dst(%365 : memref<1x128xf32, #tpu.memory_space<vmem>>)
    %c0_i32_327 = arith.constant 0 : i32
    %c0_i32_328 = arith.constant 0 : i32
    %368 = tpu.memref_slice %arg0[%60, %c0_i32_328] : memref<32x128xf32, #tpu.memory_space<any>> -> memref<1x128xf32, #tpu.memory_space<any>>
    %c6_i32_329 = arith.constant 6 : i32
    %c0_i32_330 = arith.constant 0 : i32
    %369 = tpu.memref_slice %arg17[%c6_i32_329, %c0_i32_330] : memref<32x256xf32, #tpu.memory_space<vmem>> -> memref<1x128xf32, #tpu.memory_space<vmem>>
    %370 = tpu.memref_slice %arg18[%c0_i32_327] : memref<2x!tpu.dma_semaphore, #tpu.memory_space<semaphore_mem>> -> memref<1x!tpu.dma_semaphore, #tpu.memory_space<semaphore_mem>>
    %371 = tpu.memref_squeeze %370 : memref<1x!tpu.dma_semaphore, #tpu.memory_space<semaphore_mem>> -> memref<!tpu.dma_semaphore, #tpu.memory_space<semaphore_mem>>
    tpu.wait_dma2 semaphore(%371 : memref<!tpu.dma_semaphore, #tpu.memory_space<semaphore_mem>>) src(%368 : memref<1x128xf32, #tpu.memory_space<any>>) dst(%369 : memref<1x128xf32, #tpu.memory_space<vmem>>)
    %c0_i32_331 = arith.constant 0 : i32
    %c0_i32_332 = arith.constant 0 : i32
    %372 = tpu.memref_slice %arg0[%61, %c0_i32_332] : memref<32x128xf32, #tpu.memory_space<any>> -> memref<1x128xf32, #tpu.memory_space<any>>
    %c6_i32_333 = arith.constant 6 : i32
    %c128_i32_334 = arith.constant 128 : i32
    %373 = tpu.memref_slice %arg17[%c6_i32_333, %c128_i32_334] : memref<32x256xf32, #tpu.memory_space<vmem>> -> memref<1x128xf32, #tpu.memory_space<vmem>>
    %374 = tpu.memref_slice %arg18[%c0_i32_331] : memref<2x!tpu.dma_semaphore, #tpu.memory_space<semaphore_mem>> -> memref<1x!tpu.dma_semaphore, #tpu.memory_space<semaphore_mem>>
    %375 = tpu.memref_squeeze %374 : memref<1x!tpu.dma_semaphore, #tpu.memory_space<semaphore_mem>> -> memref<!tpu.dma_semaphore, #tpu.memory_space<semaphore_mem>>
    tpu.wait_dma2 semaphore(%375 : memref<!tpu.dma_semaphore, #tpu.memory_space<semaphore_mem>>) src(%372 : memref<1x128xf32, #tpu.memory_space<any>>) dst(%373 : memref<1x128xf32, #tpu.memory_space<vmem>>)
    %c0_i32_335 = arith.constant 0 : i32
    %c0_i32_336 = arith.constant 0 : i32
    %376 = tpu.memref_slice %arg0[%70, %c0_i32_336] : memref<32x128xf32, #tpu.memory_space<any>> -> memref<1x128xf32, #tpu.memory_space<any>>
    %c7_i32_337 = arith.constant 7 : i32
    %c0_i32_338 = arith.constant 0 : i32
    %377 = tpu.memref_slice %arg17[%c7_i32_337, %c0_i32_338] : memref<32x256xf32, #tpu.memory_space<vmem>> -> memref<1x128xf32, #tpu.memory_space<vmem>>
    %378 = tpu.memref_slice %arg18[%c0_i32_335] : memref<2x!tpu.dma_semaphore, #tpu.memory_space<semaphore_mem>> -> memref<1x!tpu.dma_semaphore, #tpu.memory_space<semaphore_mem>>
    %379 = tpu.memref_squeeze %378 : memref<1x!tpu.dma_semaphore, #tpu.memory_space<semaphore_mem>> -> memref<!tpu.dma_semaphore, #tpu.memory_space<semaphore_mem>>
    tpu.wait_dma2 semaphore(%379 : memref<!tpu.dma_semaphore, #tpu.memory_space<semaphore_mem>>) src(%376 : memref<1x128xf32, #tpu.memory_space<any>>) dst(%377 : memref<1x128xf32, #tpu.memory_space<vmem>>)
    %c0_i32_339 = arith.constant 0 : i32
    %c0_i32_340 = arith.constant 0 : i32
    %380 = tpu.memref_slice %arg0[%71, %c0_i32_340] : memref<32x128xf32, #tpu.memory_space<any>> -> memref<1x128xf32, #tpu.memory_space<any>>
    %c7_i32_341 = arith.constant 7 : i32
    %c128_i32_342 = arith.constant 128 : i32
    %381 = tpu.memref_slice %arg17[%c7_i32_341, %c128_i32_342] : memref<32x256xf32, #tpu.memory_space<vmem>> -> memref<1x128xf32, #tpu.memory_space<vmem>>
    %382 = tpu.memref_slice %arg18[%c0_i32_339] : memref<2x!tpu.dma_semaphore, #tpu.memory_space<semaphore_mem>> -> memref<1x!tpu.dma_semaphore, #tpu.memory_space<semaphore_mem>>
    %383 = tpu.memref_squeeze %382 : memref<1x!tpu.dma_semaphore, #tpu.memory_space<semaphore_mem>> -> memref<!tpu.dma_semaphore, #tpu.memory_space<semaphore_mem>>
    tpu.wait_dma2 semaphore(%383 : memref<!tpu.dma_semaphore, #tpu.memory_space<semaphore_mem>>) src(%380 : memref<1x128xf32, #tpu.memory_space<any>>) dst(%381 : memref<1x128xf32, #tpu.memory_space<vmem>>)
    %c0_i32_343 = arith.constant 0 : i32
    %c0_i32_344 = arith.constant 0 : i32
    %384 = tpu.memref_slice %arg1[%80, %c0_i32_344] : memref<32x128xf32, #tpu.memory_space<any>> -> memref<1x128xf32, #tpu.memory_space<any>>
    %c8_i32_345 = arith.constant 8 : i32
    %c0_i32_346 = arith.constant 0 : i32
    %385 = tpu.memref_slice %arg17[%c8_i32_345, %c0_i32_346] : memref<32x256xf32, #tpu.memory_space<vmem>> -> memref<1x128xf32, #tpu.memory_space<vmem>>
    %386 = tpu.memref_slice %arg18[%c0_i32_343] : memref<2x!tpu.dma_semaphore, #tpu.memory_space<semaphore_mem>> -> memref<1x!tpu.dma_semaphore, #tpu.memory_space<semaphore_mem>>
    %387 = tpu.memref_squeeze %386 : memref<1x!tpu.dma_semaphore, #tpu.memory_space<semaphore_mem>> -> memref<!tpu.dma_semaphore, #tpu.memory_space<semaphore_mem>>
    tpu.wait_dma2 semaphore(%387 : memref<!tpu.dma_semaphore, #tpu.memory_space<semaphore_mem>>) src(%384 : memref<1x128xf32, #tpu.memory_space<any>>) dst(%385 : memref<1x128xf32, #tpu.memory_space<vmem>>)
    %c0_i32_347 = arith.constant 0 : i32
    %c0_i32_348 = arith.constant 0 : i32
    %388 = tpu.memref_slice %arg1[%81, %c0_i32_348] : memref<32x128xf32, #tpu.memory_space<any>> -> memref<1x128xf32, #tpu.memory_space<any>>
    %c8_i32_349 = arith.constant 8 : i32
    %c128_i32_350 = arith.constant 128 : i32
    %389 = tpu.memref_slice %arg17[%c8_i32_349, %c128_i32_350] : memref<32x256xf32, #tpu.memory_space<vmem>> -> memref<1x128xf32, #tpu.memory_space<vmem>>
    %390 = tpu.memref_slice %arg18[%c0_i32_347] : memref<2x!tpu.dma_semaphore, #tpu.memory_space<semaphore_mem>> -> memref<1x!tpu.dma_semaphore, #tpu.memory_space<semaphore_mem>>
    %391 = tpu.memref_squeeze %390 : memref<1x!tpu.dma_semaphore, #tpu.memory_space<semaphore_mem>> -> memref<!tpu.dma_semaphore, #tpu.memory_space<semaphore_mem>>
    tpu.wait_dma2 semaphore(%391 : memref<!tpu.dma_semaphore, #tpu.memory_space<semaphore_mem>>) src(%388 : memref<1x128xf32, #tpu.memory_space<any>>) dst(%389 : memref<1x128xf32, #tpu.memory_space<vmem>>)
    %c0_i32_351 = arith.constant 0 : i32
    %c0_i32_352 = arith.constant 0 : i32
    %392 = tpu.memref_slice %arg1[%90, %c0_i32_352] : memref<32x128xf32, #tpu.memory_space<any>> -> memref<1x128xf32, #tpu.memory_space<any>>
    %c9_i32_353 = arith.constant 9 : i32
    %c0_i32_354 = arith.constant 0 : i32
    %393 = tpu.memref_slice %arg17[%c9_i32_353, %c0_i32_354] : memref<32x256xf32, #tpu.memory_space<vmem>> -> memref<1x128xf32, #tpu.memory_space<vmem>>
    %394 = tpu.memref_slice %arg18[%c0_i32_351] : memref<2x!tpu.dma_semaphore, #tpu.memory_space<semaphore_mem>> -> memref<1x!tpu.dma_semaphore, #tpu.memory_space<semaphore_mem>>
    %395 = tpu.memref_squeeze %394 : memref<1x!tpu.dma_semaphore, #tpu.memory_space<semaphore_mem>> -> memref<!tpu.dma_semaphore, #tpu.memory_space<semaphore_mem>>
    tpu.wait_dma2 semaphore(%395 : memref<!tpu.dma_semaphore, #tpu.memory_space<semaphore_mem>>) src(%392 : memref<1x128xf32, #tpu.memory_space<any>>) dst(%393 : memref<1x128xf32, #tpu.memory_space<vmem>>)
    %c0_i32_355 = arith.constant 0 : i32
    %c0_i32_356 = arith.constant 0 : i32
    %396 = tpu.memref_slice %arg1[%91, %c0_i32_356] : memref<32x128xf32, #tpu.memory_space<any>> -> memref<1x128xf32, #tpu.memory_space<any>>
    %c9_i32_357 = arith.constant 9 : i32
    %c128_i32_358 = arith.constant 128 : i32
    %397 = tpu.memref_slice %arg17[%c9_i32_357, %c128_i32_358] : memref<32x256xf32, #tpu.memory_space<vmem>> -> memref<1x128xf32, #tpu.memory_space<vmem>>
    %398 = tpu.memref_slice %arg18[%c0_i32_355] : memref<2x!tpu.dma_semaphore, #tpu.memory_space<semaphore_mem>> -> memref<1x!tpu.dma_semaphore, #tpu.memory_space<semaphore_mem>>
    %399 = tpu.memref_squeeze %398 : memref<1x!tpu.dma_semaphore, #tpu.memory_space<semaphore_mem>> -> memref<!tpu.dma_semaphore, #tpu.memory_space<semaphore_mem>>
    tpu.wait_dma2 semaphore(%399 : memref<!tpu.dma_semaphore, #tpu.memory_space<semaphore_mem>>) src(%396 : memref<1x128xf32, #tpu.memory_space<any>>) dst(%397 : memref<1x128xf32, #tpu.memory_space<vmem>>)
    %c0_i32_359 = arith.constant 0 : i32
    %c0_i32_360 = arith.constant 0 : i32
    %400 = tpu.memref_slice %arg1[%100, %c0_i32_360] : memref<32x128xf32, #tpu.memory_space<any>> -> memref<1x128xf32, #tpu.memory_space<any>>
    %c10_i32_361 = arith.constant 10 : i32
    %c0_i32_362 = arith.constant 0 : i32
    %401 = tpu.memref_slice %arg17[%c10_i32_361, %c0_i32_362] : memref<32x256xf32, #tpu.memory_space<vmem>> -> memref<1x128xf32, #tpu.memory_space<vmem>>
    %402 = tpu.memref_slice %arg18[%c0_i32_359] : memref<2x!tpu.dma_semaphore, #tpu.memory_space<semaphore_mem>> -> memref<1x!tpu.dma_semaphore, #tpu.memory_space<semaphore_mem>>
    %403 = tpu.memref_squeeze %402 : memref<1x!tpu.dma_semaphore, #tpu.memory_space<semaphore_mem>> -> memref<!tpu.dma_semaphore, #tpu.memory_space<semaphore_mem>>
    tpu.wait_dma2 semaphore(%403 : memref<!tpu.dma_semaphore, #tpu.memory_space<semaphore_mem>>) src(%400 : memref<1x128xf32, #tpu.memory_space<any>>) dst(%401 : memref<1x128xf32, #tpu.memory_space<vmem>>)
    %c0_i32_363 = arith.constant 0 : i32
    %c0_i32_364 = arith.constant 0 : i32
    %404 = tpu.memref_slice %arg1[%101, %c0_i32_364] : memref<32x128xf32, #tpu.memory_space<any>> -> memref<1x128xf32, #tpu.memory_space<any>>
    %c10_i32_365 = arith.constant 10 : i32
    %c128_i32_366 = arith.constant 128 : i32
    %405 = tpu.memref_slice %arg17[%c10_i32_365, %c128_i32_366] : memref<32x256xf32, #tpu.memory_space<vmem>> -> memref<1x128xf32, #tpu.memory_space<vmem>>
    %406 = tpu.memref_slice %arg18[%c0_i32_363] : memref<2x!tpu.dma_semaphore, #tpu.memory_space<semaphore_mem>> -> memref<1x!tpu.dma_semaphore, #tpu.memory_space<semaphore_mem>>
    %407 = tpu.memref_squeeze %406 : memref<1x!tpu.dma_semaphore, #tpu.memory_space<semaphore_mem>> -> memref<!tpu.dma_semaphore, #tpu.memory_space<semaphore_mem>>
    tpu.wait_dma2 semaphore(%407 : memref<!tpu.dma_semaphore, #tpu.memory_space<semaphore_mem>>) src(%404 : memref<1x128xf32, #tpu.memory_space<any>>) dst(%405 : memref<1x128xf32, #tpu.memory_space<vmem>>)
    %c0_i32_367 = arith.constant 0 : i32
    %c0_i32_368 = arith.constant 0 : i32
    %408 = tpu.memref_slice %arg1[%110, %c0_i32_368] : memref<32x128xf32, #tpu.memory_space<any>> -> memref<1x128xf32, #tpu.memory_space<any>>
    %c11_i32_369 = arith.constant 11 : i32
    %c0_i32_370 = arith.constant 0 : i32
    %409 = tpu.memref_slice %arg17[%c11_i32_369, %c0_i32_370] : memref<32x256xf32, #tpu.memory_space<vmem>> -> memref<1x128xf32, #tpu.memory_space<vmem>>
    %410 = tpu.memref_slice %arg18[%c0_i32_367] : memref<2x!tpu.dma_semaphore, #tpu.memory_space<semaphore_mem>> -> memref<1x!tpu.dma_semaphore, #tpu.memory_space<semaphore_mem>>
    %411 = tpu.memref_squeeze %410 : memref<1x!tpu.dma_semaphore, #tpu.memory_space<semaphore_mem>> -> memref<!tpu.dma_semaphore, #tpu.memory_space<semaphore_mem>>
    tpu.wait_dma2 semaphore(%411 : memref<!tpu.dma_semaphore, #tpu.memory_space<semaphore_mem>>) src(%408 : memref<1x128xf32, #tpu.memory_space<any>>) dst(%409 : memref<1x128xf32, #tpu.memory_space<vmem>>)
    %c0_i32_371 = arith.constant 0 : i32
    %c0_i32_372 = arith.constant 0 : i32
    %412 = tpu.memref_slice %arg1[%111, %c0_i32_372] : memref<32x128xf32, #tpu.memory_space<any>> -> memref<1x128xf32, #tpu.memory_space<any>>
    %c11_i32_373 = arith.constant 11 : i32
    %c128_i32_374 = arith.constant 128 : i32
    %413 = tpu.memref_slice %arg17[%c11_i32_373, %c128_i32_374] : memref<32x256xf32, #tpu.memory_space<vmem>> -> memref<1x128xf32, #tpu.memory_space<vmem>>
    %414 = tpu.memref_slice %arg18[%c0_i32_371] : memref<2x!tpu.dma_semaphore, #tpu.memory_space<semaphore_mem>> -> memref<1x!tpu.dma_semaphore, #tpu.memory_space<semaphore_mem>>
    %415 = tpu.memref_squeeze %414 : memref<1x!tpu.dma_semaphore, #tpu.memory_space<semaphore_mem>> -> memref<!tpu.dma_semaphore, #tpu.memory_space<semaphore_mem>>
    tpu.wait_dma2 semaphore(%415 : memref<!tpu.dma_semaphore, #tpu.memory_space<semaphore_mem>>) src(%412 : memref<1x128xf32, #tpu.memory_space<any>>) dst(%413 : memref<1x128xf32, #tpu.memory_space<vmem>>)
    %c0_i32_375 = arith.constant 0 : i32
    %c0_i32_376 = arith.constant 0 : i32
    %416 = tpu.memref_slice %arg1[%120, %c0_i32_376] : memref<32x128xf32, #tpu.memory_space<any>> -> memref<1x128xf32, #tpu.memory_space<any>>
    %c12_i32_377 = arith.constant 12 : i32
    %c0_i32_378 = arith.constant 0 : i32
    %417 = tpu.memref_slice %arg17[%c12_i32_377, %c0_i32_378] : memref<32x256xf32, #tpu.memory_space<vmem>> -> memref<1x128xf32, #tpu.memory_space<vmem>>
    %418 = tpu.memref_slice %arg18[%c0_i32_375] : memref<2x!tpu.dma_semaphore, #tpu.memory_space<semaphore_mem>> -> memref<1x!tpu.dma_semaphore, #tpu.memory_space<semaphore_mem>>
    %419 = tpu.memref_squeeze %418 : memref<1x!tpu.dma_semaphore, #tpu.memory_space<semaphore_mem>> -> memref<!tpu.dma_semaphore, #tpu.memory_space<semaphore_mem>>
    tpu.wait_dma2 semaphore(%419 : memref<!tpu.dma_semaphore, #tpu.memory_space<semaphore_mem>>) src(%416 : memref<1x128xf32, #tpu.memory_space<any>>) dst(%417 : memref<1x128xf32, #tpu.memory_space<vmem>>)
    %c0_i32_379 = arith.constant 0 : i32
    %c0_i32_380 = arith.constant 0 : i32
    %420 = tpu.memref_slice %arg1[%121, %c0_i32_380] : memref<32x128xf32, #tpu.memory_space<any>> -> memref<1x128xf32, #tpu.memory_space<any>>
    %c12_i32_381 = arith.constant 12 : i32
    %c128_i32_382 = arith.constant 128 : i32
    %421 = tpu.memref_slice %arg17[%c12_i32_381, %c128_i32_382] : memref<32x256xf32, #tpu.memory_space<vmem>> -> memref<1x128xf32, #tpu.memory_space<vmem>>
    %422 = tpu.memref_slice %arg18[%c0_i32_379] : memref<2x!tpu.dma_semaphore, #tpu.memory_space<semaphore_mem>> -> memref<1x!tpu.dma_semaphore, #tpu.memory_space<semaphore_mem>>
    %423 = tpu.memref_squeeze %422 : memref<1x!tpu.dma_semaphore, #tpu.memory_space<semaphore_mem>> -> memref<!tpu.dma_semaphore, #tpu.memory_space<semaphore_mem>>
    tpu.wait_dma2 semaphore(%423 : memref<!tpu.dma_semaphore, #tpu.memory_space<semaphore_mem>>) src(%420 : memref<1x128xf32, #tpu.memory_space<any>>) dst(%421 : memref<1x128xf32, #tpu.memory_space<vmem>>)
    %c0_i32_383 = arith.constant 0 : i32
    %c0_i32_384 = arith.constant 0 : i32
    %424 = tpu.memref_slice %arg1[%130, %c0_i32_384] : memref<32x128xf32, #tpu.memory_space<any>> -> memref<1x128xf32, #tpu.memory_space<any>>
    %c13_i32_385 = arith.constant 13 : i32
    %c0_i32_386 = arith.constant 0 : i32
    %425 = tpu.memref_slice %arg17[%c13_i32_385, %c0_i32_386] : memref<32x256xf32, #tpu.memory_space<vmem>> -> memref<1x128xf32, #tpu.memory_space<vmem>>
    %426 = tpu.memref_slice %arg18[%c0_i32_383] : memref<2x!tpu.dma_semaphore, #tpu.memory_space<semaphore_mem>> -> memref<1x!tpu.dma_semaphore, #tpu.memory_space<semaphore_mem>>
    %427 = tpu.memref_squeeze %426 : memref<1x!tpu.dma_semaphore, #tpu.memory_space<semaphore_mem>> -> memref<!tpu.dma_semaphore, #tpu.memory_space<semaphore_mem>>
    tpu.wait_dma2 semaphore(%427 : memref<!tpu.dma_semaphore, #tpu.memory_space<semaphore_mem>>) src(%424 : memref<1x128xf32, #tpu.memory_space<any>>) dst(%425 : memref<1x128xf32, #tpu.memory_space<vmem>>)
    %c0_i32_387 = arith.constant 0 : i32
    %c0_i32_388 = arith.constant 0 : i32
    %428 = tpu.memref_slice %arg1[%131, %c0_i32_388] : memref<32x128xf32, #tpu.memory_space<any>> -> memref<1x128xf32, #tpu.memory_space<any>>
    %c13_i32_389 = arith.constant 13 : i32
    %c128_i32_390 = arith.constant 128 : i32
    %429 = tpu.memref_slice %arg17[%c13_i32_389, %c128_i32_390] : memref<32x256xf32, #tpu.memory_space<vmem>> -> memref<1x128xf32, #tpu.memory_space<vmem>>
    %430 = tpu.memref_slice %arg18[%c0_i32_387] : memref<2x!tpu.dma_semaphore, #tpu.memory_space<semaphore_mem>> -> memref<1x!tpu.dma_semaphore, #tpu.memory_space<semaphore_mem>>
    %431 = tpu.memref_squeeze %430 : memref<1x!tpu.dma_semaphore, #tpu.memory_space<semaphore_mem>> -> memref<!tpu.dma_semaphore, #tpu.memory_space<semaphore_mem>>
    tpu.wait_dma2 semaphore(%431 : memref<!tpu.dma_semaphore, #tpu.memory_space<semaphore_mem>>) src(%428 : memref<1x128xf32, #tpu.memory_space<any>>) dst(%429 : memref<1x128xf32, #tpu.memory_space<vmem>>)
    %c0_i32_391 = arith.constant 0 : i32
    %c0_i32_392 = arith.constant 0 : i32
    %432 = tpu.memref_slice %arg1[%140, %c0_i32_392] : memref<32x128xf32, #tpu.memory_space<any>> -> memref<1x128xf32, #tpu.memory_space<any>>
    %c14_i32_393 = arith.constant 14 : i32
    %c0_i32_394 = arith.constant 0 : i32
    %433 = tpu.memref_slice %arg17[%c14_i32_393, %c0_i32_394] : memref<32x256xf32, #tpu.memory_space<vmem>> -> memref<1x128xf32, #tpu.memory_space<vmem>>
    %434 = tpu.memref_slice %arg18[%c0_i32_391] : memref<2x!tpu.dma_semaphore, #tpu.memory_space<semaphore_mem>> -> memref<1x!tpu.dma_semaphore, #tpu.memory_space<semaphore_mem>>
    %435 = tpu.memref_squeeze %434 : memref<1x!tpu.dma_semaphore, #tpu.memory_space<semaphore_mem>> -> memref<!tpu.dma_semaphore, #tpu.memory_space<semaphore_mem>>
    tpu.wait_dma2 semaphore(%435 : memref<!tpu.dma_semaphore, #tpu.memory_space<semaphore_mem>>) src(%432 : memref<1x128xf32, #tpu.memory_space<any>>) dst(%433 : memref<1x128xf32, #tpu.memory_space<vmem>>)
    %c0_i32_395 = arith.constant 0 : i32
    %c0_i32_396 = arith.constant 0 : i32
    %436 = tpu.memref_slice %arg1[%141, %c0_i32_396] : memref<32x128xf32, #tpu.memory_space<any>> -> memref<1x128xf32, #tpu.memory_space<any>>
    %c14_i32_397 = arith.constant 14 : i32
    %c128_i32_398 = arith.constant 128 : i32
    %437 = tpu.memref_slice %arg17[%c14_i32_397, %c128_i32_398] : memref<32x256xf32, #tpu.memory_space<vmem>> -> memref<1x128xf32, #tpu.memory_space<vmem>>
    %438 = tpu.memref_slice %arg18[%c0_i32_395] : memref<2x!tpu.dma_semaphore, #tpu.memory_space<semaphore_mem>> -> memref<1x!tpu.dma_semaphore, #tpu.memory_space<semaphore_mem>>
    %439 = tpu.memref_squeeze %438 : memref<1x!tpu.dma_semaphore, #tpu.memory_space<semaphore_mem>> -> memref<!tpu.dma_semaphore, #tpu.memory_space<semaphore_mem>>
    tpu.wait_dma2 semaphore(%439 : memref<!tpu.dma_semaphore, #tpu.memory_space<semaphore_mem>>) src(%436 : memref<1x128xf32, #tpu.memory_space<any>>) dst(%437 : memref<1x128xf32, #tpu.memory_space<vmem>>)
    %c0_i32_399 = arith.constant 0 : i32
    %c0_i32_400 = arith.constant 0 : i32
    %440 = tpu.memref_slice %arg1[%150, %c0_i32_400] : memref<32x128xf32, #tpu.memory_space<any>> -> memref<1x128xf32, #tpu.memory_space<any>>
    %c15_i32_401 = arith.constant 15 : i32
    %c0_i32_402 = arith.constant 0 : i32
    %441 = tpu.memref_slice %arg17[%c15_i32_401, %c0_i32_402] : memref<32x256xf32, #tpu.memory_space<vmem>> -> memref<1x128xf32, #tpu.memory_space<vmem>>
    %442 = tpu.memref_slice %arg18[%c0_i32_399] : memref<2x!tpu.dma_semaphore, #tpu.memory_space<semaphore_mem>> -> memref<1x!tpu.dma_semaphore, #tpu.memory_space<semaphore_mem>>
    %443 = tpu.memref_squeeze %442 : memref<1x!tpu.dma_semaphore, #tpu.memory_space<semaphore_mem>> -> memref<!tpu.dma_semaphore, #tpu.memory_space<semaphore_mem>>
    tpu.wait_dma2 semaphore(%443 : memref<!tpu.dma_semaphore, #tpu.memory_space<semaphore_mem>>) src(%440 : memref<1x128xf32, #tpu.memory_space<any>>) dst(%441 : memref<1x128xf32, #tpu.memory_space<vmem>>)
    %c0_i32_403 = arith.constant 0 : i32
    %c0_i32_404 = arith.constant 0 : i32
    %444 = tpu.memref_slice %arg1[%151, %c0_i32_404] : memref<32x128xf32, #tpu.memory_space<any>> -> memref<1x128xf32, #tpu.memory_space<any>>
    %c15_i32_405 = arith.constant 15 : i32
    %c128_i32_406 = arith.constant 128 : i32
    %445 = tpu.memref_slice %arg17[%c15_i32_405, %c128_i32_406] : memref<32x256xf32, #tpu.memory_space<vmem>> -> memref<1x128xf32, #tpu.memory_space<vmem>>
    %446 = tpu.memref_slice %arg18[%c0_i32_403] : memref<2x!tpu.dma_semaphore, #tpu.memory_space<semaphore_mem>> -> memref<1x!tpu.dma_semaphore, #tpu.memory_space<semaphore_mem>>
    %447 = tpu.memref_squeeze %446 : memref<1x!tpu.dma_semaphore, #tpu.memory_space<semaphore_mem>> -> memref<!tpu.dma_semaphore, #tpu.memory_space<semaphore_mem>>
    tpu.wait_dma2 semaphore(%447 : memref<!tpu.dma_semaphore, #tpu.memory_space<semaphore_mem>>) src(%444 : memref<1x128xf32, #tpu.memory_space<any>>) dst(%445 : memref<1x128xf32, #tpu.memory_space<vmem>>)
    %c0_407 = arith.constant 0 : index
    %c0_408 = arith.constant 0 : index
    %448 = vector.load %arg17[%c0_407, %c0_408] : memref<32x256xf32, #tpu.memory_space<vmem>>, vector<16x256xf32>
    %449 = arith.truncf %448 : vector<16x256xf32> to vector<16x256xbf16>
    %c0_409 = arith.constant 0 : index
    %c0_410 = arith.constant 0 : index
    %450 = vector.load %arg2[%c0_409, %c0_410] : memref<256x128xbf16, #tpu.memory_space<vmem>>, vector<256x128xbf16>
    %cst = arith.constant dense<0.000000e+00> : vector<16x128xf32>
    %451 = tpu.matmul %449, %450, %cst {dimension_numbers = #tpu.dot_dimension_numbers<[1], [0], [0], [1], [0, 0, 1, 1], [], []>} : vector<16x256xbf16>, vector<256x128xbf16>, vector<16x128xf32> -> vector<16x128xf32>
    %c0_411 = arith.constant 0 : index
    %c0_412 = arith.constant 0 : index
    %452 = vector.load %arg3[%c0_411, %c0_412] : memref<1x128xf32, #tpu.memory_space<vmem>>, vector<1x128xf32>
    %453 = vector.broadcast %452 : vector<1x128xf32> to vector<16x128xf32>
    %454 = arith.addf %451, %453 : vector<16x128xf32>
    %455 = tpu.iota {dimensions = array<i32: 1>} : vector<16x128xi32>
    %c32_i32 = arith.constant 32 : i32
    %456 = vector.broadcast %c32_i32 : i32 to vector<16x128xi32>
    %457 = arith.cmpi slt, %455, %456 : vector<16x128xi32>
    %cst_413 = arith.constant 0.000000e+00 : f32
    %458 = vector.broadcast %cst_413 : f32 to vector<16x128xf32>
    %459 = arith.select %457, %454, %458 : vector<16x128xi1>, vector<16x128xf32>
    %460 = arith.truncf %459 : vector<16x128xf32> to vector<16x128xbf16>
    %461 = vector.extract_strided_slice %460 {offsets = [0, 0], sizes = [8, 128], strides = [1, 1]} : vector<16x128xbf16> to vector<8x128xbf16>
    %462 = vector.extract_strided_slice %460 {offsets = [8, 0], sizes = [8, 128], strides = [1, 1]} : vector<16x128xbf16> to vector<8x128xbf16>
    %463 = vector.extract_strided_slice %461 {offsets = [0, 0], sizes = [6, 128], strides = [1, 1]} : vector<8x128xbf16> to vector<6x128xbf16>
    %464 = vector.extract_strided_slice %461 {offsets = [6, 0], sizes = [2, 128], strides = [1, 1]} : vector<8x128xbf16> to vector<2x128xbf16>
    %c0_414 = arith.constant 0 : index
    %c0_415 = arith.constant 0 : index
    %465 = vector.load %arg4[%c0_414, %c0_415] : memref<6x1xi32, #tpu.memory_space<vmem>>, vector<6x1xi32>
    %cst_416 = arith.constant dense<0.000000e+00> : vector<6x8xf32>
    %466 = tpu.matmul %463, %462, %cst_416 {dimension_numbers = #tpu.dot_dimension_numbers<[1], [1], [0], [0], [0, 0, 1, 0], [], []>} : vector<6x128xbf16>, vector<8x128xbf16>, vector<6x8xf32> -> vector<6x8xf32>
    %467 = tpu.iota {dimensions = array<i32: 1>} : vector<6x8xi32>
    %468 = vector.broadcast %465 : vector<6x1xi32> to vector<6x8xi32>
    %469 = arith.cmpi eq, %467, %468 : vector<6x8xi32>
    %cst_417 = arith.constant 0.000000e+00 : f32
    %470 = vector.broadcast %cst_417 : f32 to vector<6x8xf32>
    %471 = arith.select %469, %466, %470 : vector<6x8xi1>, vector<6x8xf32>
    %cst_418 = arith.constant dense<0.000000e+00> : vector<6xf32>
    %472 = vector.multi_reduction <add>, %471, %cst_418 [1] : vector<6x8xf32> to vector<6xf32>
    %473 = vector.shape_cast %472 : vector<6xf32> to vector<6x1xf32>
    %cst_419 = arith.constant dense<0xFF800000> : vector<6xf32>
    %474 = vector.multi_reduction <maximumf>, %466, %cst_419 [1] : vector<6x8xf32> to vector<6xf32>
    %475 = vector.shape_cast %474 : vector<6xf32> to vector<6x1xf32>
    %cst_420 = arith.constant dense<0.000000e+00> : vector<6x2xf32>
    %476 = tpu.matmul %463, %464, %cst_420 {dimension_numbers = #tpu.dot_dimension_numbers<[1], [1], [0], [0], [0, 0, 1, 0], [], []>} : vector<6x128xbf16>, vector<2x128xbf16>, vector<6x2xf32> -> vector<6x2xf32>
    %477 = tpu.iota {dimensions = array<i32: 1>} : vector<6x2xi32>
    %c8_i32_421 = arith.constant 8 : i32
    %478 = vector.broadcast %c8_i32_421 : i32 to vector<6x1xi32>
    %479 = arith.subi %465, %478 : vector<6x1xi32>
    %480 = vector.broadcast %479 : vector<6x1xi32> to vector<6x2xi32>
    %481 = arith.cmpi eq, %477, %480 : vector<6x2xi32>
    %cst_422 = arith.constant 0.000000e+00 : f32
    %482 = vector.broadcast %cst_422 : f32 to vector<6x2xf32>
    %483 = arith.select %481, %476, %482 : vector<6x2xi1>, vector<6x2xf32>
    %cst_423 = arith.constant dense<0.000000e+00> : vector<6xf32>
    %484 = vector.multi_reduction <add>, %483, %cst_423 [1] : vector<6x2xf32> to vector<6xf32>
    %485 = vector.shape_cast %484 : vector<6xf32> to vector<6x1xf32>
    %486 = arith.addf %473, %485 : vector<6x1xf32>
    %cst_424 = arith.constant dense<0xFF800000> : vector<6xf32>
    %487 = vector.multi_reduction <maximumf>, %476, %cst_424 [1] : vector<6x2xf32> to vector<6xf32>
    %488 = vector.shape_cast %487 : vector<6xf32> to vector<6x1xf32>
    %489 = arith.maximumf %475, %488 : vector<6x1xf32>
    %490 = vector.broadcast %489 : vector<6x1xf32> to vector<6x8xf32>
    %491 = arith.subf %466, %490 : vector<6x8xf32>
    %492 = math.exp %491 : vector<6x8xf32>
    %cst_425 = arith.constant dense<0.000000e+00> : vector<6xf32>
    %493 = vector.multi_reduction <add>, %492, %cst_425 [1] : vector<6x8xf32> to vector<6xf32>
    %494 = vector.shape_cast %493 : vector<6xf32> to vector<6x1xf32>
    %495 = vector.broadcast %489 : vector<6x1xf32> to vector<6x2xf32>
    %496 = arith.subf %476, %495 : vector<6x2xf32>
    %497 = math.exp %496 : vector<6x2xf32>
    %cst_426 = arith.constant dense<0.000000e+00> : vector<6xf32>
    %498 = vector.multi_reduction <add>, %497, %cst_426 [1] : vector<6x2xf32> to vector<6xf32>
    %499 = vector.shape_cast %498 : vector<6xf32> to vector<6x1xf32>
    %500 = arith.addf %494, %499 : vector<6x1xf32>
    %501 = math.log %500 : vector<6x1xf32>
    %502 = arith.addf %501, %489 : vector<6x1xf32>
    %503 = arith.subf %502, %486 : vector<6x1xf32>
    %504 = vector.shape_cast %503 : vector<6x1xf32> to vector<1x6x1xf32>
    %cst_427 = arith.constant dense<0.000000e+00> : vector<1xf32>
    %505 = vector.multi_reduction <add>, %504, %cst_427 [1, 2] : vector<1x6x1xf32> to vector<1xf32>
    %506 = vector.shape_cast %505 : vector<1xf32> to vector<1x1x1xf32>
    %507 = vector.extract %506[0, 0, 0] : f32 from vector<1x1x1xf32>
    %cst_428 = arith.constant 6.000000e+00 : f32
    %508 = arith.divf %507, %cst_428 : f32
    %509 = vector.extract_strided_slice %462 {offsets = [0, 0], sizes = [6, 128], strides = [1, 1]} : vector<8x128xbf16> to vector<6x128xbf16>
    %510 = vector.extract_strided_slice %462 {offsets = [6, 0], sizes = [2, 128], strides = [1, 1]} : vector<8x128xbf16> to vector<2x128xbf16>
    %c0_429 = arith.constant 0 : index
    %c0_430 = arith.constant 0 : index
    %511 = vector.load %arg5[%c0_429, %c0_430] : memref<6x1xi32, #tpu.memory_space<vmem>>, vector<6x1xi32>
    %cst_431 = arith.constant dense<0.000000e+00> : vector<6x8xf32>
    %512 = tpu.matmul %509, %461, %cst_431 {dimension_numbers = #tpu.dot_dimension_numbers<[1], [1], [0], [0], [0, 0, 1, 0], [], []>} : vector<6x128xbf16>, vector<8x128xbf16>, vector<6x8xf32> -> vector<6x8xf32>
    %513 = tpu.iota {dimensions = array<i32: 1>} : vector<6x8xi32>
    %514 = vector.broadcast %511 : vector<6x1xi32> to vector<6x8xi32>
    %515 = arith.cmpi eq, %513, %514 : vector<6x8xi32>
    %cst_432 = arith.constant 0.000000e+00 : f32
    %516 = vector.broadcast %cst_432 : f32 to vector<6x8xf32>
    %517 = arith.select %515, %512, %516 : vector<6x8xi1>, vector<6x8xf32>
    %cst_433 = arith.constant dense<0.000000e+00> : vector<6xf32>
    %518 = vector.multi_reduction <add>, %517, %cst_433 [1] : vector<6x8xf32> to vector<6xf32>
    %519 = vector.shape_cast %518 : vector<6xf32> to vector<6x1xf32>
    %cst_434 = arith.constant dense<0xFF800000> : vector<6xf32>
    %520 = vector.multi_reduction <maximumf>, %512, %cst_434 [1] : vector<6x8xf32> to vector<6xf32>
    %521 = vector.shape_cast %520 : vector<6xf32> to vector<6x1xf32>
    %cst_435 = arith.constant dense<0.000000e+00> : vector<6x2xf32>
    %522 = tpu.matmul %509, %510, %cst_435 {dimension_numbers = #tpu.dot_dimension_numbers<[1], [1], [0], [0], [0, 0, 1, 0], [], []>} : vector<6x128xbf16>, vector<2x128xbf16>, vector<6x2xf32> -> vector<6x2xf32>
    %523 = tpu.iota {dimensions = array<i32: 1>} : vector<6x2xi32>
    %c8_i32_436 = arith.constant 8 : i32
    %524 = vector.broadcast %c8_i32_436 : i32 to vector<6x1xi32>
    %525 = arith.subi %511, %524 : vector<6x1xi32>
    %526 = vector.broadcast %525 : vector<6x1xi32> to vector<6x2xi32>
    %527 = arith.cmpi eq, %523, %526 : vector<6x2xi32>
    %cst_437 = arith.constant 0.000000e+00 : f32
    %528 = vector.broadcast %cst_437 : f32 to vector<6x2xf32>
    %529 = arith.select %527, %522, %528 : vector<6x2xi1>, vector<6x2xf32>
    %cst_438 = arith.constant dense<0.000000e+00> : vector<6xf32>
    %530 = vector.multi_reduction <add>, %529, %cst_438 [1] : vector<6x2xf32> to vector<6xf32>
    %531 = vector.shape_cast %530 : vector<6xf32> to vector<6x1xf32>
    %532 = arith.addf %519, %531 : vector<6x1xf32>
    %cst_439 = arith.constant dense<0xFF800000> : vector<6xf32>
    %533 = vector.multi_reduction <maximumf>, %522, %cst_439 [1] : vector<6x2xf32> to vector<6xf32>
    %534 = vector.shape_cast %533 : vector<6xf32> to vector<6x1xf32>
    %535 = arith.maximumf %521, %534 : vector<6x1xf32>
    %536 = vector.broadcast %535 : vector<6x1xf32> to vector<6x8xf32>
    %537 = arith.subf %512, %536 : vector<6x8xf32>
    %538 = math.exp %537 : vector<6x8xf32>
    %cst_440 = arith.constant dense<0.000000e+00> : vector<6xf32>
    %539 = vector.multi_reduction <add>, %538, %cst_440 [1] : vector<6x8xf32> to vector<6xf32>
    %540 = vector.shape_cast %539 : vector<6xf32> to vector<6x1xf32>
    %541 = vector.broadcast %535 : vector<6x1xf32> to vector<6x2xf32>
    %542 = arith.subf %522, %541 : vector<6x2xf32>
    %543 = math.exp %542 : vector<6x2xf32>
    %cst_441 = arith.constant dense<0.000000e+00> : vector<6xf32>
    %544 = vector.multi_reduction <add>, %543, %cst_441 [1] : vector<6x2xf32> to vector<6xf32>
    %545 = vector.shape_cast %544 : vector<6xf32> to vector<6x1xf32>
    %546 = arith.addf %540, %545 : vector<6x1xf32>
    %547 = math.log %546 : vector<6x1xf32>
    %548 = arith.addf %547, %535 : vector<6x1xf32>
    %549 = arith.subf %548, %532 : vector<6x1xf32>
    %550 = vector.shape_cast %549 : vector<6x1xf32> to vector<1x6x1xf32>
    %cst_442 = arith.constant dense<0.000000e+00> : vector<1xf32>
    %551 = vector.multi_reduction <add>, %550, %cst_442 [1, 2] : vector<1x6x1xf32> to vector<1xf32>
    %552 = vector.shape_cast %551 : vector<1xf32> to vector<1x1x1xf32>
    %553 = vector.extract %552[0, 0, 0] : f32 from vector<1x1x1xf32>
    %cst_443 = arith.constant 6.000000e+00 : f32
    %554 = arith.divf %553, %cst_443 : f32
    %c1_i32_444 = arith.constant 1 : i32
    %c0_i32_445 = arith.constant 0 : i32
    %555 = tpu.memref_slice %arg0[%160, %c0_i32_445] : memref<32x128xf32, #tpu.memory_space<any>> -> memref<1x128xf32, #tpu.memory_space<any>>
    %c16_i32_446 = arith.constant 16 : i32
    %c0_i32_447 = arith.constant 0 : i32
    %556 = tpu.memref_slice %arg17[%c16_i32_446, %c0_i32_447] : memref<32x256xf32, #tpu.memory_space<vmem>> -> memref<1x128xf32, #tpu.memory_space<vmem>>
    %557 = tpu.memref_slice %arg18[%c1_i32_444] : memref<2x!tpu.dma_semaphore, #tpu.memory_space<semaphore_mem>> -> memref<1x!tpu.dma_semaphore, #tpu.memory_space<semaphore_mem>>
    %558 = tpu.memref_squeeze %557 : memref<1x!tpu.dma_semaphore, #tpu.memory_space<semaphore_mem>> -> memref<!tpu.dma_semaphore, #tpu.memory_space<semaphore_mem>>
    tpu.wait_dma2 semaphore(%558 : memref<!tpu.dma_semaphore, #tpu.memory_space<semaphore_mem>>) src(%555 : memref<1x128xf32, #tpu.memory_space<any>>) dst(%556 : memref<1x128xf32, #tpu.memory_space<vmem>>)
    %c1_i32_448 = arith.constant 1 : i32
    %c0_i32_449 = arith.constant 0 : i32
    %559 = tpu.memref_slice %arg0[%161, %c0_i32_449] : memref<32x128xf32, #tpu.memory_space<any>> -> memref<1x128xf32, #tpu.memory_space<any>>
    %c16_i32_450 = arith.constant 16 : i32
    %c128_i32_451 = arith.constant 128 : i32
    %560 = tpu.memref_slice %arg17[%c16_i32_450, %c128_i32_451] : memref<32x256xf32, #tpu.memory_space<vmem>> -> memref<1x128xf32, #tpu.memory_space<vmem>>
    %561 = tpu.memref_slice %arg18[%c1_i32_448] : memref<2x!tpu.dma_semaphore, #tpu.memory_space<semaphore_mem>> -> memref<1x!tpu.dma_semaphore, #tpu.memory_space<semaphore_mem>>
    %562 = tpu.memref_squeeze %561 : memref<1x!tpu.dma_semaphore, #tpu.memory_space<semaphore_mem>> -> memref<!tpu.dma_semaphore, #tpu.memory_space<semaphore_mem>>
    tpu.wait_dma2 semaphore(%562 : memref<!tpu.dma_semaphore, #tpu.memory_space<semaphore_mem>>) src(%559 : memref<1x128xf32, #tpu.memory_space<any>>) dst(%560 : memref<1x128xf32, #tpu.memory_space<vmem>>)
    %c1_i32_452 = arith.constant 1 : i32
    %c0_i32_453 = arith.constant 0 : i32
    %563 = tpu.memref_slice %arg0[%170, %c0_i32_453] : memref<32x128xf32, #tpu.memory_space<any>> -> memref<1x128xf32, #tpu.memory_space<any>>
    %c17_i32_454 = arith.constant 17 : i32
    %c0_i32_455 = arith.constant 0 : i32
    %564 = tpu.memref_slice %arg17[%c17_i32_454, %c0_i32_455] : memref<32x256xf32, #tpu.memory_space<vmem>> -> memref<1x128xf32, #tpu.memory_space<vmem>>
    %565 = tpu.memref_slice %arg18[%c1_i32_452] : memref<2x!tpu.dma_semaphore, #tpu.memory_space<semaphore_mem>> -> memref<1x!tpu.dma_semaphore, #tpu.memory_space<semaphore_mem>>
    %566 = tpu.memref_squeeze %565 : memref<1x!tpu.dma_semaphore, #tpu.memory_space<semaphore_mem>> -> memref<!tpu.dma_semaphore, #tpu.memory_space<semaphore_mem>>
    tpu.wait_dma2 semaphore(%566 : memref<!tpu.dma_semaphore, #tpu.memory_space<semaphore_mem>>) src(%563 : memref<1x128xf32, #tpu.memory_space<any>>) dst(%564 : memref<1x128xf32, #tpu.memory_space<vmem>>)
    %c1_i32_456 = arith.constant 1 : i32
    %c0_i32_457 = arith.constant 0 : i32
    %567 = tpu.memref_slice %arg0[%171, %c0_i32_457] : memref<32x128xf32, #tpu.memory_space<any>> -> memref<1x128xf32, #tpu.memory_space<any>>
    %c17_i32_458 = arith.constant 17 : i32
    %c128_i32_459 = arith.constant 128 : i32
    %568 = tpu.memref_slice %arg17[%c17_i32_458, %c128_i32_459] : memref<32x256xf32, #tpu.memory_space<vmem>> -> memref<1x128xf32, #tpu.memory_space<vmem>>
    %569 = tpu.memref_slice %arg18[%c1_i32_456] : memref<2x!tpu.dma_semaphore, #tpu.memory_space<semaphore_mem>> -> memref<1x!tpu.dma_semaphore, #tpu.memory_space<semaphore_mem>>
    %570 = tpu.memref_squeeze %569 : memref<1x!tpu.dma_semaphore, #tpu.memory_space<semaphore_mem>> -> memref<!tpu.dma_semaphore, #tpu.memory_space<semaphore_mem>>
    tpu.wait_dma2 semaphore(%570 : memref<!tpu.dma_semaphore, #tpu.memory_space<semaphore_mem>>) src(%567 : memref<1x128xf32, #tpu.memory_space<any>>) dst(%568 : memref<1x128xf32, #tpu.memory_space<vmem>>)
    %c1_i32_460 = arith.constant 1 : i32
    %c0_i32_461 = arith.constant 0 : i32
    %571 = tpu.memref_slice %arg0[%180, %c0_i32_461] : memref<32x128xf32, #tpu.memory_space<any>> -> memref<1x128xf32, #tpu.memory_space<any>>
    %c18_i32_462 = arith.constant 18 : i32
    %c0_i32_463 = arith.constant 0 : i32
    %572 = tpu.memref_slice %arg17[%c18_i32_462, %c0_i32_463] : memref<32x256xf32, #tpu.memory_space<vmem>> -> memref<1x128xf32, #tpu.memory_space<vmem>>
    %573 = tpu.memref_slice %arg18[%c1_i32_460] : memref<2x!tpu.dma_semaphore, #tpu.memory_space<semaphore_mem>> -> memref<1x!tpu.dma_semaphore, #tpu.memory_space<semaphore_mem>>
    %574 = tpu.memref_squeeze %573 : memref<1x!tpu.dma_semaphore, #tpu.memory_space<semaphore_mem>> -> memref<!tpu.dma_semaphore, #tpu.memory_space<semaphore_mem>>
    tpu.wait_dma2 semaphore(%574 : memref<!tpu.dma_semaphore, #tpu.memory_space<semaphore_mem>>) src(%571 : memref<1x128xf32, #tpu.memory_space<any>>) dst(%572 : memref<1x128xf32, #tpu.memory_space<vmem>>)
    %c1_i32_464 = arith.constant 1 : i32
    %c0_i32_465 = arith.constant 0 : i32
    %575 = tpu.memref_slice %arg0[%181, %c0_i32_465] : memref<32x128xf32, #tpu.memory_space<any>> -> memref<1x128xf32, #tpu.memory_space<any>>
    %c18_i32_466 = arith.constant 18 : i32
    %c128_i32_467 = arith.constant 128 : i32
    %576 = tpu.memref_slice %arg17[%c18_i32_466, %c128_i32_467] : memref<32x256xf32, #tpu.memory_space<vmem>> -> memref<1x128xf32, #tpu.memory_space<vmem>>
    %577 = tpu.memref_slice %arg18[%c1_i32_464] : memref<2x!tpu.dma_semaphore, #tpu.memory_space<semaphore_mem>> -> memref<1x!tpu.dma_semaphore, #tpu.memory_space<semaphore_mem>>
    %578 = tpu.memref_squeeze %577 : memref<1x!tpu.dma_semaphore, #tpu.memory_space<semaphore_mem>> -> memref<!tpu.dma_semaphore, #tpu.memory_space<semaphore_mem>>
    tpu.wait_dma2 semaphore(%578 : memref<!tpu.dma_semaphore, #tpu.memory_space<semaphore_mem>>) src(%575 : memref<1x128xf32, #tpu.memory_space<any>>) dst(%576 : memref<1x128xf32, #tpu.memory_space<vmem>>)
    %c1_i32_468 = arith.constant 1 : i32
    %c0_i32_469 = arith.constant 0 : i32
    %579 = tpu.memref_slice %arg0[%190, %c0_i32_469] : memref<32x128xf32, #tpu.memory_space<any>> -> memref<1x128xf32, #tpu.memory_space<any>>
    %c19_i32_470 = arith.constant 19 : i32
    %c0_i32_471 = arith.constant 0 : i32
    %580 = tpu.memref_slice %arg17[%c19_i32_470, %c0_i32_471] : memref<32x256xf32, #tpu.memory_space<vmem>> -> memref<1x128xf32, #tpu.memory_space<vmem>>
    %581 = tpu.memref_slice %arg18[%c1_i32_468] : memref<2x!tpu.dma_semaphore, #tpu.memory_space<semaphore_mem>> -> memref<1x!tpu.dma_semaphore, #tpu.memory_space<semaphore_mem>>
    %582 = tpu.memref_squeeze %581 : memref<1x!tpu.dma_semaphore, #tpu.memory_space<semaphore_mem>> -> memref<!tpu.dma_semaphore, #tpu.memory_space<semaphore_mem>>
    tpu.wait_dma2 semaphore(%582 : memref<!tpu.dma_semaphore, #tpu.memory_space<semaphore_mem>>) src(%579 : memref<1x128xf32, #tpu.memory_space<any>>) dst(%580 : memref<1x128xf32, #tpu.memory_space<vmem>>)
    %c1_i32_472 = arith.constant 1 : i32
    %c0_i32_473 = arith.constant 0 : i32
    %583 = tpu.memref_slice %arg0[%191, %c0_i32_473] : memref<32x128xf32, #tpu.memory_space<any>> -> memref<1x128xf32, #tpu.memory_space<any>>
    %c19_i32_474 = arith.constant 19 : i32
    %c128_i32_475 = arith.constant 128 : i32
    %584 = tpu.memref_slice %arg17[%c19_i32_474, %c128_i32_475] : memref<32x256xf32, #tpu.memory_space<vmem>> -> memref<1x128xf32, #tpu.memory_space<vmem>>
    %585 = tpu.memref_slice %arg18[%c1_i32_472] : memref<2x!tpu.dma_semaphore, #tpu.memory_space<semaphore_mem>> -> memref<1x!tpu.dma_semaphore, #tpu.memory_space<semaphore_mem>>
    %586 = tpu.memref_squeeze %585 : memref<1x!tpu.dma_semaphore, #tpu.memory_space<semaphore_mem>> -> memref<!tpu.dma_semaphore, #tpu.memory_space<semaphore_mem>>
    tpu.wait_dma2 semaphore(%586 : memref<!tpu.dma_semaphore, #tpu.memory_space<semaphore_mem>>) src(%583 : memref<1x128xf32, #tpu.memory_space<any>>) dst(%584 : memref<1x128xf32, #tpu.memory_space<vmem>>)
    %c1_i32_476 = arith.constant 1 : i32
    %c0_i32_477 = arith.constant 0 : i32
    %587 = tpu.memref_slice %arg0[%200, %c0_i32_477] : memref<32x128xf32, #tpu.memory_space<any>> -> memref<1x128xf32, #tpu.memory_space<any>>
    %c20_i32_478 = arith.constant 20 : i32
    %c0_i32_479 = arith.constant 0 : i32
    %588 = tpu.memref_slice %arg17[%c20_i32_478, %c0_i32_479] : memref<32x256xf32, #tpu.memory_space<vmem>> -> memref<1x128xf32, #tpu.memory_space<vmem>>
    %589 = tpu.memref_slice %arg18[%c1_i32_476] : memref<2x!tpu.dma_semaphore, #tpu.memory_space<semaphore_mem>> -> memref<1x!tpu.dma_semaphore, #tpu.memory_space<semaphore_mem>>
    %590 = tpu.memref_squeeze %589 : memref<1x!tpu.dma_semaphore, #tpu.memory_space<semaphore_mem>> -> memref<!tpu.dma_semaphore, #tpu.memory_space<semaphore_mem>>
    tpu.wait_dma2 semaphore(%590 : memref<!tpu.dma_semaphore, #tpu.memory_space<semaphore_mem>>) src(%587 : memref<1x128xf32, #tpu.memory_space<any>>) dst(%588 : memref<1x128xf32, #tpu.memory_space<vmem>>)
    %c1_i32_480 = arith.constant 1 : i32
    %c0_i32_481 = arith.constant 0 : i32
    %591 = tpu.memref_slice %arg0[%201, %c0_i32_481] : memref<32x128xf32, #tpu.memory_space<any>> -> memref<1x128xf32, #tpu.memory_space<any>>
    %c20_i32_482 = arith.constant 20 : i32
    %c128_i32_483 = arith.constant 128 : i32
    %592 = tpu.memref_slice %arg17[%c20_i32_482, %c128_i32_483] : memref<32x256xf32, #tpu.memory_space<vmem>> -> memref<1x128xf32, #tpu.memory_space<vmem>>
    %593 = tpu.memref_slice %arg18[%c1_i32_480] : memref<2x!tpu.dma_semaphore, #tpu.memory_space<semaphore_mem>> -> memref<1x!tpu.dma_semaphore, #tpu.memory_space<semaphore_mem>>
    %594 = tpu.memref_squeeze %593 : memref<1x!tpu.dma_semaphore, #tpu.memory_space<semaphore_mem>> -> memref<!tpu.dma_semaphore, #tpu.memory_space<semaphore_mem>>
    tpu.wait_dma2 semaphore(%594 : memref<!tpu.dma_semaphore, #tpu.memory_space<semaphore_mem>>) src(%591 : memref<1x128xf32, #tpu.memory_space<any>>) dst(%592 : memref<1x128xf32, #tpu.memory_space<vmem>>)
    %c1_i32_484 = arith.constant 1 : i32
    %c0_i32_485 = arith.constant 0 : i32
    %595 = tpu.memref_slice %arg0[%210, %c0_i32_485] : memref<32x128xf32, #tpu.memory_space<any>> -> memref<1x128xf32, #tpu.memory_space<any>>
    %c21_i32_486 = arith.constant 21 : i32
    %c0_i32_487 = arith.constant 0 : i32
    %596 = tpu.memref_slice %arg17[%c21_i32_486, %c0_i32_487] : memref<32x256xf32, #tpu.memory_space<vmem>> -> memref<1x128xf32, #tpu.memory_space<vmem>>
    %597 = tpu.memref_slice %arg18[%c1_i32_484] : memref<2x!tpu.dma_semaphore, #tpu.memory_space<semaphore_mem>> -> memref<1x!tpu.dma_semaphore, #tpu.memory_space<semaphore_mem>>
    %598 = tpu.memref_squeeze %597 : memref<1x!tpu.dma_semaphore, #tpu.memory_space<semaphore_mem>> -> memref<!tpu.dma_semaphore, #tpu.memory_space<semaphore_mem>>
    tpu.wait_dma2 semaphore(%598 : memref<!tpu.dma_semaphore, #tpu.memory_space<semaphore_mem>>) src(%595 : memref<1x128xf32, #tpu.memory_space<any>>) dst(%596 : memref<1x128xf32, #tpu.memory_space<vmem>>)
    %c1_i32_488 = arith.constant 1 : i32
    %c0_i32_489 = arith.constant 0 : i32
    %599 = tpu.memref_slice %arg0[%211, %c0_i32_489] : memref<32x128xf32, #tpu.memory_space<any>> -> memref<1x128xf32, #tpu.memory_space<any>>
    %c21_i32_490 = arith.constant 21 : i32
    %c128_i32_491 = arith.constant 128 : i32
    %600 = tpu.memref_slice %arg17[%c21_i32_490, %c128_i32_491] : memref<32x256xf32, #tpu.memory_space<vmem>> -> memref<1x128xf32, #tpu.memory_space<vmem>>
    %601 = tpu.memref_slice %arg18[%c1_i32_488] : memref<2x!tpu.dma_semaphore, #tpu.memory_space<semaphore_mem>> -> memref<1x!tpu.dma_semaphore, #tpu.memory_space<semaphore_mem>>
    %602 = tpu.memref_squeeze %601 : memref<1x!tpu.dma_semaphore, #tpu.memory_space<semaphore_mem>> -> memref<!tpu.dma_semaphore, #tpu.memory_space<semaphore_mem>>
    tpu.wait_dma2 semaphore(%602 : memref<!tpu.dma_semaphore, #tpu.memory_space<semaphore_mem>>) src(%599 : memref<1x128xf32, #tpu.memory_space<any>>) dst(%600 : memref<1x128xf32, #tpu.memory_space<vmem>>)
    %c1_i32_492 = arith.constant 1 : i32
    %c0_i32_493 = arith.constant 0 : i32
    %603 = tpu.memref_slice %arg0[%220, %c0_i32_493] : memref<32x128xf32, #tpu.memory_space<any>> -> memref<1x128xf32, #tpu.memory_space<any>>
    %c22_i32_494 = arith.constant 22 : i32
    %c0_i32_495 = arith.constant 0 : i32
    %604 = tpu.memref_slice %arg17[%c22_i32_494, %c0_i32_495] : memref<32x256xf32, #tpu.memory_space<vmem>> -> memref<1x128xf32, #tpu.memory_space<vmem>>
    %605 = tpu.memref_slice %arg18[%c1_i32_492] : memref<2x!tpu.dma_semaphore, #tpu.memory_space<semaphore_mem>> -> memref<1x!tpu.dma_semaphore, #tpu.memory_space<semaphore_mem>>
    %606 = tpu.memref_squeeze %605 : memref<1x!tpu.dma_semaphore, #tpu.memory_space<semaphore_mem>> -> memref<!tpu.dma_semaphore, #tpu.memory_space<semaphore_mem>>
    tpu.wait_dma2 semaphore(%606 : memref<!tpu.dma_semaphore, #tpu.memory_space<semaphore_mem>>) src(%603 : memref<1x128xf32, #tpu.memory_space<any>>) dst(%604 : memref<1x128xf32, #tpu.memory_space<vmem>>)
    %c1_i32_496 = arith.constant 1 : i32
    %c0_i32_497 = arith.constant 0 : i32
    %607 = tpu.memref_slice %arg0[%221, %c0_i32_497] : memref<32x128xf32, #tpu.memory_space<any>> -> memref<1x128xf32, #tpu.memory_space<any>>
    %c22_i32_498 = arith.constant 22 : i32
    %c128_i32_499 = arith.constant 128 : i32
    %608 = tpu.memref_slice %arg17[%c22_i32_498, %c128_i32_499] : memref<32x256xf32, #tpu.memory_space<vmem>> -> memref<1x128xf32, #tpu.memory_space<vmem>>
    %609 = tpu.memref_slice %arg18[%c1_i32_496] : memref<2x!tpu.dma_semaphore, #tpu.memory_space<semaphore_mem>> -> memref<1x!tpu.dma_semaphore, #tpu.memory_space<semaphore_mem>>
    %610 = tpu.memref_squeeze %609 : memref<1x!tpu.dma_semaphore, #tpu.memory_space<semaphore_mem>> -> memref<!tpu.dma_semaphore, #tpu.memory_space<semaphore_mem>>
    tpu.wait_dma2 semaphore(%610 : memref<!tpu.dma_semaphore, #tpu.memory_space<semaphore_mem>>) src(%607 : memref<1x128xf32, #tpu.memory_space<any>>) dst(%608 : memref<1x128xf32, #tpu.memory_space<vmem>>)
    %c1_i32_500 = arith.constant 1 : i32
    %c0_i32_501 = arith.constant 0 : i32
    %611 = tpu.memref_slice %arg0[%230, %c0_i32_501] : memref<32x128xf32, #tpu.memory_space<any>> -> memref<1x128xf32, #tpu.memory_space<any>>
    %c23_i32_502 = arith.constant 23 : i32
    %c0_i32_503 = arith.constant 0 : i32
    %612 = tpu.memref_slice %arg17[%c23_i32_502, %c0_i32_503] : memref<32x256xf32, #tpu.memory_space<vmem>> -> memref<1x128xf32, #tpu.memory_space<vmem>>
    %613 = tpu.memref_slice %arg18[%c1_i32_500] : memref<2x!tpu.dma_semaphore, #tpu.memory_space<semaphore_mem>> -> memref<1x!tpu.dma_semaphore, #tpu.memory_space<semaphore_mem>>
    %614 = tpu.memref_squeeze %613 : memref<1x!tpu.dma_semaphore, #tpu.memory_space<semaphore_mem>> -> memref<!tpu.dma_semaphore, #tpu.memory_space<semaphore_mem>>
    tpu.wait_dma2 semaphore(%614 : memref<!tpu.dma_semaphore, #tpu.memory_space<semaphore_mem>>) src(%611 : memref<1x128xf32, #tpu.memory_space<any>>) dst(%612 : memref<1x128xf32, #tpu.memory_space<vmem>>)
    %c1_i32_504 = arith.constant 1 : i32
    %c0_i32_505 = arith.constant 0 : i32
    %615 = tpu.memref_slice %arg0[%231, %c0_i32_505] : memref<32x128xf32, #tpu.memory_space<any>> -> memref<1x128xf32, #tpu.memory_space<any>>
    %c23_i32_506 = arith.constant 23 : i32
    %c128_i32_507 = arith.constant 128 : i32
    %616 = tpu.memref_slice %arg17[%c23_i32_506, %c128_i32_507] : memref<32x256xf32, #tpu.memory_space<vmem>> -> memref<1x128xf32, #tpu.memory_space<vmem>>
    %617 = tpu.memref_slice %arg18[%c1_i32_504] : memref<2x!tpu.dma_semaphore, #tpu.memory_space<semaphore_mem>> -> memref<1x!tpu.dma_semaphore, #tpu.memory_space<semaphore_mem>>
    %618 = tpu.memref_squeeze %617 : memref<1x!tpu.dma_semaphore, #tpu.memory_space<semaphore_mem>> -> memref<!tpu.dma_semaphore, #tpu.memory_space<semaphore_mem>>
    tpu.wait_dma2 semaphore(%618 : memref<!tpu.dma_semaphore, #tpu.memory_space<semaphore_mem>>) src(%615 : memref<1x128xf32, #tpu.memory_space<any>>) dst(%616 : memref<1x128xf32, #tpu.memory_space<vmem>>)
    %c1_i32_508 = arith.constant 1 : i32
    %c0_i32_509 = arith.constant 0 : i32
    %619 = tpu.memref_slice %arg1[%240, %c0_i32_509] : memref<32x128xf32, #tpu.memory_space<any>> -> memref<1x128xf32, #tpu.memory_space<any>>
    %c24_i32_510 = arith.constant 24 : i32
    %c0_i32_511 = arith.constant 0 : i32
    %620 = tpu.memref_slice %arg17[%c24_i32_510, %c0_i32_511] : memref<32x256xf32, #tpu.memory_space<vmem>> -> memref<1x128xf32, #tpu.memory_space<vmem>>
    %621 = tpu.memref_slice %arg18[%c1_i32_508] : memref<2x!tpu.dma_semaphore, #tpu.memory_space<semaphore_mem>> -> memref<1x!tpu.dma_semaphore, #tpu.memory_space<semaphore_mem>>
    %622 = tpu.memref_squeeze %621 : memref<1x!tpu.dma_semaphore, #tpu.memory_space<semaphore_mem>> -> memref<!tpu.dma_semaphore, #tpu.memory_space<semaphore_mem>>
    tpu.wait_dma2 semaphore(%622 : memref<!tpu.dma_semaphore, #tpu.memory_space<semaphore_mem>>) src(%619 : memref<1x128xf32, #tpu.memory_space<any>>) dst(%620 : memref<1x128xf32, #tpu.memory_space<vmem>>)
    %c1_i32_512 = arith.constant 1 : i32
    %c0_i32_513 = arith.constant 0 : i32
    %623 = tpu.memref_slice %arg1[%241, %c0_i32_513] : memref<32x128xf32, #tpu.memory_space<any>> -> memref<1x128xf32, #tpu.memory_space<any>>
    %c24_i32_514 = arith.constant 24 : i32
    %c128_i32_515 = arith.constant 128 : i32
    %624 = tpu.memref_slice %arg17[%c24_i32_514, %c128_i32_515] : memref<32x256xf32, #tpu.memory_space<vmem>> -> memref<1x128xf32, #tpu.memory_space<vmem>>
    %625 = tpu.memref_slice %arg18[%c1_i32_512] : memref<2x!tpu.dma_semaphore, #tpu.memory_space<semaphore_mem>> -> memref<1x!tpu.dma_semaphore, #tpu.memory_space<semaphore_mem>>
    %626 = tpu.memref_squeeze %625 : memref<1x!tpu.dma_semaphore, #tpu.memory_space<semaphore_mem>> -> memref<!tpu.dma_semaphore, #tpu.memory_space<semaphore_mem>>
    tpu.wait_dma2 semaphore(%626 : memref<!tpu.dma_semaphore, #tpu.memory_space<semaphore_mem>>) src(%623 : memref<1x128xf32, #tpu.memory_space<any>>) dst(%624 : memref<1x128xf32, #tpu.memory_space<vmem>>)
    %c1_i32_516 = arith.constant 1 : i32
    %c0_i32_517 = arith.constant 0 : i32
    %627 = tpu.memref_slice %arg1[%250, %c0_i32_517] : memref<32x128xf32, #tpu.memory_space<any>> -> memref<1x128xf32, #tpu.memory_space<any>>
    %c25_i32_518 = arith.constant 25 : i32
    %c0_i32_519 = arith.constant 0 : i32
    %628 = tpu.memref_slice %arg17[%c25_i32_518, %c0_i32_519] : memref<32x256xf32, #tpu.memory_space<vmem>> -> memref<1x128xf32, #tpu.memory_space<vmem>>
    %629 = tpu.memref_slice %arg18[%c1_i32_516] : memref<2x!tpu.dma_semaphore, #tpu.memory_space<semaphore_mem>> -> memref<1x!tpu.dma_semaphore, #tpu.memory_space<semaphore_mem>>
    %630 = tpu.memref_squeeze %629 : memref<1x!tpu.dma_semaphore, #tpu.memory_space<semaphore_mem>> -> memref<!tpu.dma_semaphore, #tpu.memory_space<semaphore_mem>>
    tpu.wait_dma2 semaphore(%630 : memref<!tpu.dma_semaphore, #tpu.memory_space<semaphore_mem>>) src(%627 : memref<1x128xf32, #tpu.memory_space<any>>) dst(%628 : memref<1x128xf32, #tpu.memory_space<vmem>>)
    %c1_i32_520 = arith.constant 1 : i32
    %c0_i32_521 = arith.constant 0 : i32
    %631 = tpu.memref_slice %arg1[%251, %c0_i32_521] : memref<32x128xf32, #tpu.memory_space<any>> -> memref<1x128xf32, #tpu.memory_space<any>>
    %c25_i32_522 = arith.constant 25 : i32
    %c128_i32_523 = arith.constant 128 : i32
    %632 = tpu.memref_slice %arg17[%c25_i32_522, %c128_i32_523] : memref<32x256xf32, #tpu.memory_space<vmem>> -> memref<1x128xf32, #tpu.memory_space<vmem>>
    %633 = tpu.memref_slice %arg18[%c1_i32_520] : memref<2x!tpu.dma_semaphore, #tpu.memory_space<semaphore_mem>> -> memref<1x!tpu.dma_semaphore, #tpu.memory_space<semaphore_mem>>
    %634 = tpu.memref_squeeze %633 : memref<1x!tpu.dma_semaphore, #tpu.memory_space<semaphore_mem>> -> memref<!tpu.dma_semaphore, #tpu.memory_space<semaphore_mem>>
    tpu.wait_dma2 semaphore(%634 : memref<!tpu.dma_semaphore, #tpu.memory_space<semaphore_mem>>) src(%631 : memref<1x128xf32, #tpu.memory_space<any>>) dst(%632 : memref<1x128xf32, #tpu.memory_space<vmem>>)
    %c1_i32_524 = arith.constant 1 : i32
    %c0_i32_525 = arith.constant 0 : i32
    %635 = tpu.memref_slice %arg1[%260, %c0_i32_525] : memref<32x128xf32, #tpu.memory_space<any>> -> memref<1x128xf32, #tpu.memory_space<any>>
    %c26_i32_526 = arith.constant 26 : i32
    %c0_i32_527 = arith.constant 0 : i32
    %636 = tpu.memref_slice %arg17[%c26_i32_526, %c0_i32_527] : memref<32x256xf32, #tpu.memory_space<vmem>> -> memref<1x128xf32, #tpu.memory_space<vmem>>
    %637 = tpu.memref_slice %arg18[%c1_i32_524] : memref<2x!tpu.dma_semaphore, #tpu.memory_space<semaphore_mem>> -> memref<1x!tpu.dma_semaphore, #tpu.memory_space<semaphore_mem>>
    %638 = tpu.memref_squeeze %637 : memref<1x!tpu.dma_semaphore, #tpu.memory_space<semaphore_mem>> -> memref<!tpu.dma_semaphore, #tpu.memory_space<semaphore_mem>>
    tpu.wait_dma2 semaphore(%638 : memref<!tpu.dma_semaphore, #tpu.memory_space<semaphore_mem>>) src(%635 : memref<1x128xf32, #tpu.memory_space<any>>) dst(%636 : memref<1x128xf32, #tpu.memory_space<vmem>>)
    %c1_i32_528 = arith.constant 1 : i32
    %c0_i32_529 = arith.constant 0 : i32
    %639 = tpu.memref_slice %arg1[%261, %c0_i32_529] : memref<32x128xf32, #tpu.memory_space<any>> -> memref<1x128xf32, #tpu.memory_space<any>>
    %c26_i32_530 = arith.constant 26 : i32
    %c128_i32_531 = arith.constant 128 : i32
    %640 = tpu.memref_slice %arg17[%c26_i32_530, %c128_i32_531] : memref<32x256xf32, #tpu.memory_space<vmem>> -> memref<1x128xf32, #tpu.memory_space<vmem>>
    %641 = tpu.memref_slice %arg18[%c1_i32_528] : memref<2x!tpu.dma_semaphore, #tpu.memory_space<semaphore_mem>> -> memref<1x!tpu.dma_semaphore, #tpu.memory_space<semaphore_mem>>
    %642 = tpu.memref_squeeze %641 : memref<1x!tpu.dma_semaphore, #tpu.memory_space<semaphore_mem>> -> memref<!tpu.dma_semaphore, #tpu.memory_space<semaphore_mem>>
    tpu.wait_dma2 semaphore(%642 : memref<!tpu.dma_semaphore, #tpu.memory_space<semaphore_mem>>) src(%639 : memref<1x128xf32, #tpu.memory_space<any>>) dst(%640 : memref<1x128xf32, #tpu.memory_space<vmem>>)
    %c1_i32_532 = arith.constant 1 : i32
    %c0_i32_533 = arith.constant 0 : i32
    %643 = tpu.memref_slice %arg1[%270, %c0_i32_533] : memref<32x128xf32, #tpu.memory_space<any>> -> memref<1x128xf32, #tpu.memory_space<any>>
    %c27_i32_534 = arith.constant 27 : i32
    %c0_i32_535 = arith.constant 0 : i32
    %644 = tpu.memref_slice %arg17[%c27_i32_534, %c0_i32_535] : memref<32x256xf32, #tpu.memory_space<vmem>> -> memref<1x128xf32, #tpu.memory_space<vmem>>
    %645 = tpu.memref_slice %arg18[%c1_i32_532] : memref<2x!tpu.dma_semaphore, #tpu.memory_space<semaphore_mem>> -> memref<1x!tpu.dma_semaphore, #tpu.memory_space<semaphore_mem>>
    %646 = tpu.memref_squeeze %645 : memref<1x!tpu.dma_semaphore, #tpu.memory_space<semaphore_mem>> -> memref<!tpu.dma_semaphore, #tpu.memory_space<semaphore_mem>>
    tpu.wait_dma2 semaphore(%646 : memref<!tpu.dma_semaphore, #tpu.memory_space<semaphore_mem>>) src(%643 : memref<1x128xf32, #tpu.memory_space<any>>) dst(%644 : memref<1x128xf32, #tpu.memory_space<vmem>>)
    %c1_i32_536 = arith.constant 1 : i32
    %c0_i32_537 = arith.constant 0 : i32
    %647 = tpu.memref_slice %arg1[%271, %c0_i32_537] : memref<32x128xf32, #tpu.memory_space<any>> -> memref<1x128xf32, #tpu.memory_space<any>>
    %c27_i32_538 = arith.constant 27 : i32
    %c128_i32_539 = arith.constant 128 : i32
    %648 = tpu.memref_slice %arg17[%c27_i32_538, %c128_i32_539] : memref<32x256xf32, #tpu.memory_space<vmem>> -> memref<1x128xf32, #tpu.memory_space<vmem>>
    %649 = tpu.memref_slice %arg18[%c1_i32_536] : memref<2x!tpu.dma_semaphore, #tpu.memory_space<semaphore_mem>> -> memref<1x!tpu.dma_semaphore, #tpu.memory_space<semaphore_mem>>
    %650 = tpu.memref_squeeze %649 : memref<1x!tpu.dma_semaphore, #tpu.memory_space<semaphore_mem>> -> memref<!tpu.dma_semaphore, #tpu.memory_space<semaphore_mem>>
    tpu.wait_dma2 semaphore(%650 : memref<!tpu.dma_semaphore, #tpu.memory_space<semaphore_mem>>) src(%647 : memref<1x128xf32, #tpu.memory_space<any>>) dst(%648 : memref<1x128xf32, #tpu.memory_space<vmem>>)
    %c1_i32_540 = arith.constant 1 : i32
    %c0_i32_541 = arith.constant 0 : i32
    %651 = tpu.memref_slice %arg1[%280, %c0_i32_541] : memref<32x128xf32, #tpu.memory_space<any>> -> memref<1x128xf32, #tpu.memory_space<any>>
    %c28_i32_542 = arith.constant 28 : i32
    %c0_i32_543 = arith.constant 0 : i32
    %652 = tpu.memref_slice %arg17[%c28_i32_542, %c0_i32_543] : memref<32x256xf32, #tpu.memory_space<vmem>> -> memref<1x128xf32, #tpu.memory_space<vmem>>
    %653 = tpu.memref_slice %arg18[%c1_i32_540] : memref<2x!tpu.dma_semaphore, #tpu.memory_space<semaphore_mem>> -> memref<1x!tpu.dma_semaphore, #tpu.memory_space<semaphore_mem>>
    %654 = tpu.memref_squeeze %653 : memref<1x!tpu.dma_semaphore, #tpu.memory_space<semaphore_mem>> -> memref<!tpu.dma_semaphore, #tpu.memory_space<semaphore_mem>>
    tpu.wait_dma2 semaphore(%654 : memref<!tpu.dma_semaphore, #tpu.memory_space<semaphore_mem>>) src(%651 : memref<1x128xf32, #tpu.memory_space<any>>) dst(%652 : memref<1x128xf32, #tpu.memory_space<vmem>>)
    %c1_i32_544 = arith.constant 1 : i32
    %c0_i32_545 = arith.constant 0 : i32
    %655 = tpu.memref_slice %arg1[%281, %c0_i32_545] : memref<32x128xf32, #tpu.memory_space<any>> -> memref<1x128xf32, #tpu.memory_space<any>>
    %c28_i32_546 = arith.constant 28 : i32
    %c128_i32_547 = arith.constant 128 : i32
    %656 = tpu.memref_slice %arg17[%c28_i32_546, %c128_i32_547] : memref<32x256xf32, #tpu.memory_space<vmem>> -> memref<1x128xf32, #tpu.memory_space<vmem>>
    %657 = tpu.memref_slice %arg18[%c1_i32_544] : memref<2x!tpu.dma_semaphore, #tpu.memory_space<semaphore_mem>> -> memref<1x!tpu.dma_semaphore, #tpu.memory_space<semaphore_mem>>
    %658 = tpu.memref_squeeze %657 : memref<1x!tpu.dma_semaphore, #tpu.memory_space<semaphore_mem>> -> memref<!tpu.dma_semaphore, #tpu.memory_space<semaphore_mem>>
    tpu.wait_dma2 semaphore(%658 : memref<!tpu.dma_semaphore, #tpu.memory_space<semaphore_mem>>) src(%655 : memref<1x128xf32, #tpu.memory_space<any>>) dst(%656 : memref<1x128xf32, #tpu.memory_space<vmem>>)
    %c1_i32_548 = arith.constant 1 : i32
    %c0_i32_549 = arith.constant 0 : i32
    %659 = tpu.memref_slice %arg1[%290, %c0_i32_549] : memref<32x128xf32, #tpu.memory_space<any>> -> memref<1x128xf32, #tpu.memory_space<any>>
    %c29_i32_550 = arith.constant 29 : i32
    %c0_i32_551 = arith.constant 0 : i32
    %660 = tpu.memref_slice %arg17[%c29_i32_550, %c0_i32_551] : memref<32x256xf32, #tpu.memory_space<vmem>> -> memref<1x128xf32, #tpu.memory_space<vmem>>
    %661 = tpu.memref_slice %arg18[%c1_i32_548] : memref<2x!tpu.dma_semaphore, #tpu.memory_space<semaphore_mem>> -> memref<1x!tpu.dma_semaphore, #tpu.memory_space<semaphore_mem>>
    %662 = tpu.memref_squeeze %661 : memref<1x!tpu.dma_semaphore, #tpu.memory_space<semaphore_mem>> -> memref<!tpu.dma_semaphore, #tpu.memory_space<semaphore_mem>>
    tpu.wait_dma2 semaphore(%662 : memref<!tpu.dma_semaphore, #tpu.memory_space<semaphore_mem>>) src(%659 : memref<1x128xf32, #tpu.memory_space<any>>) dst(%660 : memref<1x128xf32, #tpu.memory_space<vmem>>)
    %c1_i32_552 = arith.constant 1 : i32
    %c0_i32_553 = arith.constant 0 : i32
    %663 = tpu.memref_slice %arg1[%291, %c0_i32_553] : memref<32x128xf32, #tpu.memory_space<any>> -> memref<1x128xf32, #tpu.memory_space<any>>
    %c29_i32_554 = arith.constant 29 : i32
    %c128_i32_555 = arith.constant 128 : i32
    %664 = tpu.memref_slice %arg17[%c29_i32_554, %c128_i32_555] : memref<32x256xf32, #tpu.memory_space<vmem>> -> memref<1x128xf32, #tpu.memory_space<vmem>>
    %665 = tpu.memref_slice %arg18[%c1_i32_552] : memref<2x!tpu.dma_semaphore, #tpu.memory_space<semaphore_mem>> -> memref<1x!tpu.dma_semaphore, #tpu.memory_space<semaphore_mem>>
    %666 = tpu.memref_squeeze %665 : memref<1x!tpu.dma_semaphore, #tpu.memory_space<semaphore_mem>> -> memref<!tpu.dma_semaphore, #tpu.memory_space<semaphore_mem>>
    tpu.wait_dma2 semaphore(%666 : memref<!tpu.dma_semaphore, #tpu.memory_space<semaphore_mem>>) src(%663 : memref<1x128xf32, #tpu.memory_space<any>>) dst(%664 : memref<1x128xf32, #tpu.memory_space<vmem>>)
    %c1_i32_556 = arith.constant 1 : i32
    %c0_i32_557 = arith.constant 0 : i32
    %667 = tpu.memref_slice %arg1[%300, %c0_i32_557] : memref<32x128xf32, #tpu.memory_space<any>> -> memref<1x128xf32, #tpu.memory_space<any>>
    %c30_i32_558 = arith.constant 30 : i32
    %c0_i32_559 = arith.constant 0 : i32
    %668 = tpu.memref_slice %arg17[%c30_i32_558, %c0_i32_559] : memref<32x256xf32, #tpu.memory_space<vmem>> -> memref<1x128xf32, #tpu.memory_space<vmem>>
    %669 = tpu.memref_slice %arg18[%c1_i32_556] : memref<2x!tpu.dma_semaphore, #tpu.memory_space<semaphore_mem>> -> memref<1x!tpu.dma_semaphore, #tpu.memory_space<semaphore_mem>>
    %670 = tpu.memref_squeeze %669 : memref<1x!tpu.dma_semaphore, #tpu.memory_space<semaphore_mem>> -> memref<!tpu.dma_semaphore, #tpu.memory_space<semaphore_mem>>
    tpu.wait_dma2 semaphore(%670 : memref<!tpu.dma_semaphore, #tpu.memory_space<semaphore_mem>>) src(%667 : memref<1x128xf32, #tpu.memory_space<any>>) dst(%668 : memref<1x128xf32, #tpu.memory_space<vmem>>)
    %c1_i32_560 = arith.constant 1 : i32
    %c0_i32_561 = arith.constant 0 : i32
    %671 = tpu.memref_slice %arg1[%301, %c0_i32_561] : memref<32x128xf32, #tpu.memory_space<any>> -> memref<1x128xf32, #tpu.memory_space<any>>
    %c30_i32_562 = arith.constant 30 : i32
    %c128_i32_563 = arith.constant 128 : i32
    %672 = tpu.memref_slice %arg17[%c30_i32_562, %c128_i32_563] : memref<32x256xf32, #tpu.memory_space<vmem>> -> memref<1x128xf32, #tpu.memory_space<vmem>>
    %673 = tpu.memref_slice %arg18[%c1_i32_560] : memref<2x!tpu.dma_semaphore, #tpu.memory_space<semaphore_mem>> -> memref<1x!tpu.dma_semaphore, #tpu.memory_space<semaphore_mem>>
    %674 = tpu.memref_squeeze %673 : memref<1x!tpu.dma_semaphore, #tpu.memory_space<semaphore_mem>> -> memref<!tpu.dma_semaphore, #tpu.memory_space<semaphore_mem>>
    tpu.wait_dma2 semaphore(%674 : memref<!tpu.dma_semaphore, #tpu.memory_space<semaphore_mem>>) src(%671 : memref<1x128xf32, #tpu.memory_space<any>>) dst(%672 : memref<1x128xf32, #tpu.memory_space<vmem>>)
    %c1_i32_564 = arith.constant 1 : i32
    %c0_i32_565 = arith.constant 0 : i32
    %675 = tpu.memref_slice %arg1[%310, %c0_i32_565] : memref<32x128xf32, #tpu.memory_space<any>> -> memref<1x128xf32, #tpu.memory_space<any>>
    %c31_i32_566 = arith.constant 31 : i32
    %c0_i32_567 = arith.constant 0 : i32
    %676 = tpu.memref_slice %arg17[%c31_i32_566, %c0_i32_567] : memref<32x256xf32, #tpu.memory_space<vmem>> -> memref<1x128xf32, #tpu.memory_space<vmem>>
    %677 = tpu.memref_slice %arg18[%c1_i32_564] : memref<2x!tpu.dma_semaphore, #tpu.memory_space<semaphore_mem>> -> memref<1x!tpu.dma_semaphore, #tpu.memory_space<semaphore_mem>>
    %678 = tpu.memref_squeeze %677 : memref<1x!tpu.dma_semaphore, #tpu.memory_space<semaphore_mem>> -> memref<!tpu.dma_semaphore, #tpu.memory_space<semaphore_mem>>
    tpu.wait_dma2 semaphore(%678 : memref<!tpu.dma_semaphore, #tpu.memory_space<semaphore_mem>>) src(%675 : memref<1x128xf32, #tpu.memory_space<any>>) dst(%676 : memref<1x128xf32, #tpu.memory_space<vmem>>)
    %c1_i32_568 = arith.constant 1 : i32
    %c0_i32_569 = arith.constant 0 : i32
    %679 = tpu.memref_slice %arg1[%311, %c0_i32_569] : memref<32x128xf32, #tpu.memory_space<any>> -> memref<1x128xf32, #tpu.memory_space<any>>
    %c31_i32_570 = arith.constant 31 : i32
    %c128_i32_571 = arith.constant 128 : i32
    %680 = tpu.memref_slice %arg17[%c31_i32_570, %c128_i32_571] : memref<32x256xf32, #tpu.memory_space<vmem>> -> memref<1x128xf32, #tpu.memory_space<vmem>>
    %681 = tpu.memref_slice %arg18[%c1_i32_568] : memref<2x!tpu.dma_semaphore, #tpu.memory_space<semaphore_mem>> -> memref<1x!tpu.dma_semaphore, #tpu.memory_space<semaphore_mem>>
    %682 = tpu.memref_squeeze %681 : memref<1x!tpu.dma_semaphore, #tpu.memory_space<semaphore_mem>> -> memref<!tpu.dma_semaphore, #tpu.memory_space<semaphore_mem>>
    tpu.wait_dma2 semaphore(%682 : memref<!tpu.dma_semaphore, #tpu.memory_space<semaphore_mem>>) src(%679 : memref<1x128xf32, #tpu.memory_space<any>>) dst(%680 : memref<1x128xf32, #tpu.memory_space<vmem>>)
    %c16 = arith.constant 16 : index
    %c0_572 = arith.constant 0 : index
    %683 = vector.load %arg17[%c16, %c0_572] : memref<32x256xf32, #tpu.memory_space<vmem>>, vector<16x256xf32>
    %684 = arith.truncf %683 : vector<16x256xf32> to vector<16x256xbf16>
    %c0_573 = arith.constant 0 : index
    %c0_574 = arith.constant 0 : index
    %685 = vector.load %arg2[%c0_573, %c0_574] : memref<256x128xbf16, #tpu.memory_space<vmem>>, vector<256x128xbf16>
    %cst_575 = arith.constant dense<0.000000e+00> : vector<16x128xf32>
    %686 = tpu.matmul %684, %685, %cst_575 {dimension_numbers = #tpu.dot_dimension_numbers<[1], [0], [0], [1], [0, 0, 1, 1], [], []>} : vector<16x256xbf16>, vector<256x128xbf16>, vector<16x128xf32> -> vector<16x128xf32>
    %c0_576 = arith.constant 0 : index
    %c0_577 = arith.constant 0 : index
    %687 = vector.load %arg3[%c0_576, %c0_577] : memref<1x128xf32, #tpu.memory_space<vmem>>, vector<1x128xf32>
    %688 = vector.broadcast %687 : vector<1x128xf32> to vector<16x128xf32>
    %689 = arith.addf %686, %688 : vector<16x128xf32>
    %690 = tpu.iota {dimensions = array<i32: 1>} : vector<16x128xi32>
    %c32_i32_578 = arith.constant 32 : i32
    %691 = vector.broadcast %c32_i32_578 : i32 to vector<16x128xi32>
    %692 = arith.cmpi eq, %690, %691 : vector<16x128xi32>
    %cst_579 = arith.constant 0.000000e+00 : f32
    %693 = vector.broadcast %cst_579 : f32 to vector<16x128xf32>
    %694 = arith.select %692, %689, %693 : vector<16x128xi1>, vector<16x128xf32>
    %cst_580 = arith.constant dense<0.000000e+00> : vector<16xf32>
    %695 = vector.multi_reduction <add>, %694, %cst_580 [1] : vector<16x128xf32> to vector<16xf32>
    %696 = vector.shape_cast %695 : vector<16xf32> to vector<16x1xf32>
    %c0_581 = arith.constant 0 : index
    %c0_582 = arith.constant 0 : index
    %697 = vector.load %arg6[%c0_581, %c0_582] : memref<16x1xf32, #tpu.memory_space<vmem>>, vector<16x1xf32>
    %698 = arith.mulf %696, %697 : vector<16x1xf32>
    %cst_583 = arith.constant 0.000000e+00 : f32
    %699 = vector.broadcast %cst_583 : f32 to vector<16x1xf32>
    %700 = arith.maximumf %698, %699 : vector<16x1xf32>
    %701 = math.absf %698 : vector<16x1xf32>
    %cst_584 = arith.constant 0.000000e+00 : f32
    %702 = vector.broadcast %cst_584 : f32 to vector<16x1xf32>
    %703 = arith.subf %702, %701 : vector<16x1xf32>
    %704 = math.exp %703 : vector<16x1xf32>
    %cst_585 = arith.constant 1.000000e+00 : f32
    %705 = vector.broadcast %cst_585 : f32 to vector<16x1xf32>
    %706 = arith.addf %705, %704 : vector<16x1xf32>
    %707 = math.log %706 : vector<16x1xf32>
    %708 = arith.addf %700, %707 : vector<16x1xf32>
    %709 = vector.extract_strided_slice %708 {offsets = [0, 0], sizes = [8, 1], strides = [1, 1]} : vector<16x1xf32> to vector<8x1xf32>
    %710 = vector.shape_cast %709 : vector<8x1xf32> to vector<1x8x1xf32>
    %cst_586 = arith.constant dense<0.000000e+00> : vector<1xf32>
    %711 = vector.multi_reduction <add>, %710, %cst_586 [1, 2] : vector<1x8x1xf32> to vector<1xf32>
    %712 = vector.shape_cast %711 : vector<1xf32> to vector<1x1x1xf32>
    %713 = vector.extract %712[0, 0, 0] : f32 from vector<1x1x1xf32>
    %cst_587 = arith.constant 8.000000e+00 : f32
    %714 = arith.divf %713, %cst_587 : f32
    %715 = vector.extract_strided_slice %708 {offsets = [8, 0], sizes = [8, 1], strides = [1, 1]} : vector<16x1xf32> to vector<8x1xf32>
    %716 = vector.shape_cast %715 : vector<8x1xf32> to vector<1x8x1xf32>
    %cst_588 = arith.constant dense<0.000000e+00> : vector<1xf32>
    %717 = vector.multi_reduction <add>, %716, %cst_588 [1, 2] : vector<1x8x1xf32> to vector<1xf32>
    %718 = vector.shape_cast %717 : vector<1xf32> to vector<1x1x1xf32>
    %719 = vector.extract %718[0, 0, 0] : f32 from vector<1x1x1xf32>
    %cst_589 = arith.constant 8.000000e+00 : f32
    %720 = arith.divf %719, %cst_589 : f32
    %721 = arith.addf %508, %554 : f32
    %c0_590 = arith.constant 0 : index
    %722 = memref.load %arg15[%c0_590] : memref<1xf32, #tpu.memory_space<smem>>
    %723 = arith.addf %714, %720 : f32
    %724 = arith.mulf %722, %723 : f32
    %725 = arith.addf %721, %724 : f32
    %c0_591 = arith.constant 0 : index
    %c0_592 = arith.constant 0 : index
    %726 = memref.load %arg16[%c0_591, %c0_592] : memref<1x1xf32, #tpu.memory_space<smem>>
    memref.store %725, %arg16[%c0_591, %c0_592] : memref<1x1xf32, #tpu.memory_space<smem>>
    return
  }
}

</mosaic_0001>

<llo_original>
// kernel: tpu_custom_call.1
$region0: #{tpu_custom_call.1}
  #allocation0 [shape = 'u32[]', space=smem, size = 0x4, offset = 0x4, fixed_abs, tag = 'smem constant byte address 0x4 - core index']
  #allocation1 [shape = 'u32[144,128]{1,0:T(1,128)}', space=vmem, size = 0x12000, scoped, tag = 'internal scratch']
  #allocation2 [shape = 'f32[32,256]{1,0:T(8,128)}', space=vmem, size = 0x8000, scoped, tag = 'scratch operand']
  #allocation3 [shape = 's32[2]{0}', space=sflag, size = 0x8, scoped, tag = 'scratch operand']
  #allocation4 [shape = 'f32[1]{0:T(128)S(6)}', space=smem, size = 0x200, scoped, tag = 'scoped memory for tpu_custom_call.1']
  #allocation22 [shape = 's32[]', space=sflag, size = 0x4, offset = 0, fixed_abs, tag = 'sflag constant byte address 0x0 - dummy sync flag']
  #allocation23 [shape = 's32[]', space=sflag, size = 0x4, offset = 0, fixed_abs, tag = 'sflag constant byte address 0x0 - dummy sync flag']
  #allocation24 [shape = 's32[]', space=sflag, size = 0x4, offset = 0, fixed_abs, tag = 'sflag constant byte address 0x0 - dummy sync flag']
  #allocation25 [shape = 's32[]', space=sflag, size = 0x4, offset = 0, fixed_abs, tag = 'sflag constant byte address 0x0 - dummy sync flag']
  #allocation26 [shape = 's32[]', space=sflag, size = 0x4, offset = 0, fixed_abs, tag = 'sflag constant byte address 0x0 - dummy sync flag']
  #allocation27 [shape = 's32[]', space=sflag, size = 0x4, offset = 0, fixed_abs, tag = 'sflag constant byte address 0x0 - dummy sync flag']
  #allocation28 [shape = 's32[]', space=sflag, size = 0x4, offset = 0, fixed_abs, tag = 'sflag constant byte address 0x0 - dummy sync flag']
  #allocation29 [shape = 's32[]', space=sflag, size = 0x4, offset = 0, fixed_abs, tag = 'sflag constant byte address 0x0 - dummy sync flag']
  #allocation30 [shape = 's32[]', space=sflag, size = 0x4, offset = 0, fixed_abs, tag = 'sflag constant byte address 0x0 - dummy sync flag']
  #allocation31 [shape = 's32[]', space=sflag, size = 0x4, offset = 0, fixed_abs, tag = 'sflag constant byte address 0x0 - dummy sync flag']
  #allocation32 [shape = 's32[]', space=sflag, size = 0x4, offset = 0, fixed_abs, tag = 'sflag constant byte address 0x0 - dummy sync flag']
  #allocation33 [shape = 's32[]', space=sflag, size = 0x4, offset = 0, fixed_abs, tag = 'sflag constant byte address 0x0 - dummy sync flag']
  #allocation34 [shape = 's32[]', space=sflag, size = 0x4, offset = 0, fixed_abs, tag = 'sflag constant byte address 0x0 - dummy sync flag']
  #allocation35 [shape = 's32[]', space=sflag, size = 0x4, offset = 0, fixed_abs, tag = 'sflag constant byte address 0x0 - dummy sync flag']
  #allocation36 [shape = 's32[]', space=sflag, size = 0x4, offset = 0, fixed_abs, tag = 'sflag constant byte address 0x0 - dummy sync flag']
  #allocation37 [shape = 's32[]', space=sflag, size = 0x4, offset = 0, fixed_abs, tag = 'sflag constant byte address 0x0 - dummy sync flag']
  #allocation38 [shape = 's32[]', space=sflag, size = 0x4, offset = 0, fixed_abs, tag = 'sflag constant byte address 0x0 - dummy sync flag']
  #allocation39 [shape = 's32[]', space=sflag, size = 0x4, offset = 0, fixed_abs, tag = 'sflag constant byte address 0x0 - dummy sync flag']
  #allocation40 [shape = 'u32[]', space=smem, size = 0x4, offset = 0x44, fixed_abs, tag = 'smem constant byte address 0x44 - assertion arg 0']
  #allocation41 [shape = 'u32[]', space=smem, size = 0x4, offset = 0x48, fixed_abs, tag = 'smem constant byte address 0x48 - assertion arg 1']
  #allocation42 [shape = 's32[]', space=sflag, size = 0x4, offset = 0, fixed_abs, tag = 'sflag constant byte address 0x0 - dummy sync flag']
  #allocation43 [shape = 's32[]', space=sflag, size = 0x4, offset = 0, fixed_abs, tag = 'sflag constant byte address 0x0 - dummy sync flag']
  #allocation44 [shape = 's32[]', space=sflag, size = 0x4, offset = 0, fixed_abs, tag = 'sflag constant byte address 0x0 - dummy sync flag']
  #allocation45 [shape = 's32[]', space=sflag, size = 0x4, offset = 0, fixed_abs, tag = 'sflag constant byte address 0x0 - dummy sync flag']
  #allocation46 [shape = 's32[]', space=sflag, size = 0x4, offset = 0, fixed_abs, tag = 'sflag constant byte address 0x0 - dummy sync flag']
  #allocation47 [shape = 's32[]', space=sflag, size = 0x4, offset = 0, fixed_abs, tag = 'sflag constant byte address 0x0 - dummy sync flag']
  #allocation48 [shape = 's32[]', space=sflag, size = 0x4, offset = 0, fixed_abs, tag = 'sflag constant byte address 0x0 - dummy sync flag']
  #allocation49 [shape = 's32[]', space=sflag, size = 0x4, offset = 0, fixed_abs, tag = 'sflag constant byte address 0x0 - dummy sync flag']
  #allocation50 [shape = 's32[]', space=sflag, size = 0x4, offset = 0, fixed_abs, tag = 'sflag constant byte address 0x0 - dummy sync flag']
  #allocation51 [shape = 's32[]', space=sflag, size = 0x4, offset = 0, fixed_abs, tag = 'sflag constant byte address 0x0 - dummy sync flag']
  #allocation52 [shape = 's32[]', space=sflag, size = 0x4, offset = 0, fixed_abs, tag = 'sflag constant byte address 0x0 - dummy sync flag']
  #allocation53 [shape = 's32[]', space=sflag, size = 0x4, offset = 0, fixed_abs, tag = 'sflag constant byte address 0x0 - dummy sync flag']
  #allocation54 [shape = 's32[]', space=sflag, size = 0x4, offset = 0, fixed_abs, tag = 'sflag constant byte address 0x0 - dummy sync flag']
  #allocation55 [shape = 's32[]', space=sflag, size = 0x4, offset = 0, fixed_abs, tag = 'sflag constant byte address 0x0 - dummy sync flag']
  #allocation56 [shape = 's32[]', space=sflag, size = 0x4, offset = 0, fixed_abs, tag = 'sflag constant byte address 0x0 - dummy sync flag']
  #allocation57 [shape = 's32[]', space=sflag, size = 0x4, offset = 0, fixed_abs, tag = 'sflag constant byte address 0x0 - dummy sync flag']
  #allocation58 [shape = 's32[]', space=sflag, size = 0x4, offset = 0, fixed_abs, tag = 'sflag constant byte address 0x0 - dummy sync flag']
  #allocation59 [shape = 's32[]', space=sflag, size = 0x4, offset = 0, fixed_abs, tag = 'sflag constant byte address 0x0 - dummy sync flag']
  #allocation60 [shape = 's32[]', space=sflag, size = 0x4, offset = 0, fixed_abs, tag = 'sflag constant byte address 0x0 - dummy sync flag']
  #allocation61 [shape = 's32[]', space=sflag, size = 0x4, offset = 0, fixed_abs, tag = 'sflag constant byte address 0x0 - dummy sync flag']
  #allocation62 [shape = 's32[]', space=sflag, size = 0x4, offset = 0, fixed_abs, tag = 'sflag constant byte address 0x0 - dummy sync flag']
  #allocation63 [shape = 's32[]', space=sflag, size = 0x4, offset = 0, fixed_abs, tag = 'sflag constant byte address 0x0 - dummy sync flag']
  #allocation64 [shape = 's32[]', space=sflag, size = 0x4, offset = 0, fixed_abs, tag = 'sflag constant byte address 0x0 - dummy sync flag']
  #allocation65 [shape = 's32[]', space=sflag, size = 0x4, offset = 0, fixed_abs, tag = 'sflag constant byte address 0x0 - dummy sync flag']
  #allocation66 [shape = 's32[]', space=sflag, size = 0x4, offset = 0, fixed_abs, tag = 'sflag constant byte address 0x0 - dummy sync flag']
  #allocation67 [shape = 's32[]', space=sflag, size = 0x4, offset = 0, fixed_abs, tag = 'sflag constant byte address 0x0 - dummy sync flag']
  #allocation68 [shape = 's32[]', space=sflag, size = 0x4, offset = 0, fixed_abs, tag = 'sflag constant byte address 0x0 - dummy sync flag']
  #allocation69 [shape = 's32[]', space=sflag, size = 0x4, offset = 0, fixed_abs, tag = 'sflag constant byte address 0x0 - dummy sync flag']
  #allocation70 [shape = 's32[]', space=sflag, size = 0x4, offset = 0, fixed_abs, tag = 'sflag constant byte address 0x0 - dummy sync flag']
  #allocation71 [shape = 's32[]', space=sflag, size = 0x4, offset = 0, fixed_abs, tag = 'sflag constant byte address 0x0 - dummy sync flag']
  #allocation72 [shape = 's32[]', space=sflag, size = 0x4, offset = 0, fixed_abs, tag = 'sflag constant byte address 0x0 - dummy sync flag']
  #allocation73 [shape = 's32[]', space=sflag, size = 0x4, offset = 0, fixed_abs, tag = 'sflag constant byte address 0x0 - dummy sync flag']
  #allocation74 [shape = 's32[]', space=sflag, size = 0x4, offset = 0, fixed_abs, tag = 'sflag constant byte address 0x0 - dummy sync flag']
  #allocation75 [shape = 's32[]', space=sflag, size = 0x4, offset = 0, fixed_abs, tag = 'sflag constant byte address 0x0 - dummy sync flag']
  #allocation76 [shape = 's32[]', space=sflag, size = 0x4, offset = 0, fixed_abs, tag = 'sflag constant byte address 0x0 - dummy sync flag']
  #allocation77 [shape = 's32[]', space=sflag, size = 0x4, offset = 0, fixed_abs, tag = 'sflag constant byte address 0x0 - dummy sync flag']
  #allocation78 [shape = 's32[]', space=sflag, size = 0x4, offset = 0, fixed_abs, tag = 'sflag constant byte address 0x0 - dummy sync flag']
  #allocation79 [shape = 's32[]', space=sflag, size = 0x4, offset = 0, fixed_abs, tag = 'sflag constant byte address 0x0 - dummy sync flag']
  #allocation80 [shape = 's32[]', space=sflag, size = 0x4, offset = 0, fixed_abs, tag = 'sflag constant byte address 0x0 - dummy sync flag']
  #allocation81 [shape = 's32[]', space=sflag, size = 0x4, offset = 0, fixed_abs, tag = 'sflag constant byte address 0x0 - dummy sync flag']
  #allocation82 [shape = 's32[]', space=sflag, size = 0x4, offset = 0, fixed_abs, tag = 'sflag constant byte address 0x0 - dummy sync flag']
  #allocation83 [shape = 's32[]', space=sflag, size = 0x4, offset = 0, fixed_abs, tag = 'sflag constant byte address 0x0 - dummy sync flag']
  #allocation84 [shape = 's32[]', space=sflag, size = 0x4, offset = 0, fixed_abs, tag = 'sflag constant byte address 0x0 - dummy sync flag']
  #allocation85 [shape = 's32[]', space=sflag, size = 0x4, offset = 0, fixed_abs, tag = 'sflag constant byte address 0x0 - dummy sync flag']
  #allocation86 [shape = 's32[]', space=sflag, size = 0x4, offset = 0, fixed_abs, tag = 'sflag constant byte address 0x0 - dummy sync flag']
  #allocation87 [shape = 's32[]', space=sflag, size = 0x4, offset = 0, fixed_abs, tag = 'sflag constant byte address 0x0 - dummy sync flag']
  #allocation88 [shape = 's32[]', space=sflag, size = 0x4, offset = 0, fixed_abs, tag = 'sflag constant byte address 0x0 - dummy sync flag']
  #allocation89 [shape = 's32[]', space=sflag, size = 0x4, offset = 0, fixed_abs, tag = 'sflag constant byte address 0x0 - dummy sync flag']
  #allocation90 [shape = 's32[]', space=sflag, size = 0x4, offset = 0, fixed_abs, tag = 'sflag constant byte address 0x0 - dummy sync flag']
  #allocation91 [shape = 's32[]', space=sflag, size = 0x4, offset = 0, fixed_abs, tag = 'sflag constant byte address 0x0 - dummy sync flag']
  #allocation92 [shape = 's32[]', space=sflag, size = 0x4, offset = 0, fixed_abs, tag = 'sflag constant byte address 0x0 - dummy sync flag']
  #allocation93 [shape = 's32[]', space=sflag, size = 0x4, offset = 0, fixed_abs, tag = 'sflag constant byte address 0x0 - dummy sync flag']
  #allocation94 [shape = 's32[]', space=sflag, size = 0x4, offset = 0, fixed_abs, tag = 'sflag constant byte address 0x0 - dummy sync flag']
  #allocation95 [shape = 's32[]', space=sflag, size = 0x4, offset = 0, fixed_abs, tag = 'sflag constant byte address 0x0 - dummy sync flag']
  #allocation96 [shape = 's32[]', space=sflag, size = 0x4, offset = 0, fixed_abs, tag = 'sflag constant byte address 0x0 - dummy sync flag']
  #allocation97 [shape = 's32[]', space=sflag, size = 0x4, offset = 0, fixed_abs, tag = 'sflag constant byte address 0x0 - dummy sync flag']
  #allocation98 [shape = 's32[]', space=sflag, size = 0x4, offset = 0, fixed_abs, tag = 'sflag constant byte address 0x0 - dummy sync flag']
  #allocation99 [shape = 's32[]', space=sflag, size = 0x4, offset = 0, fixed_abs, tag = 'sflag constant byte address 0x0 - dummy sync flag']
  #allocation100 [shape = 's32[]', space=sflag, size = 0x4, offset = 0, fixed_abs, tag = 'sflag constant byte address 0x0 - dummy sync flag']
  #allocation101 [shape = 's32[]', space=sflag, size = 0x4, offset = 0, fixed_abs, tag = 'sflag constant byte address 0x0 - dummy sync flag']
  #allocation102 [shape = 's32[]', space=sflag, size = 0x4, offset = 0, fixed_abs, tag = 'sflag constant byte address 0x0 - dummy sync flag']
  #allocation103 [shape = 's32[]', space=sflag, size = 0x4, offset = 0, fixed_abs, tag = 'sflag constant byte address 0x0 - dummy sync flag']
  #allocation104 [shape = 's32[]', space=sflag, size = 0x4, offset = 0, fixed_abs, tag = 'sflag constant byte address 0x0 - dummy sync flag']
  #allocation105 [shape = 's32[]', space=sflag, size = 0x4, offset = 0, fixed_abs, tag = 'sflag constant byte address 0x0 - dummy sync flag']
  #allocation106 [shape = 's32[]', space=sflag, size = 0x4, offset = 0, fixed_abs, tag = 'sflag constant byte address 0x0 - dummy sync flag']
  #allocation107 [shape = 's32[]', space=sflag, size = 0x4, offset = 0, fixed_abs, tag = 'sflag constant byte address 0x0 - dummy sync flag']
  #allocation108 [shape = 's32[]', space=sflag, size = 0x4, offset = 0, fixed_abs, tag = 'sflag constant byte address 0x0 - dummy sync flag']
  #allocation109 [shape = 's32[]', space=sflag, size = 0x4, offset = 0, fixed_abs, tag = 'sflag constant byte address 0x0 - dummy sync flag']
  #allocation110 [shape = 's32[]', space=sflag, size = 0x4, offset = 0, fixed_abs, tag = 'sflag constant byte address 0x0 - dummy sync flag']
  #allocation111 [shape = 's32[]', space=sflag, size = 0x4, offset = 0, fixed_abs, tag = 'sflag constant byte address 0x0 - dummy sync flag']
  #allocation112 [shape = 's32[]', space=sflag, size = 0x4, offset = 0, fixed_abs, tag = 'sflag constant byte address 0x0 - dummy sync flag']
  #allocation113 [shape = 's32[]', space=sflag, size = 0x4, offset = 0, fixed_abs, tag = 'sflag constant byte address 0x0 - dummy sync flag']
  #allocation114 [shape = 's32[]', space=sflag, size = 0x4, offset = 0, fixed_abs, tag = 'sflag constant byte address 0x0 - dummy sync flag']
  #allocation115 [shape = 's32[]', space=sflag, size = 0x4, offset = 0, fixed_abs, tag = 'sflag constant byte address 0x0 - dummy sync flag']
  #allocation116 [shape = 's32[]', space=sflag, size = 0x4, offset = 0, fixed_abs, tag = 'sflag constant byte address 0x0 - dummy sync flag']
  #allocation117 [shape = 's32[]', space=sflag, size = 0x4, offset = 0, fixed_abs, tag = 'sflag constant byte address 0x0 - dummy sync flag']
  #allocation118 [shape = 's32[]', space=sflag, size = 0x4, offset = 0, fixed_abs, tag = 'sflag constant byte address 0x0 - dummy sync flag']
  #allocation119 [shape = 's32[]', space=sflag, size = 0x4, offset = 0, fixed_abs, tag = 'sflag constant byte address 0x0 - dummy sync flag']
  %s0 = inlined_call_operand.vmem [shape: f32[32,128], index: 0, kind: input, shape index: {}]
  %s1 = inlined_call_operand.hbm [shape: f32[32,128], index: 1, kind: input, shape index: {}]
  %s2 = inlined_call_operand.hbm [shape: bf16[256,128], index: 2, kind: input, shape index: {}]
  %s3 = inlined_call_operand.vmem [shape: f32[1,128], index: 3, kind: input, shape index: {}]
  %s4 = inlined_call_operand.vmem [shape: s32[6,1], index: 4, kind: input, shape index: {}]
  %s5 = inlined_call_operand.vmem [shape: s32[6,1], index: 5, kind: input, shape index: {}]
  %s6 = inlined_call_operand.vmem [shape: f32[16,1], index: 6, kind: input, shape index: {}]
  %s7 = inlined_call_operand.vmem [shape: s32[8], index: 7, kind: input, shape index: {}]
  %s8 = inlined_call_operand.vmem [shape: s32[8], index: 8, kind: input, shape index: {}]
  %s9 = inlined_call_operand.vmem [shape: s32[8], index: 9, kind: input, shape index: {}]
  %s10 = inlined_call_operand.vmem [shape: s32[8], index: 10, kind: input, shape index: {}]
  %s11 = inlined_call_operand.vmem [shape: s32[8], index: 11, kind: input, shape index: {}]
  %s12 = inlined_call_operand.vmem [shape: s32[8], index: 12, kind: input, shape index: {}]
  %s13 = inlined_call_operand.vmem [shape: s32[8], index: 13, kind: input, shape index: {}]
  %s14 = inlined_call_operand.vmem [shape: s32[8], index: 14, kind: input, shape index: {}]
  %s15 = inlined_call_operand.<no memory space> [shape: f32[1], index: 15, kind: input, shape index: {}]
  %s16 = inlined_call_operand.hbm [shape: f32[1,1], index: 16, kind: output, shape index: {}]
  %s17 = sld [smem:[#allocation0]]
  $region1190: #{tpu_custom_call.1} parent=0
    _
  %s19 = ssub.s32 1, %s17
  %s20 = scalar_select 0, %s19, %s17
  %21 = sst [smem:[#allocation4]] %s15
  $region1: #{tpu_custom_call.1} parent=0
    #allocation5 [shape = 'u8[65536]{0}', space=vmem, size = 0x10000, scoped, tag = 'input window, operand 2, single buffered']
    #allocation6 [shape = 's32[1]{0}', space=sflag, size = 0x4, scoped, tag = 'scoped memory for tpu_custom_call.1']
    #allocation7 [shape = 's32[1]{0}', space=sflag, size = 0x4, scoped, tag = 'scoped memory for tpu_custom_call.1']
    #allocation8 [shape = 's32[1]{0}', space=sflag, size = 0x4, scoped, tag = 'scoped memory for tpu_custom_call.1']
    #allocation9 [shape = 'u8[512]{0}', space=smem, size = 0x200, scoped, tag = 'input window, operand 7, single buffered']
    #allocation10 [shape = 'u8[512]{0}', space=smem, size = 0x200, scoped, tag = 'input window, operand 8, single buffered']
    #allocation11 [shape = 's32[1]{0}', space=sflag, size = 0x4, scoped, tag = 'scoped memory for tpu_custom_call.1']
    #allocation12 [shape = 'u8[512]{0}', space=smem, size = 0x200, scoped, tag = 'input window, operand 9, single buffered']
    #allocation13 [shape = 'u8[512]{0}', space=smem, size = 0x200, scoped, tag = 'input window, operand 10, single buffered']
    #allocation14 [shape = 's32[1]{0}', space=sflag, size = 0x4, scoped, tag = 'scoped memory for tpu_custom_call.1']
    #allocation15 [shape = 'u8[512]{0}', space=smem, size = 0x200, scoped, tag = 'input window, operand 11, single buffered']
    #allocation16 [shape = 'u8[512]{0}', space=smem, size = 0x200, scoped, tag = 'input window, operand 12, single buffered']
    #allocation17 [shape = 's32[1]{0}', space=sflag, size = 0x4, scoped, tag = 'scoped memory for tpu_custom_call.1']
    #allocation18 [shape = 'u8[512]{0}', space=smem, size = 0x200, scoped, tag = 'input window, operand 13, single buffered']
    #allocation19 [shape = 'u8[512]{0}', space=smem, size = 0x200, scoped, tag = 'input window, operand 14, single buffered']
    #allocation20 [shape = 's32[1]{0}', space=sflag, size = 0x4, scoped, tag = 'scoped memory for tpu_custom_call.1']
    #allocation21 [shape = 'u8[512]{0}', space=smem, size = 0x200, scoped, tag = 'output window, operand 0, single buffered']
    %22 = vsyncpa [#allocation6], 0
    %23 = vsyncpa [#allocation8], 0
    %24 = vsyncpa [#allocation11], 0
    %25 = vsyncpa [#allocation14], 0
    %26 = vsyncpa [#allocation17], 0
    %27 = vsyncpa [#allocation20], 0
    %28 = vsyncpa [#allocation7], 0
    // Predicated region
    $region2: #{tpu_custom_call.1} parent=1 // pred_check
      _
    $region3: #{tpu_custom_call.1} parent=1 // pred_check_branch
      %30 = sbr.rel (0) target = $region5
    $region4: #{tpu_custom_call.1} parent=1 // pred_region
      %s32 = ssub.s32 2048, 2048
      %33 = vsyncadd [#allocation6], %s32
      %s34 = sshll.u32 [#allocation5], 4
      %s35 = int_to_ptr.vmem [resolvable:$true] %s34
      %40 = dma.hbm_to_vmem [thread:$0]  %s2, 2048, %s35, [#allocation6], 64, 64, 4
    $region5: #{tpu_custom_call.1} parent=1 // pred_fallthru
      _
    // Predicated region
    $region6: #{tpu_custom_call.1} parent=1 // pred_check
      _
    $region7: #{tpu_custom_call.1} parent=1 // pred_check_branch
      %42 = sbr.rel (0) target = $region9
    $region8: #{tpu_custom_call.1} parent=1 // pred_region
      _
    $region9: #{tpu_custom_call.1} parent=1 // pred_fallthru
      _
    // Predicated region
    $region10: #{tpu_custom_call.1} parent=1 // pred_check
      _
    $region11: #{tpu_custom_call.1} parent=1 // pred_check_branch
      %44 = sbr.rel (0) target = $region13
    $region12: #{tpu_custom_call.1} parent=1 // pred_region
      _
    $region13: #{tpu_custom_call.1} parent=1 // pred_fallthru
      _
    // Predicated region
    $region14: #{tpu_custom_call.1} parent=1 // pred_check
      _
    $region15: #{tpu_custom_call.1} parent=1 // pred_check_branch
      %46 = sbr.rel (0) target = $region17
    $region16: #{tpu_custom_call.1} parent=1 // pred_region
      _
    $region17: #{tpu_custom_call.1} parent=1 // pred_fallthru
      _
    // Predicated region
    $region18: #{tpu_custom_call.1} parent=1 // pred_check
      _
    $region19: #{tpu_custom_call.1} parent=1 // pred_check_branch
      %48 = sbr.rel (0) target = $region21
    $region20: #{tpu_custom_call.1} parent=1 // pred_region
      _
    $region21: #{tpu_custom_call.1} parent=1 // pred_fallthru
      _
    // Predicated region
    $region22: #{tpu_custom_call.1} parent=1 // pred_check
      _
    $region23: #{tpu_custom_call.1} parent=1 // pred_check_branch
      %50 = sbr.rel (0) target = $region25
    $region24: #{tpu_custom_call.1} parent=1 // pred_region
      %s52 = ssub.s32 16, 16
      %53 = vsyncadd [#allocation8], %s52
      %s55 = sshll.u32 %s7, 4
      %s56 = int_to_ptr.vmem [resolvable:$true] %s55
      %58 = dma.vmem_to_smem %s56, 16, [#allocation9], [#allocation8]
    $region25: #{tpu_custom_call.1} parent=1 // pred_fallthru
      _
    // Predicated region
    $region26: #{tpu_custom_call.1} parent=1 // pred_check
      _
    $region27: #{tpu_custom_call.1} parent=1 // pred_check_branch
      %60 = sbr.rel (0) target = $region29
    $region28: #{tpu_custom_call.1} parent=1 // pred_region
      %s62 = ssub.s32 16, 16
      %63 = vsyncadd [#allocation11], %s62
      %s65 = sshll.u32 %s8, 4
      %s66 = int_to_ptr.vmem [resolvable:$true] %s65
      %68 = dma.vmem_to_smem %s66, 16, [#allocation10], [#allocation11]
    $region29: #{tpu_custom_call.1} parent=1 // pred_fallthru
      _
    // Predicated region
    $region30: #{tpu_custom_call.1} parent=1 // pred_check
      _
    $region31: #{tpu_custom_call.1} parent=1 // pred_check_branch
      %70 = sbr.rel (0) target = $region33
    $region32: #{tpu_custom_call.1} parent=1 // pred_region
      %s72 = ssub.s32 16, 16
      %73 = vsyncadd [#allocation11], %s72
      %s75 = sshll.u32 %s9, 4
      %s76 = int_to_ptr.vmem [resolvable:$true] %s75
      %78 = dma.vmem_to_smem %s76, 16, [#allocation12], [#allocation11]
    $region33: #{tpu_custom_call.1} parent=1 // pred_fallthru
      _
    // Predicated region
    $region34: #{tpu_custom_call.1} parent=1 // pred_check
      _
    $region35: #{tpu_custom_call.1} parent=1 // pred_check_branch
      %80 = sbr.rel (0) target = $region37
    $region36: #{tpu_custom_call.1} parent=1 // pred_region
      %s82 = ssub.s32 16, 16
      %83 = vsyncadd [#allocation14], %s82
      %s85 = sshll.u32 %s10, 4
      %s86 = int_to_ptr.vmem [resolvable:$true] %s85
      %88 = dma.vmem_to_smem %s86, 16, [#allocation13], [#allocation14]
    $region37: #{tpu_custom_call.1} parent=1 // pred_fallthru
      _
    // Predicated region
    $region38: #{tpu_custom_call.1} parent=1 // pred_check
      _
    $region39: #{tpu_custom_call.1} parent=1 // pred_check_branch
      %90 = sbr.rel (0) target = $region41
    $region40: #{tpu_custom_call.1} parent=1 // pred_region
      %s92 = ssub.s32 16, 16
      %93 = vsyncadd [#allocation14], %s92
      %s95 = sshll.u32 %s11, 4
      %s96 = int_to_ptr.vmem [resolvable:$true] %s95
      %98 = dma.vmem_to_smem %s96, 16, [#allocation15], [#allocation14]
    $region41: #{tpu_custom_call.1} parent=1 // pred_fallthru
      _
    // Predicated region
    $region42: #{tpu_custom_call.1} parent=1 // pred_check
      _
    $region43: #{tpu_custom_call.1} parent=1 // pred_check_branch
      %100 = sbr.rel (0) target = $region45
    $region44: #{tpu_custom_call.1} parent=1 // pred_region
      %s102 = ssub.s32 16, 16
      %103 = vsyncadd [#allocation17], %s102
      %s105 = sshll.u32 %s12, 4
      %s106 = int_to_ptr.vmem [resolvable:$true] %s105
      %108 = dma.vmem_to_smem %s106, 16, [#allocation16], [#allocation17]
    $region45: #{tpu_custom_call.1} parent=1 // pred_fallthru
      _
    // Predicated region
    $region46: #{tpu_custom_call.1} parent=1 // pred_check
      _
    $region47: #{tpu_custom_call.1} parent=1 // pred_check_branch
      %110 = sbr.rel (0) target = $region49
    $region48: #{tpu_custom_call.1} parent=1 // pred_region
      %s112 = ssub.s32 16, 16
      %113 = vsyncadd [#allocation17], %s112
      %s115 = sshll.u32 %s13, 4
      %s116 = int_to_ptr.vmem [resolvable:$true] %s115
      %118 = dma.vmem_to_smem %s116, 16, [#allocation18], [#allocation17]
    $region49: #{tpu_custom_call.1} parent=1 // pred_fallthru
      _
    // Predicated region
    $region50: #{tpu_custom_call.1} parent=1 // pred_check
      _
    $region51: #{tpu_custom_call.1} parent=1 // pred_check_branch
      %120 = sbr.rel (0) target = $region53
    $region52: #{tpu_custom_call.1} parent=1 // pred_region
      %s122 = ssub.s32 16, 16
      %123 = vsyncadd [#allocation20], %s122
      %s125 = sshll.u32 %s14, 4
      %s126 = int_to_ptr.vmem [resolvable:$true] %s125
      %128 = dma.vmem_to_smem %s126, 16, [#allocation19], [#allocation20]
    $region53: #{tpu_custom_call.1} parent=1 // pred_fallthru
      _
    // Predicated region
    $region54: #{tpu_custom_call.1} parent=1 // pred_check
      _
    $region55: #{tpu_custom_call.1} parent=1 // pred_check_branch
      %130 = sbr.rel (0) target = $region57
    $region56: #{tpu_custom_call.1} parent=1 // pred_region
      _
    $region57: #{tpu_custom_call.1} parent=1 // pred_fallthru
      _
    // Predicated region
    $region58: #{tpu_custom_call.1} parent=1 // pred_check
      _
    $region59: #{tpu_custom_call.1} parent=1 // pred_check_branch
      %132 = sbr.rel (0) target = $region61
    $region60: #{tpu_custom_call.1} parent=1 // pred_region
      %133 = dma.done [#allocation6], 2048
    $region61: #{tpu_custom_call.1} parent=1 // pred_fallthru
      _
    // Predicated region
    $region62: #{tpu_custom_call.1} parent=1 // pred_check
      _
    $region63: #{tpu_custom_call.1} parent=1 // pred_check_branch
      %135 = sbr.rel (0) target = $region65
    $region64: #{tpu_custom_call.1} parent=1 // pred_region
      %136 = dma.done [#allocation8], 16
    $region65: #{tpu_custom_call.1} parent=1 // pred_fallthru
      _
    // Predicated region
    $region66: #{tpu_custom_call.1} parent=1 // pred_check
      _
    $region67: #{tpu_custom_call.1} parent=1 // pred_check_branch
      %138 = sbr.rel (0) target = $region69
    $region68: #{tpu_custom_call.1} parent=1 // pred_region
      %139 = dma.done [#allocation11], 16
    $region69: #{tpu_custom_call.1} parent=1 // pred_fallthru
      _
    // Predicated region
    $region70: #{tpu_custom_call.1} parent=1 // pred_check
      _
    $region71: #{tpu_custom_call.1} parent=1 // pred_check_branch
      %141 = sbr.rel (0) target = $region73
    $region72: #{tpu_custom_call.1} parent=1 // pred_region
      %142 = dma.done [#allocation11], 16
    $region73: #{tpu_custom_call.1} parent=1 // pred_fallthru
      _
    // Predicated region
    $region74: #{tpu_custom_call.1} parent=1 // pred_check
      _
    $region75: #{tpu_custom_call.1} parent=1 // pred_check_branch
      %144 = sbr.rel (0) target = $region77
    $region76: #{tpu_custom_call.1} parent=1 // pred_region
      %145 = dma.done [#allocation14], 16
    $region77: #{tpu_custom_call.1} parent=1 // pred_fallthru
      _
    // Predicated region
    $region78: #{tpu_custom_call.1} parent=1 // pred_check
      _
    $region79: #{tpu_custom_call.1} parent=1 // pred_check_branch
      %147 = sbr.rel (0) target = $region81
    $region80: #{tpu_custom_call.1} parent=1 // pred_region
      %148 = dma.done [#allocation14], 16
    $region81: #{tpu_custom_call.1} parent=1 // pred_fallthru
      _
    // Predicated region
    $region82: #{tpu_custom_call.1} parent=1 // pred_check
      _
    $region83: #{tpu_custom_call.1} parent=1 // pred_check_branch
      %150 = sbr.rel (0) target = $region85
    $region84: #{tpu_custom_call.1} parent=1 // pred_region
      %151 = dma.done [#allocation17], 16
    $region85: #{tpu_custom_call.1} parent=1 // pred_fallthru
      _
    // Predicated region
    $region86: #{tpu_custom_call.1} parent=1 // pred_check
      _
    $region87: #{tpu_custom_call.1} parent=1 // pred_check_branch
      %153 = sbr.rel (0) target = $region89
    $region88: #{tpu_custom_call.1} parent=1 // pred_region
      %154 = dma.done [#allocation17], 16
    $region89: #{tpu_custom_call.1} parent=1 // pred_fallthru
      _
    // Predicated region
    $region90: #{tpu_custom_call.1} parent=1 // pred_check
      _
    $region91: #{tpu_custom_call.1} parent=1 // pred_check_branch
      %156 = sbr.rel (0) target = $region93
    $region92: #{tpu_custom_call.1} parent=1 // pred_region
      %157 = dma.done [#allocation20], 16
    $region93: #{tpu_custom_call.1} parent=1 // pred_fallthru
      _
    %158 = sfence
    %s160 = sld [smem:[#allocation9]]
    %s161 = sld [smem:[#allocation10]]
    %s162 = scalar_lea.vmem %s0, %s160
    %p164 = scmp.lt.u32.totalorder 1, 8
    %p165 = pneg %p164
    // Predicated region
    $region94: #{tpu_custom_call.1} parent=1 // pred_check
      _
    $region95: #{tpu_custom_call.1} parent=1 // pred_check_branch
      %167 = sbr.rel (%p164) target = $region97
    $region96: #{tpu_custom_call.1} parent=1 // pred_region
      %s182 = sand.u32 1, 7
      %p183 = scmp.eq.s32.totalorder %s182, 0
      %p184 = pneg %p183
      // Predicated region
      $region109: #{tpu_custom_call.1} parent=96 // pred_check
        _
      $region110: #{tpu_custom_call.1} parent=96 // pred_check_branch
        %186 = sbr.rel (%p183) target = $region112
      $region111: #{tpu_custom_call.1} parent=96 // pred_region
        %s187 = sand.u32 1, 7
        %s188 = ssub.s32 1, %s187
        %s189 = scalar_lea.vmem %s162, %s188
        %s190 = ssub.s32 1, %s187
        %s191 = scalar_lea.vmem [#allocation2], %s190
        %s192 = sshllo.u32 0, %s187
        loop: start=0, step=1, limit=1
        $region113: #{tpu_custom_call.1} parent=111 // loop_pre_header
          _
        $region114: #{tpu_custom_call.1} parent=111 // loop_header
          %s194 = sphi 0, %s198
          %p195 = scmp.ge.s32.totalorder %s194, 1
          %s199 = sphi %s189, %s189
          %s200 = sphi %s191, %s191
        $region115: #{tpu_custom_call.1} parent=111 // loop_header_branch
          %197 = sbr.rel (%p195) target = $region119
        $region116: #{tpu_custom_call.1} parent=111 // loop_body
          %v201 = vld [vmem:[%s199] sm:%s192]
          %202 = vst [vmem:[%s200] sm:%s192] %v201
        $region117: #{tpu_custom_call.1} parent=111 // loop_footer
          %s198 = sadd.s32 1, %s194
        $region118: #{tpu_custom_call.1} parent=111 // loop_footer_branch
          %193 = sbr.rel target = $region114
        $region119: #{tpu_custom_call.1} parent=111 // loop_exit
          _
      $region112: #{tpu_custom_call.1} parent=96 // pred_fallthru
        _
    $region97: #{tpu_custom_call.1} parent=1 // pred_fallthru
      _
    // Predicated region
    $region98: #{tpu_custom_call.1} parent=1 // pred_check
      %p168 = pneg %p164
    $region99: #{tpu_custom_call.1} parent=1 // pred_check_branch
      %170 = sbr.rel (%p168) target = $region101
    $region100: #{tpu_custom_call.1} parent=1 // pred_region
      %s171 = sshllo.u32 0, 1
      loop: start=0, step=1, limit=1
      $region102: #{tpu_custom_call.1} parent=100 // loop_pre_header
        _
      $region103: #{tpu_custom_call.1} parent=100 // loop_header
        %s173 = sphi 0, %s177
        %p174 = scmp.ge.s32.totalorder %s173, 1
        %s178 = sphi %s162, %s162
        %s179 = sphi [#allocation2], [#allocation2]
      $region104: #{tpu_custom_call.1} parent=100 // loop_header_branch
        %176 = sbr.rel (%p174) target = $region108
      $region105: #{tpu_custom_call.1} parent=100 // loop_body
        %v180 = vld [vmem:[%s178] sm:%s171]
        %181 = vst [vmem:[%s179] sm:%s171] %v180
      $region106: #{tpu_custom_call.1} parent=100 // loop_footer
        %s177 = sadd.s32 1, %s173
      $region107: #{tpu_custom_call.1} parent=100 // loop_footer_branch
        %172 = sbr.rel target = $region103
      $region108: #{tpu_custom_call.1} parent=100 // loop_exit
        _
    $region101: #{tpu_custom_call.1} parent=1 // pred_fallthru
      _
    // Predicated region
    $region120: #{tpu_custom_call.1} parent=1 // pred_check
      _
    $region121: #{tpu_custom_call.1} parent=1 // pred_check_branch
      %205 = sbr.rel (0) target = $region123
    $region122: #{tpu_custom_call.1} parent=1 // pred_region
      %206 = vsyncadd [#allocation3], 16
    $region123: #{tpu_custom_call.1} parent=1 // pred_fallthru
      _
    %s207 = scalar_lea.vmem %s0, %s161
    %s208 = scalar_lea.vmem [#allocation2], 8
    %p210 = scmp.lt.u32.totalorder 1, 8
    %p211 = pneg %p210
    // Predicated region
    $region124: #{tpu_custom_call.1} parent=1 // pred_check
      _
    $region125: #{tpu_custom_call.1} parent=1 // pred_check_branch
      %213 = sbr.rel (%p210) target = $region127
    $region126: #{tpu_custom_call.1} parent=1 // pred_region
      %s228 = sand.u32 1, 7
      %p229 = scmp.eq.s32.totalorder %s228, 0
      %p230 = pneg %p229
      // Predicated region
      $region139: #{tpu_custom_call.1} parent=126 // pred_check
        _
      $region140: #{tpu_custom_call.1} parent=126 // pred_check_branch
        %232 = sbr.rel (%p229) target = $region142
      $region141: #{tpu_custom_call.1} parent=126 // pred_region
        %s233 = sand.u32 1, 7
        %s234 = ssub.s32 1, %s233
        %s235 = scalar_lea.vmem %s207, %s234
        %s236 = ssub.s32 1, %s233
        %s237 = scalar_lea.vmem %s208, %s236 [#allocation2]
        %s238 = sshllo.u32 0, %s233
        loop: start=0, step=1, limit=1
        $region143: #{tpu_custom_call.1} parent=141 // loop_pre_header
          _
        $region144: #{tpu_custom_call.1} parent=141 // loop_header
          %s240 = sphi 0, %s244
          %p241 = scmp.ge.s32.totalorder %s240, 1
          %s245 = sphi %s235, %s235
          %s246 = sphi %s237, %s237
        $region145: #{tpu_custom_call.1} parent=141 // loop_header_branch
          %243 = sbr.rel (%p241) target = $region149
        $region146: #{tpu_custom_call.1} parent=141 // loop_body
          %v247 = vld [vmem:[%s245] sm:%s238]
          %248 = vst [vmem:[%s246] sm:%s238] %v247
        $region147: #{tpu_custom_call.1} parent=141 // loop_footer
          %s244 = sadd.s32 1, %s240
        $region148: #{tpu_custom_call.1} parent=141 // loop_footer_branch
          %239 = sbr.rel target = $region144
        $region149: #{tpu_custom_call.1} parent=141 // loop_exit
          _
      $region142: #{tpu_custom_call.1} parent=126 // pred_fallthru
        _
    $region127: #{tpu_custom_call.1} parent=1 // pred_fallthru
      _
    // Predicated region
    $region128: #{tpu_custom_call.1} parent=1 // pred_check
      %p214 = pneg %p210
    $region129: #{tpu_custom_call.1} parent=1 // pred_check_branch
      %216 = sbr.rel (%p214) target = $region131
    $region130: #{tpu_custom_call.1} parent=1 // pred_region
      %s217 = sshllo.u32 0, 1
      loop: start=0, step=1, limit=1
      $region132: #{tpu_custom_call.1} parent=130 // loop_pre_header
        _
      $region133: #{tpu_custom_call.1} parent=130 // loop_header
        %s219 = sphi 0, %s223
        %p220 = scmp.ge.s32.totalorder %s219, 1
        %s224 = sphi %s207, %s207
        %s225 = sphi %s208, %s208
      $region134: #{tpu_custom_call.1} parent=130 // loop_header_branch
        %222 = sbr.rel (%p220) target = $region138
      $region135: #{tpu_custom_call.1} parent=130 // loop_body
        %v226 = vld [vmem:[%s224] sm:%s217]
        %227 = vst [vmem:[%s225] sm:%s217] %v226
      $region136: #{tpu_custom_call.1} parent=130 // loop_footer
        %s223 = sadd.s32 1, %s219
      $region137: #{tpu_custom_call.1} parent=130 // loop_footer_branch
        %218 = sbr.rel target = $region133
      $region138: #{tpu_custom_call.1} parent=130 // loop_exit
        _
    $region131: #{tpu_custom_call.1} parent=1 // pred_fallthru
      _
    // Predicated region
    $region150: #{tpu_custom_call.1} parent=1 // pred_check
      _
    $region151: #{tpu_custom_call.1} parent=1 // pred_check_branch
      %251 = sbr.rel (0) target = $region153
    $region152: #{tpu_custom_call.1} parent=1 // pred_region
      %252 = vsyncadd [#allocation3], 16
    $region153: #{tpu_custom_call.1} parent=1 // pred_fallthru
      _
    %s253 = sld [smem:[#allocation9 + $0x1]]
    %s254 = sld [smem:[#allocation10 + $0x1]]
    %s255 = scalar_lea.vmem %s0, %s253
    %s256 = scalar_lea.vmem [#allocation2], 1
    %p258 = scmp.lt.u32.totalorder 1, 8
    %p259 = pneg %p258
    // Predicated region
    $region154: #{tpu_custom_call.1} parent=1 // pred_check
      _
    $region155: #{tpu_custom_call.1} parent=1 // pred_check_branch
      %261 = sbr.rel (%p258) target = $region157
    $region156: #{tpu_custom_call.1} parent=1 // pred_region
      %s276 = sand.u32 1, 7
      %p277 = scmp.eq.s32.totalorder %s276, 0
      %p278 = pneg %p277
      // Predicated region
      $region169: #{tpu_custom_call.1} parent=156 // pred_check
        _
      $region170: #{tpu_custom_call.1} parent=156 // pred_check_branch
        %280 = sbr.rel (%p277) target = $region172
      $region171: #{tpu_custom_call.1} parent=156 // pred_region
        %s281 = sand.u32 1, 7
        %s282 = ssub.s32 1, %s281
        %s283 = scalar_lea.vmem %s255, %s282
        %s284 = ssub.s32 1, %s281
        %s285 = scalar_lea.vmem %s256, %s284 [#allocation2]
        %s286 = sshllo.u32 0, %s281
        loop: start=0, step=1, limit=1
        $region173: #{tpu_custom_call.1} parent=171 // loop_pre_header
          _
        $region174: #{tpu_custom_call.1} parent=171 // loop_header
          %s288 = sphi 0, %s292
          %p289 = scmp.ge.s32.totalorder %s288, 1
          %s293 = sphi %s283, %s283
          %s294 = sphi %s285, %s285
        $region175: #{tpu_custom_call.1} parent=171 // loop_header_branch
          %291 = sbr.rel (%p289) target = $region179
        $region176: #{tpu_custom_call.1} parent=171 // loop_body
          %v295 = vld [vmem:[%s293] sm:%s286]
          %296 = vst [vmem:[%s294] sm:%s286] %v295
        $region177: #{tpu_custom_call.1} parent=171 // loop_footer
          %s292 = sadd.s32 1, %s288
        $region178: #{tpu_custom_call.1} parent=171 // loop_footer_branch
          %287 = sbr.rel target = $region174
        $region179: #{tpu_custom_call.1} parent=171 // loop_exit
          _
      $region172: #{tpu_custom_call.1} parent=156 // pred_fallthru
        _
    $region157: #{tpu_custom_call.1} parent=1 // pred_fallthru
      _
    // Predicated region
    $region158: #{tpu_custom_call.1} parent=1 // pred_check
      %p262 = pneg %p258
    $region159: #{tpu_custom_call.1} parent=1 // pred_check_branch
      %264 = sbr.rel (%p262) target = $region161
    $region160: #{tpu_custom_call.1} parent=1 // pred_region
      %s265 = sshllo.u32 0, 1
      loop: start=0, step=1, limit=1
      $region162: #{tpu_custom_call.1} parent=160 // loop_pre_header
        _
      $region163: #{tpu_custom_call.1} parent=160 // loop_header
        %s267 = sphi 0, %s271
        %p268 = scmp.ge.s32.totalorder %s267, 1
        %s272 = sphi %s255, %s255
        %s273 = sphi %s256, %s256
      $region164: #{tpu_custom_call.1} parent=160 // loop_header_branch
        %270 = sbr.rel (%p268) target = $region168
      $region165: #{tpu_custom_call.1} parent=160 // loop_body
        %v274 = vld [vmem:[%s272] sm:%s265]
        %275 = vst [vmem:[%s273] sm:%s265] %v274
      $region166: #{tpu_custom_call.1} parent=160 // loop_footer
        %s271 = sadd.s32 1, %s267
      $region167: #{tpu_custom_call.1} parent=160 // loop_footer_branch
        %266 = sbr.rel target = $region163
      $region168: #{tpu_custom_call.1} parent=160 // loop_exit
        _
    $region161: #{tpu_custom_call.1} parent=1 // pred_fallthru
      _
    // Predicated region
    $region180: #{tpu_custom_call.1} parent=1 // pred_check
      _
    $region181: #{tpu_custom_call.1} parent=1 // pred_check_branch
      %299 = sbr.rel (0) target = $region183
    $region182: #{tpu_custom_call.1} parent=1 // pred_region
      %300 = vsyncadd [#allocation3], 16
    $region183: #{tpu_custom_call.1} parent=1 // pred_fallthru
      _
    %s301 = scalar_lea.vmem %s0, %s254
    %s302 = scalar_lea.vmem [#allocation2], 9
    %p304 = scmp.lt.u32.totalorder 1, 8
    %p305 = pneg %p304
    // Predicated region
    $region184: #{tpu_custom_call.1} parent=1 // pred_check
      _
    $region185: #{tpu_custom_call.1} parent=1 // pred_check_branch
      %307 = sbr.rel (%p304) target = $region187
    $region186: #{tpu_custom_call.1} parent=1 // pred_region
      %s322 = sand.u32 1, 7
      %p323 = scmp.eq.s32.totalorder %s322, 0
      %p324 = pneg %p323
      // Predicated region
      $region199: #{tpu_custom_call.1} parent=186 // pred_check
        _
      $region200: #{tpu_custom_call.1} parent=186 // pred_check_branch
        %326 = sbr.rel (%p323) target = $region202
      $region201: #{tpu_custom_call.1} parent=186 // pred_region
        %s327 = sand.u32 1, 7
        %s328 = ssub.s32 1, %s327
        %s329 = scalar_lea.vmem %s301, %s328
        %s330 = ssub.s32 1, %s327
        %s331 = scalar_lea.vmem %s302, %s330 [#allocation2]
        %s332 = sshllo.u32 0, %s327
        loop: start=0, step=1, limit=1
        $region203: #{tpu_custom_call.1} parent=201 // loop_pre_header
          _
        $region204: #{tpu_custom_call.1} parent=201 // loop_header
          %s334 = sphi 0, %s338
          %p335 = scmp.ge.s32.totalorder %s334, 1
          %s339 = sphi %s329, %s329
          %s340 = sphi %s331, %s331
        $region205: #{tpu_custom_call.1} parent=201 // loop_header_branch
          %337 = sbr.rel (%p335) target = $region209
        $region206: #{tpu_custom_call.1} parent=201 // loop_body
          %v341 = vld [vmem:[%s339] sm:%s332]
          %342 = vst [vmem:[%s340] sm:%s332] %v341
        $region207: #{tpu_custom_call.1} parent=201 // loop_footer
          %s338 = sadd.s32 1, %s334
        $region208: #{tpu_custom_call.1} parent=201 // loop_footer_branch
          %333 = sbr.rel target = $region204
        $region209: #{tpu_custom_call.1} parent=201 // loop_exit
          _
      $region202: #{tpu_custom_call.1} parent=186 // pred_fallthru
        _
    $region187: #{tpu_custom_call.1} parent=1 // pred_fallthru
      _
    // Predicated region
    $region188: #{tpu_custom_call.1} parent=1 // pred_check
      %p308 = pneg %p304
    $region189: #{tpu_custom_call.1} parent=1 // pred_check_branch
      %310 = sbr.rel (%p308) target = $region191
    $region190: #{tpu_custom_call.1} parent=1 // pred_region
      %s311 = sshllo.u32 0, 1
      loop: start=0, step=1, limit=1
      $region192: #{tpu_custom_call.1} parent=190 // loop_pre_header
        _
      $region193: #{tpu_custom_call.1} parent=190 // loop_header
        %s313 = sphi 0, %s317
        %p314 = scmp.ge.s32.totalorder %s313, 1
        %s318 = sphi %s301, %s301
        %s319 = sphi %s302, %s302
      $region194: #{tpu_custom_call.1} parent=190 // loop_header_branch
        %316 = sbr.rel (%p314) target = $region198
      $region195: #{tpu_custom_call.1} parent=190 // loop_body
        %v320 = vld [vmem:[%s318] sm:%s311]
        %321 = vst [vmem:[%s319] sm:%s311] %v320
      $region196: #{tpu_custom_call.1} parent=190 // loop_footer
        %s317 = sadd.s32 1, %s313
      $region197: #{tpu_custom_call.1} parent=190 // loop_footer_branch
        %312 = sbr.rel target = $region193
      $region198: #{tpu_custom_call.1} parent=190 // loop_exit
        _
    $region191: #{tpu_custom_call.1} parent=1 // pred_fallthru
      _
    // Predicated region
    $region210: #{tpu_custom_call.1} parent=1 // pred_check
      _
    $region211: #{tpu_custom_call.1} parent=1 // pred_check_branch
      %345 = sbr.rel (0) target = $region213
    $region212: #{tpu_custom_call.1} parent=1 // pred_region
      %346 = vsyncadd [#allocation3], 16
    $region213: #{tpu_custom_call.1} parent=1 // pred_fallthru
      _
    %s347 = sld [smem:[#allocation9 + $0x2]]
    %s348 = sld [smem:[#allocation10 + $0x2]]
    %s349 = scalar_lea.vmem %s0, %s347
    %s350 = scalar_lea.vmem [#allocation2], 2
    %p352 = scmp.lt.u32.totalorder 1, 8
    %p353 = pneg %p352
    // Predicated region
    $region214: #{tpu_custom_call.1} parent=1 // pred_check
      _
    $region215: #{tpu_custom_call.1} parent=1 // pred_check_branch
      %355 = sbr.rel (%p352) target = $region217
    $region216: #{tpu_custom_call.1} parent=1 // pred_region
      %s370 = sand.u32 1, 7
      %p371 = scmp.eq.s32.totalorder %s370, 0
      %p372 = pneg %p371
      // Predicated region
      $region229: #{tpu_custom_call.1} parent=216 // pred_check
        _
      $region230: #{tpu_custom_call.1} parent=216 // pred_check_branch
        %374 = sbr.rel (%p371) target = $region232
      $region231: #{tpu_custom_call.1} parent=216 // pred_region
        %s375 = sand.u32 1, 7
        %s376 = ssub.s32 1, %s375
        %s377 = scalar_lea.vmem %s349, %s376
        %s378 = ssub.s32 1, %s375
        %s379 = scalar_lea.vmem %s350, %s378 [#allocation2]
        %s380 = sshllo.u32 0, %s375
        loop: start=0, step=1, limit=1
        $region233: #{tpu_custom_call.1} parent=231 // loop_pre_header
          _
        $region234: #{tpu_custom_call.1} parent=231 // loop_header
          %s382 = sphi 0, %s386
          %p383 = scmp.ge.s32.totalorder %s382, 1
          %s387 = sphi %s377, %s377
          %s388 = sphi %s379, %s379
        $region235: #{tpu_custom_call.1} parent=231 // loop_header_branch
          %385 = sbr.rel (%p383) target = $region239
        $region236: #{tpu_custom_call.1} parent=231 // loop_body
          %v389 = vld [vmem:[%s387] sm:%s380]
          %390 = vst [vmem:[%s388] sm:%s380] %v389
        $region237: #{tpu_custom_call.1} parent=231 // loop_footer
          %s386 = sadd.s32 1, %s382
        $region238: #{tpu_custom_call.1} parent=231 // loop_footer_branch
          %381 = sbr.rel target = $region234
        $region239: #{tpu_custom_call.1} parent=231 // loop_exit
          _
      $region232: #{tpu_custom_call.1} parent=216 // pred_fallthru
        _
    $region217: #{tpu_custom_call.1} parent=1 // pred_fallthru
      _
    // Predicated region
    $region218: #{tpu_custom_call.1} parent=1 // pred_check
      %p356 = pneg %p352
    $region219: #{tpu_custom_call.1} parent=1 // pred_check_branch
      %358 = sbr.rel (%p356) target = $region221
    $region220: #{tpu_custom_call.1} parent=1 // pred_region
      %s359 = sshllo.u32 0, 1
      loop: start=0, step=1, limit=1
      $region222: #{tpu_custom_call.1} parent=220 // loop_pre_header
        _
      $region223: #{tpu_custom_call.1} parent=220 // loop_header
        %s361 = sphi 0, %s365
        %p362 = scmp.ge.s32.totalorder %s361, 1
        %s366 = sphi %s349, %s349
        %s367 = sphi %s350, %s350
      $region224: #{tpu_custom_call.1} parent=220 // loop_header_branch
        %364 = sbr.rel (%p362) target = $region228
      $region225: #{tpu_custom_call.1} parent=220 // loop_body
        %v368 = vld [vmem:[%s366] sm:%s359]
        %369 = vst [vmem:[%s367] sm:%s359] %v368
      $region226: #{tpu_custom_call.1} parent=220 // loop_footer
        %s365 = sadd.s32 1, %s361
      $region227: #{tpu_custom_call.1} parent=220 // loop_footer_branch
        %360 = sbr.rel target = $region223
      $region228: #{tpu_custom_call.1} parent=220 // loop_exit
        _
    $region221: #{tpu_custom_call.1} parent=1 // pred_fallthru
      _
    // Predicated region
    $region240: #{tpu_custom_call.1} parent=1 // pred_check
      _
    $region241: #{tpu_custom_call.1} parent=1 // pred_check_branch
      %393 = sbr.rel (0) target = $region243
    $region242: #{tpu_custom_call.1} parent=1 // pred_region
      %394 = vsyncadd [#allocation3], 16
    $region243: #{tpu_custom_call.1} parent=1 // pred_fallthru
      _
    %s395 = scalar_lea.vmem %s0, %s348
    %s396 = scalar_lea.vmem [#allocation2], 10
    %p398 = scmp.lt.u32.totalorder 1, 8
    %p399 = pneg %p398
    // Predicated region
    $region244: #{tpu_custom_call.1} parent=1 // pred_check
      _
    $region245: #{tpu_custom_call.1} parent=1 // pred_check_branch
      %401 = sbr.rel (%p398) target = $region247
    $region246: #{tpu_custom_call.1} parent=1 // pred_region
      %s416 = sand.u32 1, 7
      %p417 = scmp.eq.s32.totalorder %s416, 0
      %p418 = pneg %p417
      // Predicated region
      $region259: #{tpu_custom_call.1} parent=246 // pred_check
        _
      $region260: #{tpu_custom_call.1} parent=246 // pred_check_branch
        %420 = sbr.rel (%p417) target = $region262
      $region261: #{tpu_custom_call.1} parent=246 // pred_region
        %s421 = sand.u32 1, 7
        %s422 = ssub.s32 1, %s421
        %s423 = scalar_lea.vmem %s395, %s422
        %s424 = ssub.s32 1, %s421
        %s425 = scalar_lea.vmem %s396, %s424 [#allocation2]
        %s426 = sshllo.u32 0, %s421
        loop: start=0, step=1, limit=1
        $region263: #{tpu_custom_call.1} parent=261 // loop_pre_header
          _
        $region264: #{tpu_custom_call.1} parent=261 // loop_header
          %s428 = sphi 0, %s432
          %p429 = scmp.ge.s32.totalorder %s428, 1
          %s433 = sphi %s423, %s423
          %s434 = sphi %s425, %s425
        $region265: #{tpu_custom_call.1} parent=261 // loop_header_branch
          %431 = sbr.rel (%p429) target = $region269
        $region266: #{tpu_custom_call.1} parent=261 // loop_body
          %v435 = vld [vmem:[%s433] sm:%s426]
          %436 = vst [vmem:[%s434] sm:%s426] %v435
        $region267: #{tpu_custom_call.1} parent=261 // loop_footer
          %s432 = sadd.s32 1, %s428
        $region268: #{tpu_custom_call.1} parent=261 // loop_footer_branch
          %427 = sbr.rel target = $region264
        $region269: #{tpu_custom_call.1} parent=261 // loop_exit
          _
      $region262: #{tpu_custom_call.1} parent=246 // pred_fallthru
        _
    $region247: #{tpu_custom_call.1} parent=1 // pred_fallthru
      _
    // Predicated region
    $region248: #{tpu_custom_call.1} parent=1 // pred_check
      %p402 = pneg %p398
    $region249: #{tpu_custom_call.1} parent=1 // pred_check_branch
      %404 = sbr.rel (%p402) target = $region251
    $region250: #{tpu_custom_call.1} parent=1 // pred_region
      %s405 = sshllo.u32 0, 1
      loop: start=0, step=1, limit=1
      $region252: #{tpu_custom_call.1} parent=250 // loop_pre_header
        _
      $region253: #{tpu_custom_call.1} parent=250 // loop_header
        %s407 = sphi 0, %s411
        %p408 = scmp.ge.s32.totalorder %s407, 1
        %s412 = sphi %s395, %s395
        %s413 = sphi %s396, %s396
      $region254: #{tpu_custom_call.1} parent=250 // loop_header_branch
        %410 = sbr.rel (%p408) target = $region258
      $region255: #{tpu_custom_call.1} parent=250 // loop_body
        %v414 = vld [vmem:[%s412] sm:%s405]
        %415 = vst [vmem:[%s413] sm:%s405] %v414
      $region256: #{tpu_custom_call.1} parent=250 // loop_footer
        %s411 = sadd.s32 1, %s407
      $region257: #{tpu_custom_call.1} parent=250 // loop_footer_branch
        %406 = sbr.rel target = $region253
      $region258: #{tpu_custom_call.1} parent=250 // loop_exit
        _
    $region251: #{tpu_custom_call.1} parent=1 // pred_fallthru
      _
    // Predicated region
    $region270: #{tpu_custom_call.1} parent=1 // pred_check
      _
    $region271: #{tpu_custom_call.1} parent=1 // pred_check_branch
      %439 = sbr.rel (0) target = $region273
    $region272: #{tpu_custom_call.1} parent=1 // pred_region
      %440 = vsyncadd [#allocation3], 16
    $region273: #{tpu_custom_call.1} parent=1 // pred_fallthru
      _
    %s441 = sld [smem:[#allocation9 + $0x3]]
    %s442 = sld [smem:[#allocation10 + $0x3]]
    %s443 = scalar_lea.vmem %s0, %s441
    %s444 = scalar_lea.vmem [#allocation2], 3
    %p446 = scmp.lt.u32.totalorder 1, 8
    %p447 = pneg %p446
    // Predicated region
    $region274: #{tpu_custom_call.1} parent=1 // pred_check
      _
    $region275: #{tpu_custom_call.1} parent=1 // pred_check_branch
      %449 = sbr.rel (%p446) target = $region277
    $region276: #{tpu_custom_call.1} parent=1 // pred_region
      %s464 = sand.u32 1, 7
      %p465 = scmp.eq.s32.totalorder %s464, 0
      %p466 = pneg %p465
      // Predicated region
      $region289: #{tpu_custom_call.1} parent=276 // pred_check
        _
      $region290: #{tpu_custom_call.1} parent=276 // pred_check_branch
        %468 = sbr.rel (%p465) target = $region292
      $region291: #{tpu_custom_call.1} parent=276 // pred_region
        %s469 = sand.u32 1, 7
        %s470 = ssub.s32 1, %s469
        %s471 = scalar_lea.vmem %s443, %s470
        %s472 = ssub.s32 1, %s469
        %s473 = scalar_lea.vmem %s444, %s472 [#allocation2]
        %s474 = sshllo.u32 0, %s469
        loop: start=0, step=1, limit=1
        $region293: #{tpu_custom_call.1} parent=291 // loop_pre_header
          _
        $region294: #{tpu_custom_call.1} parent=291 // loop_header
          %s476 = sphi 0, %s480
          %p477 = scmp.ge.s32.totalorder %s476, 1
          %s481 = sphi %s471, %s471
          %s482 = sphi %s473, %s473
        $region295: #{tpu_custom_call.1} parent=291 // loop_header_branch
          %479 = sbr.rel (%p477) target = $region299
        $region296: #{tpu_custom_call.1} parent=291 // loop_body
          %v483 = vld [vmem:[%s481] sm:%s474]
          %484 = vst [vmem:[%s482] sm:%s474] %v483
        $region297: #{tpu_custom_call.1} parent=291 // loop_footer
          %s480 = sadd.s32 1, %s476
        $region298: #{tpu_custom_call.1} parent=291 // loop_footer_branch
          %475 = sbr.rel target = $region294
        $region299: #{tpu_custom_call.1} parent=291 // loop_exit
          _
      $region292: #{tpu_custom_call.1} parent=276 // pred_fallthru
        _
    $region277: #{tpu_custom_call.1} parent=1 // pred_fallthru
      _
    // Predicated region
    $region278: #{tpu_custom_call.1} parent=1 // pred_check
      %p450 = pneg %p446
    $region279: #{tpu_custom_call.1} parent=1 // pred_check_branch
      %452 = sbr.rel (%p450) target = $region281
    $region280: #{tpu_custom_call.1} parent=1 // pred_region
      %s453 = sshllo.u32 0, 1
      loop: start=0, step=1, limit=1
      $region282: #{tpu_custom_call.1} parent=280 // loop_pre_header
        _
      $region283: #{tpu_custom_call.1} parent=280 // loop_header
        %s455 = sphi 0, %s459
        %p456 = scmp.ge.s32.totalorder %s455, 1
        %s460 = sphi %s443, %s443
        %s461 = sphi %s444, %s444
      $region284: #{tpu_custom_call.1} parent=280 // loop_header_branch
        %458 = sbr.rel (%p456) target = $region288
      $region285: #{tpu_custom_call.1} parent=280 // loop_body
        %v462 = vld [vmem:[%s460] sm:%s453]
        %463 = vst [vmem:[%s461] sm:%s453] %v462
      $region286: #{tpu_custom_call.1} parent=280 // loop_footer
        %s459 = sadd.s32 1, %s455
      $region287: #{tpu_custom_call.1} parent=280 // loop_footer_branch
        %454 = sbr.rel target = $region283
      $region288: #{tpu_custom_call.1} parent=280 // loop_exit
        _
    $region281: #{tpu_custom_call.1} parent=1 // pred_fallthru
      _
    // Predicated region
    $region300: #{tpu_custom_call.1} parent=1 // pred_check
      _
    $region301: #{tpu_custom_call.1} parent=1 // pred_check_branch
      %487 = sbr.rel (0) target = $region303
    $region302: #{tpu_custom_call.1} parent=1 // pred_region
      %488 = vsyncadd [#allocation3], 16
    $region303: #{tpu_custom_call.1} parent=1 // pred_fallthru
      _
    %s489 = scalar_lea.vmem %s0, %s442
    %s490 = scalar_lea.vmem [#allocation2], 11
    %p492 = scmp.lt.u32.totalorder 1, 8
    %p493 = pneg %p492
    // Predicated region
    $region304: #{tpu_custom_call.1} parent=1 // pred_check
      _
    $region305: #{tpu_custom_call.1} parent=1 // pred_check_branch
      %495 = sbr.rel (%p492) target = $region307
    $region306: #{tpu_custom_call.1} parent=1 // pred_region
      %s510 = sand.u32 1, 7
      %p511 = scmp.eq.s32.totalorder %s510, 0
      %p512 = pneg %p511
      // Predicated region
      $region319: #{tpu_custom_call.1} parent=306 // pred_check
        _
      $region320: #{tpu_custom_call.1} parent=306 // pred_check_branch
        %514 = sbr.rel (%p511) target = $region322
      $region321: #{tpu_custom_call.1} parent=306 // pred_region
        %s515 = sand.u32 1, 7
        %s516 = ssub.s32 1, %s515
        %s517 = scalar_lea.vmem %s489, %s516
        %s518 = ssub.s32 1, %s515
        %s519 = scalar_lea.vmem %s490, %s518 [#allocation2]
        %s520 = sshllo.u32 0, %s515
        loop: start=0, step=1, limit=1
        $region323: #{tpu_custom_call.1} parent=321 // loop_pre_header
          _
        $region324: #{tpu_custom_call.1} parent=321 // loop_header
          %s522 = sphi 0, %s526
          %p523 = scmp.ge.s32.totalorder %s522, 1
          %s527 = sphi %s517, %s517
          %s528 = sphi %s519, %s519
        $region325: #{tpu_custom_call.1} parent=321 // loop_header_branch
          %525 = sbr.rel (%p523) target = $region329
        $region326: #{tpu_custom_call.1} parent=321 // loop_body
          %v529 = vld [vmem:[%s527] sm:%s520]
          %530 = vst [vmem:[%s528] sm:%s520] %v529
        $region327: #{tpu_custom_call.1} parent=321 // loop_footer
          %s526 = sadd.s32 1, %s522
        $region328: #{tpu_custom_call.1} parent=321 // loop_footer_branch
          %521 = sbr.rel target = $region324
        $region329: #{tpu_custom_call.1} parent=321 // loop_exit
          _
      $region322: #{tpu_custom_call.1} parent=306 // pred_fallthru
        _
    $region307: #{tpu_custom_call.1} parent=1 // pred_fallthru
      _
    // Predicated region
    $region308: #{tpu_custom_call.1} parent=1 // pred_check
      %p496 = pneg %p492
    $region309: #{tpu_custom_call.1} parent=1 // pred_check_branch
      %498 = sbr.rel (%p496) target = $region311
    $region310: #{tpu_custom_call.1} parent=1 // pred_region
      %s499 = sshllo.u32 0, 1
      loop: start=0, step=1, limit=1
      $region312: #{tpu_custom_call.1} parent=310 // loop_pre_header
        _
      $region313: #{tpu_custom_call.1} parent=310 // loop_header
        %s501 = sphi 0, %s505
        %p502 = scmp.ge.s32.totalorder %s501, 1
        %s506 = sphi %s489, %s489
        %s507 = sphi %s490, %s490
      $region314: #{tpu_custom_call.1} parent=310 // loop_header_branch
        %504 = sbr.rel (%p502) target = $region318
      $region315: #{tpu_custom_call.1} parent=310 // loop_body
        %v508 = vld [vmem:[%s506] sm:%s499]
        %509 = vst [vmem:[%s507] sm:%s499] %v508
      $region316: #{tpu_custom_call.1} parent=310 // loop_footer
        %s505 = sadd.s32 1, %s501
      $region317: #{tpu_custom_call.1} parent=310 // loop_footer_branch
        %500 = sbr.rel target = $region313
      $region318: #{tpu_custom_call.1} parent=310 // loop_exit
        _
    $region311: #{tpu_custom_call.1} parent=1 // pred_fallthru
      _
    // Predicated region
    $region330: #{tpu_custom_call.1} parent=1 // pred_check
      _
    $region331: #{tpu_custom_call.1} parent=1 // pred_check_branch
      %533 = sbr.rel (0) target = $region333
    $region332: #{tpu_custom_call.1} parent=1 // pred_region
      %534 = vsyncadd [#allocation3], 16
    $region333: #{tpu_custom_call.1} parent=1 // pred_fallthru
      _
    %s535 = sld [smem:[#allocation9 + $0x4]]
    %s536 = sld [smem:[#allocation10 + $0x4]]
    %s537 = scalar_lea.vmem %s0, %s535
    %s538 = scalar_lea.vmem [#allocation2], 4
    %p540 = scmp.lt.u32.totalorder 1, 8
    %p541 = pneg %p540
    // Predicated region
    $region334: #{tpu_custom_call.1} parent=1 // pred_check
      _
    $region335: #{tpu_custom_call.1} parent=1 // pred_check_branch
      %543 = sbr.rel (%p540) target = $region337
    $region336: #{tpu_custom_call.1} parent=1 // pred_region
      %s558 = sand.u32 1, 7
      %p559 = scmp.eq.s32.totalorder %s558, 0
      %p560 = pneg %p559
      // Predicated region
      $region349: #{tpu_custom_call.1} parent=336 // pred_check
        _
      $region350: #{tpu_custom_call.1} parent=336 // pred_check_branch
        %562 = sbr.rel (%p559) target = $region352
      $region351: #{tpu_custom_call.1} parent=336 // pred_region
        %s563 = sand.u32 1, 7
        %s564 = ssub.s32 1, %s563
        %s565 = scalar_lea.vmem %s537, %s564
        %s566 = ssub.s32 1, %s563
        %s567 = scalar_lea.vmem %s538, %s566 [#allocation2]
        %s568 = sshllo.u32 0, %s563
        loop: start=0, step=1, limit=1
        $region353: #{tpu_custom_call.1} parent=351 // loop_pre_header
          _
        $region354: #{tpu_custom_call.1} parent=351 // loop_header
          %s570 = sphi 0, %s574
          %p571 = scmp.ge.s32.totalorder %s570, 1
          %s575 = sphi %s565, %s565
          %s576 = sphi %s567, %s567
        $region355: #{tpu_custom_call.1} parent=351 // loop_header_branch
          %573 = sbr.rel (%p571) target = $region359
        $region356: #{tpu_custom_call.1} parent=351 // loop_body
          %v577 = vld [vmem:[%s575] sm:%s568]
          %578 = vst [vmem:[%s576] sm:%s568] %v577
        $region357: #{tpu_custom_call.1} parent=351 // loop_footer
          %s574 = sadd.s32 1, %s570
        $region358: #{tpu_custom_call.1} parent=351 // loop_footer_branch
          %569 = sbr.rel target = $region354
        $region359: #{tpu_custom_call.1} parent=351 // loop_exit
          _
      $region352: #{tpu_custom_call.1} parent=336 // pred_fallthru
        _
    $region337: #{tpu_custom_call.1} parent=1 // pred_fallthru
      _
    // Predicated region
    $region338: #{tpu_custom_call.1} parent=1 // pred_check
      %p544 = pneg %p540
    $region339: #{tpu_custom_call.1} parent=1 // pred_check_branch
      %546 = sbr.rel (%p544) target = $region341
    $region340: #{tpu_custom_call.1} parent=1 // pred_region
      %s547 = sshllo.u32 0, 1
      loop: start=0, step=1, limit=1
      $region342: #{tpu_custom_call.1} parent=340 // loop_pre_header
        _
      $region343: #{tpu_custom_call.1} parent=340 // loop_header
        %s549 = sphi 0, %s553
        %p550 = scmp.ge.s32.totalorder %s549, 1
        %s554 = sphi %s537, %s537
        %s555 = sphi %s538, %s538
      $region344: #{tpu_custom_call.1} parent=340 // loop_header_branch
        %552 = sbr.rel (%p550) target = $region348
      $region345: #{tpu_custom_call.1} parent=340 // loop_body
        %v556 = vld [vmem:[%s554] sm:%s547]
        %557 = vst [vmem:[%s555] sm:%s547] %v556
      $region346: #{tpu_custom_call.1} parent=340 // loop_footer
        %s553 = sadd.s32 1, %s549
      $region347: #{tpu_custom_call.1} parent=340 // loop_footer_branch
        %548 = sbr.rel target = $region343
      $region348: #{tpu_custom_call.1} parent=340 // loop_exit
        _
    $region341: #{tpu_custom_call.1} parent=1 // pred_fallthru
      _
    // Predicated region
    $region360: #{tpu_custom_call.1} parent=1 // pred_check
      _
    $region361: #{tpu_custom_call.1} parent=1 // pred_check_branch
      %581 = sbr.rel (0) target = $region363
    $region362: #{tpu_custom_call.1} parent=1 // pred_region
      %582 = vsyncadd [#allocation3], 16
    $region363: #{tpu_custom_call.1} parent=1 // pred_fallthru
      _
    %s583 = scalar_lea.vmem %s0, %s536
    %s584 = scalar_lea.vmem [#allocation2], 12
    %p586 = scmp.lt.u32.totalorder 1, 8
    %p587 = pneg %p586
    // Predicated region
    $region364: #{tpu_custom_call.1} parent=1 // pred_check
      _
    $region365: #{tpu_custom_call.1} parent=1 // pred_check_branch
      %589 = sbr.rel (%p586) target = $region367
    $region366: #{tpu_custom_call.1} parent=1 // pred_region
      %s604 = sand.u32 1, 7
      %p605 = scmp.eq.s32.totalorder %s604, 0
      %p606 = pneg %p605
      // Predicated region
      $region379: #{tpu_custom_call.1} parent=366 // pred_check
        _
      $region380: #{tpu_custom_call.1} parent=366 // pred_check_branch
        %608 = sbr.rel (%p605) target = $region382
      $region381: #{tpu_custom_call.1} parent=366 // pred_region
        %s609 = sand.u32 1, 7
        %s610 = ssub.s32 1, %s609
        %s611 = scalar_lea.vmem %s583, %s610
        %s612 = ssub.s32 1, %s609
        %s613 = scalar_lea.vmem %s584, %s612 [#allocation2]
        %s614 = sshllo.u32 0, %s609
        loop: start=0, step=1, limit=1
        $region383: #{tpu_custom_call.1} parent=381 // loop_pre_header
          _
        $region384: #{tpu_custom_call.1} parent=381 // loop_header
          %s616 = sphi 0, %s620
          %p617 = scmp.ge.s32.totalorder %s616, 1
          %s621 = sphi %s611, %s611
          %s622 = sphi %s613, %s613
        $region385: #{tpu_custom_call.1} parent=381 // loop_header_branch
          %619 = sbr.rel (%p617) target = $region389
        $region386: #{tpu_custom_call.1} parent=381 // loop_body
          %v623 = vld [vmem:[%s621] sm:%s614]
          %624 = vst [vmem:[%s622] sm:%s614] %v623
        $region387: #{tpu_custom_call.1} parent=381 // loop_footer
          %s620 = sadd.s32 1, %s616
        $region388: #{tpu_custom_call.1} parent=381 // loop_footer_branch
          %615 = sbr.rel target = $region384
        $region389: #{tpu_custom_call.1} parent=381 // loop_exit
          _
      $region382: #{tpu_custom_call.1} parent=366 // pred_fallthru
        _
    $region367: #{tpu_custom_call.1} parent=1 // pred_fallthru
      _
    // Predicated region
    $region368: #{tpu_custom_call.1} parent=1 // pred_check
      %p590 = pneg %p586
    $region369: #{tpu_custom_call.1} parent=1 // pred_check_branch
      %592 = sbr.rel (%p590) target = $region371
    $region370: #{tpu_custom_call.1} parent=1 // pred_region
      %s593 = sshllo.u32 0, 1
      loop: start=0, step=1, limit=1
      $region372: #{tpu_custom_call.1} parent=370 // loop_pre_header
        _
      $region373: #{tpu_custom_call.1} parent=370 // loop_header
        %s595 = sphi 0, %s599
        %p596 = scmp.ge.s32.totalorder %s595, 1
        %s600 = sphi %s583, %s583
        %s601 = sphi %s584, %s584
      $region374: #{tpu_custom_call.1} parent=370 // loop_header_branch
        %598 = sbr.rel (%p596) target = $region378
      $region375: #{tpu_custom_call.1} parent=370 // loop_body
        %v602 = vld [vmem:[%s600] sm:%s593]
        %603 = vst [vmem:[%s601] sm:%s593] %v602
      $region376: #{tpu_custom_call.1} parent=370 // loop_footer
        %s599 = sadd.s32 1, %s595
      $region377: #{tpu_custom_call.1} parent=370 // loop_footer_branch
        %594 = sbr.rel target = $region373
      $region378: #{tpu_custom_call.1} parent=370 // loop_exit
        _
    $region371: #{tpu_custom_call.1} parent=1 // pred_fallthru
      _
    // Predicated region
    $region390: #{tpu_custom_call.1} parent=1 // pred_check
      _
    $region391: #{tpu_custom_call.1} parent=1 // pred_check_branch
      %627 = sbr.rel (0) target = $region393
    $region392: #{tpu_custom_call.1} parent=1 // pred_region
      %628 = vsyncadd [#allocation3], 16
    $region393: #{tpu_custom_call.1} parent=1 // pred_fallthru
      _
    %s629 = sld [smem:[#allocation9 + $0x5]]
    %s630 = sld [smem:[#allocation10 + $0x5]]
    %s631 = scalar_lea.vmem %s0, %s629
    %s632 = scalar_lea.vmem [#allocation2], 5
    %p634 = scmp.lt.u32.totalorder 1, 8
    %p635 = pneg %p634
    // Predicated region
    $region394: #{tpu_custom_call.1} parent=1 // pred_check
      _
    $region395: #{tpu_custom_call.1} parent=1 // pred_check_branch
      %637 = sbr.rel (%p634) target = $region397
    $region396: #{tpu_custom_call.1} parent=1 // pred_region
      %s652 = sand.u32 1, 7
      %p653 = scmp.eq.s32.totalorder %s652, 0
      %p654 = pneg %p653
      // Predicated region
      $region409: #{tpu_custom_call.1} parent=396 // pred_check
        _
      $region410: #{tpu_custom_call.1} parent=396 // pred_check_branch
        %656 = sbr.rel (%p653) target = $region412
      $region411: #{tpu_custom_call.1} parent=396 // pred_region
        %s657 = sand.u32 1, 7
        %s658 = ssub.s32 1, %s657
        %s659 = scalar_lea.vmem %s631, %s658
        %s660 = ssub.s32 1, %s657
        %s661 = scalar_lea.vmem %s632, %s660 [#allocation2]
        %s662 = sshllo.u32 0, %s657
        loop: start=0, step=1, limit=1
        $region413: #{tpu_custom_call.1} parent=411 // loop_pre_header
          _
        $region414: #{tpu_custom_call.1} parent=411 // loop_header
          %s664 = sphi 0, %s668
          %p665 = scmp.ge.s32.totalorder %s664, 1
          %s669 = sphi %s659, %s659
          %s670 = sphi %s661, %s661
        $region415: #{tpu_custom_call.1} parent=411 // loop_header_branch
          %667 = sbr.rel (%p665) target = $region419
        $region416: #{tpu_custom_call.1} parent=411 // loop_body
          %v671 = vld [vmem:[%s669] sm:%s662]
          %672 = vst [vmem:[%s670] sm:%s662] %v671
        $region417: #{tpu_custom_call.1} parent=411 // loop_footer
          %s668 = sadd.s32 1, %s664
        $region418: #{tpu_custom_call.1} parent=411 // loop_footer_branch
          %663 = sbr.rel target = $region414
        $region419: #{tpu_custom_call.1} parent=411 // loop_exit
          _
      $region412: #{tpu_custom_call.1} parent=396 // pred_fallthru
        _
    $region397: #{tpu_custom_call.1} parent=1 // pred_fallthru
      _
    // Predicated region
    $region398: #{tpu_custom_call.1} parent=1 // pred_check
      %p638 = pneg %p634
    $region399: #{tpu_custom_call.1} parent=1 // pred_check_branch
      %640 = sbr.rel (%p638) target = $region401
    $region400: #{tpu_custom_call.1} parent=1 // pred_region
      %s641 = sshllo.u32 0, 1
      loop: start=0, step=1, limit=1
      $region402: #{tpu_custom_call.1} parent=400 // loop_pre_header
        _
      $region403: #{tpu_custom_call.1} parent=400 // loop_header
        %s643 = sphi 0, %s647
        %p644 = scmp.ge.s32.totalorder %s643, 1
        %s648 = sphi %s631, %s631
        %s649 = sphi %s632, %s632
      $region404: #{tpu_custom_call.1} parent=400 // loop_header_branch
        %646 = sbr.rel (%p644) target = $region408
      $region405: #{tpu_custom_call.1} parent=400 // loop_body
        %v650 = vld [vmem:[%s648] sm:%s641]
        %651 = vst [vmem:[%s649] sm:%s641] %v650
      $region406: #{tpu_custom_call.1} parent=400 // loop_footer
        %s647 = sadd.s32 1, %s643
      $region407: #{tpu_custom_call.1} parent=400 // loop_footer_branch
        %642 = sbr.rel target = $region403
      $region408: #{tpu_custom_call.1} parent=400 // loop_exit
        _
    $region401: #{tpu_custom_call.1} parent=1 // pred_fallthru
      _
    // Predicated region
    $region420: #{tpu_custom_call.1} parent=1 // pred_check
      _
    $region421: #{tpu_custom_call.1} parent=1 // pred_check_branch
      %675 = sbr.rel (0) target = $region423
    $region422: #{tpu_custom_call.1} parent=1 // pred_region
      %676 = vsyncadd [#allocation3], 16
    $region423: #{tpu_custom_call.1} parent=1 // pred_fallthru
      _
    %s677 = scalar_lea.vmem %s0, %s630
    %s678 = scalar_lea.vmem [#allocation2], 13
    %p680 = scmp.lt.u32.totalorder 1, 8
    %p681 = pneg %p680
    // Predicated region
    $region424: #{tpu_custom_call.1} parent=1 // pred_check
      _
    $region425: #{tpu_custom_call.1} parent=1 // pred_check_branch
      %683 = sbr.rel (%p680) target = $region427
    $region426: #{tpu_custom_call.1} parent=1 // pred_region
      %s698 = sand.u32 1, 7
      %p699 = scmp.eq.s32.totalorder %s698, 0
      %p700 = pneg %p699
      // Predicated region
      $region439: #{tpu_custom_call.1} parent=426 // pred_check
        _
      $region440: #{tpu_custom_call.1} parent=426 // pred_check_branch
        %702 = sbr.rel (%p699) target = $region442
      $region441: #{tpu_custom_call.1} parent=426 // pred_region
        %s703 = sand.u32 1, 7
        %s704 = ssub.s32 1, %s703
        %s705 = scalar_lea.vmem %s677, %s704
        %s706 = ssub.s32 1, %s703
        %s707 = scalar_lea.vmem %s678, %s706 [#allocation2]
        %s708 = sshllo.u32 0, %s703
        loop: start=0, step=1, limit=1
        $region443: #{tpu_custom_call.1} parent=441 // loop_pre_header
          _
        $region444: #{tpu_custom_call.1} parent=441 // loop_header
          %s710 = sphi 0, %s714
          %p711 = scmp.ge.s32.totalorder %s710, 1
          %s715 = sphi %s705, %s705
          %s716 = sphi %s707, %s707
        $region445: #{tpu_custom_call.1} parent=441 // loop_header_branch
          %713 = sbr.rel (%p711) target = $region449
        $region446: #{tpu_custom_call.1} parent=441 // loop_body
          %v717 = vld [vmem:[%s715] sm:%s708]
          %718 = vst [vmem:[%s716] sm:%s708] %v717
        $region447: #{tpu_custom_call.1} parent=441 // loop_footer
          %s714 = sadd.s32 1, %s710
        $region448: #{tpu_custom_call.1} parent=441 // loop_footer_branch
          %709 = sbr.rel target = $region444
        $region449: #{tpu_custom_call.1} parent=441 // loop_exit
          _
      $region442: #{tpu_custom_call.1} parent=426 // pred_fallthru
        _
    $region427: #{tpu_custom_call.1} parent=1 // pred_fallthru
      _
    // Predicated region
    $region428: #{tpu_custom_call.1} parent=1 // pred_check
      %p684 = pneg %p680
    $region429: #{tpu_custom_call.1} parent=1 // pred_check_branch
      %686 = sbr.rel (%p684) target = $region431
    $region430: #{tpu_custom_call.1} parent=1 // pred_region
      %s687 = sshllo.u32 0, 1
      loop: start=0, step=1, limit=1
      $region432: #{tpu_custom_call.1} parent=430 // loop_pre_header
        _
      $region433: #{tpu_custom_call.1} parent=430 // loop_header
        %s689 = sphi 0, %s693
        %p690 = scmp.ge.s32.totalorder %s689, 1
        %s694 = sphi %s677, %s677
        %s695 = sphi %s678, %s678
      $region434: #{tpu_custom_call.1} parent=430 // loop_header_branch
        %692 = sbr.rel (%p690) target = $region438
      $region435: #{tpu_custom_call.1} parent=430 // loop_body
        %v696 = vld [vmem:[%s694] sm:%s687]
        %697 = vst [vmem:[%s695] sm:%s687] %v696
      $region436: #{tpu_custom_call.1} parent=430 // loop_footer
        %s693 = sadd.s32 1, %s689
      $region437: #{tpu_custom_call.1} parent=430 // loop_footer_branch
        %688 = sbr.rel target = $region433
      $region438: #{tpu_custom_call.1} parent=430 // loop_exit
        _
    $region431: #{tpu_custom_call.1} parent=1 // pred_fallthru
      _
    // Predicated region
    $region450: #{tpu_custom_call.1} parent=1 // pred_check
      _
    $region451: #{tpu_custom_call.1} parent=1 // pred_check_branch
      %721 = sbr.rel (0) target = $region453
    $region452: #{tpu_custom_call.1} parent=1 // pred_region
      %722 = vsyncadd [#allocation3], 16
    $region453: #{tpu_custom_call.1} parent=1 // pred_fallthru
      _
    %s723 = sld [smem:[#allocation9 + $0x6]]
    %s724 = sld [smem:[#allocation10 + $0x6]]
    %s725 = scalar_lea.vmem %s0, %s723
    %s726 = scalar_lea.vmem [#allocation2], 6
    %p728 = scmp.lt.u32.totalorder 1, 8
    %p729 = pneg %p728
    // Predicated region
    $region454: #{tpu_custom_call.1} parent=1 // pred_check
      _
    $region455: #{tpu_custom_call.1} parent=1 // pred_check_branch
      %731 = sbr.rel (%p728) target = $region457
    $region456: #{tpu_custom_call.1} parent=1 // pred_region
      %s746 = sand.u32 1, 7
      %p747 = scmp.eq.s32.totalorder %s746, 0
      %p748 = pneg %p747
      // Predicated region
      $region469: #{tpu_custom_call.1} parent=456 // pred_check
        _
      $region470: #{tpu_custom_call.1} parent=456 // pred_check_branch
        %750 = sbr.rel (%p747) target = $region472
      $region471: #{tpu_custom_call.1} parent=456 // pred_region
        %s751 = sand.u32 1, 7
        %s752 = ssub.s32 1, %s751
        %s753 = scalar_lea.vmem %s725, %s752
        %s754 = ssub.s32 1, %s751
        %s755 = scalar_lea.vmem %s726, %s754 [#allocation2]
        %s756 = sshllo.u32 0, %s751
        loop: start=0, step=1, limit=1
        $region473: #{tpu_custom_call.1} parent=471 // loop_pre_header
          _
        $region474: #{tpu_custom_call.1} parent=471 // loop_header
          %s758 = sphi 0, %s762
          %p759 = scmp.ge.s32.totalorder %s758, 1
          %s763 = sphi %s753, %s753
          %s764 = sphi %s755, %s755
        $region475: #{tpu_custom_call.1} parent=471 // loop_header_branch
          %761 = sbr.rel (%p759) target = $region479
        $region476: #{tpu_custom_call.1} parent=471 // loop_body
          %v765 = vld [vmem:[%s763] sm:%s756]
          %766 = vst [vmem:[%s764] sm:%s756] %v765
        $region477: #{tpu_custom_call.1} parent=471 // loop_footer
          %s762 = sadd.s32 1, %s758
        $region478: #{tpu_custom_call.1} parent=471 // loop_footer_branch
          %757 = sbr.rel target = $region474
        $region479: #{tpu_custom_call.1} parent=471 // loop_exit
          _
      $region472: #{tpu_custom_call.1} parent=456 // pred_fallthru
        _
    $region457: #{tpu_custom_call.1} parent=1 // pred_fallthru
      _
    // Predicated region
    $region458: #{tpu_custom_call.1} parent=1 // pred_check
      %p732 = pneg %p728
    $region459: #{tpu_custom_call.1} parent=1 // pred_check_branch
      %734 = sbr.rel (%p732) target = $region461
    $region460: #{tpu_custom_call.1} parent=1 // pred_region
      %s735 = sshllo.u32 0, 1
      loop: start=0, step=1, limit=1
      $region462: #{tpu_custom_call.1} parent=460 // loop_pre_header
        _
      $region463: #{tpu_custom_call.1} parent=460 // loop_header
        %s737 = sphi 0, %s741
        %p738 = scmp.ge.s32.totalorder %s737, 1
        %s742 = sphi %s725, %s725
        %s743 = sphi %s726, %s726
      $region464: #{tpu_custom_call.1} parent=460 // loop_header_branch
        %740 = sbr.rel (%p738) target = $region468
      $region465: #{tpu_custom_call.1} parent=460 // loop_body
        %v744 = vld [vmem:[%s742] sm:%s735]
        %745 = vst [vmem:[%s743] sm:%s735] %v744
      $region466: #{tpu_custom_call.1} parent=460 // loop_footer
        %s741 = sadd.s32 1, %s737
      $region467: #{tpu_custom_call.1} parent=460 // loop_footer_branch
        %736 = sbr.rel target = $region463
      $region468: #{tpu_custom_call.1} parent=460 // loop_exit
        _
    $region461: #{tpu_custom_call.1} parent=1 // pred_fallthru
      _
    // Predicated region
    $region480: #{tpu_custom_call.1} parent=1 // pred_check
      _
    $region481: #{tpu_custom_call.1} parent=1 // pred_check_branch
      %769 = sbr.rel (0) target = $region483
    $region482: #{tpu_custom_call.1} parent=1 // pred_region
      %770 = vsyncadd [#allocation3], 16
    $region483: #{tpu_custom_call.1} parent=1 // pred_fallthru
      _
    %s771 = scalar_lea.vmem %s0, %s724
    %s772 = scalar_lea.vmem [#allocation2], 14
    %p774 = scmp.lt.u32.totalorder 1, 8
    %p775 = pneg %p774
    // Predicated region
    $region484: #{tpu_custom_call.1} parent=1 // pred_check
      _
    $region485: #{tpu_custom_call.1} parent=1 // pred_check_branch
      %777 = sbr.rel (%p774) target = $region487
    $region486: #{tpu_custom_call.1} parent=1 // pred_region
      %s792 = sand.u32 1, 7
      %p793 = scmp.eq.s32.totalorder %s792, 0
      %p794 = pneg %p793
      // Predicated region
      $region499: #{tpu_custom_call.1} parent=486 // pred_check
        _
      $region500: #{tpu_custom_call.1} parent=486 // pred_check_branch
        %796 = sbr.rel (%p793) target = $region502
      $region501: #{tpu_custom_call.1} parent=486 // pred_region
        %s797 = sand.u32 1, 7
        %s798 = ssub.s32 1, %s797
        %s799 = scalar_lea.vmem %s771, %s798
        %s800 = ssub.s32 1, %s797
        %s801 = scalar_lea.vmem %s772, %s800 [#allocation2]
        %s802 = sshllo.u32 0, %s797
        loop: start=0, step=1, limit=1
        $region503: #{tpu_custom_call.1} parent=501 // loop_pre_header
          _
        $region504: #{tpu_custom_call.1} parent=501 // loop_header
          %s804 = sphi 0, %s808
          %p805 = scmp.ge.s32.totalorder %s804, 1
          %s809 = sphi %s799, %s799
          %s810 = sphi %s801, %s801
        $region505: #{tpu_custom_call.1} parent=501 // loop_header_branch
          %807 = sbr.rel (%p805) target = $region509
        $region506: #{tpu_custom_call.1} parent=501 // loop_body
          %v811 = vld [vmem:[%s809] sm:%s802]
          %812 = vst [vmem:[%s810] sm:%s802] %v811
        $region507: #{tpu_custom_call.1} parent=501 // loop_footer
          %s808 = sadd.s32 1, %s804
        $region508: #{tpu_custom_call.1} parent=501 // loop_footer_branch
          %803 = sbr.rel target = $region504
        $region509: #{tpu_custom_call.1} parent=501 // loop_exit
          _
      $region502: #{tpu_custom_call.1} parent=486 // pred_fallthru
        _
    $region487: #{tpu_custom_call.1} parent=1 // pred_fallthru
      _
    // Predicated region
    $region488: #{tpu_custom_call.1} parent=1 // pred_check
      %p778 = pneg %p774
    $region489: #{tpu_custom_call.1} parent=1 // pred_check_branch
      %780 = sbr.rel (%p778) target = $region491
    $region490: #{tpu_custom_call.1} parent=1 // pred_region
      %s781 = sshllo.u32 0, 1
      loop: start=0, step=1, limit=1
      $region492: #{tpu_custom_call.1} parent=490 // loop_pre_header
        _
      $region493: #{tpu_custom_call.1} parent=490 // loop_header
        %s783 = sphi 0, %s787
        %p784 = scmp.ge.s32.totalorder %s783, 1
        %s788 = sphi %s771, %s771
        %s789 = sphi %s772, %s772
      $region494: #{tpu_custom_call.1} parent=490 // loop_header_branch
        %786 = sbr.rel (%p784) target = $region498
      $region495: #{tpu_custom_call.1} parent=490 // loop_body
        %v790 = vld [vmem:[%s788] sm:%s781]
        %791 = vst [vmem:[%s789] sm:%s781] %v790
      $region496: #{tpu_custom_call.1} parent=490 // loop_footer
        %s787 = sadd.s32 1, %s783
      $region497: #{tpu_custom_call.1} parent=490 // loop_footer_branch
        %782 = sbr.rel target = $region493
      $region498: #{tpu_custom_call.1} parent=490 // loop_exit
        _
    $region491: #{tpu_custom_call.1} parent=1 // pred_fallthru
      _
    // Predicated region
    $region510: #{tpu_custom_call.1} parent=1 // pred_check
      _
    $region511: #{tpu_custom_call.1} parent=1 // pred_check_branch
      %815 = sbr.rel (0) target = $region513
    $region512: #{tpu_custom_call.1} parent=1 // pred_region
      %816 = vsyncadd [#allocation3], 16
    $region513: #{tpu_custom_call.1} parent=1 // pred_fallthru
      _
    %s817 = sld [smem:[#allocation9 + $0x7]]
    %s818 = sld [smem:[#allocation10 + $0x7]]
    %s819 = scalar_lea.vmem %s0, %s817
    %s820 = scalar_lea.vmem [#allocation2], 7
    %p822 = scmp.lt.u32.totalorder 1, 8
    %p823 = pneg %p822
    // Predicated region
    $region514: #{tpu_custom_call.1} parent=1 // pred_check
      _
    $region515: #{tpu_custom_call.1} parent=1 // pred_check_branch
      %825 = sbr.rel (%p822) target = $region517
    $region516: #{tpu_custom_call.1} parent=1 // pred_region
      %s840 = sand.u32 1, 7
      %p841 = scmp.eq.s32.totalorder %s840, 0
      %p842 = pneg %p841
      // Predicated region
      $region529: #{tpu_custom_call.1} parent=516 // pred_check
        _
      $region530: #{tpu_custom_call.1} parent=516 // pred_check_branch
        %844 = sbr.rel (%p841) target = $region532
      $region531: #{tpu_custom_call.1} parent=516 // pred_region
        %s845 = sand.u32 1, 7
        %s846 = ssub.s32 1, %s845
        %s847 = scalar_lea.vmem %s819, %s846
        %s848 = ssub.s32 1, %s845
        %s849 = scalar_lea.vmem %s820, %s848 [#allocation2]
        %s850 = sshllo.u32 0, %s845
        loop: start=0, step=1, limit=1
        $region533: #{tpu_custom_call.1} parent=531 // loop_pre_header
          _
        $region534: #{tpu_custom_call.1} parent=531 // loop_header
          %s852 = sphi 0, %s856
          %p853 = scmp.ge.s32.totalorder %s852, 1
          %s857 = sphi %s847, %s847
          %s858 = sphi %s849, %s849
        $region535: #{tpu_custom_call.1} parent=531 // loop_header_branch
          %855 = sbr.rel (%p853) target = $region539
        $region536: #{tpu_custom_call.1} parent=531 // loop_body
          %v859 = vld [vmem:[%s857] sm:%s850]
          %860 = vst [vmem:[%s858] sm:%s850] %v859
        $region537: #{tpu_custom_call.1} parent=531 // loop_footer
          %s856 = sadd.s32 1, %s852
        $region538: #{tpu_custom_call.1} parent=531 // loop_footer_branch
          %851 = sbr.rel target = $region534
        $region539: #{tpu_custom_call.1} parent=531 // loop_exit
          _
      $region532: #{tpu_custom_call.1} parent=516 // pred_fallthru
        _
    $region517: #{tpu_custom_call.1} parent=1 // pred_fallthru
      _
    // Predicated region
    $region518: #{tpu_custom_call.1} parent=1 // pred_check
      %p826 = pneg %p822
    $region519: #{tpu_custom_call.1} parent=1 // pred_check_branch
      %828 = sbr.rel (%p826) target = $region521
    $region520: #{tpu_custom_call.1} parent=1 // pred_region
      %s829 = sshllo.u32 0, 1
      loop: start=0, step=1, limit=1
      $region522: #{tpu_custom_call.1} parent=520 // loop_pre_header
        _
      $region523: #{tpu_custom_call.1} parent=520 // loop_header
        %s831 = sphi 0, %s835
        %p832 = scmp.ge.s32.totalorder %s831, 1
        %s836 = sphi %s819, %s819
        %s837 = sphi %s820, %s820
      $region524: #{tpu_custom_call.1} parent=520 // loop_header_branch
        %834 = sbr.rel (%p832) target = $region528
      $region525: #{tpu_custom_call.1} parent=520 // loop_body
        %v838 = vld [vmem:[%s836] sm:%s829]
        %839 = vst [vmem:[%s837] sm:%s829] %v838
      $region526: #{tpu_custom_call.1} parent=520 // loop_footer
        %s835 = sadd.s32 1, %s831
      $region527: #{tpu_custom_call.1} parent=520 // loop_footer_branch
        %830 = sbr.rel target = $region523
      $region528: #{tpu_custom_call.1} parent=520 // loop_exit
        _
    $region521: #{tpu_custom_call.1} parent=1 // pred_fallthru
      _
    // Predicated region
    $region540: #{tpu_custom_call.1} parent=1 // pred_check
      _
    $region541: #{tpu_custom_call.1} parent=1 // pred_check_branch
      %863 = sbr.rel (0) target = $region543
    $region542: #{tpu_custom_call.1} parent=1 // pred_region
      %864 = vsyncadd [#allocation3], 16
    $region543: #{tpu_custom_call.1} parent=1 // pred_fallthru
      _
    %s865 = scalar_lea.vmem %s0, %s818
    %s866 = scalar_lea.vmem [#allocation2], 15
    %p868 = scmp.lt.u32.totalorder 1, 8
    %p869 = pneg %p868
    // Predicated region
    $region544: #{tpu_custom_call.1} parent=1 // pred_check
      _
    $region545: #{tpu_custom_call.1} parent=1 // pred_check_branch
      %871 = sbr.rel (%p868) target = $region547
    $region546: #{tpu_custom_call.1} parent=1 // pred_region
      %s886 = sand.u32 1, 7
      %p887 = scmp.eq.s32.totalorder %s886, 0
      %p888 = pneg %p887
      // Predicated region
      $region559: #{tpu_custom_call.1} parent=546 // pred_check
        _
      $region560: #{tpu_custom_call.1} parent=546 // pred_check_branch
        %890 = sbr.rel (%p887) target = $region562
      $region561: #{tpu_custom_call.1} parent=546 // pred_region
        %s891 = sand.u32 1, 7
        %s892 = ssub.s32 1, %s891
        %s893 = scalar_lea.vmem %s865, %s892
        %s894 = ssub.s32 1, %s891
        %s895 = scalar_lea.vmem %s866, %s894 [#allocation2]
        %s896 = sshllo.u32 0, %s891
        loop: start=0, step=1, limit=1
        $region563: #{tpu_custom_call.1} parent=561 // loop_pre_header
          _
        $region564: #{tpu_custom_call.1} parent=561 // loop_header
          %s898 = sphi 0, %s902
          %p899 = scmp.ge.s32.totalorder %s898, 1
          %s903 = sphi %s893, %s893
          %s904 = sphi %s895, %s895
        $region565: #{tpu_custom_call.1} parent=561 // loop_header_branch
          %901 = sbr.rel (%p899) target = $region569
        $region566: #{tpu_custom_call.1} parent=561 // loop_body
          %v905 = vld [vmem:[%s903] sm:%s896]
          %906 = vst [vmem:[%s904] sm:%s896] %v905
        $region567: #{tpu_custom_call.1} parent=561 // loop_footer
          %s902 = sadd.s32 1, %s898
        $region568: #{tpu_custom_call.1} parent=561 // loop_footer_branch
          %897 = sbr.rel target = $region564
        $region569: #{tpu_custom_call.1} parent=561 // loop_exit
          _
      $region562: #{tpu_custom_call.1} parent=546 // pred_fallthru
        _
    $region547: #{tpu_custom_call.1} parent=1 // pred_fallthru
      _
    // Predicated region
    $region548: #{tpu_custom_call.1} parent=1 // pred_check
      %p872 = pneg %p868
    $region549: #{tpu_custom_call.1} parent=1 // pred_check_branch
      %874 = sbr.rel (%p872) target = $region551
    $region550: #{tpu_custom_call.1} parent=1 // pred_region
      %s875 = sshllo.u32 0, 1
      loop: start=0, step=1, limit=1
      $region552: #{tpu_custom_call.1} parent=550 // loop_pre_header
        _
      $region553: #{tpu_custom_call.1} parent=550 // loop_header
        %s877 = sphi 0, %s881
        %p878 = scmp.ge.s32.totalorder %s877, 1
        %s882 = sphi %s865, %s865
        %s883 = sphi %s866, %s866
      $region554: #{tpu_custom_call.1} parent=550 // loop_header_branch
        %880 = sbr.rel (%p878) target = $region558
      $region555: #{tpu_custom_call.1} parent=550 // loop_body
        %v884 = vld [vmem:[%s882] sm:%s875]
        %885 = vst [vmem:[%s883] sm:%s875] %v884
      $region556: #{tpu_custom_call.1} parent=550 // loop_footer
        %s881 = sadd.s32 1, %s877
      $region557: #{tpu_custom_call.1} parent=550 // loop_footer_branch
        %876 = sbr.rel target = $region553
      $region558: #{tpu_custom_call.1} parent=550 // loop_exit
        _
    $region551: #{tpu_custom_call.1} parent=1 // pred_fallthru
      _
    // Predicated region
    $region570: #{tpu_custom_call.1} parent=1 // pred_check
      _
    $region571: #{tpu_custom_call.1} parent=1 // pred_check_branch
      %909 = sbr.rel (0) target = $region573
    $region572: #{tpu_custom_call.1} parent=1 // pred_region
      %910 = vsyncadd [#allocation3], 16
    $region573: #{tpu_custom_call.1} parent=1 // pred_fallthru
      _
    %s911 = sld [smem:[#allocation12]]
    %s912 = sld [smem:[#allocation13]]
    %s913 = smul.addr %s911, 16
    %s914 = scalar_lea.hbm %s1, %s913
    %s915 = scalar_lea.vmem [#allocation2], 16
    // Predicated region
    $region574: #{tpu_custom_call.1} parent=1 // pred_check
      _
    $region575: #{tpu_custom_call.1} parent=1 // pred_check_branch
      %917 = sbr.rel target = $region577
    $region576: #{tpu_custom_call.1} parent=1 // pred_region
      %918 = sst [smem:[#allocation40]] [#allocation39]
      %919 = sst [smem:[#allocation41]] [#allocation38]
    $region577: #{tpu_custom_call.1} parent=1 // pred_fallthru
      _
    %921 = shalt.err (0)
    %s923 = sshll.u32 %s915, 4
    %s924 = int_to_ptr.vmem [resolvable:$true] %s923
    %926 = dma.hbm_to_vmem [thread:$0]  %s914, 16, %s924, [#allocation3]
    %s927 = smul.addr %s912, 16
    %s928 = scalar_lea.hbm %s1, %s927
    %s929 = scalar_lea.vmem [#allocation2], 24
    // Predicated region
    $region578: #{tpu_custom_call.1} parent=1 // pred_check
      _
    $region579: #{tpu_custom_call.1} parent=1 // pred_check_branch
      %931 = sbr.rel target = $region581
    $region580: #{tpu_custom_call.1} parent=1 // pred_region
      %932 = sst [smem:[#allocation40]] [#allocation43]
      %933 = sst [smem:[#allocation41]] [#allocation42]
    $region581: #{tpu_custom_call.1} parent=1 // pred_fallthru
      _
    %935 = shalt.err (0)
    %s937 = sshll.u32 %s929, 4
    %s938 = int_to_ptr.vmem [resolvable:$true] %s937
    %940 = dma.hbm_to_vmem [thread:$0]  %s928, 16, %s938, [#allocation3]
    %s941 = sld [smem:[#allocation12 + $0x1]]
    %s942 = sld [smem:[#allocation13 + $0x1]]
    %s943 = smul.addr %s941, 16
    %s944 = scalar_lea.hbm %s1, %s943
    %s945 = scalar_lea.vmem [#allocation2], 17
    // Predicated region
    $region582: #{tpu_custom_call.1} parent=1 // pred_check
      _
    $region583: #{tpu_custom_call.1} parent=1 // pred_check_branch
      %947 = sbr.rel target = $region585
    $region584: #{tpu_custom_call.1} parent=1 // pred_region
      %948 = sst [smem:[#allocation40]] [#allocation45]
      %949 = sst [smem:[#allocation41]] [#allocation44]
    $region585: #{tpu_custom_call.1} parent=1 // pred_fallthru
      _
    %951 = shalt.err (0)
    %s953 = sshll.u32 %s945, 4
    %s954 = int_to_ptr.vmem [resolvable:$true] %s953
    %956 = dma.hbm_to_vmem [thread:$0]  %s944, 16, %s954, [#allocation3]
    %s957 = smul.addr %s942, 16
    %s958 = scalar_lea.hbm %s1, %s957
    %s959 = scalar_lea.vmem [#allocation2], 25
    // Predicated region
    $region586: #{tpu_custom_call.1} parent=1 // pred_check
      _
    $region587: #{tpu_custom_call.1} parent=1 // pred_check_branch
      %961 = sbr.rel target = $region589
    $region588: #{tpu_custom_call.1} parent=1 // pred_region
      %962 = sst [smem:[#allocation40]] [#allocation47]
      %963 = sst [smem:[#allocation41]] [#allocation46]
    $region589: #{tpu_custom_call.1} parent=1 // pred_fallthru
      _
    %965 = shalt.err (0)
    %s967 = sshll.u32 %s959, 4
    %s968 = int_to_ptr.vmem [resolvable:$true] %s967
    %970 = dma.hbm_to_vmem [thread:$0]  %s958, 16, %s968, [#allocation3]
    %s971 = sld [smem:[#allocation12 + $0x2]]
    %s972 = sld [smem:[#allocation13 + $0x2]]
    %s973 = smul.addr %s971, 16
    %s974 = scalar_lea.hbm %s1, %s973
    %s975 = scalar_lea.vmem [#allocation2], 18
    // Predicated region
    $region590: #{tpu_custom_call.1} parent=1 // pred_check
      _
    $region591: #{tpu_custom_call.1} parent=1 // pred_check_branch
      %977 = sbr.rel target = $region593
    $region592: #{tpu_custom_call.1} parent=1 // pred_region
      %978 = sst [smem:[#allocation40]] [#allocation49]
      %979 = sst [smem:[#allocation41]] [#allocation48]
    $region593: #{tpu_custom_call.1} parent=1 // pred_fallthru
      _
    %981 = shalt.err (0)
    %s983 = sshll.u32 %s975, 4
    %s984 = int_to_ptr.vmem [resolvable:$true] %s983
    %986 = dma.hbm_to_vmem [thread:$0]  %s974, 16, %s984, [#allocation3]
    %s987 = smul.addr %s972, 16
    %s988 = scalar_lea.hbm %s1, %s987
    %s989 = scalar_lea.vmem [#allocation2], 26
    // Predicated region
    $region594: #{tpu_custom_call.1} parent=1 // pred_check
      _
    $region595: #{tpu_custom_call.1} parent=1 // pred_check_branch
      %991 = sbr.rel target = $region597
    $region596: #{tpu_custom_call.1} parent=1 // pred_region
      %992 = sst [smem:[#allocation40]] [#allocation51]
      %993 = sst [smem:[#allocation41]] [#allocation50]
    $region597: #{tpu_custom_call.1} parent=1 // pred_fallthru
      _
    %995 = shalt.err (0)
    %s997 = sshll.u32 %s989, 4
    %s998 = int_to_ptr.vmem [resolvable:$true] %s997
    %1000 = dma.hbm_to_vmem [thread:$0]  %s988, 16, %s998, [#allocation3]
    %s1001 = sld [smem:[#allocation12 + $0x3]]
    %s1002 = sld [smem:[#allocation13 + $0x3]]
    %s1003 = smul.addr %s1001, 16
    %s1004 = scalar_lea.hbm %s1, %s1003
    %s1005 = scalar_lea.vmem [#allocation2], 19
    // Predicated region
    $region598: #{tpu_custom_call.1} parent=1 // pred_check
      _
    $region599: #{tpu_custom_call.1} parent=1 // pred_check_branch
      %1007 = sbr.rel target = $region601
    $region600: #{tpu_custom_call.1} parent=1 // pred_region
      %1008 = sst [smem:[#allocation40]] [#allocation53]
      %1009 = sst [smem:[#allocation41]] [#allocation52]
    $region601: #{tpu_custom_call.1} parent=1 // pred_fallthru
      _
    %1011 = shalt.err (0)
    %s1013 = sshll.u32 %s1005, 4
    %s1014 = int_to_ptr.vmem [resolvable:$true] %s1013
    %1016 = dma.hbm_to_vmem [thread:$0]  %s1004, 16, %s1014, [#allocation3]
    %s1017 = smul.addr %s1002, 16
    %s1018 = scalar_lea.hbm %s1, %s1017
    %s1019 = scalar_lea.vmem [#allocation2], 27
    // Predicated region
    $region602: #{tpu_custom_call.1} parent=1 // pred_check
      _
    $region603: #{tpu_custom_call.1} parent=1 // pred_check_branch
      %1021 = sbr.rel target = $region605
    $region604: #{tpu_custom_call.1} parent=1 // pred_region
      %1022 = sst [smem:[#allocation40]] [#allocation55]
      %1023 = sst [smem:[#allocation41]] [#allocation54]
    $region605: #{tpu_custom_call.1} parent=1 // pred_fallthru
      _
    %1025 = shalt.err (0)
    %s1027 = sshll.u32 %s1019, 4
    %s1028 = int_to_ptr.vmem [resolvable:$true] %s1027
    %1030 = dma.hbm_to_vmem [thread:$0]  %s1018, 16, %s1028, [#allocation3]
    %s1031 = sld [smem:[#allocation12 + $0x4]]
    %s1032 = sld [smem:[#allocation13 + $0x4]]
    %s1033 = smul.addr %s1031, 16
    %s1034 = scalar_lea.hbm %s1, %s1033
    %s1035 = scalar_lea.vmem [#allocation2], 20
    // Predicated region
    $region606: #{tpu_custom_call.1} parent=1 // pred_check
      _
    $region607: #{tpu_custom_call.1} parent=1 // pred_check_branch
      %1037 = sbr.rel target = $region609
    $region608: #{tpu_custom_call.1} parent=1 // pred_region
      %1038 = sst [smem:[#allocation40]] [#allocation57]
      %1039 = sst [smem:[#allocation41]] [#allocation56]
    $region609: #{tpu_custom_call.1} parent=1 // pred_fallthru
      _
    %1041 = shalt.err (0)
    %s1043 = sshll.u32 %s1035, 4
    %s1044 = int_to_ptr.vmem [resolvable:$true] %s1043
    %1046 = dma.hbm_to_vmem [thread:$0]  %s1034, 16, %s1044, [#allocation3]
    %s1047 = smul.addr %s1032, 16
    %s1048 = scalar_lea.hbm %s1, %s1047
    %s1049 = scalar_lea.vmem [#allocation2], 28
    // Predicated region
    $region610: #{tpu_custom_call.1} parent=1 // pred_check
      _
    $region611: #{tpu_custom_call.1} parent=1 // pred_check_branch
      %1051 = sbr.rel target = $region613
    $region612: #{tpu_custom_call.1} parent=1 // pred_region
      %1052 = sst [smem:[#allocation40]] [#allocation59]
      %1053 = sst [smem:[#allocation41]] [#allocation58]
    $region613: #{tpu_custom_call.1} parent=1 // pred_fallthru
      _
    %1055 = shalt.err (0)
    %s1057 = sshll.u32 %s1049, 4
    %s1058 = int_to_ptr.vmem [resolvable:$true] %s1057
    %1060 = dma.hbm_to_vmem [thread:$0]  %s1048, 16, %s1058, [#allocation3]
    %s1061 = sld [smem:[#allocation12 + $0x5]]
    %s1062 = sld [smem:[#allocation13 + $0x5]]
    %s1063 = smul.addr %s1061, 16
    %s1064 = scalar_lea.hbm %s1, %s1063
    %s1065 = scalar_lea.vmem [#allocation2], 21
    // Predicated region
    $region614: #{tpu_custom_call.1} parent=1 // pred_check
      _
    $region615: #{tpu_custom_call.1} parent=1 // pred_check_branch
      %1067 = sbr.rel target = $region617
    $region616: #{tpu_custom_call.1} parent=1 // pred_region
      %1068 = sst [smem:[#allocation40]] [#allocation61]
      %1069 = sst [smem:[#allocation41]] [#allocation60]
    $region617: #{tpu_custom_call.1} parent=1 // pred_fallthru
      _
    %1071 = shalt.err (0)
    %s1073 = sshll.u32 %s1065, 4
    %s1074 = int_to_ptr.vmem [resolvable:$true] %s1073
    %1076 = dma.hbm_to_vmem [thread:$0]  %s1064, 16, %s1074, [#allocation3]
    %s1077 = smul.addr %s1062, 16
    %s1078 = scalar_lea.hbm %s1, %s1077
    %s1079 = scalar_lea.vmem [#allocation2], 29
    // Predicated region
    $region618: #{tpu_custom_call.1} parent=1 // pred_check
      _
    $region619: #{tpu_custom_call.1} parent=1 // pred_check_branch
      %1081 = sbr.rel target = $region621
    $region620: #{tpu_custom_call.1} parent=1 // pred_region
      %1082 = sst [smem:[#allocation40]] [#allocation63]
      %1083 = sst [smem:[#allocation41]] [#allocation62]
    $region621: #{tpu_custom_call.1} parent=1 // pred_fallthru
      _
    %1085 = shalt.err (0)
    %s1087 = sshll.u32 %s1079, 4
    %s1088 = int_to_ptr.vmem [resolvable:$true] %s1087
    %1090 = dma.hbm_to_vmem [thread:$0]  %s1078, 16, %s1088, [#allocation3]
    %s1091 = sld [smem:[#allocation12 + $0x6]]
    %s1092 = sld [smem:[#allocation13 + $0x6]]
    %s1093 = smul.addr %s1091, 16
    %s1094 = scalar_lea.hbm %s1, %s1093
    %s1095 = scalar_lea.vmem [#allocation2], 22
    // Predicated region
    $region622: #{tpu_custom_call.1} parent=1 // pred_check
      _
    $region623: #{tpu_custom_call.1} parent=1 // pred_check_branch
      %1097 = sbr.rel target = $region625
    $region624: #{tpu_custom_call.1} parent=1 // pred_region
      %1098 = sst [smem:[#allocation40]] [#allocation65]
      %1099 = sst [smem:[#allocation41]] [#allocation64]
    $region625: #{tpu_custom_call.1} parent=1 // pred_fallthru
      _
    %1101 = shalt.err (0)
    %s1103 = sshll.u32 %s1095, 4
    %s1104 = int_to_ptr.vmem [resolvable:$true] %s1103
    %1106 = dma.hbm_to_vmem [thread:$0]  %s1094, 16, %s1104, [#allocation3]
    %s1107 = smul.addr %s1092, 16
    %s1108 = scalar_lea.hbm %s1, %s1107
    %s1109 = scalar_lea.vmem [#allocation2], 30
    // Predicated region
    $region626: #{tpu_custom_call.1} parent=1 // pred_check
      _
    $region627: #{tpu_custom_call.1} parent=1 // pred_check_branch
      %1111 = sbr.rel target = $region629
    $region628: #{tpu_custom_call.1} parent=1 // pred_region
      %1112 = sst [smem:[#allocation40]] [#allocation67]
      %1113 = sst [smem:[#allocation41]] [#allocation66]
    $region629: #{tpu_custom_call.1} parent=1 // pred_fallthru
      _
    %1115 = shalt.err (0)
    %s1117 = sshll.u32 %s1109, 4
    %s1118 = int_to_ptr.vmem [resolvable:$true] %s1117
    %1120 = dma.hbm_to_vmem [thread:$0]  %s1108, 16, %s1118, [#allocation3]
    %s1121 = sld [smem:[#allocation12 + $0x7]]
    %s1122 = sld [smem:[#allocation13 + $0x7]]
    %s1123 = smul.addr %s1121, 16
    %s1124 = scalar_lea.hbm %s1, %s1123
    %s1125 = scalar_lea.vmem [#allocation2], 23
    // Predicated region
    $region630: #{tpu_custom_call.1} parent=1 // pred_check
      _
    $region631: #{tpu_custom_call.1} parent=1 // pred_check_branch
      %1127 = sbr.rel target = $region633
    $region632: #{tpu_custom_call.1} parent=1 // pred_region
      %1128 = sst [smem:[#allocation40]] [#allocation69]
      %1129 = sst [smem:[#allocation41]] [#allocation68]
    $region633: #{tpu_custom_call.1} parent=1 // pred_fallthru
      _
    %1131 = shalt.err (0)
    %s1133 = sshll.u32 %s1125, 4
    %s1134 = int_to_ptr.vmem [resolvable:$true] %s1133
    %1136 = dma.hbm_to_vmem [thread:$0]  %s1124, 16, %s1134, [#allocation3]
    %s1137 = smul.addr %s1122, 16
    %s1138 = scalar_lea.hbm %s1, %s1137
    %s1139 = scalar_lea.vmem [#allocation2], 31
    // Predicated region
    $region634: #{tpu_custom_call.1} parent=1 // pred_check
      _
    $region635: #{tpu_custom_call.1} parent=1 // pred_check_branch
      %1141 = sbr.rel target = $region637
    $region636: #{tpu_custom_call.1} parent=1 // pred_region
      %1142 = sst [smem:[#allocation40]] [#allocation71]
      %1143 = sst [smem:[#allocation41]] [#allocation70]
    $region637: #{tpu_custom_call.1} parent=1 // pred_fallthru
      _
    %1145 = shalt.err (0)
    %s1147 = sshll.u32 %s1139, 4
    %s1148 = int_to_ptr.vmem [resolvable:$true] %s1147
    %1150 = dma.hbm_to_vmem [thread:$0]  %s1138, 16, %s1148, [#allocation3]
    %s1151 = sld [smem:[#allocation15]]
    %s1152 = sld [smem:[#allocation16]]
    %s1153 = scalar_lea.vmem %s0, %s1151
    %s1154 = scalar_lea.vmem [#allocation2], 32
    %s1155 = scalar_lea.sflag [#allocation3], 1
    %p1157 = scmp.lt.u32.totalorder 1, 8
    %p1158 = pneg %p1157
    // Predicated region
    $region638: #{tpu_custom_call.1} parent=1 // pred_check
      _
    $region639: #{tpu_custom_call.1} parent=1 // pred_check_branch
      %1160 = sbr.rel (%p1157) target = $region641
    $region640: #{tpu_custom_call.1} parent=1 // pred_region
      %s1175 = sand.u32 1, 7
      %p1176 = scmp.eq.s32.totalorder %s1175, 0
      %p1177 = pneg %p1176
      // Predicated region
      $region653: #{tpu_custom_call.1} parent=640 // pred_check
        _
      $region654: #{tpu_custom_call.1} parent=640 // pred_check_branch
        %1179 = sbr.rel (%p1176) target = $region656
      $region655: #{tpu_custom_call.1} parent=640 // pred_region
        %s1180 = sand.u32 1, 7
        %s1181 = ssub.s32 1, %s1180
        %s1182 = scalar_lea.vmem %s1153, %s1181
        %s1183 = ssub.s32 1, %s1180
        %s1184 = scalar_lea.vmem %s1154, %s1183 [#allocation2]
        %s1185 = sshllo.u32 0, %s1180
        loop: start=0, step=1, limit=1
        $region657: #{tpu_custom_call.1} parent=655 // loop_pre_header
          _
        $region658: #{tpu_custom_call.1} parent=655 // loop_header
          %s1187 = sphi 0, %s1191
          %p1188 = scmp.ge.s32.totalorder %s1187, 1
          %s1192 = sphi %s1182, %s1182
          %s1193 = sphi %s1184, %s1184
        $region659: #{tpu_custom_call.1} parent=655 // loop_header_branch
          %1190 = sbr.rel (%p1188) target = $region663
        $region660: #{tpu_custom_call.1} parent=655 // loop_body
          %v1194 = vld [vmem:[%s1192] sm:%s1185]
          %1195 = vst [vmem:[%s1193] sm:%s1185] %v1194
        $region661: #{tpu_custom_call.1} parent=655 // loop_footer
          %s1191 = sadd.s32 1, %s1187
        $region662: #{tpu_custom_call.1} parent=655 // loop_footer_branch
          %1186 = sbr.rel target = $region658
        $region663: #{tpu_custom_call.1} parent=655 // loop_exit
          _
      $region656: #{tpu_custom_call.1} parent=640 // pred_fallthru
        _
    $region641: #{tpu_custom_call.1} parent=1 // pred_fallthru
      _
    // Predicated region
    $region642: #{tpu_custom_call.1} parent=1 // pred_check
      %p1161 = pneg %p1157
    $region643: #{tpu_custom_call.1} parent=1 // pred_check_branch
      %1163 = sbr.rel (%p1161) target = $region645
    $region644: #{tpu_custom_call.1} parent=1 // pred_region
      %s1164 = sshllo.u32 0, 1
      loop: start=0, step=1, limit=1
      $region646: #{tpu_custom_call.1} parent=644 // loop_pre_header
        _
      $region647: #{tpu_custom_call.1} parent=644 // loop_header
        %s1166 = sphi 0, %s1170
        %p1167 = scmp.ge.s32.totalorder %s1166, 1
        %s1171 = sphi %s1153, %s1153
        %s1172 = sphi %s1154, %s1154
      $region648: #{tpu_custom_call.1} parent=644 // loop_header_branch
        %1169 = sbr.rel (%p1167) target = $region652
      $region649: #{tpu_custom_call.1} parent=644 // loop_body
        %v1173 = vld [vmem:[%s1171] sm:%s1164]
        %1174 = vst [vmem:[%s1172] sm:%s1164] %v1173
      $region650: #{tpu_custom_call.1} parent=644 // loop_footer
        %s1170 = sadd.s32 1, %s1166
      $region651: #{tpu_custom_call.1} parent=644 // loop_footer_branch
        %1165 = sbr.rel target = $region647
      $region652: #{tpu_custom_call.1} parent=644 // loop_exit
        _
    $region645: #{tpu_custom_call.1} parent=1 // pred_fallthru
      _
    // Predicated region
    $region664: #{tpu_custom_call.1} parent=1 // pred_check
      _
    $region665: #{tpu_custom_call.1} parent=1 // pred_check_branch
      %1198 = sbr.rel (0) target = $region667
    $region666: #{tpu_custom_call.1} parent=1 // pred_region
      %1199 = vsyncadd %s1155, 16
    $region667: #{tpu_custom_call.1} parent=1 // pred_fallthru
      _
    %s1200 = scalar_lea.vmem %s0, %s1152
    %s1201 = scalar_lea.vmem [#allocation2], 40
    %p1203 = scmp.lt.u32.totalorder 1, 8
    %p1204 = pneg %p1203
    // Predicated region
    $region668: #{tpu_custom_call.1} parent=1 // pred_check
      _
    $region669: #{tpu_custom_call.1} parent=1 // pred_check_branch
      %1206 = sbr.rel (%p1203) target = $region671
    $region670: #{tpu_custom_call.1} parent=1 // pred_region
      %s1221 = sand.u32 1, 7
      %p1222 = scmp.eq.s32.totalorder %s1221, 0
      %p1223 = pneg %p1222
      // Predicated region
      $region683: #{tpu_custom_call.1} parent=670 // pred_check
        _
      $region684: #{tpu_custom_call.1} parent=670 // pred_check_branch
        %1225 = sbr.rel (%p1222) target = $region686
      $region685: #{tpu_custom_call.1} parent=670 // pred_region
        %s1226 = sand.u32 1, 7
        %s1227 = ssub.s32 1, %s1226
        %s1228 = scalar_lea.vmem %s1200, %s1227
        %s1229 = ssub.s32 1, %s1226
        %s1230 = scalar_lea.vmem %s1201, %s1229 [#allocation2]
        %s1231 = sshllo.u32 0, %s1226
        loop: start=0, step=1, limit=1
        $region687: #{tpu_custom_call.1} parent=685 // loop_pre_header
          _
        $region688: #{tpu_custom_call.1} parent=685 // loop_header
          %s1233 = sphi 0, %s1237
          %p1234 = scmp.ge.s32.totalorder %s1233, 1
          %s1238 = sphi %s1228, %s1228
          %s1239 = sphi %s1230, %s1230
        $region689: #{tpu_custom_call.1} parent=685 // loop_header_branch
          %1236 = sbr.rel (%p1234) target = $region693
        $region690: #{tpu_custom_call.1} parent=685 // loop_body
          %v1240 = vld [vmem:[%s1238] sm:%s1231]
          %1241 = vst [vmem:[%s1239] sm:%s1231] %v1240
        $region691: #{tpu_custom_call.1} parent=685 // loop_footer
          %s1237 = sadd.s32 1, %s1233
        $region692: #{tpu_custom_call.1} parent=685 // loop_footer_branch
          %1232 = sbr.rel target = $region688
        $region693: #{tpu_custom_call.1} parent=685 // loop_exit
          _
      $region686: #{tpu_custom_call.1} parent=670 // pred_fallthru
        _
    $region671: #{tpu_custom_call.1} parent=1 // pred_fallthru
      _
    // Predicated region
    $region672: #{tpu_custom_call.1} parent=1 // pred_check
      %p1207 = pneg %p1203
    $region673: #{tpu_custom_call.1} parent=1 // pred_check_branch
      %1209 = sbr.rel (%p1207) target = $region675
    $region674: #{tpu_custom_call.1} parent=1 // pred_region
      %s1210 = sshllo.u32 0, 1
      loop: start=0, step=1, limit=1
      $region676: #{tpu_custom_call.1} parent=674 // loop_pre_header
        _
      $region677: #{tpu_custom_call.1} parent=674 // loop_header
        %s1212 = sphi 0, %s1216
        %p1213 = scmp.ge.s32.totalorder %s1212, 1
        %s1217 = sphi %s1200, %s1200
        %s1218 = sphi %s1201, %s1201
      $region678: #{tpu_custom_call.1} parent=674 // loop_header_branch
        %1215 = sbr.rel (%p1213) target = $region682
      $region679: #{tpu_custom_call.1} parent=674 // loop_body
        %v1219 = vld [vmem:[%s1217] sm:%s1210]
        %1220 = vst [vmem:[%s1218] sm:%s1210] %v1219
      $region680: #{tpu_custom_call.1} parent=674 // loop_footer
        %s1216 = sadd.s32 1, %s1212
      $region681: #{tpu_custom_call.1} parent=674 // loop_footer_branch
        %1211 = sbr.rel target = $region677
      $region682: #{tpu_custom_call.1} parent=674 // loop_exit
        _
    $region675: #{tpu_custom_call.1} parent=1 // pred_fallthru
      _
    // Predicated region
    $region694: #{tpu_custom_call.1} parent=1 // pred_check
      _
    $region695: #{tpu_custom_call.1} parent=1 // pred_check_branch
      %1244 = sbr.rel (0) target = $region697
    $region696: #{tpu_custom_call.1} parent=1 // pred_region
      %1245 = vsyncadd %s1155, 16
    $region697: #{tpu_custom_call.1} parent=1 // pred_fallthru
      _
    %s1246 = sld [smem:[#allocation15 + $0x1]]
    %s1247 = sld [smem:[#allocation16 + $0x1]]
    %s1248 = scalar_lea.vmem %s0, %s1246
    %s1249 = scalar_lea.vmem [#allocation2], 33
    %p1251 = scmp.lt.u32.totalorder 1, 8
    %p1252 = pneg %p1251
    // Predicated region
    $region698: #{tpu_custom_call.1} parent=1 // pred_check
      _
    $region699: #{tpu_custom_call.1} parent=1 // pred_check_branch
      %1254 = sbr.rel (%p1251) target = $region701
    $region700: #{tpu_custom_call.1} parent=1 // pred_region
      %s1269 = sand.u32 1, 7
      %p1270 = scmp.eq.s32.totalorder %s1269, 0
      %p1271 = pneg %p1270
      // Predicated region
      $region713: #{tpu_custom_call.1} parent=700 // pred_check
        _
      $region714: #{tpu_custom_call.1} parent=700 // pred_check_branch
        %1273 = sbr.rel (%p1270) target = $region716
      $region715: #{tpu_custom_call.1} parent=700 // pred_region
        %s1274 = sand.u32 1, 7
        %s1275 = ssub.s32 1, %s1274
        %s1276 = scalar_lea.vmem %s1248, %s1275
        %s1277 = ssub.s32 1, %s1274
        %s1278 = scalar_lea.vmem %s1249, %s1277 [#allocation2]
        %s1279 = sshllo.u32 0, %s1274
        loop: start=0, step=1, limit=1
        $region717: #{tpu_custom_call.1} parent=715 // loop_pre_header
          _
        $region718: #{tpu_custom_call.1} parent=715 // loop_header
          %s1281 = sphi 0, %s1285
          %p1282 = scmp.ge.s32.totalorder %s1281, 1
          %s1286 = sphi %s1276, %s1276
          %s1287 = sphi %s1278, %s1278
        $region719: #{tpu_custom_call.1} parent=715 // loop_header_branch
          %1284 = sbr.rel (%p1282) target = $region723
        $region720: #{tpu_custom_call.1} parent=715 // loop_body
          %v1288 = vld [vmem:[%s1286] sm:%s1279]
          %1289 = vst [vmem:[%s1287] sm:%s1279] %v1288
        $region721: #{tpu_custom_call.1} parent=715 // loop_footer
          %s1285 = sadd.s32 1, %s1281
        $region722: #{tpu_custom_call.1} parent=715 // loop_footer_branch
          %1280 = sbr.rel target = $region718
        $region723: #{tpu_custom_call.1} parent=715 // loop_exit
          _
      $region716: #{tpu_custom_call.1} parent=700 // pred_fallthru
        _
    $region701: #{tpu_custom_call.1} parent=1 // pred_fallthru
      _
    // Predicated region
    $region702: #{tpu_custom_call.1} parent=1 // pred_check
      %p1255 = pneg %p1251
    $region703: #{tpu_custom_call.1} parent=1 // pred_check_branch
      %1257 = sbr.rel (%p1255) target = $region705
    $region704: #{tpu_custom_call.1} parent=1 // pred_region
      %s1258 = sshllo.u32 0, 1
      loop: start=0, step=1, limit=1
      $region706: #{tpu_custom_call.1} parent=704 // loop_pre_header
        _
      $region707: #{tpu_custom_call.1} parent=704 // loop_header
        %s1260 = sphi 0, %s1264
        %p1261 = scmp.ge.s32.totalorder %s1260, 1
        %s1265 = sphi %s1248, %s1248
        %s1266 = sphi %s1249, %s1249
      $region708: #{tpu_custom_call.1} parent=704 // loop_header_branch
        %1263 = sbr.rel (%p1261) target = $region712
      $region709: #{tpu_custom_call.1} parent=704 // loop_body
        %v1267 = vld [vmem:[%s1265] sm:%s1258]
        %1268 = vst [vmem:[%s1266] sm:%s1258] %v1267
      $region710: #{tpu_custom_call.1} parent=704 // loop_footer
        %s1264 = sadd.s32 1, %s1260
      $region711: #{tpu_custom_call.1} parent=704 // loop_footer_branch
        %1259 = sbr.rel target = $region707
      $region712: #{tpu_custom_call.1} parent=704 // loop_exit
        _
    $region705: #{tpu_custom_call.1} parent=1 // pred_fallthru
      _
    // Predicated region
    $region724: #{tpu_custom_call.1} parent=1 // pred_check
      _
    $region725: #{tpu_custom_call.1} parent=1 // pred_check_branch
      %1292 = sbr.rel (0) target = $region727
    $region726: #{tpu_custom_call.1} parent=1 // pred_region
      %1293 = vsyncadd %s1155, 16
    $region727: #{tpu_custom_call.1} parent=1 // pred_fallthru
      _
    %s1294 = scalar_lea.vmem %s0, %s1247
    %s1295 = scalar_lea.vmem [#allocation2], 41
    %p1297 = scmp.lt.u32.totalorder 1, 8
    %p1298 = pneg %p1297
    // Predicated region
    $region728: #{tpu_custom_call.1} parent=1 // pred_check
      _
    $region729: #{tpu_custom_call.1} parent=1 // pred_check_branch
      %1300 = sbr.rel (%p1297) target = $region731
    $region730: #{tpu_custom_call.1} parent=1 // pred_region
      %s1315 = sand.u32 1, 7
      %p1316 = scmp.eq.s32.totalorder %s1315, 0
      %p1317 = pneg %p1316
      // Predicated region
      $region743: #{tpu_custom_call.1} parent=730 // pred_check
        _
      $region744: #{tpu_custom_call.1} parent=730 // pred_check_branch
        %1319 = sbr.rel (%p1316) target = $region746
      $region745: #{tpu_custom_call.1} parent=730 // pred_region
        %s1320 = sand.u32 1, 7
        %s1321 = ssub.s32 1, %s1320
        %s1322 = scalar_lea.vmem %s1294, %s1321
        %s1323 = ssub.s32 1, %s1320
        %s1324 = scalar_lea.vmem %s1295, %s1323 [#allocation2]
        %s1325 = sshllo.u32 0, %s1320
        loop: start=0, step=1, limit=1
        $region747: #{tpu_custom_call.1} parent=745 // loop_pre_header
          _
        $region748: #{tpu_custom_call.1} parent=745 // loop_header
          %s1327 = sphi 0, %s1331
          %p1328 = scmp.ge.s32.totalorder %s1327, 1
          %s1332 = sphi %s1322, %s1322
          %s1333 = sphi %s1324, %s1324
        $region749: #{tpu_custom_call.1} parent=745 // loop_header_branch
          %1330 = sbr.rel (%p1328) target = $region753
        $region750: #{tpu_custom_call.1} parent=745 // loop_body
          %v1334 = vld [vmem:[%s1332] sm:%s1325]
          %1335 = vst [vmem:[%s1333] sm:%s1325] %v1334
        $region751: #{tpu_custom_call.1} parent=745 // loop_footer
          %s1331 = sadd.s32 1, %s1327
        $region752: #{tpu_custom_call.1} parent=745 // loop_footer_branch
          %1326 = sbr.rel target = $region748
        $region753: #{tpu_custom_call.1} parent=745 // loop_exit
          _
      $region746: #{tpu_custom_call.1} parent=730 // pred_fallthru
        _
    $region731: #{tpu_custom_call.1} parent=1 // pred_fallthru
      _
    // Predicated region
    $region732: #{tpu_custom_call.1} parent=1 // pred_check
      %p1301 = pneg %p1297
    $region733: #{tpu_custom_call.1} parent=1 // pred_check_branch
      %1303 = sbr.rel (%p1301) target = $region735
    $region734: #{tpu_custom_call.1} parent=1 // pred_region
      %s1304 = sshllo.u32 0, 1
      loop: start=0, step=1, limit=1
      $region736: #{tpu_custom_call.1} parent=734 // loop_pre_header
        _
      $region737: #{tpu_custom_call.1} parent=734 // loop_header
        %s1306 = sphi 0, %s1310
        %p1307 = scmp.ge.s32.totalorder %s1306, 1
        %s1311 = sphi %s1294, %s1294
        %s1312 = sphi %s1295, %s1295
      $region738: #{tpu_custom_call.1} parent=734 // loop_header_branch
        %1309 = sbr.rel (%p1307) target = $region742
      $region739: #{tpu_custom_call.1} parent=734 // loop_body
        %v1313 = vld [vmem:[%s1311] sm:%s1304]
        %1314 = vst [vmem:[%s1312] sm:%s1304] %v1313
      $region740: #{tpu_custom_call.1} parent=734 // loop_footer
        %s1310 = sadd.s32 1, %s1306
      $region741: #{tpu_custom_call.1} parent=734 // loop_footer_branch
        %1305 = sbr.rel target = $region737
      $region742: #{tpu_custom_call.1} parent=734 // loop_exit
        _
    $region735: #{tpu_custom_call.1} parent=1 // pred_fallthru
      _
    // Predicated region
    $region754: #{tpu_custom_call.1} parent=1 // pred_check
      _
    $region755: #{tpu_custom_call.1} parent=1 // pred_check_branch
      %1338 = sbr.rel (0) target = $region757
    $region756: #{tpu_custom_call.1} parent=1 // pred_region
      %1339 = vsyncadd %s1155, 16
    $region757: #{tpu_custom_call.1} parent=1 // pred_fallthru
      _
    %s1340 = sld [smem:[#allocation15 + $0x2]]
    %s1341 = sld [smem:[#allocation16 + $0x2]]
    %s1342 = scalar_lea.vmem %s0, %s1340
    %s1343 = scalar_lea.vmem [#allocation2], 34
    %p1345 = scmp.lt.u32.totalorder 1, 8
    %p1346 = pneg %p1345
    // Predicated region
    $region758: #{tpu_custom_call.1} parent=1 // pred_check
      _
    $region759: #{tpu_custom_call.1} parent=1 // pred_check_branch
      %1348 = sbr.rel (%p1345) target = $region761
    $region760: #{tpu_custom_call.1} parent=1 // pred_region
      %s1363 = sand.u32 1, 7
      %p1364 = scmp.eq.s32.totalorder %s1363, 0
      %p1365 = pneg %p1364
      // Predicated region
      $region773: #{tpu_custom_call.1} parent=760 // pred_check
        _
      $region774: #{tpu_custom_call.1} parent=760 // pred_check_branch
        %1367 = sbr.rel (%p1364) target = $region776
      $region775: #{tpu_custom_call.1} parent=760 // pred_region
        %s1368 = sand.u32 1, 7
        %s1369 = ssub.s32 1, %s1368
        %s1370 = scalar_lea.vmem %s1342, %s1369
        %s1371 = ssub.s32 1, %s1368
        %s1372 = scalar_lea.vmem %s1343, %s1371 [#allocation2]
        %s1373 = sshllo.u32 0, %s1368
        loop: start=0, step=1, limit=1
        $region777: #{tpu_custom_call.1} parent=775 // loop_pre_header
          _
        $region778: #{tpu_custom_call.1} parent=775 // loop_header
          %s1375 = sphi 0, %s1379
          %p1376 = scmp.ge.s32.totalorder %s1375, 1
          %s1380 = sphi %s1370, %s1370
          %s1381 = sphi %s1372, %s1372
        $region779: #{tpu_custom_call.1} parent=775 // loop_header_branch
          %1378 = sbr.rel (%p1376) target = $region783
        $region780: #{tpu_custom_call.1} parent=775 // loop_body
          %v1382 = vld [vmem:[%s1380] sm:%s1373]
          %1383 = vst [vmem:[%s1381] sm:%s1373] %v1382
        $region781: #{tpu_custom_call.1} parent=775 // loop_footer
          %s1379 = sadd.s32 1, %s1375
        $region782: #{tpu_custom_call.1} parent=775 // loop_footer_branch
          %1374 = sbr.rel target = $region778
        $region783: #{tpu_custom_call.1} parent=775 // loop_exit
          _
      $region776: #{tpu_custom_call.1} parent=760 // pred_fallthru
        _
    $region761: #{tpu_custom_call.1} parent=1 // pred_fallthru
      _
    // Predicated region
    $region762: #{tpu_custom_call.1} parent=1 // pred_check
      %p1349 = pneg %p1345
    $region763: #{tpu_custom_call.1} parent=1 // pred_check_branch
      %1351 = sbr.rel (%p1349) target = $region765
    $region764: #{tpu_custom_call.1} parent=1 // pred_region
      %s1352 = sshllo.u32 0, 1
      loop: start=0, step=1, limit=1
      $region766: #{tpu_custom_call.1} parent=764 // loop_pre_header
        _
      $region767: #{tpu_custom_call.1} parent=764 // loop_header
        %s1354 = sphi 0, %s1358
        %p1355 = scmp.ge.s32.totalorder %s1354, 1
        %s1359 = sphi %s1342, %s1342
        %s1360 = sphi %s1343, %s1343
      $region768: #{tpu_custom_call.1} parent=764 // loop_header_branch
        %1357 = sbr.rel (%p1355) target = $region772
      $region769: #{tpu_custom_call.1} parent=764 // loop_body
        %v1361 = vld [vmem:[%s1359] sm:%s1352]
        %1362 = vst [vmem:[%s1360] sm:%s1352] %v1361
      $region770: #{tpu_custom_call.1} parent=764 // loop_footer
        %s1358 = sadd.s32 1, %s1354
      $region771: #{tpu_custom_call.1} parent=764 // loop_footer_branch
        %1353 = sbr.rel target = $region767
      $region772: #{tpu_custom_call.1} parent=764 // loop_exit
        _
    $region765: #{tpu_custom_call.1} parent=1 // pred_fallthru
      _
    // Predicated region
    $region784: #{tpu_custom_call.1} parent=1 // pred_check
      _
    $region785: #{tpu_custom_call.1} parent=1 // pred_check_branch
      %1386 = sbr.rel (0) target = $region787
    $region786: #{tpu_custom_call.1} parent=1 // pred_region
      %1387 = vsyncadd %s1155, 16
    $region787: #{tpu_custom_call.1} parent=1 // pred_fallthru
      _
    %s1388 = scalar_lea.vmem %s0, %s1341
    %s1389 = scalar_lea.vmem [#allocation2], 42
    %p1391 = scmp.lt.u32.totalorder 1, 8
    %p1392 = pneg %p1391
    // Predicated region
    $region788: #{tpu_custom_call.1} parent=1 // pred_check
      _
    $region789: #{tpu_custom_call.1} parent=1 // pred_check_branch
      %1394 = sbr.rel (%p1391) target = $region791
    $region790: #{tpu_custom_call.1} parent=1 // pred_region
      %s1409 = sand.u32 1, 7
      %p1410 = scmp.eq.s32.totalorder %s1409, 0
      %p1411 = pneg %p1410
      // Predicated region
      $region803: #{tpu_custom_call.1} parent=790 // pred_check
        _
      $region804: #{tpu_custom_call.1} parent=790 // pred_check_branch
        %1413 = sbr.rel (%p1410) target = $region806
      $region805: #{tpu_custom_call.1} parent=790 // pred_region
        %s1414 = sand.u32 1, 7
        %s1415 = ssub.s32 1, %s1414
        %s1416 = scalar_lea.vmem %s1388, %s1415
        %s1417 = ssub.s32 1, %s1414
        %s1418 = scalar_lea.vmem %s1389, %s1417 [#allocation2]
        %s1419 = sshllo.u32 0, %s1414
        loop: start=0, step=1, limit=1
        $region807: #{tpu_custom_call.1} parent=805 // loop_pre_header
          _
        $region808: #{tpu_custom_call.1} parent=805 // loop_header
          %s1421 = sphi 0, %s1425
          %p1422 = scmp.ge.s32.totalorder %s1421, 1
          %s1426 = sphi %s1416, %s1416
          %s1427 = sphi %s1418, %s1418
        $region809: #{tpu_custom_call.1} parent=805 // loop_header_branch
          %1424 = sbr.rel (%p1422) target = $region813
        $region810: #{tpu_custom_call.1} parent=805 // loop_body
          %v1428 = vld [vmem:[%s1426] sm:%s1419]
          %1429 = vst [vmem:[%s1427] sm:%s1419] %v1428
        $region811: #{tpu_custom_call.1} parent=805 // loop_footer
          %s1425 = sadd.s32 1, %s1421
        $region812: #{tpu_custom_call.1} parent=805 // loop_footer_branch
          %1420 = sbr.rel target = $region808
        $region813: #{tpu_custom_call.1} parent=805 // loop_exit
          _
      $region806: #{tpu_custom_call.1} parent=790 // pred_fallthru
        _
    $region791: #{tpu_custom_call.1} parent=1 // pred_fallthru
      _
    // Predicated region
    $region792: #{tpu_custom_call.1} parent=1 // pred_check
      %p1395 = pneg %p1391
    $region793: #{tpu_custom_call.1} parent=1 // pred_check_branch
      %1397 = sbr.rel (%p1395) target = $region795
    $region794: #{tpu_custom_call.1} parent=1 // pred_region
      %s1398 = sshllo.u32 0, 1
      loop: start=0, step=1, limit=1
      $region796: #{tpu_custom_call.1} parent=794 // loop_pre_header
        _
      $region797: #{tpu_custom_call.1} parent=794 // loop_header
        %s1400 = sphi 0, %s1404
        %p1401 = scmp.ge.s32.totalorder %s1400, 1
        %s1405 = sphi %s1388, %s1388
        %s1406 = sphi %s1389, %s1389
      $region798: #{tpu_custom_call.1} parent=794 // loop_header_branch
        %1403 = sbr.rel (%p1401) target = $region802
      $region799: #{tpu_custom_call.1} parent=794 // loop_body
        %v1407 = vld [vmem:[%s1405] sm:%s1398]
        %1408 = vst [vmem:[%s1406] sm:%s1398] %v1407
      $region800: #{tpu_custom_call.1} parent=794 // loop_footer
        %s1404 = sadd.s32 1, %s1400
      $region801: #{tpu_custom_call.1} parent=794 // loop_footer_branch
        %1399 = sbr.rel target = $region797
      $region802: #{tpu_custom_call.1} parent=794 // loop_exit
        _
    $region795: #{tpu_custom_call.1} parent=1 // pred_fallthru
      _
    // Predicated region
    $region814: #{tpu_custom_call.1} parent=1 // pred_check
      _
    $region815: #{tpu_custom_call.1} parent=1 // pred_check_branch
      %1432 = sbr.rel (0) target = $region817
    $region816: #{tpu_custom_call.1} parent=1 // pred_region
      %1433 = vsyncadd %s1155, 16
    $region817: #{tpu_custom_call.1} parent=1 // pred_fallthru
      _
    %s1434 = sld [smem:[#allocation15 + $0x3]]
    %s1435 = sld [smem:[#allocation16 + $0x3]]
    %s1436 = scalar_lea.vmem %s0, %s1434
    %s1437 = scalar_lea.vmem [#allocation2], 35
    %p1439 = scmp.lt.u32.totalorder 1, 8
    %p1440 = pneg %p1439
    // Predicated region
    $region818: #{tpu_custom_call.1} parent=1 // pred_check
      _
    $region819: #{tpu_custom_call.1} parent=1 // pred_check_branch
      %1442 = sbr.rel (%p1439) target = $region821
    $region820: #{tpu_custom_call.1} parent=1 // pred_region
      %s1457 = sand.u32 1, 7
      %p1458 = scmp.eq.s32.totalorder %s1457, 0
      %p1459 = pneg %p1458
      // Predicated region
      $region833: #{tpu_custom_call.1} parent=820 // pred_check
        _
      $region834: #{tpu_custom_call.1} parent=820 // pred_check_branch
        %1461 = sbr.rel (%p1458) target = $region836
      $region835: #{tpu_custom_call.1} parent=820 // pred_region
        %s1462 = sand.u32 1, 7
        %s1463 = ssub.s32 1, %s1462
        %s1464 = scalar_lea.vmem %s1436, %s1463
        %s1465 = ssub.s32 1, %s1462
        %s1466 = scalar_lea.vmem %s1437, %s1465 [#allocation2]
        %s1467 = sshllo.u32 0, %s1462
        loop: start=0, step=1, limit=1
        $region837: #{tpu_custom_call.1} parent=835 // loop_pre_header
          _
        $region838: #{tpu_custom_call.1} parent=835 // loop_header
          %s1469 = sphi 0, %s1473
          %p1470 = scmp.ge.s32.totalorder %s1469, 1
          %s1474 = sphi %s1464, %s1464
          %s1475 = sphi %s1466, %s1466
        $region839: #{tpu_custom_call.1} parent=835 // loop_header_branch
          %1472 = sbr.rel (%p1470) target = $region843
        $region840: #{tpu_custom_call.1} parent=835 // loop_body
          %v1476 = vld [vmem:[%s1474] sm:%s1467]
          %1477 = vst [vmem:[%s1475] sm:%s1467] %v1476
        $region841: #{tpu_custom_call.1} parent=835 // loop_footer
          %s1473 = sadd.s32 1, %s1469
        $region842: #{tpu_custom_call.1} parent=835 // loop_footer_branch
          %1468 = sbr.rel target = $region838
        $region843: #{tpu_custom_call.1} parent=835 // loop_exit
          _
      $region836: #{tpu_custom_call.1} parent=820 // pred_fallthru
        _
    $region821: #{tpu_custom_call.1} parent=1 // pred_fallthru
      _
    // Predicated region
    $region822: #{tpu_custom_call.1} parent=1 // pred_check
      %p1443 = pneg %p1439
    $region823: #{tpu_custom_call.1} parent=1 // pred_check_branch
      %1445 = sbr.rel (%p1443) target = $region825
    $region824: #{tpu_custom_call.1} parent=1 // pred_region
      %s1446 = sshllo.u32 0, 1
      loop: start=0, step=1, limit=1
      $region826: #{tpu_custom_call.1} parent=824 // loop_pre_header
        _
      $region827: #{tpu_custom_call.1} parent=824 // loop_header
        %s1448 = sphi 0, %s1452
        %p1449 = scmp.ge.s32.totalorder %s1448, 1
        %s1453 = sphi %s1436, %s1436
        %s1454 = sphi %s1437, %s1437
      $region828: #{tpu_custom_call.1} parent=824 // loop_header_branch
        %1451 = sbr.rel (%p1449) target = $region832
      $region829: #{tpu_custom_call.1} parent=824 // loop_body
        %v1455 = vld [vmem:[%s1453] sm:%s1446]
        %1456 = vst [vmem:[%s1454] sm:%s1446] %v1455
      $region830: #{tpu_custom_call.1} parent=824 // loop_footer
        %s1452 = sadd.s32 1, %s1448
      $region831: #{tpu_custom_call.1} parent=824 // loop_footer_branch
        %1447 = sbr.rel target = $region827
      $region832: #{tpu_custom_call.1} parent=824 // loop_exit
        _
    $region825: #{tpu_custom_call.1} parent=1 // pred_fallthru
      _
    // Predicated region
    $region844: #{tpu_custom_call.1} parent=1 // pred_check
      _
    $region845: #{tpu_custom_call.1} parent=1 // pred_check_branch
      %1480 = sbr.rel (0) target = $region847
    $region846: #{tpu_custom_call.1} parent=1 // pred_region
      %1481 = vsyncadd %s1155, 16
    $region847: #{tpu_custom_call.1} parent=1 // pred_fallthru
      _
    %s1482 = scalar_lea.vmem %s0, %s1435
    %s1483 = scalar_lea.vmem [#allocation2], 43
    %p1485 = scmp.lt.u32.totalorder 1, 8
    %p1486 = pneg %p1485
    // Predicated region
    $region848: #{tpu_custom_call.1} parent=1 // pred_check
      _
    $region849: #{tpu_custom_call.1} parent=1 // pred_check_branch
      %1488 = sbr.rel (%p1485) target = $region851
    $region850: #{tpu_custom_call.1} parent=1 // pred_region
      %s1503 = sand.u32 1, 7
      %p1504 = scmp.eq.s32.totalorder %s1503, 0
      %p1505 = pneg %p1504
      // Predicated region
      $region863: #{tpu_custom_call.1} parent=850 // pred_check
        _
      $region864: #{tpu_custom_call.1} parent=850 // pred_check_branch
        %1507 = sbr.rel (%p1504) target = $region866
      $region865: #{tpu_custom_call.1} parent=850 // pred_region
        %s1508 = sand.u32 1, 7
        %s1509 = ssub.s32 1, %s1508
        %s1510 = scalar_lea.vmem %s1482, %s1509
        %s1511 = ssub.s32 1, %s1508
        %s1512 = scalar_lea.vmem %s1483, %s1511 [#allocation2]
        %s1513 = sshllo.u32 0, %s1508
        loop: start=0, step=1, limit=1
        $region867: #{tpu_custom_call.1} parent=865 // loop_pre_header
          _
        $region868: #{tpu_custom_call.1} parent=865 // loop_header
          %s1515 = sphi 0, %s1519
          %p1516 = scmp.ge.s32.totalorder %s1515, 1
          %s1520 = sphi %s1510, %s1510
          %s1521 = sphi %s1512, %s1512
        $region869: #{tpu_custom_call.1} parent=865 // loop_header_branch
          %1518 = sbr.rel (%p1516) target = $region873
        $region870: #{tpu_custom_call.1} parent=865 // loop_body
          %v1522 = vld [vmem:[%s1520] sm:%s1513]
          %1523 = vst [vmem:[%s1521] sm:%s1513] %v1522
        $region871: #{tpu_custom_call.1} parent=865 // loop_footer
          %s1519 = sadd.s32 1, %s1515
        $region872: #{tpu_custom_call.1} parent=865 // loop_footer_branch
          %1514 = sbr.rel target = $region868
        $region873: #{tpu_custom_call.1} parent=865 // loop_exit
          _
      $region866: #{tpu_custom_call.1} parent=850 // pred_fallthru
        _
    $region851: #{tpu_custom_call.1} parent=1 // pred_fallthru
      _
    // Predicated region
    $region852: #{tpu_custom_call.1} parent=1 // pred_check
      %p1489 = pneg %p1485
    $region853: #{tpu_custom_call.1} parent=1 // pred_check_branch
      %1491 = sbr.rel (%p1489) target = $region855
    $region854: #{tpu_custom_call.1} parent=1 // pred_region
      %s1492 = sshllo.u32 0, 1
      loop: start=0, step=1, limit=1
      $region856: #{tpu_custom_call.1} parent=854 // loop_pre_header
        _
      $region857: #{tpu_custom_call.1} parent=854 // loop_header
        %s1494 = sphi 0, %s1498
        %p1495 = scmp.ge.s32.totalorder %s1494, 1
        %s1499 = sphi %s1482, %s1482
        %s1500 = sphi %s1483, %s1483
      $region858: #{tpu_custom_call.1} parent=854 // loop_header_branch
        %1497 = sbr.rel (%p1495) target = $region862
      $region859: #{tpu_custom_call.1} parent=854 // loop_body
        %v1501 = vld [vmem:[%s1499] sm:%s1492]
        %1502 = vst [vmem:[%s1500] sm:%s1492] %v1501
      $region860: #{tpu_custom_call.1} parent=854 // loop_footer
        %s1498 = sadd.s32 1, %s1494
      $region861: #{tpu_custom_call.1} parent=854 // loop_footer_branch
        %1493 = sbr.rel target = $region857
      $region862: #{tpu_custom_call.1} parent=854 // loop_exit
        _
    $region855: #{tpu_custom_call.1} parent=1 // pred_fallthru
      _
    // Predicated region
    $region874: #{tpu_custom_call.1} parent=1 // pred_check
      _
    $region875: #{tpu_custom_call.1} parent=1 // pred_check_branch
      %1526 = sbr.rel (0) target = $region877
    $region876: #{tpu_custom_call.1} parent=1 // pred_region
      %1527 = vsyncadd %s1155, 16
    $region877: #{tpu_custom_call.1} parent=1 // pred_fallthru
      _
    %s1528 = sld [smem:[#allocation15 + $0x4]]
    %s1529 = sld [smem:[#allocation16 + $0x4]]
    %s1530 = scalar_lea.vmem %s0, %s1528
    %s1531 = scalar_lea.vmem [#allocation2], 36
    %p1533 = scmp.lt.u32.totalorder 1, 8
    %p1534 = pneg %p1533
    // Predicated region
    $region878: #{tpu_custom_call.1} parent=1 // pred_check
      _
    $region879: #{tpu_custom_call.1} parent=1 // pred_check_branch
      %1536 = sbr.rel (%p1533) target = $region881
    $region880: #{tpu_custom_call.1} parent=1 // pred_region
      %s1551 = sand.u32 1, 7
      %p1552 = scmp.eq.s32.totalorder %s1551, 0
      %p1553 = pneg %p1552
      // Predicated region
      $region893: #{tpu_custom_call.1} parent=880 // pred_check
        _
      $region894: #{tpu_custom_call.1} parent=880 // pred_check_branch
        %1555 = sbr.rel (%p1552) target = $region896
      $region895: #{tpu_custom_call.1} parent=880 // pred_region
        %s1556 = sand.u32 1, 7
        %s1557 = ssub.s32 1, %s1556
        %s1558 = scalar_lea.vmem %s1530, %s1557
        %s1559 = ssub.s32 1, %s1556
        %s1560 = scalar_lea.vmem %s1531, %s1559 [#allocation2]
        %s1561 = sshllo.u32 0, %s1556
        loop: start=0, step=1, limit=1
        $region897: #{tpu_custom_call.1} parent=895 // loop_pre_header
          _
        $region898: #{tpu_custom_call.1} parent=895 // loop_header
          %s1563 = sphi 0, %s1567
          %p1564 = scmp.ge.s32.totalorder %s1563, 1
          %s1568 = sphi %s1558, %s1558
          %s1569 = sphi %s1560, %s1560
        $region899: #{tpu_custom_call.1} parent=895 // loop_header_branch
          %1566 = sbr.rel (%p1564) target = $region903
        $region900: #{tpu_custom_call.1} parent=895 // loop_body
          %v1570 = vld [vmem:[%s1568] sm:%s1561]
          %1571 = vst [vmem:[%s1569] sm:%s1561] %v1570
        $region901: #{tpu_custom_call.1} parent=895 // loop_footer
          %s1567 = sadd.s32 1, %s1563
        $region902: #{tpu_custom_call.1} parent=895 // loop_footer_branch
          %1562 = sbr.rel target = $region898
        $region903: #{tpu_custom_call.1} parent=895 // loop_exit
          _
      $region896: #{tpu_custom_call.1} parent=880 // pred_fallthru
        _
    $region881: #{tpu_custom_call.1} parent=1 // pred_fallthru
      _
    // Predicated region
    $region882: #{tpu_custom_call.1} parent=1 // pred_check
      %p1537 = pneg %p1533
    $region883: #{tpu_custom_call.1} parent=1 // pred_check_branch
      %1539 = sbr.rel (%p1537) target = $region885
    $region884: #{tpu_custom_call.1} parent=1 // pred_region
      %s1540 = sshllo.u32 0, 1
      loop: start=0, step=1, limit=1
      $region886: #{tpu_custom_call.1} parent=884 // loop_pre_header
        _
      $region887: #{tpu_custom_call.1} parent=884 // loop_header
        %s1542 = sphi 0, %s1546
        %p1543 = scmp.ge.s32.totalorder %s1542, 1
        %s1547 = sphi %s1530, %s1530
        %s1548 = sphi %s1531, %s1531
      $region888: #{tpu_custom_call.1} parent=884 // loop_header_branch
        %1545 = sbr.rel (%p1543) target = $region892
      $region889: #{tpu_custom_call.1} parent=884 // loop_body
        %v1549 = vld [vmem:[%s1547] sm:%s1540]
        %1550 = vst [vmem:[%s1548] sm:%s1540] %v1549
      $region890: #{tpu_custom_call.1} parent=884 // loop_footer
        %s1546 = sadd.s32 1, %s1542
      $region891: #{tpu_custom_call.1} parent=884 // loop_footer_branch
        %1541 = sbr.rel target = $region887
      $region892: #{tpu_custom_call.1} parent=884 // loop_exit
        _
    $region885: #{tpu_custom_call.1} parent=1 // pred_fallthru
      _
    // Predicated region
    $region904: #{tpu_custom_call.1} parent=1 // pred_check
      _
    $region905: #{tpu_custom_call.1} parent=1 // pred_check_branch
      %1574 = sbr.rel (0) target = $region907
    $region906: #{tpu_custom_call.1} parent=1 // pred_region
      %1575 = vsyncadd %s1155, 16
    $region907: #{tpu_custom_call.1} parent=1 // pred_fallthru
      _
    %s1576 = scalar_lea.vmem %s0, %s1529
    %s1577 = scalar_lea.vmem [#allocation2], 44
    %p1579 = scmp.lt.u32.totalorder 1, 8
    %p1580 = pneg %p1579
    // Predicated region
    $region908: #{tpu_custom_call.1} parent=1 // pred_check
      _
    $region909: #{tpu_custom_call.1} parent=1 // pred_check_branch
      %1582 = sbr.rel (%p1579) target = $region911
    $region910: #{tpu_custom_call.1} parent=1 // pred_region
      %s1597 = sand.u32 1, 7
      %p1598 = scmp.eq.s32.totalorder %s1597, 0
      %p1599 = pneg %p1598
      // Predicated region
      $region923: #{tpu_custom_call.1} parent=910 // pred_check
        _
      $region924: #{tpu_custom_call.1} parent=910 // pred_check_branch
        %1601 = sbr.rel (%p1598) target = $region926
      $region925: #{tpu_custom_call.1} parent=910 // pred_region
        %s1602 = sand.u32 1, 7
        %s1603 = ssub.s32 1, %s1602
        %s1604 = scalar_lea.vmem %s1576, %s1603
        %s1605 = ssub.s32 1, %s1602
        %s1606 = scalar_lea.vmem %s1577, %s1605 [#allocation2]
        %s1607 = sshllo.u32 0, %s1602
        loop: start=0, step=1, limit=1
        $region927: #{tpu_custom_call.1} parent=925 // loop_pre_header
          _
        $region928: #{tpu_custom_call.1} parent=925 // loop_header
          %s1609 = sphi 0, %s1613
          %p1610 = scmp.ge.s32.totalorder %s1609, 1
          %s1614 = sphi %s1604, %s1604
          %s1615 = sphi %s1606, %s1606
        $region929: #{tpu_custom_call.1} parent=925 // loop_header_branch
          %1612 = sbr.rel (%p1610) target = $region933
        $region930: #{tpu_custom_call.1} parent=925 // loop_body
          %v1616 = vld [vmem:[%s1614] sm:%s1607]
          %1617 = vst [vmem:[%s1615] sm:%s1607] %v1616
        $region931: #{tpu_custom_call.1} parent=925 // loop_footer
          %s1613 = sadd.s32 1, %s1609
        $region932: #{tpu_custom_call.1} parent=925 // loop_footer_branch
          %1608 = sbr.rel target = $region928
        $region933: #{tpu_custom_call.1} parent=925 // loop_exit
          _
      $region926: #{tpu_custom_call.1} parent=910 // pred_fallthru
        _
    $region911: #{tpu_custom_call.1} parent=1 // pred_fallthru
      _
    // Predicated region
    $region912: #{tpu_custom_call.1} parent=1 // pred_check
      %p1583 = pneg %p1579
    $region913: #{tpu_custom_call.1} parent=1 // pred_check_branch
      %1585 = sbr.rel (%p1583) target = $region915
    $region914: #{tpu_custom_call.1} parent=1 // pred_region
      %s1586 = sshllo.u32 0, 1
      loop: start=0, step=1, limit=1
      $region916: #{tpu_custom_call.1} parent=914 // loop_pre_header
        _
      $region917: #{tpu_custom_call.1} parent=914 // loop_header
        %s1588 = sphi 0, %s1592
        %p1589 = scmp.ge.s32.totalorder %s1588, 1
        %s1593 = sphi %s1576, %s1576
        %s1594 = sphi %s1577, %s1577
      $region918: #{tpu_custom_call.1} parent=914 // loop_header_branch
        %1591 = sbr.rel (%p1589) target = $region922
      $region919: #{tpu_custom_call.1} parent=914 // loop_body
        %v1595 = vld [vmem:[%s1593] sm:%s1586]
        %1596 = vst [vmem:[%s1594] sm:%s1586] %v1595
      $region920: #{tpu_custom_call.1} parent=914 // loop_footer
        %s1592 = sadd.s32 1, %s1588
      $region921: #{tpu_custom_call.1} parent=914 // loop_footer_branch
        %1587 = sbr.rel target = $region917
      $region922: #{tpu_custom_call.1} parent=914 // loop_exit
        _
    $region915: #{tpu_custom_call.1} parent=1 // pred_fallthru
      _
    // Predicated region
    $region934: #{tpu_custom_call.1} parent=1 // pred_check
      _
    $region935: #{tpu_custom_call.1} parent=1 // pred_check_branch
      %1620 = sbr.rel (0) target = $region937
    $region936: #{tpu_custom_call.1} parent=1 // pred_region
      %1621 = vsyncadd %s1155, 16
    $region937: #{tpu_custom_call.1} parent=1 // pred_fallthru
      _
    %s1622 = sld [smem:[#allocation15 + $0x5]]
    %s1623 = sld [smem:[#allocation16 + $0x5]]
    %s1624 = scalar_lea.vmem %s0, %s1622
    %s1625 = scalar_lea.vmem [#allocation2], 37
    %p1627 = scmp.lt.u32.totalorder 1, 8
    %p1628 = pneg %p1627
    // Predicated region
    $region938: #{tpu_custom_call.1} parent=1 // pred_check
      _
    $region939: #{tpu_custom_call.1} parent=1 // pred_check_branch
      %1630 = sbr.rel (%p1627) target = $region941
    $region940: #{tpu_custom_call.1} parent=1 // pred_region
      %s1645 = sand.u32 1, 7
      %p1646 = scmp.eq.s32.totalorder %s1645, 0
      %p1647 = pneg %p1646
      // Predicated region
      $region953: #{tpu_custom_call.1} parent=940 // pred_check
        _
      $region954: #{tpu_custom_call.1} parent=940 // pred_check_branch
        %1649 = sbr.rel (%p1646) target = $region956
      $region955: #{tpu_custom_call.1} parent=940 // pred_region
        %s1650 = sand.u32 1, 7
        %s1651 = ssub.s32 1, %s1650
        %s1652 = scalar_lea.vmem %s1624, %s1651
        %s1653 = ssub.s32 1, %s1650
        %s1654 = scalar_lea.vmem %s1625, %s1653 [#allocation2]
        %s1655 = sshllo.u32 0, %s1650
        loop: start=0, step=1, limit=1
        $region957: #{tpu_custom_call.1} parent=955 // loop_pre_header
          _
        $region958: #{tpu_custom_call.1} parent=955 // loop_header
          %s1657 = sphi 0, %s1661
          %p1658 = scmp.ge.s32.totalorder %s1657, 1
          %s1662 = sphi %s1652, %s1652
          %s1663 = sphi %s1654, %s1654
        $region959: #{tpu_custom_call.1} parent=955 // loop_header_branch
          %1660 = sbr.rel (%p1658) target = $region963
        $region960: #{tpu_custom_call.1} parent=955 // loop_body
          %v1664 = vld [vmem:[%s1662] sm:%s1655]
          %1665 = vst [vmem:[%s1663] sm:%s1655] %v1664
        $region961: #{tpu_custom_call.1} parent=955 // loop_footer
          %s1661 = sadd.s32 1, %s1657
        $region962: #{tpu_custom_call.1} parent=955 // loop_footer_branch
          %1656 = sbr.rel target = $region958
        $region963: #{tpu_custom_call.1} parent=955 // loop_exit
          _
      $region956: #{tpu_custom_call.1} parent=940 // pred_fallthru
        _
    $region941: #{tpu_custom_call.1} parent=1 // pred_fallthru
      _
    // Predicated region
    $region942: #{tpu_custom_call.1} parent=1 // pred_check
      %p1631 = pneg %p1627
    $region943: #{tpu_custom_call.1} parent=1 // pred_check_branch
      %1633 = sbr.rel (%p1631) target = $region945
    $region944: #{tpu_custom_call.1} parent=1 // pred_region
      %s1634 = sshllo.u32 0, 1
      loop: start=0, step=1, limit=1
      $region946: #{tpu_custom_call.1} parent=944 // loop_pre_header
        _
      $region947: #{tpu_custom_call.1} parent=944 // loop_header
        %s1636 = sphi 0, %s1640
        %p1637 = scmp.ge.s32.totalorder %s1636, 1
        %s1641 = sphi %s1624, %s1624
        %s1642 = sphi %s1625, %s1625
      $region948: #{tpu_custom_call.1} parent=944 // loop_header_branch
        %1639 = sbr.rel (%p1637) target = $region952
      $region949: #{tpu_custom_call.1} parent=944 // loop_body
        %v1643 = vld [vmem:[%s1641] sm:%s1634]
        %1644 = vst [vmem:[%s1642] sm:%s1634] %v1643
      $region950: #{tpu_custom_call.1} parent=944 // loop_footer
        %s1640 = sadd.s32 1, %s1636
      $region951: #{tpu_custom_call.1} parent=944 // loop_footer_branch
        %1635 = sbr.rel target = $region947
      $region952: #{tpu_custom_call.1} parent=944 // loop_exit
        _
    $region945: #{tpu_custom_call.1} parent=1 // pred_fallthru
      _
    // Predicated region
    $region964: #{tpu_custom_call.1} parent=1 // pred_check
      _
    $region965: #{tpu_custom_call.1} parent=1 // pred_check_branch
      %1668 = sbr.rel (0) target = $region967
    $region966: #{tpu_custom_call.1} parent=1 // pred_region
      %1669 = vsyncadd %s1155, 16
    $region967: #{tpu_custom_call.1} parent=1 // pred_fallthru
      _
    %s1670 = scalar_lea.vmem %s0, %s1623
    %s1671 = scalar_lea.vmem [#allocation2], 45
    %p1673 = scmp.lt.u32.totalorder 1, 8
    %p1674 = pneg %p1673
    // Predicated region
    $region968: #{tpu_custom_call.1} parent=1 // pred_check
      _
    $region969: #{tpu_custom_call.1} parent=1 // pred_check_branch
      %1676 = sbr.rel (%p1673) target = $region971
    $region970: #{tpu_custom_call.1} parent=1 // pred_region
      %s1691 = sand.u32 1, 7
      %p1692 = scmp.eq.s32.totalorder %s1691, 0
      %p1693 = pneg %p1692
      // Predicated region
      $region983: #{tpu_custom_call.1} parent=970 // pred_check
        _
      $region984: #{tpu_custom_call.1} parent=970 // pred_check_branch
        %1695 = sbr.rel (%p1692) target = $region986
      $region985: #{tpu_custom_call.1} parent=970 // pred_region
        %s1696 = sand.u32 1, 7
        %s1697 = ssub.s32 1, %s1696
        %s1698 = scalar_lea.vmem %s1670, %s1697
        %s1699 = ssub.s32 1, %s1696
        %s1700 = scalar_lea.vmem %s1671, %s1699 [#allocation2]
        %s1701 = sshllo.u32 0, %s1696
        loop: start=0, step=1, limit=1
        $region987: #{tpu_custom_call.1} parent=985 // loop_pre_header
          _
        $region988: #{tpu_custom_call.1} parent=985 // loop_header
          %s1703 = sphi 0, %s1707
          %p1704 = scmp.ge.s32.totalorder %s1703, 1
          %s1708 = sphi %s1698, %s1698
          %s1709 = sphi %s1700, %s1700
        $region989: #{tpu_custom_call.1} parent=985 // loop_header_branch
          %1706 = sbr.rel (%p1704) target = $region993
        $region990: #{tpu_custom_call.1} parent=985 // loop_body
          %v1710 = vld [vmem:[%s1708] sm:%s1701]
          %1711 = vst [vmem:[%s1709] sm:%s1701] %v1710
        $region991: #{tpu_custom_call.1} parent=985 // loop_footer
          %s1707 = sadd.s32 1, %s1703
        $region992: #{tpu_custom_call.1} parent=985 // loop_footer_branch
          %1702 = sbr.rel target = $region988
        $region993: #{tpu_custom_call.1} parent=985 // loop_exit
          _
      $region986: #{tpu_custom_call.1} parent=970 // pred_fallthru
        _
    $region971: #{tpu_custom_call.1} parent=1 // pred_fallthru
      _
    // Predicated region
    $region972: #{tpu_custom_call.1} parent=1 // pred_check
      %p1677 = pneg %p1673
    $region973: #{tpu_custom_call.1} parent=1 // pred_check_branch
      %1679 = sbr.rel (%p1677) target = $region975
    $region974: #{tpu_custom_call.1} parent=1 // pred_region
      %s1680 = sshllo.u32 0, 1
      loop: start=0, step=1, limit=1
      $region976: #{tpu_custom_call.1} parent=974 // loop_pre_header
        _
      $region977: #{tpu_custom_call.1} parent=974 // loop_header
        %s1682 = sphi 0, %s1686
        %p1683 = scmp.ge.s32.totalorder %s1682, 1
        %s1687 = sphi %s1670, %s1670
        %s1688 = sphi %s1671, %s1671
      $region978: #{tpu_custom_call.1} parent=974 // loop_header_branch
        %1685 = sbr.rel (%p1683) target = $region982
      $region979: #{tpu_custom_call.1} parent=974 // loop_body
        %v1689 = vld [vmem:[%s1687] sm:%s1680]
        %1690 = vst [vmem:[%s1688] sm:%s1680] %v1689
      $region980: #{tpu_custom_call.1} parent=974 // loop_footer
        %s1686 = sadd.s32 1, %s1682
      $region981: #{tpu_custom_call.1} parent=974 // loop_footer_branch
        %1681 = sbr.rel target = $region977
      $region982: #{tpu_custom_call.1} parent=974 // loop_exit
        _
    $region975: #{tpu_custom_call.1} parent=1 // pred_fallthru
      _
    // Predicated region
    $region994: #{tpu_custom_call.1} parent=1 // pred_check
      _
    $region995: #{tpu_custom_call.1} parent=1 // pred_check_branch
      %1714 = sbr.rel (0) target = $region997
    $region996: #{tpu_custom_call.1} parent=1 // pred_region
      %1715 = vsyncadd %s1155, 16
    $region997: #{tpu_custom_call.1} parent=1 // pred_fallthru
      _
    %s1716 = sld [smem:[#allocation15 + $0x6]]
    %s1717 = sld [smem:[#allocation16 + $0x6]]
    %s1718 = scalar_lea.vmem %s0, %s1716
    %s1719 = scalar_lea.vmem [#allocation2], 38
    %p1721 = scmp.lt.u32.totalorder 1, 8
    %p1722 = pneg %p1721
    // Predicated region
    $region998: #{tpu_custom_call.1} parent=1 // pred_check
      _
    $region999: #{tpu_custom_call.1} parent=1 // pred_check_branch
      %1724 = sbr.rel (%p1721) target = $region1001
    $region1000: #{tpu_custom_call.1} parent=1 // pred_region
      %s1739 = sand.u32 1, 7
      %p1740 = scmp.eq.s32.totalorder %s1739, 0
      %p1741 = pneg %p1740
      // Predicated region
      $region1013: #{tpu_custom_call.1} parent=1000 // pred_check
        _
      $region1014: #{tpu_custom_call.1} parent=1000 // pred_check_branch
        %1743 = sbr.rel (%p1740) target = $region1016
      $region1015: #{tpu_custom_call.1} parent=1000 // pred_region
        %s1744 = sand.u32 1, 7
        %s1745 = ssub.s32 1, %s1744
        %s1746 = scalar_lea.vmem %s1718, %s1745
        %s1747 = ssub.s32 1, %s1744
        %s1748 = scalar_lea.vmem %s1719, %s1747 [#allocation2]
        %s1749 = sshllo.u32 0, %s1744
        loop: start=0, step=1, limit=1
        $region1017: #{tpu_custom_call.1} parent=1015 // loop_pre_header
          _
        $region1018: #{tpu_custom_call.1} parent=1015 // loop_header
          %s1751 = sphi 0, %s1755
          %p1752 = scmp.ge.s32.totalorder %s1751, 1
          %s1756 = sphi %s1746, %s1746
          %s1757 = sphi %s1748, %s1748
        $region1019: #{tpu_custom_call.1} parent=1015 // loop_header_branch
          %1754 = sbr.rel (%p1752) target = $region1023
        $region1020: #{tpu_custom_call.1} parent=1015 // loop_body
          %v1758 = vld [vmem:[%s1756] sm:%s1749]
          %1759 = vst [vmem:[%s1757] sm:%s1749] %v1758
        $region1021: #{tpu_custom_call.1} parent=1015 // loop_footer
          %s1755 = sadd.s32 1, %s1751
        $region1022: #{tpu_custom_call.1} parent=1015 // loop_footer_branch
          %1750 = sbr.rel target = $region1018
        $region1023: #{tpu_custom_call.1} parent=1015 // loop_exit
          _
      $region1016: #{tpu_custom_call.1} parent=1000 // pred_fallthru
        _
    $region1001: #{tpu_custom_call.1} parent=1 // pred_fallthru
      _
    // Predicated region
    $region1002: #{tpu_custom_call.1} parent=1 // pred_check
      %p1725 = pneg %p1721
    $region1003: #{tpu_custom_call.1} parent=1 // pred_check_branch
      %1727 = sbr.rel (%p1725) target = $region1005
    $region1004: #{tpu_custom_call.1} parent=1 // pred_region
      %s1728 = sshllo.u32 0, 1
      loop: start=0, step=1, limit=1
      $region1006: #{tpu_custom_call.1} parent=1004 // loop_pre_header
        _
      $region1007: #{tpu_custom_call.1} parent=1004 // loop_header
        %s1730 = sphi 0, %s1734
        %p1731 = scmp.ge.s32.totalorder %s1730, 1
        %s1735 = sphi %s1718, %s1718
        %s1736 = sphi %s1719, %s1719
      $region1008: #{tpu_custom_call.1} parent=1004 // loop_header_branch
        %1733 = sbr.rel (%p1731) target = $region1012
      $region1009: #{tpu_custom_call.1} parent=1004 // loop_body
        %v1737 = vld [vmem:[%s1735] sm:%s1728]
        %1738 = vst [vmem:[%s1736] sm:%s1728] %v1737
      $region1010: #{tpu_custom_call.1} parent=1004 // loop_footer
        %s1734 = sadd.s32 1, %s1730
      $region1011: #{tpu_custom_call.1} parent=1004 // loop_footer_branch
        %1729 = sbr.rel target = $region1007
      $region1012: #{tpu_custom_call.1} parent=1004 // loop_exit
        _
    $region1005: #{tpu_custom_call.1} parent=1 // pred_fallthru
      _
    // Predicated region
    $region1024: #{tpu_custom_call.1} parent=1 // pred_check
      _
    $region1025: #{tpu_custom_call.1} parent=1 // pred_check_branch
      %1762 = sbr.rel (0) target = $region1027
    $region1026: #{tpu_custom_call.1} parent=1 // pred_region
      %1763 = vsyncadd %s1155, 16
    $region1027: #{tpu_custom_call.1} parent=1 // pred_fallthru
      _
    %s1764 = scalar_lea.vmem %s0, %s1717
    %s1765 = scalar_lea.vmem [#allocation2], 46
    %p1767 = scmp.lt.u32.totalorder 1, 8
    %p1768 = pneg %p1767
    // Predicated region
    $region1028: #{tpu_custom_call.1} parent=1 // pred_check
      _
    $region1029: #{tpu_custom_call.1} parent=1 // pred_check_branch
      %1770 = sbr.rel (%p1767) target = $region1031
    $region1030: #{tpu_custom_call.1} parent=1 // pred_region
      %s1785 = sand.u32 1, 7
      %p1786 = scmp.eq.s32.totalorder %s1785, 0
      %p1787 = pneg %p1786
      // Predicated region
      $region1043: #{tpu_custom_call.1} parent=1030 // pred_check
        _
      $region1044: #{tpu_custom_call.1} parent=1030 // pred_check_branch
        %1789 = sbr.rel (%p1786) target = $region1046
      $region1045: #{tpu_custom_call.1} parent=1030 // pred_region
        %s1790 = sand.u32 1, 7
        %s1791 = ssub.s32 1, %s1790
        %s1792 = scalar_lea.vmem %s1764, %s1791
        %s1793 = ssub.s32 1, %s1790
        %s1794 = scalar_lea.vmem %s1765, %s1793 [#allocation2]
        %s1795 = sshllo.u32 0, %s1790
        loop: start=0, step=1, limit=1
        $region1047: #{tpu_custom_call.1} parent=1045 // loop_pre_header
          _
        $region1048: #{tpu_custom_call.1} parent=1045 // loop_header
          %s1797 = sphi 0, %s1801
          %p1798 = scmp.ge.s32.totalorder %s1797, 1
          %s1802 = sphi %s1792, %s1792
          %s1803 = sphi %s1794, %s1794
        $region1049: #{tpu_custom_call.1} parent=1045 // loop_header_branch
          %1800 = sbr.rel (%p1798) target = $region1053
        $region1050: #{tpu_custom_call.1} parent=1045 // loop_body
          %v1804 = vld [vmem:[%s1802] sm:%s1795]
          %1805 = vst [vmem:[%s1803] sm:%s1795] %v1804
        $region1051: #{tpu_custom_call.1} parent=1045 // loop_footer
          %s1801 = sadd.s32 1, %s1797
        $region1052: #{tpu_custom_call.1} parent=1045 // loop_footer_branch
          %1796 = sbr.rel target = $region1048
        $region1053: #{tpu_custom_call.1} parent=1045 // loop_exit
          _
      $region1046: #{tpu_custom_call.1} parent=1030 // pred_fallthru
        _
    $region1031: #{tpu_custom_call.1} parent=1 // pred_fallthru
      _
    // Predicated region
    $region1032: #{tpu_custom_call.1} parent=1 // pred_check
      %p1771 = pneg %p1767
    $region1033: #{tpu_custom_call.1} parent=1 // pred_check_branch
      %1773 = sbr.rel (%p1771) target = $region1035
    $region1034: #{tpu_custom_call.1} parent=1 // pred_region
      %s1774 = sshllo.u32 0, 1
      loop: start=0, step=1, limit=1
      $region1036: #{tpu_custom_call.1} parent=1034 // loop_pre_header
        _
      $region1037: #{tpu_custom_call.1} parent=1034 // loop_header
        %s1776 = sphi 0, %s1780
        %p1777 = scmp.ge.s32.totalorder %s1776, 1
        %s1781 = sphi %s1764, %s1764
        %s1782 = sphi %s1765, %s1765
      $region1038: #{tpu_custom_call.1} parent=1034 // loop_header_branch
        %1779 = sbr.rel (%p1777) target = $region1042
      $region1039: #{tpu_custom_call.1} parent=1034 // loop_body
        %v1783 = vld [vmem:[%s1781] sm:%s1774]
        %1784 = vst [vmem:[%s1782] sm:%s1774] %v1783
      $region1040: #{tpu_custom_call.1} parent=1034 // loop_footer
        %s1780 = sadd.s32 1, %s1776
      $region1041: #{tpu_custom_call.1} parent=1034 // loop_footer_branch
        %1775 = sbr.rel target = $region1037
      $region1042: #{tpu_custom_call.1} parent=1034 // loop_exit
        _
    $region1035: #{tpu_custom_call.1} parent=1 // pred_fallthru
      _
    // Predicated region
    $region1054: #{tpu_custom_call.1} parent=1 // pred_check
      _
    $region1055: #{tpu_custom_call.1} parent=1 // pred_check_branch
      %1808 = sbr.rel (0) target = $region1057
    $region1056: #{tpu_custom_call.1} parent=1 // pred_region
      %1809 = vsyncadd %s1155, 16
    $region1057: #{tpu_custom_call.1} parent=1 // pred_fallthru
      _
    %s1810 = sld [smem:[#allocation15 + $0x7]]
    %s1811 = sld [smem:[#allocation16 + $0x7]]
    %s1812 = scalar_lea.vmem %s0, %s1810
    %s1813 = scalar_lea.vmem [#allocation2], 39
    %p1815 = scmp.lt.u32.totalorder 1, 8
    %p1816 = pneg %p1815
    // Predicated region
    $region1058: #{tpu_custom_call.1} parent=1 // pred_check
      _
    $region1059: #{tpu_custom_call.1} parent=1 // pred_check_branch
      %1818 = sbr.rel (%p1815) target = $region1061
    $region1060: #{tpu_custom_call.1} parent=1 // pred_region
      %s1833 = sand.u32 1, 7
      %p1834 = scmp.eq.s32.totalorder %s1833, 0
      %p1835 = pneg %p1834
      // Predicated region
      $region1073: #{tpu_custom_call.1} parent=1060 // pred_check
        _
      $region1074: #{tpu_custom_call.1} parent=1060 // pred_check_branch
        %1837 = sbr.rel (%p1834) target = $region1076
      $region1075: #{tpu_custom_call.1} parent=1060 // pred_region
        %s1838 = sand.u32 1, 7
        %s1839 = ssub.s32 1, %s1838
        %s1840 = scalar_lea.vmem %s1812, %s1839
        %s1841 = ssub.s32 1, %s1838
        %s1842 = scalar_lea.vmem %s1813, %s1841 [#allocation2]
        %s1843 = sshllo.u32 0, %s1838
        loop: start=0, step=1, limit=1
        $region1077: #{tpu_custom_call.1} parent=1075 // loop_pre_header
          _
        $region1078: #{tpu_custom_call.1} parent=1075 // loop_header
          %s1845 = sphi 0, %s1849
          %p1846 = scmp.ge.s32.totalorder %s1845, 1
          %s1850 = sphi %s1840, %s1840
          %s1851 = sphi %s1842, %s1842
        $region1079: #{tpu_custom_call.1} parent=1075 // loop_header_branch
          %1848 = sbr.rel (%p1846) target = $region1083
        $region1080: #{tpu_custom_call.1} parent=1075 // loop_body
          %v1852 = vld [vmem:[%s1850] sm:%s1843]
          %1853 = vst [vmem:[%s1851] sm:%s1843] %v1852
        $region1081: #{tpu_custom_call.1} parent=1075 // loop_footer
          %s1849 = sadd.s32 1, %s1845
        $region1082: #{tpu_custom_call.1} parent=1075 // loop_footer_branch
          %1844 = sbr.rel target = $region1078
        $region1083: #{tpu_custom_call.1} parent=1075 // loop_exit
          _
      $region1076: #{tpu_custom_call.1} parent=1060 // pred_fallthru
        _
    $region1061: #{tpu_custom_call.1} parent=1 // pred_fallthru
      _
    // Predicated region
    $region1062: #{tpu_custom_call.1} parent=1 // pred_check
      %p1819 = pneg %p1815
    $region1063: #{tpu_custom_call.1} parent=1 // pred_check_branch
      %1821 = sbr.rel (%p1819) target = $region1065
    $region1064: #{tpu_custom_call.1} parent=1 // pred_region
      %s1822 = sshllo.u32 0, 1
      loop: start=0, step=1, limit=1
      $region1066: #{tpu_custom_call.1} parent=1064 // loop_pre_header
        _
      $region1067: #{tpu_custom_call.1} parent=1064 // loop_header
        %s1824 = sphi 0, %s1828
        %p1825 = scmp.ge.s32.totalorder %s1824, 1
        %s1829 = sphi %s1812, %s1812
        %s1830 = sphi %s1813, %s1813
      $region1068: #{tpu_custom_call.1} parent=1064 // loop_header_branch
        %1827 = sbr.rel (%p1825) target = $region1072
      $region1069: #{tpu_custom_call.1} parent=1064 // loop_body
        %v1831 = vld [vmem:[%s1829] sm:%s1822]
        %1832 = vst [vmem:[%s1830] sm:%s1822] %v1831
      $region1070: #{tpu_custom_call.1} parent=1064 // loop_footer
        %s1828 = sadd.s32 1, %s1824
      $region1071: #{tpu_custom_call.1} parent=1064 // loop_footer_branch
        %1823 = sbr.rel target = $region1067
      $region1072: #{tpu_custom_call.1} parent=1064 // loop_exit
        _
    $region1065: #{tpu_custom_call.1} parent=1 // pred_fallthru
      _
    // Predicated region
    $region1084: #{tpu_custom_call.1} parent=1 // pred_check
      _
    $region1085: #{tpu_custom_call.1} parent=1 // pred_check_branch
      %1856 = sbr.rel (0) target = $region1087
    $region1086: #{tpu_custom_call.1} parent=1 // pred_region
      %1857 = vsyncadd %s1155, 16
    $region1087: #{tpu_custom_call.1} parent=1 // pred_fallthru
      _
    %s1858 = scalar_lea.vmem %s0, %s1811
    %s1859 = scalar_lea.vmem [#allocation2], 47
    %p1861 = scmp.lt.u32.totalorder 1, 8
    %p1862 = pneg %p1861
    // Predicated region
    $region1088: #{tpu_custom_call.1} parent=1 // pred_check
      _
    $region1089: #{tpu_custom_call.1} parent=1 // pred_check_branch
      %1864 = sbr.rel (%p1861) target = $region1091
    $region1090: #{tpu_custom_call.1} parent=1 // pred_region
      %s1879 = sand.u32 1, 7
      %p1880 = scmp.eq.s32.totalorder %s1879, 0
      %p1881 = pneg %p1880
      // Predicated region
      $region1103: #{tpu_custom_call.1} parent=1090 // pred_check
        _
      $region1104: #{tpu_custom_call.1} parent=1090 // pred_check_branch
        %1883 = sbr.rel (%p1880) target = $region1106
      $region1105: #{tpu_custom_call.1} parent=1090 // pred_region
        %s1884 = sand.u32 1, 7
        %s1885 = ssub.s32 1, %s1884
        %s1886 = scalar_lea.vmem %s1858, %s1885
        %s1887 = ssub.s32 1, %s1884
        %s1888 = scalar_lea.vmem %s1859, %s1887 [#allocation2]
        %s1889 = sshllo.u32 0, %s1884
        loop: start=0, step=1, limit=1
        $region1107: #{tpu_custom_call.1} parent=1105 // loop_pre_header
          _
        $region1108: #{tpu_custom_call.1} parent=1105 // loop_header
          %s1891 = sphi 0, %s1895
          %p1892 = scmp.ge.s32.totalorder %s1891, 1
          %s1896 = sphi %s1886, %s1886
          %s1897 = sphi %s1888, %s1888
        $region1109: #{tpu_custom_call.1} parent=1105 // loop_header_branch
          %1894 = sbr.rel (%p1892) target = $region1113
        $region1110: #{tpu_custom_call.1} parent=1105 // loop_body
          %v1898 = vld [vmem:[%s1896] sm:%s1889]
          %1899 = vst [vmem:[%s1897] sm:%s1889] %v1898
        $region1111: #{tpu_custom_call.1} parent=1105 // loop_footer
          %s1895 = sadd.s32 1, %s1891
        $region1112: #{tpu_custom_call.1} parent=1105 // loop_footer_branch
          %1890 = sbr.rel target = $region1108
        $region1113: #{tpu_custom_call.1} parent=1105 // loop_exit
          _
      $region1106: #{tpu_custom_call.1} parent=1090 // pred_fallthru
        _
    $region1091: #{tpu_custom_call.1} parent=1 // pred_fallthru
      _
    // Predicated region
    $region1092: #{tpu_custom_call.1} parent=1 // pred_check
      %p1865 = pneg %p1861
    $region1093: #{tpu_custom_call.1} parent=1 // pred_check_branch
      %1867 = sbr.rel (%p1865) target = $region1095
    $region1094: #{tpu_custom_call.1} parent=1 // pred_region
      %s1868 = sshllo.u32 0, 1
      loop: start=0, step=1, limit=1
      $region1096: #{tpu_custom_call.1} parent=1094 // loop_pre_header
        _
      $region1097: #{tpu_custom_call.1} parent=1094 // loop_header
        %s1870 = sphi 0, %s1874
        %p1871 = scmp.ge.s32.totalorder %s1870, 1
        %s1875 = sphi %s1858, %s1858
        %s1876 = sphi %s1859, %s1859
      $region1098: #{tpu_custom_call.1} parent=1094 // loop_header_branch
        %1873 = sbr.rel (%p1871) target = $region1102
      $region1099: #{tpu_custom_call.1} parent=1094 // loop_body
        %v1877 = vld [vmem:[%s1875] sm:%s1868]
        %1878 = vst [vmem:[%s1876] sm:%s1868] %v1877
      $region1100: #{tpu_custom_call.1} parent=1094 // loop_footer
        %s1874 = sadd.s32 1, %s1870
      $region1101: #{tpu_custom_call.1} parent=1094 // loop_footer_branch
        %1869 = sbr.rel target = $region1097
      $region1102: #{tpu_custom_call.1} parent=1094 // loop_exit
        _
    $region1095: #{tpu_custom_call.1} parent=1 // pred_fallthru
      _
    // Predicated region
    $region1114: #{tpu_custom_call.1} parent=1 // pred_check
      _
    $region1115: #{tpu_custom_call.1} parent=1 // pred_check_branch
      %1902 = sbr.rel (0) target = $region1117
    $region1116: #{tpu_custom_call.1} parent=1 // pred_region
      %1903 = vsyncadd %s1155, 16
    $region1117: #{tpu_custom_call.1} parent=1 // pred_fallthru
      _
    %s1904 = sld [smem:[#allocation18]]
    %s1905 = sld [smem:[#allocation19]]
    %s1906 = smul.addr %s1904, 16
    %s1907 = scalar_lea.hbm %s1, %s1906
    %s1908 = scalar_lea.vmem [#allocation2], 48
    // Predicated region
    $region1118: #{tpu_custom_call.1} parent=1 // pred_check
      _
    $region1119: #{tpu_custom_call.1} parent=1 // pred_check_branch
      %1910 = sbr.rel target = $region1121
    $region1120: #{tpu_custom_call.1} parent=1 // pred_region
      %1911 = sst [smem:[#allocation40]] [#allocation89]
      %1912 = sst [smem:[#allocation41]] [#allocation88]
    $region1121: #{tpu_custom_call.1} parent=1 // pred_fallthru
      _
    %1914 = shalt.err (0)
    %s1916 = sshll.u32 %s1908, 4
    %s1917 = int_to_ptr.vmem [resolvable:$true] %s1916
    %1919 = dma.hbm_to_vmem [thread:$0]  %s1907, 16, %s1917, %s1155
    %s1920 = smul.addr %s1905, 16
    %s1921 = scalar_lea.hbm %s1, %s1920
    %s1922 = scalar_lea.vmem [#allocation2], 56
    // Predicated region
    $region1122: #{tpu_custom_call.1} parent=1 // pred_check
      _
    $region1123: #{tpu_custom_call.1} parent=1 // pred_check_branch
      %1924 = sbr.rel target = $region1125
    $region1124: #{tpu_custom_call.1} parent=1 // pred_region
      %1925 = sst [smem:[#allocation40]] [#allocation91]
      %1926 = sst [smem:[#allocation41]] [#allocation90]
    $region1125: #{tpu_custom_call.1} parent=1 // pred_fallthru
      _
    %1928 = shalt.err (0)
    %s1930 = sshll.u32 %s1922, 4
    %s1931 = int_to_ptr.vmem [resolvable:$true] %s1930
    %1933 = dma.hbm_to_vmem [thread:$0]  %s1921, 16, %s1931, %s1155
    %s1934 = sld [smem:[#allocation18 + $0x1]]
    %s1935 = sld [smem:[#allocation19 + $0x1]]
    %s1936 = smul.addr %s1934, 16
    %s1937 = scalar_lea.hbm %s1, %s1936
    %s1938 = scalar_lea.vmem [#allocation2], 49
    // Predicated region
    $region1126: #{tpu_custom_call.1} parent=1 // pred_check
      _
    $region1127: #{tpu_custom_call.1} parent=1 // pred_check_branch
      %1940 = sbr.rel target = $region1129
    $region1128: #{tpu_custom_call.1} parent=1 // pred_region
      %1941 = sst [smem:[#allocation40]] [#allocation93]
      %1942 = sst [smem:[#allocation41]] [#allocation92]
    $region1129: #{tpu_custom_call.1} parent=1 // pred_fallthru
      _
    %1944 = shalt.err (0)
    %s1946 = sshll.u32 %s1938, 4
    %s1947 = int_to_ptr.vmem [resolvable:$true] %s1946
    %1949 = dma.hbm_to_vmem [thread:$0]  %s1937, 16, %s1947, %s1155
    %s1950 = smul.addr %s1935, 16
    %s1951 = scalar_lea.hbm %s1, %s1950
    %s1952 = scalar_lea.vmem [#allocation2], 57
    // Predicated region
    $region1130: #{tpu_custom_call.1} parent=1 // pred_check
      _
    $region1131: #{tpu_custom_call.1} parent=1 // pred_check_branch
      %1954 = sbr.rel target = $region1133
    $region1132: #{tpu_custom_call.1} parent=1 // pred_region
      %1955 = sst [smem:[#allocation40]] [#allocation95]
      %1956 = sst [smem:[#allocation41]] [#allocation94]
    $region1133: #{tpu_custom_call.1} parent=1 // pred_fallthru
      _
    %1958 = shalt.err (0)
    %s1960 = sshll.u32 %s1952, 4
    %s1961 = int_to_ptr.vmem [resolvable:$true] %s1960
    %1963 = dma.hbm_to_vmem [thread:$0]  %s1951, 16, %s1961, %s1155
    %s1964 = sld [smem:[#allocation18 + $0x2]]
    %s1965 = sld [smem:[#allocation19 + $0x2]]
    %s1966 = smul.addr %s1964, 16
    %s1967 = scalar_lea.hbm %s1, %s1966
    %s1968 = scalar_lea.vmem [#allocation2], 50
    // Predicated region
    $region1134: #{tpu_custom_call.1} parent=1 // pred_check
      _
    $region1135: #{tpu_custom_call.1} parent=1 // pred_check_branch
      %1970 = sbr.rel target = $region1137
    $region1136: #{tpu_custom_call.1} parent=1 // pred_region
      %1971 = sst [smem:[#allocation40]] [#allocation97]
      %1972 = sst [smem:[#allocation41]] [#allocation96]
    $region1137: #{tpu_custom_call.1} parent=1 // pred_fallthru
      _
    %1974 = shalt.err (0)
    %s1976 = sshll.u32 %s1968, 4
    %s1977 = int_to_ptr.vmem [resolvable:$true] %s1976
    %1979 = dma.hbm_to_vmem [thread:$0]  %s1967, 16, %s1977, %s1155
    %s1980 = smul.addr %s1965, 16
    %s1981 = scalar_lea.hbm %s1, %s1980
    %s1982 = scalar_lea.vmem [#allocation2], 58
    // Predicated region
    $region1138: #{tpu_custom_call.1} parent=1 // pred_check
      _
    $region1139: #{tpu_custom_call.1} parent=1 // pred_check_branch
      %1984 = sbr.rel target = $region1141
    $region1140: #{tpu_custom_call.1} parent=1 // pred_region
      %1985 = sst [smem:[#allocation40]] [#allocation99]
      %1986 = sst [smem:[#allocation41]] [#allocation98]
    $region1141: #{tpu_custom_call.1} parent=1 // pred_fallthru
      _
    %1988 = shalt.err (0)
    %s1990 = sshll.u32 %s1982, 4
    %s1991 = int_to_ptr.vmem [resolvable:$true] %s1990
    %1993 = dma.hbm_to_vmem [thread:$0]  %s1981, 16, %s1991, %s1155
    %s1994 = sld [smem:[#allocation18 + $0x3]]
    %s1995 = sld [smem:[#allocation19 + $0x3]]
    %s1996 = smul.addr %s1994, 16
    %s1997 = scalar_lea.hbm %s1, %s1996
    %s1998 = scalar_lea.vmem [#allocation2], 51
    // Predicated region
    $region1142: #{tpu_custom_call.1} parent=1 // pred_check
      _
    $region1143: #{tpu_custom_call.1} parent=1 // pred_check_branch
      %2000 = sbr.rel target = $region1145
    $region1144: #{tpu_custom_call.1} parent=1 // pred_region
      %2001 = sst [smem:[#allocation40]] [#allocation101]
      %2002 = sst [smem:[#allocation41]] [#allocation100]
    $region1145: #{tpu_custom_call.1} parent=1 // pred_fallthru
      _
    %2004 = shalt.err (0)
    %s2006 = sshll.u32 %s1998, 4
    %s2007 = int_to_ptr.vmem [resolvable:$true] %s2006
    %2009 = dma.hbm_to_vmem [thread:$0]  %s1997, 16, %s2007, %s1155
    %s2010 = smul.addr %s1995, 16
    %s2011 = scalar_lea.hbm %s1, %s2010
    %s2012 = scalar_lea.vmem [#allocation2], 59
    // Predicated region
    $region1146: #{tpu_custom_call.1} parent=1 // pred_check
      _
    $region1147: #{tpu_custom_call.1} parent=1 // pred_check_branch
      %2014 = sbr.rel target = $region1149
    $region1148: #{tpu_custom_call.1} parent=1 // pred_region
      %2015 = sst [smem:[#allocation40]] [#allocation103]
      %2016 = sst [smem:[#allocation41]] [#allocation102]
    $region1149: #{tpu_custom_call.1} parent=1 // pred_fallthru
      _
    %2018 = shalt.err (0)
    %s2020 = sshll.u32 %s2012, 4
    %s2021 = int_to_ptr.vmem [resolvable:$true] %s2020
    %2023 = dma.hbm_to_vmem [thread:$0]  %s2011, 16, %s2021, %s1155
    %s2024 = sld [smem:[#allocation18 + $0x4]]
    %s2025 = sld [smem:[#allocation19 + $0x4]]
    %s2026 = smul.addr %s2024, 16
    %s2027 = scalar_lea.hbm %s1, %s2026
    %s2028 = scalar_lea.vmem [#allocation2], 52
    // Predicated region
    $region1150: #{tpu_custom_call.1} parent=1 // pred_check
      _
    $region1151: #{tpu_custom_call.1} parent=1 // pred_check_branch
      %2030 = sbr.rel target = $region1153
    $region1152: #{tpu_custom_call.1} parent=1 // pred_region
      %2031 = sst [smem:[#allocation40]] [#allocation105]
      %2032 = sst [smem:[#allocation41]] [#allocation104]
    $region1153: #{tpu_custom_call.1} parent=1 // pred_fallthru
      _
    %2034 = shalt.err (0)
    %s2036 = sshll.u32 %s2028, 4
    %s2037 = int_to_ptr.vmem [resolvable:$true] %s2036
    %2039 = dma.hbm_to_vmem [thread:$0]  %s2027, 16, %s2037, %s1155
    %s2040 = smul.addr %s2025, 16
    %s2041 = scalar_lea.hbm %s1, %s2040
    %s2042 = scalar_lea.vmem [#allocation2], 60
    // Predicated region
    $region1154: #{tpu_custom_call.1} parent=1 // pred_check
      _
    $region1155: #{tpu_custom_call.1} parent=1 // pred_check_branch
      %2044 = sbr.rel target = $region1157
    $region1156: #{tpu_custom_call.1} parent=1 // pred_region
      %2045 = sst [smem:[#allocation40]] [#allocation107]
      %2046 = sst [smem:[#allocation41]] [#allocation106]
    $region1157: #{tpu_custom_call.1} parent=1 // pred_fallthru
      _
    %2048 = shalt.err (0)
    %s2050 = sshll.u32 %s2042, 4
    %s2051 = int_to_ptr.vmem [resolvable:$true] %s2050
    %2053 = dma.hbm_to_vmem [thread:$0]  %s2041, 16, %s2051, %s1155
    %s2054 = sld [smem:[#allocation18 + $0x5]]
    %s2055 = sld [smem:[#allocation19 + $0x5]]
    %s2056 = smul.addr %s2054, 16
    %s2057 = scalar_lea.hbm %s1, %s2056
    %s2058 = scalar_lea.vmem [#allocation2], 53
    // Predicated region
    $region1158: #{tpu_custom_call.1} parent=1 // pred_check
      _
    $region1159: #{tpu_custom_call.1} parent=1 // pred_check_branch
      %2060 = sbr.rel target = $region1161
    $region1160: #{tpu_custom_call.1} parent=1 // pred_region
      %2061 = sst [smem:[#allocation40]] [#allocation109]
      %2062 = sst [smem:[#allocation41]] [#allocation108]
    $region1161: #{tpu_custom_call.1} parent=1 // pred_fallthru
      _
    %2064 = shalt.err (0)
    %s2066 = sshll.u32 %s2058, 4
    %s2067 = int_to_ptr.vmem [resolvable:$true] %s2066
    %2069 = dma.hbm_to_vmem [thread:$0]  %s2057, 16, %s2067, %s1155
    %s2070 = smul.addr %s2055, 16
    %s2071 = scalar_lea.hbm %s1, %s2070
    %s2072 = scalar_lea.vmem [#allocation2], 61
    // Predicated region
    $region1162: #{tpu_custom_call.1} parent=1 // pred_check
      _
    $region1163: #{tpu_custom_call.1} parent=1 // pred_check_branch
      %2074 = sbr.rel target = $region1165
    $region1164: #{tpu_custom_call.1} parent=1 // pred_region
      %2075 = sst [smem:[#allocation40]] [#allocation111]
      %2076 = sst [smem:[#allocation41]] [#allocation110]
    $region1165: #{tpu_custom_call.1} parent=1 // pred_fallthru
      _
    %2078 = shalt.err (0)
    %s2080 = sshll.u32 %s2072, 4
    %s2081 = int_to_ptr.vmem [resolvable:$true] %s2080
    %2083 = dma.hbm_to_vmem [thread:$0]  %s2071, 16, %s2081, %s1155
    %s2084 = sld [smem:[#allocation18 + $0x6]]
    %s2085 = sld [smem:[#allocation19 + $0x6]]
    %s2086 = smul.addr %s2084, 16
    %s2087 = scalar_lea.hbm %s1, %s2086
    %s2088 = scalar_lea.vmem [#allocation2], 54
    // Predicated region
    $region1166: #{tpu_custom_call.1} parent=1 // pred_check
      _
    $region1167: #{tpu_custom_call.1} parent=1 // pred_check_branch
      %2090 = sbr.rel target = $region1169
    $region1168: #{tpu_custom_call.1} parent=1 // pred_region
      %2091 = sst [smem:[#allocation40]] [#allocation113]
      %2092 = sst [smem:[#allocation41]] [#allocation112]
    $region1169: #{tpu_custom_call.1} parent=1 // pred_fallthru
      _
    %2094 = shalt.err (0)
    %s2096 = sshll.u32 %s2088, 4
    %s2097 = int_to_ptr.vmem [resolvable:$true] %s2096
    %2099 = dma.hbm_to_vmem [thread:$0]  %s2087, 16, %s2097, %s1155
    %s2100 = smul.addr %s2085, 16
    %s2101 = scalar_lea.hbm %s1, %s2100
    %s2102 = scalar_lea.vmem [#allocation2], 62
    // Predicated region
    $region1170: #{tpu_custom_call.1} parent=1 // pred_check
      _
    $region1171: #{tpu_custom_call.1} parent=1 // pred_check_branch
      %2104 = sbr.rel target = $region1173
    $region1172: #{tpu_custom_call.1} parent=1 // pred_region
      %2105 = sst [smem:[#allocation40]] [#allocation115]
      %2106 = sst [smem:[#allocation41]] [#allocation114]
    $region1173: #{tpu_custom_call.1} parent=1 // pred_fallthru
      _
    %2108 = shalt.err (0)
    %s2110 = sshll.u32 %s2102, 4
    %s2111 = int_to_ptr.vmem [resolvable:$true] %s2110
    %2113 = dma.hbm_to_vmem [thread:$0]  %s2101, 16, %s2111, %s1155
    %s2114 = sld [smem:[#allocation18 + $0x7]]
    %s2115 = sld [smem:[#allocation19 + $0x7]]
    %s2116 = smul.addr %s2114, 16
    %s2117 = scalar_lea.hbm %s1, %s2116
    %s2118 = scalar_lea.vmem [#allocation2], 55
    // Predicated region
    $region1174: #{tpu_custom_call.1} parent=1 // pred_check
      _
    $region1175: #{tpu_custom_call.1} parent=1 // pred_check_branch
      %2120 = sbr.rel target = $region1177
    $region1176: #{tpu_custom_call.1} parent=1 // pred_region
      %2121 = sst [smem:[#allocation40]] [#allocation117]
      %2122 = sst [smem:[#allocation41]] [#allocation116]
    $region1177: #{tpu_custom_call.1} parent=1 // pred_fallthru
      _
    %2124 = shalt.err (0)
    %s2126 = sshll.u32 %s2118, 4
    %s2127 = int_to_ptr.vmem [resolvable:$true] %s2126
    %2129 = dma.hbm_to_vmem [thread:$0]  %s2117, 16, %s2127, %s1155
    %s2130 = smul.addr %s2115, 16
    %s2131 = scalar_lea.hbm %s1, %s2130
    %s2132 = scalar_lea.vmem [#allocation2], 63
    // Predicated region
    $region1178: #{tpu_custom_call.1} parent=1 // pred_check
      _
    $region1179: #{tpu_custom_call.1} parent=1 // pred_check_branch
      %2134 = sbr.rel target = $region1181
    $region1180: #{tpu_custom_call.1} parent=1 // pred_region
      %2135 = sst [smem:[#allocation40]] [#allocation119]
      %2136 = sst [smem:[#allocation41]] [#allocation118]
    $region1181: #{tpu_custom_call.1} parent=1 // pred_fallthru
      _
    %2138 = shalt.err (0)
    %s2140 = sshll.u32 %s2132, 4
    %s2141 = int_to_ptr.vmem [resolvable:$true] %s2140
    %2143 = dma.hbm_to_vmem [thread:$0]  %s2131, 16, %s2141, %s1155
    %s2144 = smul.u32 1, 1
    %s2145 = sshll.u32 %s2144, 4
    %2146 = dma.done [#allocation3], %s2145
    %s2147 = sshll.u32 %s2144, 4
    %2148 = dma.done [#allocation3], %s2147
    %s2149 = sshll.u32 %s2144, 4
    %2150 = dma.done [#allocation3], %s2149
    %s2151 = sshll.u32 %s2144, 4
    %2152 = dma.done [#allocation3], %s2151
    %s2153 = sshll.u32 %s2144, 4
    %2154 = dma.done [#allocation3], %s2153
    %s2155 = sshll.u32 %s2144, 4
    %2156 = dma.done [#allocation3], %s2155
    %s2157 = sshll.u32 %s2144, 4
    %2158 = dma.done [#allocation3], %s2157
    %s2159 = sshll.u32 %s2144, 4
    %2160 = dma.done [#allocation3], %s2159
    %s2161 = sshll.u32 %s2144, 4
    %2162 = dma.done [#allocation3], %s2161
    %s2163 = sshll.u32 %s2144, 4
    %2164 = dma.done [#allocation3], %s2163
    %s2165 = sshll.u32 %s2144, 4
    %2166 = dma.done [#allocation3], %s2165
    %s2167 = sshll.u32 %s2144, 4
    %2168 = dma.done [#allocation3], %s2167
    %s2169 = sshll.u32 %s2144, 4
    %2170 = dma.done [#allocation3], %s2169
    %s2171 = sshll.u32 %s2144, 4
    %2172 = dma.done [#allocation3], %s2171
    %s2173 = sshll.u32 %s2144, 4
    %2174 = dma.done [#allocation3], %s2173
    %s2175 = sshll.u32 %s2144, 4
    %2176 = dma.done [#allocation3], %s2175
    %s2177 = sshll.u32 %s2144, 4
    %2178 = dma.done [#allocation3], %s2177
    %s2179 = sshll.u32 %s2144, 4
    %2180 = dma.done [#allocation3], %s2179
    %s2181 = sshll.u32 %s2144, 4
    %2182 = dma.done [#allocation3], %s2181
    %s2183 = sshll.u32 %s2144, 4
    %2184 = dma.done [#allocation3], %s2183
    %s2185 = sshll.u32 %s2144, 4
    %2186 = dma.done [#allocation3], %s2185
    %s2187 = sshll.u32 %s2144, 4
    %2188 = dma.done [#allocation3], %s2187
    %s2189 = sshll.u32 %s2144, 4
    %2190 = dma.done [#allocation3], %s2189
    %s2191 = sshll.u32 %s2144, 4
    %2192 = dma.done [#allocation3], %s2191
    %s2193 = sshll.u32 %s2144, 4
    %2194 = dma.done [#allocation3], %s2193
    %s2195 = sshll.u32 %s2144, 4
    %2196 = dma.done [#allocation3], %s2195
    %s2197 = sshll.u32 %s2144, 4
    %2198 = dma.done [#allocation3], %s2197
    %s2199 = sshll.u32 %s2144, 4
    %2200 = dma.done [#allocation3], %s2199
    %s2201 = sshll.u32 %s2144, 4
    %2202 = dma.done [#allocation3], %s2201
    %s2203 = sshll.u32 %s2144, 4
    %2204 = dma.done [#allocation3], %s2203
    %s2205 = sshll.u32 %s2144, 4
    %2206 = dma.done [#allocation3], %s2205
    %s2207 = sshll.u32 %s2144, 4
    %2208 = dma.done [#allocation3], %s2207
    %v2209 = vld [vmem:[#allocation2] sm:$0xff]
    %v2210 = vld [vmem:[#allocation2 + $0x8] sm:$0xff]
    %v2211 = vld [vmem:[#allocation2 + $0x10] sm:$0xff]
    %v2212 = vld [vmem:[#allocation2 + $0x18] sm:$0xff]
    %v2213 = vpack.c.bf16 %v2211, %v2209
    %v2214 = vpack.c.bf16 %v2212, %v2210
    %v2215 = vld [vmem:[#allocation5] sm:$0xf]
    %v2216 = vld [vmem:[#allocation5 + $0x4] sm:$0xf]
    %v2217 = vld [vmem:[#allocation5 + $0x8] sm:$0xf]
    %v2218 = vld [vmem:[#allocation5 + $0xc] sm:$0xf]
    %v2219 = vld [vmem:[#allocation5 + $0x10] sm:$0xf]
    %v2220 = vld [vmem:[#allocation5 + $0x14] sm:$0xf]
    %v2221 = vld [vmem:[#allocation5 + $0x18] sm:$0xf]
    %v2222 = vld [vmem:[#allocation5 + $0x1c] sm:$0xf]
    %v2223 = vld [vmem:[#allocation5 + $0x20] sm:$0xf]
    %v2224 = vld [vmem:[#allocation5 + $0x24] sm:$0xf]
    %v2225 = vld [vmem:[#allocation5 + $0x28] sm:$0xf]
    %v2226 = vld [vmem:[#allocation5 + $0x2c] sm:$0xf]
    %v2227 = vld [vmem:[#allocation5 + $0x30] sm:$0xf]
    %v2228 = vld [vmem:[#allocation5 + $0x34] sm:$0xf]
    %v2229 = vld [vmem:[#allocation5 + $0x38] sm:$0xf]
    %v2230 = vld [vmem:[#allocation5 + $0x3c] sm:$0xf]
    %v2231 = vld [vmem:[#allocation5 + $0x40] sm:$0xf]
    %v2232 = vld [vmem:[#allocation5 + $0x44] sm:$0xf]
    %v2233 = vld [vmem:[#allocation5 + $0x48] sm:$0xf]
    %v2234 = vld [vmem:[#allocation5 + $0x4c] sm:$0xf]
    %v2235 = vld [vmem:[#allocation5 + $0x50] sm:$0xf]
    %v2236 = vld [vmem:[#allocation5 + $0x54] sm:$0xf]
    %v2237 = vld [vmem:[#allocation5 + $0x58] sm:$0xf]
    %v2238 = vld [vmem:[#allocation5 + $0x5c] sm:$0xf]
    %v2239 = vld [vmem:[#allocation5 + $0x60] sm:$0xf]
    %v2240 = vld [vmem:[#allocation5 + $0x64] sm:$0xf]
    %v2241 = vld [vmem:[#allocation5 + $0x68] sm:$0xf]
    %v2242 = vld [vmem:[#allocation5 + $0x6c] sm:$0xf]
    %v2243 = vld [vmem:[#allocation5 + $0x70] sm:$0xf]
    %v2244 = vld [vmem:[#allocation5 + $0x74] sm:$0xf]
    %v2245 = vld [vmem:[#allocation5 + $0x78] sm:$0xf]
    %v2246 = vld [vmem:[#allocation5 + $0x7c] sm:$0xf]
    %v2247 = vld [vmem:[%s3] sm:$0x1]
    %v2249 = vlaneseq
    %v2250 = vshrl.u32 %v2249, 7
    %v2251 = vsub.s32 0, %v2250
    %v2252 = vrot.slane %v2247, %v2251
    %v2286 = vunpack.c.l.b16 %v2215
    %v2287 = vunpack.c.l.b16 %v2216
    %v2288 = vunpack.c.l.b16 %v2217
    %v2289 = vunpack.c.l.b16 %v2218
    %v2290 = vunpack.c.l.b16 %v2219
    %v2291 = vunpack.c.l.b16 %v2220
    %v2292 = vunpack.c.l.b16 %v2221
    %v2293 = vunpack.c.l.b16 %v2222
    %v2294 = vunpack.c.l.b16 %v2223
    %v2295 = vunpack.c.l.b16 %v2224
    %v2296 = vunpack.c.l.b16 %v2225
    %v2297 = vunpack.c.l.b16 %v2226
    %v2298 = vunpack.c.l.b16 %v2227
    %v2299 = vunpack.c.l.b16 %v2228
    %v2300 = vunpack.c.l.b16 %v2229
    %v2301 = vunpack.c.l.b16 %v2230
    %v2302 = vunpack.c.l.b16 %v2231
    %v2303 = vunpack.c.l.b16 %v2232
    %v2304 = vunpack.c.l.b16 %v2233
    %v2305 = vunpack.c.l.b16 %v2234
    %v2306 = vunpack.c.l.b16 %v2235
    %v2307 = vunpack.c.l.b16 %v2236
    %v2308 = vunpack.c.l.b16 %v2237
    %v2309 = vunpack.c.l.b16 %v2238
    %v2310 = vunpack.c.l.b16 %v2239
    %v2311 = vunpack.c.l.b16 %v2240
    %v2312 = vunpack.c.l.b16 %v2241
    %v2313 = vunpack.c.l.b16 %v2242
    %v2314 = vunpack.c.l.b16 %v2243
    %v2315 = vunpack.c.l.b16 %v2244
    %v2316 = vunpack.c.l.b16 %v2245
    %v2317 = vunpack.c.l.b16 %v2246
    %v2318 = vpack.c.b16 %v2287, %v2286
    %v2319 = vpack.c.b16 %v2289, %v2288
    %v2320 = vpack.c.b16 %v2291, %v2290
    %v2321 = vpack.c.b16 %v2293, %v2292
    %v2322 = vpack.c.b16 %v2295, %v2294
    %v2323 = vpack.c.b16 %v2297, %v2296
    %v2324 = vpack.c.b16 %v2299, %v2298
    %v2325 = vpack.c.b16 %v2301, %v2300
    %v2326 = vpack.c.b16 %v2303, %v2302
    %v2327 = vpack.c.b16 %v2305, %v2304
    %v2328 = vpack.c.b16 %v2307, %v2306
    %v2329 = vpack.c.b16 %v2309, %v2308
    %v2330 = vpack.c.b16 %v2311, %v2310
    %v2331 = vpack.c.b16 %v2313, %v2312
    %v2332 = vpack.c.b16 %v2315, %v2314
    %v2333 = vpack.c.b16 %v2317, %v2316
    %2350 = vmatprep.subr.bf16.mxu0 0
    %2351 = vmatpush1.bf16.msra.mxu0 %v2318
    %2352 = vmatprep.subr.bf16.mxu0 0
    %2353 = vmatpush1.bf16.msra.mxu0 %v2319
    %2354 = vmatprep.subr.bf16.mxu0 0
    %2355 = vmatpush1.bf16.msra.mxu0 %v2320
    %2356 = vmatprep.subr.bf16.mxu0 0
    %2357 = vmatpush1.bf16.msra.mxu0 %v2321
    %2358 = vmatprep.subr.bf16.mxu0 0
    %2359 = vmatpush1.bf16.msra.mxu0 %v2322
    %2360 = vmatprep.subr.bf16.mxu0 0
    %2361 = vmatpush1.bf16.msra.mxu0 %v2323
    %2362 = vmatprep.subr.bf16.mxu0 0
    %2363 = vmatpush1.bf16.msra.mxu0 %v2324
    %2364 = vmatprep.subr.bf16.mxu0 0
    %2365 = vmatpush1.bf16.msra.mxu0 %v2325
    %2366 = vmatprep.subr.bf16.mxu0 0
    %2367 = vmatpush1.bf16.msra.mxu0 %v2326
    %2368 = vmatprep.subr.bf16.mxu0 0
    %2369 = vmatpush1.bf16.msra.mxu0 %v2327
    %2370 = vmatprep.subr.bf16.mxu0 0
    %2371 = vmatpush1.bf16.msra.mxu0 %v2328
    %2372 = vmatprep.subr.bf16.mxu0 0
    %2373 = vmatpush1.bf16.msra.mxu0 %v2329
    %2374 = vmatprep.subr.bf16.mxu0 0
    %2375 = vmatpush1.bf16.msra.mxu0 %v2330
    %2376 = vmatprep.subr.bf16.mxu0 0
    %2377 = vmatpush1.bf16.msra.mxu0 %v2331
    %2378 = vmatprep.subr.bf16.mxu0 0
    %2379 = vmatpush1.bf16.msra.mxu0 %v2332
    %2380 = vmatprep.subr.bf16.mxu0 0
    %2381 = vmatpush1.bf16.msra.mxu0 %v2333
    %2382 = vmatprep.mubr.bf16.mxu0 %v2214
    %2383 = vmatmul.mubr.bf16.gmra.mrb[0].mxu0 %v2213
    %v2384 = vpop.f32.mrb[0].mxu0
    %v2385 = vadd.f32 %v2252, %v2384
    %v2386 = vpop.f32.mrb[0].mxu0
    %v2387 = vpop.f32.mrb[0].mxu0
    %v2388 = vadd.f32 %v2252, %v2387
    %v2389 = vpop.f32.mrb[0].mxu0
    %2390 = vdwg.mxu0
    %v2391 = vlaneseq
    %v2392 = vand.u32 %v2391, 127
    %vm2393 = vcmp.lt.s32.totalorder %v2392, 32
    %v2394 = vsel %vm2393, %v2385, 0.0
    %v2395 = vsel %vm2393, %v2388, 0.0
    %v2396 = vpack.c.bf16 %v2395, %v2394
    %v2397 = vld [vmem:[%s4] sm:$0x3f]
    %v2399 = vrot.slane %v2396, 4
    %2401 = vmatprep.subr.bf16.mxu0 0
    %2402 = vmatpush1.bf16.xpose.msra.mxu0 %v2399
    %2403 = vmatprep.subr.bf16.mxu0 0
    %2404 = vmatpush1.bf16.xpose.msra.mxu0 0
    %2405 = vmatprep.subr.bf16.mxu0 0
    %2406 = vmatpush1.bf16.xpose.msra.mxu0 0
    %2407 = vmatprep.subr.bf16.mxu0 0
    %2408 = vmatpush1.bf16.xpose.msra.mxu0 0
    %2409 = vmatprep.subr.bf16.mxu0 0
    %2410 = vmatpush1.bf16.xpose.msra.mxu0 0
    %2411 = vmatprep.subr.bf16.mxu0 0
    %2412 = vmatpush1.bf16.xpose.msra.mxu0 0
    %2413 = vmatprep.subr.bf16.mxu0 0
    %2414 = vmatpush1.bf16.xpose.msra.mxu0 0
    %2415 = vmatprep.subr.bf16.mxu0 0
    %2416 = vmatpush1.bf16.xpose.msra.mxu0 0
    %2417 = vmatprep.subr.bf16.mxu0 0
    %2418 = vmatpush1.bf16.xpose.msra.mxu0 0
    %2419 = vmatprep.subr.bf16.mxu0 0
    %2420 = vmatpush1.bf16.xpose.msra.mxu0 0
    %2421 = vmatprep.subr.bf16.mxu0 0
    %2422 = vmatpush1.bf16.xpose.msra.mxu0 0
    %2423 = vmatprep.subr.bf16.mxu0 0
    %2424 = vmatpush1.bf16.xpose.msra.mxu0 0
    %2425 = vmatprep.subr.bf16.mxu0 0
    %2426 = vmatpush1.bf16.xpose.msra.mxu0 0
    %2427 = vmatprep.subr.bf16.mxu0 0
    %2428 = vmatpush1.bf16.xpose.msra.mxu0 0
    %2429 = vmatprep.subr.bf16.mxu0 0
    %2430 = vmatpush1.bf16.xpose.msra.mxu0 0
    %2431 = vmatprep.subr.bf16.mxu0 0
    %2432 = vmatpush1.bf16.xpose.msra.mxu0 0
    %2433 = vmatprep.mubr.bf16.mxu0 0
    %2434 = vmatmul.mubr.bf16.gmra.mrb[0].mxu0 %v2396
    %v2435 = vpop.f32.mrb[0].mxu0
    %v2436 = vadd.f32 0.0, %v2435
    %v2437 = vpop.f32.mrb[0].mxu0
    %v2438 = vpop.f32.mrb[0].mxu0
    %v2439 = vpop.f32.mrb[0].mxu0
    %2440 = vdwg.mxu0
    %2441 = vset.pattern.permute.xlu0 0
    %2442 = vperm.xlu0 %2441, %v2397
    %v2443 = vpop.permute.xlu0 %2442
    %vm2444 = vcmp.eq.s32.totalorder %v2392, %v2443
    %v2445 = vsel %vm2444, %v2436, 0.0
    %vm2446 = vcmask 62464
    %v2447 = vsel %vm2446, %v2445, 0.0
    %2448 = vadd.xlane.f32.xlu0 %v2447
    %v2449 = vpop.xlane.xlu0 %2448
    %v2450 = vsel %vm2446, %v2436, -inf
    %2451 = vmax.xlane.f32.xlu0 %v2450
    %v2452 = vpop.xlane.xlu0 %2451
    %v2453 = vrot.slane %v2396, 3
    %2455 = vmatprep.subr.bf16.mxu0 0
    %2456 = vmatpush1.bf16.xpose.msra.mxu0 %v2453
    %2457 = vmatprep.subr.bf16.mxu0 0
    %2458 = vmatpush1.bf16.xpose.msra.mxu0 0
    %2459 = vmatprep.subr.bf16.mxu0 0
    %2460 = vmatpush1.bf16.xpose.msra.mxu0 0
    %2461 = vmatprep.subr.bf16.mxu0 0
    %2462 = vmatpush1.bf16.xpose.msra.mxu0 0
    %2463 = vmatprep.subr.bf16.mxu0 0
    %2464 = vmatpush1.bf16.xpose.msra.mxu0 0
    %2465 = vmatprep.subr.bf16.mxu0 0
    %2466 = vmatpush1.bf16.xpose.msra.mxu0 0
    %2467 = vmatprep.subr.bf16.mxu0 0
    %2468 = vmatpush1.bf16.xpose.msra.mxu0 0
    %2469 = vmatprep.subr.bf16.mxu0 0
    %2470 = vmatpush1.bf16.xpose.msra.mxu0 0
    %2471 = vmatprep.subr.bf16.mxu0 0
    %2472 = vmatpush1.bf16.xpose.msra.mxu0 0
    %2473 = vmatprep.subr.bf16.mxu0 0
    %2474 = vmatpush1.bf16.xpose.msra.mxu0 0
    %2475 = vmatprep.subr.bf16.mxu0 0
    %2476 = vmatpush1.bf16.xpose.msra.mxu0 0
    %2477 = vmatprep.subr.bf16.mxu0 0
    %2478 = vmatpush1.bf16.xpose.msra.mxu0 0
    %2479 = vmatprep.subr.bf16.mxu0 0
    %2480 = vmatpush1.bf16.xpose.msra.mxu0 0
    %2481 = vmatprep.subr.bf16.mxu0 0
    %2482 = vmatpush1.bf16.xpose.msra.mxu0 0
    %2483 = vmatprep.subr.bf16.mxu0 0
    %2484 = vmatpush1.bf16.xpose.msra.mxu0 0
    %2485 = vmatprep.subr.bf16.mxu0 0
    %2486 = vmatpush1.bf16.xpose.msra.mxu0 0
    %2487 = vmatprep.mubr.bf16.mxu0 0
    %2488 = vmatmul.mubr.bf16.gmra.mrb[0].mxu0 %v2396
    %v2489 = vpop.f32.mrb[0].mxu0
    %v2490 = vadd.f32 0.0, %v2489
    %v2491 = vpop.f32.mrb[0].mxu0
    %v2492 = vpop.f32.mrb[0].mxu0
    %v2493 = vpop.f32.mrb[0].mxu0
    %2494 = vdwg.mxu0
    %v2495 = vsub.s32 %v2397, 8
    %2496 = vset.pattern.permute.xlu0 0
    %2497 = vperm.xlu0 %2496, %v2495
    %v2498 = vpop.permute.xlu0 %2497
    %vm2499 = vcmp.eq.s32.totalorder %v2392, %v2498
    %v2500 = vsel %vm2499, %v2490, 0.0
    %vm2501 = vcmask 13312
    %v2502 = vsel %vm2501, %v2500, 0.0
    %2503 = vadd.xlane.f32.xlu0 %v2502
    %v2504 = vpop.xlane.xlu0 %2503
    %v2505 = vadd.f32 %v2449, %v2504
    %v2506 = vsel %vm2501, %v2490, -inf
    %2507 = vmax.xlane.f32.xlu0 %v2506
    %v2508 = vpop.xlane.xlu0 %2507
    %v2509 = vmax.f32 %v2452, %v2508
    %v2510 = vsub.f32 %v2436, %v2509
    %v2511 = vmul.f32 %v2510, 1.442695
    %v2512 = vpow.pop %v2511
    %v2513 = vsel %vm2446, %v2512, 0.0
    %2514 = vadd.xlane.f32.xlu0 %v2513
    %v2515 = vpop.xlane.xlu0 %2514
    %v2516 = vsub.f32 %v2490, %v2509
    %v2517 = vmul.f32 %v2516, 1.442695
    %v2518 = vpow.pop %v2517
    %v2519 = vsel %vm2501, %v2518, 0.0
    %2520 = vadd.xlane.f32.xlu0 %v2519
    %v2521 = vpop.xlane.xlu0 %2520
    %v2522 = vadd.f32 %v2515, %v2521
    %v2523 = vlog2.pop %v2522
    %v2524 = vmul.f32 %v2523, 0.6931472
    %v2525 = vadd.f32 %v2524, %v2509
    %v2526 = vsub.f32 %v2525, %v2505
    %vm2527 = vcmask 5120
    %v2528 = vsel %vm2527, %v2526, 0.0
    %2529 = vadd.xlane.f32.xlu0 %v2528
    %v2530 = vpop.xlane.xlu0 %2529
    %v2531 = vrot.slane %v2530, 4
    %v2532 = vadd.f32 %v2530, %v2531
    %v2533 = vrot.slane %v2532, 2
    %v2534 = vadd.f32 %v2532, %v2533
    %v2535 = vrot.slane %v2534, 1
    %v2536 = vadd.f32 %v2534, %v2535
    %s2537 = vtos %v2536
    %v2538 = vrcp.pop 6.0
    %s2539 = vtos %v2538
    %s2540 = smul.f32 %s2537, %s2539
    %v2541 = vld [vmem:[%s5] sm:$0x3f]
    %2542 = vmatprep.subr.bf16.mxu0 0
    %2543 = vmatpush1.bf16.xpose.msra.mxu0 %v2396
    %2544 = vmatprep.subr.bf16.mxu0 0
    %2545 = vmatpush1.bf16.xpose.msra.mxu0 0
    %2546 = vmatprep.subr.bf16.mxu0 0
    %2547 = vmatpush1.bf16.xpose.msra.mxu0 0
    %2548 = vmatprep.subr.bf16.mxu0 0
    %2549 = vmatpush1.bf16.xpose.msra.mxu0 0
    %2550 = vmatprep.subr.bf16.mxu0 0
    %2551 = vmatpush1.bf16.xpose.msra.mxu0 0
    %2552 = vmatprep.subr.bf16.mxu0 0
    %2553 = vmatpush1.bf16.xpose.msra.mxu0 0
    %2554 = vmatprep.subr.bf16.mxu0 0
    %2555 = vmatpush1.bf16.xpose.msra.mxu0 0
    %2556 = vmatprep.subr.bf16.mxu0 0
    %2557 = vmatpush1.bf16.xpose.msra.mxu0 0
    %2558 = vmatprep.subr.bf16.mxu0 0
    %2559 = vmatpush1.bf16.xpose.msra.mxu0 0
    %2560 = vmatprep.subr.bf16.mxu0 0
    %2561 = vmatpush1.bf16.xpose.msra.mxu0 0
    %2562 = vmatprep.subr.bf16.mxu0 0
    %2563 = vmatpush1.bf16.xpose.msra.mxu0 0
    %2564 = vmatprep.subr.bf16.mxu0 0
    %2565 = vmatpush1.bf16.xpose.msra.mxu0 0
    %2566 = vmatprep.subr.bf16.mxu0 0
    %2567 = vmatpush1.bf16.xpose.msra.mxu0 0
    %2568 = vmatprep.subr.bf16.mxu0 0
    %2569 = vmatpush1.bf16.xpose.msra.mxu0 0
    %2570 = vmatprep.subr.bf16.mxu0 0
    %2571 = vmatpush1.bf16.xpose.msra.mxu0 0
    %2572 = vmatprep.subr.bf16.mxu0 0
    %2573 = vmatpush1.bf16.xpose.msra.mxu0 0
    %2574 = vmatprep.mubr.bf16.mxu0 0
    %2575 = vmatmul.mubr.bf16.gmra.mrb[0].mxu0 %v2399
    %v2576 = vpop.f32.mrb[0].mxu0
    %v2577 = vadd.f32 0.0, %v2576
    %v2578 = vpop.f32.mrb[0].mxu0
    %v2579 = vpop.f32.mrb[0].mxu0
    %v2580 = vpop.f32.mrb[0].mxu0
    %2581 = vdwg.mxu0
    %2582 = vset.pattern.permute.xlu0 0
    %2583 = vperm.xlu0 %2582, %v2541
    %v2584 = vpop.permute.xlu0 %2583
    %vm2585 = vcmp.eq.s32.totalorder %v2392, %v2584
    %v2586 = vsel %vm2585, %v2577, 0.0
    %v2587 = vsel %vm2446, %v2586, 0.0
    %2588 = vadd.xlane.f32.xlu0 %v2587
    %v2589 = vpop.xlane.xlu0 %2588
    %v2590 = vsel %vm2446, %v2577, -inf
    %2591 = vmax.xlane.f32.xlu0 %v2590
    %v2592 = vpop.xlane.xlu0 %2591
    %v2593 = vrot.slane %v2396, 7
    %2595 = vmatprep.subr.bf16.mxu0 0
    %2596 = vmatpush1.bf16.xpose.msra.mxu0 %v2593
    %2597 = vmatprep.subr.bf16.mxu0 0
    %2598 = vmatpush1.bf16.xpose.msra.mxu0 0
    %2599 = vmatprep.subr.bf16.mxu0 0
    %2600 = vmatpush1.bf16.xpose.msra.mxu0 0
    %2601 = vmatprep.subr.bf16.mxu0 0
    %2602 = vmatpush1.bf16.xpose.msra.mxu0 0
    %2603 = vmatprep.subr.bf16.mxu0 0
    %2604 = vmatpush1.bf16.xpose.msra.mxu0 0
    %2605 = vmatprep.subr.bf16.mxu0 0
    %2606 = vmatpush1.bf16.xpose.msra.mxu0 0
    %2607 = vmatprep.subr.bf16.mxu0 0
    %2608 = vmatpush1.bf16.xpose.msra.mxu0 0
    %2609 = vmatprep.subr.bf16.mxu0 0
    %2610 = vmatpush1.bf16.xpose.msra.mxu0 0
    %2611 = vmatprep.subr.bf16.mxu0 0
    %2612 = vmatpush1.bf16.xpose.msra.mxu0 0
    %2613 = vmatprep.subr.bf16.mxu0 0
    %2614 = vmatpush1.bf16.xpose.msra.mxu0 0
    %2615 = vmatprep.subr.bf16.mxu0 0
    %2616 = vmatpush1.bf16.xpose.msra.mxu0 0
    %2617 = vmatprep.subr.bf16.mxu0 0
    %2618 = vmatpush1.bf16.xpose.msra.mxu0 0
    %2619 = vmatprep.subr.bf16.mxu0 0
    %2620 = vmatpush1.bf16.xpose.msra.mxu0 0
    %2621 = vmatprep.subr.bf16.mxu0 0
    %2622 = vmatpush1.bf16.xpose.msra.mxu0 0
    %2623 = vmatprep.subr.bf16.mxu0 0
    %2624 = vmatpush1.bf16.xpose.msra.mxu0 0
    %2625 = vmatprep.subr.bf16.mxu0 0
    %2626 = vmatpush1.bf16.xpose.msra.mxu0 0
    %2627 = vmatprep.mubr.bf16.mxu0 0
    %2628 = vmatmul.mubr.bf16.gmra.mrb[0].mxu0 %v2399
    %v2629 = vpop.f32.mrb[0].mxu0
    %v2630 = vadd.f32 0.0, %v2629
    %v2631 = vpop.f32.mrb[0].mxu0
    %v2632 = vpop.f32.mrb[0].mxu0
    %v2633 = vpop.f32.mrb[0].mxu0
    %2634 = vdwg.mxu0
    %v2635 = vsub.s32 %v2541, 8
    %2636 = vset.pattern.permute.xlu0 0
    %2637 = vperm.xlu0 %2636, %v2635
    %v2638 = vpop.permute.xlu0 %2637
    %vm2639 = vcmp.eq.s32.totalorder %v2392, %v2638
    %v2640 = vsel %vm2639, %v2630, 0.0
    %v2641 = vsel %vm2501, %v2640, 0.0
    %2642 = vadd.xlane.f32.xlu0 %v2641
    %v2643 = vpop.xlane.xlu0 %2642
    %v2644 = vadd.f32 %v2589, %v2643
    %v2645 = vsel %vm2501, %v2630, -inf
    %2646 = vmax.xlane.f32.xlu0 %v2645
    %v2647 = vpop.xlane.xlu0 %2646
    %v2648 = vmax.f32 %v2592, %v2647
    %v2649 = vsub.f32 %v2577, %v2648
    %v2650 = vmul.f32 %v2649, 1.442695
    %v2651 = vpow.pop %v2650
    %v2652 = vsel %vm2446, %v2651, 0.0
    %2653 = vadd.xlane.f32.xlu0 %v2652
    %v2654 = vpop.xlane.xlu0 %2653
    %v2655 = vsub.f32 %v2630, %v2648
    %v2656 = vmul.f32 %v2655, 1.442695
    %v2657 = vpow.pop %v2656
    %v2658 = vsel %vm2501, %v2657, 0.0
    %2659 = vadd.xlane.f32.xlu0 %v2658
    %v2660 = vpop.xlane.xlu0 %2659
    %v2661 = vadd.f32 %v2654, %v2660
    %v2662 = vlog2.pop %v2661
    %v2663 = vmul.f32 %v2662, 0.6931472
    %v2664 = vadd.f32 %v2663, %v2648
    %v2665 = vsub.f32 %v2664, %v2644
    %v2666 = vsel %vm2527, %v2665, 0.0
    %2667 = vadd.xlane.f32.xlu0 %v2666
    %v2668 = vpop.xlane.xlu0 %2667
    %v2669 = vrot.slane %v2668, 4
    %v2670 = vadd.f32 %v2668, %v2669
    %v2671 = vrot.slane %v2670, 2
    %v2672 = vadd.f32 %v2670, %v2671
    %v2673 = vrot.slane %v2672, 1
    %v2674 = vadd.f32 %v2672, %v2673
    %s2675 = vtos %v2674
    %v2676 = vrcp.pop 6.0
    %s2677 = vtos %v2676
    %s2678 = smul.f32 %s2675, %s2677
    %s2679 = sshll.u32 %s2144, 4
    %2680 = dma.done %s1155, %s2679
    %s2681 = sshll.u32 %s2144, 4
    %2682 = dma.done %s1155, %s2681
    %s2683 = sshll.u32 %s2144, 4
    %2684 = dma.done %s1155, %s2683
    %s2685 = sshll.u32 %s2144, 4
    %2686 = dma.done %s1155, %s2685
    %s2687 = sshll.u32 %s2144, 4
    %2688 = dma.done %s1155, %s2687
    %s2689 = sshll.u32 %s2144, 4
    %2690 = dma.done %s1155, %s2689
    %s2691 = sshll.u32 %s2144, 4
    %2692 = dma.done %s1155, %s2691
    %s2693 = sshll.u32 %s2144, 4
    %2694 = dma.done %s1155, %s2693
    %s2695 = sshll.u32 %s2144, 4
    %2696 = dma.done %s1155, %s2695
    %s2697 = sshll.u32 %s2144, 4
    %2698 = dma.done %s1155, %s2697
    %s2699 = sshll.u32 %s2144, 4
    %2700 = dma.done %s1155, %s2699
    %s2701 = sshll.u32 %s2144, 4
    %2702 = dma.done %s1155, %s2701
    %s2703 = sshll.u32 %s2144, 4
    %2704 = dma.done %s1155, %s2703
    %s2705 = sshll.u32 %s2144, 4
    %2706 = dma.done %s1155, %s2705
    %s2707 = sshll.u32 %s2144, 4
    %2708 = dma.done %s1155, %s2707
    %s2709 = sshll.u32 %s2144, 4
    %2710 = dma.done %s1155, %s2709
    %s2711 = sshll.u32 %s2144, 4
    %2712 = dma.done %s1155, %s2711
    %s2713 = sshll.u32 %s2144, 4
    %2714 = dma.done %s1155, %s2713
    %s2715 = sshll.u32 %s2144, 4
    %2716 = dma.done %s1155, %s2715
    %s2717 = sshll.u32 %s2144, 4
    %2718 = dma.done %s1155, %s2717
    %s2719 = sshll.u32 %s2144, 4
    %2720 = dma.done %s1155, %s2719
    %s2721 = sshll.u32 %s2144, 4
    %2722 = dma.done %s1155, %s2721
    %s2723 = sshll.u32 %s2144, 4
    %2724 = dma.done %s1155, %s2723
    %s2725 = sshll.u32 %s2144, 4
    %2726 = dma.done %s1155, %s2725
    %s2727 = sshll.u32 %s2144, 4
    %2728 = dma.done %s1155, %s2727
    %s2729 = sshll.u32 %s2144, 4
    %2730 = dma.done %s1155, %s2729
    %s2731 = sshll.u32 %s2144, 4
    %2732 = dma.done %s1155, %s2731
    %s2733 = sshll.u32 %s2144, 4
    %2734 = dma.done %s1155, %s2733
    %s2735 = sshll.u32 %s2144, 4
    %2736 = dma.done %s1155, %s2735
    %s2737 = sshll.u32 %s2144, 4
    %2738 = dma.done %s1155, %s2737
    %s2739 = sshll.u32 %s2144, 4
    %2740 = dma.done %s1155, %s2739
    %s2741 = sshll.u32 %s2144, 4
    %2742 = dma.done %s1155, %s2741
    %v2743 = vld [vmem:[#allocation2 + $0x20] sm:$0xff]
    %v2744 = vld [vmem:[#allocation2 + $0x28] sm:$0xff]
    %v2745 = vld [vmem:[#allocation2 + $0x30] sm:$0xff]
    %v2746 = vld [vmem:[#allocation2 + $0x38] sm:$0xff]
    %v2747 = vpack.c.bf16 %v2745, %v2743
    %v2748 = vpack.c.bf16 %v2746, %v2744
    %v2749 = vld [vmem:[#allocation5] sm:$0xf]
    %v2750 = vld [vmem:[#allocation5 + $0x4] sm:$0xf]
    %v2751 = vld [vmem:[#allocation5 + $0x8] sm:$0xf]
    %v2752 = vld [vmem:[#allocation5 + $0xc] sm:$0xf]
    %v2753 = vld [vmem:[#allocation5 + $0x10] sm:$0xf]
    %v2754 = vld [vmem:[#allocation5 + $0x14] sm:$0xf]
    %v2755 = vld [vmem:[#allocation5 + $0x18] sm:$0xf]
    %v2756 = vld [vmem:[#allocation5 + $0x1c] sm:$0xf]
    %v2757 = vld [vmem:[#allocation5 + $0x20] sm:$0xf]
    %v2758 = vld [vmem:[#allocation5 + $0x24] sm:$0xf]
    %v2759 = vld [vmem:[#allocation5 + $0x28] sm:$0xf]
    %v2760 = vld [vmem:[#allocation5 + $0x2c] sm:$0xf]
    %v2761 = vld [vmem:[#allocation5 + $0x30] sm:$0xf]
    %v2762 = vld [vmem:[#allocation5 + $0x34] sm:$0xf]
    %v2763 = vld [vmem:[#allocation5 + $0x38] sm:$0xf]
    %v2764 = vld [vmem:[#allocation5 + $0x3c] sm:$0xf]
    %v2765 = vld [vmem:[#allocation5 + $0x40] sm:$0xf]
    %v2766 = vld [vmem:[#allocation5 + $0x44] sm:$0xf]
    %v2767 = vld [vmem:[#allocation5 + $0x48] sm:$0xf]
    %v2768 = vld [vmem:[#allocation5 + $0x4c] sm:$0xf]
    %v2769 = vld [vmem:[#allocation5 + $0x50] sm:$0xf]
    %v2770 = vld [vmem:[#allocation5 + $0x54] sm:$0xf]
    %v2771 = vld [vmem:[#allocation5 + $0x58] sm:$0xf]
    %v2772 = vld [vmem:[#allocation5 + $0x5c] sm:$0xf]
    %v2773 = vld [vmem:[#allocation5 + $0x60] sm:$0xf]
    %v2774 = vld [vmem:[#allocation5 + $0x64] sm:$0xf]
    %v2775 = vld [vmem:[#allocation5 + $0x68] sm:$0xf]
    %v2776 = vld [vmem:[#allocation5 + $0x6c] sm:$0xf]
    %v2777 = vld [vmem:[#allocation5 + $0x70] sm:$0xf]
    %v2778 = vld [vmem:[#allocation5 + $0x74] sm:$0xf]
    %v2779 = vld [vmem:[#allocation5 + $0x78] sm:$0xf]
    %v2780 = vld [vmem:[#allocation5 + $0x7c] sm:$0xf]
    %v2781 = vld [vmem:[%s3] sm:$0x1]
    %v2783 = vlaneseq
    %v2784 = vshrl.u32 %v2783, 7
    %v2785 = vsub.s32 0, %v2784
    %v2786 = vrot.slane %v2781, %v2785
    %v2820 = vunpack.c.l.b16 %v2749
    %v2821 = vunpack.c.l.b16 %v2750
    %v2822 = vunpack.c.l.b16 %v2751
    %v2823 = vunpack.c.l.b16 %v2752
    %v2824 = vunpack.c.l.b16 %v2753
    %v2825 = vunpack.c.l.b16 %v2754
    %v2826 = vunpack.c.l.b16 %v2755
    %v2827 = vunpack.c.l.b16 %v2756
    %v2828 = vunpack.c.l.b16 %v2757
    %v2829 = vunpack.c.l.b16 %v2758
    %v2830 = vunpack.c.l.b16 %v2759
    %v2831 = vunpack.c.l.b16 %v2760
    %v2832 = vunpack.c.l.b16 %v2761
    %v2833 = vunpack.c.l.b16 %v2762
    %v2834 = vunpack.c.l.b16 %v2763
    %v2835 = vunpack.c.l.b16 %v2764
    %v2836 = vunpack.c.l.b16 %v2765
    %v2837 = vunpack.c.l.b16 %v2766
    %v2838 = vunpack.c.l.b16 %v2767
    %v2839 = vunpack.c.l.b16 %v2768
    %v2840 = vunpack.c.l.b16 %v2769
    %v2841 = vunpack.c.l.b16 %v2770
    %v2842 = vunpack.c.l.b16 %v2771
    %v2843 = vunpack.c.l.b16 %v2772
    %v2844 = vunpack.c.l.b16 %v2773
    %v2845 = vunpack.c.l.b16 %v2774
    %v2846 = vunpack.c.l.b16 %v2775
    %v2847 = vunpack.c.l.b16 %v2776
    %v2848 = vunpack.c.l.b16 %v2777
    %v2849 = vunpack.c.l.b16 %v2778
    %v2850 = vunpack.c.l.b16 %v2779
    %v2851 = vunpack.c.l.b16 %v2780
    %v2852 = vpack.c.b16 %v2821, %v2820
    %v2853 = vpack.c.b16 %v2823, %v2822
    %v2854 = vpack.c.b16 %v2825, %v2824
    %v2855 = vpack.c.b16 %v2827, %v2826
    %v2856 = vpack.c.b16 %v2829, %v2828
    %v2857 = vpack.c.b16 %v2831, %v2830
    %v2858 = vpack.c.b16 %v2833, %v2832
    %v2859 = vpack.c.b16 %v2835, %v2834
    %v2860 = vpack.c.b16 %v2837, %v2836
    %v2861 = vpack.c.b16 %v2839, %v2838
    %v2862 = vpack.c.b16 %v2841, %v2840
    %v2863 = vpack.c.b16 %v2843, %v2842
    %v2864 = vpack.c.b16 %v2845, %v2844
    %v2865 = vpack.c.b16 %v2847, %v2846
    %v2866 = vpack.c.b16 %v2849, %v2848
    %v2867 = vpack.c.b16 %v2851, %v2850
    %2884 = vmatprep.subr.bf16.mxu0 0
    %2885 = vmatpush1.bf16.msra.mxu0 %v2852
    %2886 = vmatprep.subr.bf16.mxu0 0
    %2887 = vmatpush1.bf16.msra.mxu0 %v2853
    %2888 = vmatprep.subr.bf16.mxu0 0
    %2889 = vmatpush1.bf16.msra.mxu0 %v2854
    %2890 = vmatprep.subr.bf16.mxu0 0
    %2891 = vmatpush1.bf16.msra.mxu0 %v2855
    %2892 = vmatprep.subr.bf16.mxu0 0
    %2893 = vmatpush1.bf16.msra.mxu0 %v2856
    %2894 = vmatprep.subr.bf16.mxu0 0
    %2895 = vmatpush1.bf16.msra.mxu0 %v2857
    %2896 = vmatprep.subr.bf16.mxu0 0
    %2897 = vmatpush1.bf16.msra.mxu0 %v2858
    %2898 = vmatprep.subr.bf16.mxu0 0
    %2899 = vmatpush1.bf16.msra.mxu0 %v2859
    %2900 = vmatprep.subr.bf16.mxu0 0
    %2901 = vmatpush1.bf16.msra.mxu0 %v2860
    %2902 = vmatprep.subr.bf16.mxu0 0
    %2903 = vmatpush1.bf16.msra.mxu0 %v2861
    %2904 = vmatprep.subr.bf16.mxu0 0
    %2905 = vmatpush1.bf16.msra.mxu0 %v2862
    %2906 = vmatprep.subr.bf16.mxu0 0
    %2907 = vmatpush1.bf16.msra.mxu0 %v2863
    %2908 = vmatprep.subr.bf16.mxu0 0
    %2909 = vmatpush1.bf16.msra.mxu0 %v2864
    %2910 = vmatprep.subr.bf16.mxu0 0
    %2911 = vmatpush1.bf16.msra.mxu0 %v2865
    %2912 = vmatprep.subr.bf16.mxu0 0
    %2913 = vmatpush1.bf16.msra.mxu0 %v2866
    %2914 = vmatprep.subr.bf16.mxu0 0
    %2915 = vmatpush1.bf16.msra.mxu0 %v2867
    %2916 = vmatprep.mubr.bf16.mxu0 %v2748
    %2917 = vmatmul.mubr.bf16.gmra.mrb[0].mxu0 %v2747
    %v2918 = vpop.f32.mrb[0].mxu0
    %v2919 = vadd.f32 %v2786, %v2918
    %v2920 = vpop.f32.mrb[0].mxu0
    %v2921 = vpop.f32.mrb[0].mxu0
    %v2922 = vadd.f32 %v2786, %v2921
    %v2923 = vpop.f32.mrb[0].mxu0
    %2924 = vdwg.mxu0
    %vm2925 = vcmp.eq.s32.totalorder %v2392, 32
    %v2926 = vsel %vm2925, %v2919, 0.0
    %v2927 = vsel %vm2925, %v2922, 0.0
    %2928 = vadd.xlane.f32.xlu0 %v2926
    %v2929 = vpop.xlane.xlu0 %2928
    %2930 = vadd.xlane.f32.xlu0 %v2927
    %v2931 = vpop.xlane.xlu0 %2930
    %v2932 = vld [vmem:[%s6] sm:$0xff]
    %v2933 = vld [vmem:[%s6 + $0x8] sm:$0xff]
    %v2934 = vmul.f32 %v2929, %v2932
    %v2935 = vmul.f32 %v2931, %v2933
    %v2936 = vmax.f32 %v2934, 0.0
    %v2937 = vmax.f32 %v2935, 0.0
    %v2938 = vand.u32 2147483647, %v2934
    %v2939 = vand.u32 2147483647, %v2935
    %v2940 = vsub.f32 0.0, %v2938
    %v2941 = vsub.f32 0.0, %v2939
    %v2942 = vmul.f32 %v2940, 1.442695
    %v2943 = vpow.pop %v2942
    %v2944 = vmul.f32 %v2941, 1.442695
    %v2945 = vpow.pop %v2944
    %v2946 = vadd.f32 %v2943, 1.0
    %v2947 = vadd.f32 %v2945, 1.0
    %v2948 = vlog2.pop %v2946
    %v2949 = vmul.f32 %v2948, 0.6931472
    %v2950 = vlog2.pop %v2947
    %v2951 = vmul.f32 %v2950, 0.6931472
    %v2952 = vadd.f32 %v2936, %v2949
    %v2953 = vadd.f32 %v2937, %v2951
    %vm2954 = vcmask 7168
    %v2955 = vsel %vm2954, %v2952, 0.0
    %2956 = vadd.xlane.f32.xlu0 %v2955
    %v2957 = vpop.xlane.xlu0 %2956
    %v2958 = vrot.slane %v2957, 4
    %v2959 = vadd.f32 %v2957, %v2958
    %v2960 = vrot.slane %v2959, 2
    %v2961 = vadd.f32 %v2959, %v2960
    %v2962 = vrot.slane %v2961, 1
    %v2963 = vadd.f32 %v2961, %v2962
    %s2964 = vtos %v2963
    %v2965 = vrcp.pop 8.0
    %s2966 = vtos %v2965
    %s2967 = smul.f32 %s2964, %s2966
    %v2968 = vsel %vm2954, %v2953, 0.0
    %2969 = vadd.xlane.f32.xlu0 %v2968
    %v2970 = vpop.xlane.xlu0 %2969
    %v2971 = vrot.slane %v2970, 4
    %v2972 = vadd.f32 %v2970, %v2971
    %v2973 = vrot.slane %v2972, 2
    %v2974 = vadd.f32 %v2972, %v2973
    %v2975 = vrot.slane %v2974, 1
    %v2976 = vadd.f32 %v2974, %v2975
    %s2977 = vtos %v2976
    %v2978 = vrcp.pop 8.0
    %s2979 = vtos %v2978
    %s2980 = smul.f32 %s2977, %s2979
    %s2981 = sadd.f32 %s2540, %s2678
    %s2982 = sld [smem:[#allocation4]]
    %s2983 = sadd.f32 %s2967, %s2980
    %s2984 = smul.f32 %s2982, %s2983
    %s2985 = sadd.f32 %s2981, %s2984
    %s2986 = scalar_lea.smem [#allocation21], 0
    %2987 = sst [smem:[%s2986]] %s2985
    // Predicated region
    $region1182: #{tpu_custom_call.1} parent=1 // pred_check
      _
    $region1183: #{tpu_custom_call.1} parent=1 // pred_check_branch
      %2989 = sbr.rel (0) target = $region1185
    $region1184: #{tpu_custom_call.1} parent=1 // pred_region
      %s2991 = ssub.s32 16, 16
      %2992 = vsyncadd [#allocation7], %s2991
      %2995 = dma.smem_to_hbm [#allocation21], 16, %s16, [#allocation7]
    $region1185: #{tpu_custom_call.1} parent=1 // pred_fallthru
      _
    // Predicated region
    $region1186: #{tpu_custom_call.1} parent=1 // pred_check
      _
    $region1187: #{tpu_custom_call.1} parent=1 // pred_check_branch
      %2997 = sbr.rel (0) target = $region1189
    $region1188: #{tpu_custom_call.1} parent=1 // pred_region
      %2998 = dma.done [#allocation7], 16
    $region1189: #{tpu_custom_call.1} parent=1 // pred_fallthru
      _
    %2999 = sfence
    %3000 = vsyncpa [#allocation6], 1
    %3001 = vsyncpa [#allocation7], 1
    %3002 = vsyncpa [#allocation8], 1
    %3003 = vsyncpa [#allocation11], 1
    %3004 = vsyncpa [#allocation14], 1
    %3005 = vsyncpa [#allocation17], 1
    %3006 = vsyncpa [#allocation20], 1
  %3007 = vsyncmov [#allocation3]
  %s3008 = vpop.sfrf %3007
  %p3009 = scmp.eq.s32.totalorder %s3008, 0
  %p3010 = pneg %p3009
  %3012 = shalt.err (%p3010)
  %s3013 = scalar_lea.sflag [#allocation3], 1
  %3014 = vsyncmov %s3013
  %s3015 = vpop.sfrf %3014
  %p3016 = scmp.eq.s32.totalorder %s3015, 0
  %p3017 = pneg %p3016
  %3019 = shalt.err (%p3017)

</llo_original>
